<compile_context>
chip_gen: v7x
topology: tpu7x:2x2x1
jax: 0.10.0
libtpu: 0.0.40
codegen_flags: <defaults>
</compile_context>

<pallas_src>
import functools

import jax
import jax.numpy as jnp
from jax import lax
from jax.experimental import pallas as pl
from jax.experimental.pallas import tpu as pltpu  # noqa: F401  (kept for TPU-specific tuning hooks)

# ---------------- scaled-down config (original values in comments) ----------------
B   = 2                      # batch_size            (orig 8)
S   = 8                      # sequence length
V   = 32                     # vocab size
E   = 16                     # embedding_length      (orig 200)
H   = 32                     # LSTM hidden / dir     (orig units = 256)
H2  = 2 * H                  # BiLSTM feature dim    (orig 512)
AS  = 16                     # W_s1 out              (orig 350)
R   = 4                      # attention hops        (orig 30)
DH  = 64                     # hidden_d              (orig 512)
A1, A2, A3, A4 = 32, 16, 8, 1    # atmf dense sizes  (orig 256, 64, 8, 1)
CIN = 4                      # image channels
IMG = 16                     # image spatial         (orig 224)
K   = 4                      # conv stand-in kernel = stride
P   = (IMG // K) ** 2        # image feature positions (orig 49)

f32 = jnp.float32


# ---------------------------------- helpers ---------------------------------------
def _softmax(x, axis):
    m = jnp.max(x, axis=axis, keepdims=True)
    e = jnp.exp(x - m)
    return e * pl.reciprocal(jnp.sum(e, axis=axis, keepdims=True), approx=True)


def _sigmoid(x):
    # sigmoid(x) == 0.5 * (tanh(x / 2) + 1): one EUP transcendental, no divide.
    return 0.5 * jnp.tanh(0.5 * x) + 0.5


# ------------------------------ fused forward kernel -------------------------------
def _memo_fused_kernel(
        x_ref, patch_ref,                        # activations
        wih_ref, whh_ref, b8_ref,                # BiLSTM (packed)
        ws1_ref, bs1_ref, ws2_ref, bs2_ref,      # attention_net
        convw_ref, convb_ref,                    # VGG19-bottom stand-in
        wb_ref,                                  # W_b
        l1w_ref, l1b_ref,                        # l_1
        wF_ref, wf_ref,                          # W_F, W_f (stored squeezed)
        a1w_ref, a1b_ref, a2w_ref, a2b_ref,
        a3w_ref, a3b_ref, a4w_ref, a4b_ref,      # atmf dense chain
        out_ref):
    # --------------------------------- BiLSTM --------------------------------------
    # Hoisted input projection: one (S*B, E) x (E, 8H) matmul, biases folded in.
    x_flat = x_ref[...].reshape(S * B, E)                         # rows ordered (t, b)
    xp = jnp.dot(x_flat, wih_ref[...], preferred_element_type=f32) + b8_ref[...]
    # One-time static per-gate/direction split (no per-step 32-lane slicing).
    xg = [xp[:, k * H:(k + 1) * H] for k in range(8)]             # each (S*B, H)
    wg = [whh_ref[k] for k in range(8)]                           # each (H, H)

    def cell(px, h, c, w):
        # px / w: 4-tuples (i, f, g, o) of (B, H) projections and (H, H) weights.
        i_g = _sigmoid(px[0] + jnp.dot(h, w[0], preferred_element_type=f32))
        f_g = _sigmoid(px[1] + jnp.dot(h, w[1], preferred_element_type=f32))
        g_g = jnp.tanh(px[2] + jnp.dot(h, w[2], preferred_element_type=f32))
        o_g = _sigmoid(px[3] + jnp.dot(h, w[3], preferred_element_type=f32))
        c_new = f_g * c + i_g * g_g
        return o_g * jnp.tanh(c_new), c_new

    hf = jnp.zeros((B, H), f32); cf = jnp.zeros((B, H), f32)
    hr = jnp.zeros((B, H), f32); cr = jnp.zeros((B, H), f32)
    out_f = [None] * S
    out_r = [None] * S
    # Fully unrolled (S static & small): straight-line code, static indices, and
    # the independent fwd / rev recurrences interleave for ILP.
    for t in range(S):
        rf = slice(t * B, (t + 1) * B)
        hf, cf = cell(tuple(xg[k][rf] for k in range(4)), hf, cf, wg[0:4])
        out_f[t] = hf
        tr = S - 1 - t
        rr = slice(tr * B, (tr + 1) * B)
        hr, cr = cell(tuple(xg[4 + k][rr] for k in range(4)), hr, cr, wg[4:8])
        out_r[tr] = hr

    text = jnp.concatenate([jnp.stack(out_f, axis=1),
                            jnp.stack(out_r, axis=1)], axis=-1)   # (B, S, 2H)

    # ----------------------- attention_net + bmm pooling ---------------------------
    ws1 = ws1_ref[...]; bs1 = bs1_ref[...]; ws2 = ws2_ref[...]; bs2 = bs2_ref[...]

    def attn_pool(feat, n):
        xf = feat.reshape(B * n, H2)
        u = jnp.tanh(jnp.dot(xf, ws1, preferred_element_type=f32) + bs1)   # (B*n, AS)
        a = jnp.dot(u, ws2, preferred_element_type=f32) + bs2              # (B*n, R)
        a = _softmax(a.reshape(B, n, R), axis=1)                           # softmax over n
        pooled = jnp.einsum('bnr,bnh->brh', a, feat,
                            preferred_element_type=f32)                    # (B, R, 2H)
        return pooled.reshape(B, R * H2)

    hidden_flat = attn_pool(text, S)                                        # (B, R*2H)

    # ---------------------- VGG19-bottom stand-in (patch conv) ---------------------
    feat = jnp.dot(patch_ref[...], convw_ref[...],
                   preferred_element_type=f32) + convb_ref[...]             # (B*P, 2H)
    img_feat = jnp.maximum(feat, 0.0).reshape(B, P, H2)                     # (B, P, 2H)

    # --------------------------- image_encoding_filter -----------------------------
    wb = wb_ref[...]                                                        # (B, 2H, 2H)
    aff_int = jnp.einsum('bsh,bhk->bsk', text, wb, preferred_element_type=f32)
    aff = jnp.einsum('bsk,bpk->bsp', aff_int, img_feat, preferred_element_type=f32)
    aff_sum = jnp.sum(aff, axis=1, keepdims=True)                           # (B, 1, P)
    # NOTE: the reference divides by the raw (sign-unconstrained) column sum.
    alpha = aff / aff_sum
    a_h = jnp.einsum('bsp,bsh->bph', alpha, text, preferred_element_type=f32)  # (B, P, 2H)
    # CosineSimilarity(dim=2, eps=1e-6): dot / (max(|x|, eps) * max(|y|, eps))
    dotp = jnp.sum(img_feat * a_h, axis=-1, keepdims=True)
    ss1 = jnp.sum(img_feat * img_feat, axis=-1, keepdims=True)
    ss2 = jnp.sum(a_h * a_h, axis=-1, keepdims=True)
    eps2 = 1e-6 * 1e-6
    cos = dotp * lax.rsqrt(jnp.maximum(ss1, eps2)) * lax.rsqrt(jnp.maximum(ss2, eps2))
    gated = a_h * (1.0 - cos)                                               # (B, P, 2H)

    img_flat = attn_pool(gated, P)                                          # (B, R*2H)

    # ------------------------- l_1 (text & image fused) ----------------------------
    stacked = jnp.concatenate([hidden_flat, img_flat], axis=0)              # (2B, R*2H)
    s_all = jnp.dot(stacked, l1w_ref[...], preferred_element_type=f32) + l1b_ref[...]
    s_text, s_image = s_all[0:B], s_all[B:2 * B]                            # (B, DH) each

    # ------------------------------------ ATMF -------------------------------------
    # dense chain (no nonlinearities, as in the reference), both rows at once
    h = jnp.dot(s_all, a1w_ref[...], preferred_element_type=f32) + a1b_ref[...]
    h = jnp.dot(h, a2w_ref[...], preferred_element_type=f32) + a2b_ref[...]
    h = jnp.dot(h, a3w_ref[...], preferred_element_type=f32) + a3b_ref[...]
    h = jnp.dot(h, a4w_ref[...], preferred_element_type=f32) + a4b_ref[...]  # (2B, 1)
    s_pair = jnp.concatenate([h[0:B], h[B:2 * B]], axis=1)                  # (B, 2) [text|image]
    s_scale = _softmax(s_pair, axis=-1) + 1.0                               # (B, 2)

    mm = jnp.stack([s_text, s_image], axis=-1)                              # (B, DH, 2)
    wei = mm * s_scale[:, None, :]                                          # (B, DH, 2)
    pf = jnp.tanh(jnp.einsum('bij,bjc->bic', wF_ref[...], wei,
                             preferred_element_type=f32))                   # (B, DH, 2)
    pf = _softmax(pf, axis=-1)
    gamma = jnp.sum(wf_ref[...][:, :, None] * pf, axis=1)                   # (B, 2)
    out_ref[...] = jnp.sum(wei * gamma[:, None, :], axis=-1)                # (B, DH)


def _fused_forward(x_seq, patches, p):
    # Grid-less pallas_call: every operand is a whole-array VMEM block (total
    # working set < 0.5 MiB), single invocation, no pipelining needed.
    return pl.pallas_call(
        _memo_fused_kernel,
        out_shape=jax.ShapeDtypeStruct((B, DH), f32),
    )(x_seq, patches,
      p['wih'], p['whh'], p['b8'],
      p['ws1'], p['bs1'], p['ws2'], p['bs2'],
      p['conv_w'], p['conv_b'],
      p['W_b'],
      p['l1_w'], p['l1_b'],
      p['W_F'], p['W_f'],
      p['a1_w'], p['a1_b'], p['a2_w'], p['a2_b'],
      p['a3_w'], p['a3_b'], p['a4_w'], p['a4_b'])


# -------------------------------- full forward pass --------------------------------
def memo_lstm_forward(params, img, tokens):
    # embedding gather + layout glue (outside the kernel)
    emb = jnp.take(params['emb'], tokens, axis=0)                 # (B, S, E)
    x_seq = jnp.transpose(emb, (1, 0, 2)).astype(f32)             # (S, B, E)
    # VGG19-bottom stand-in input: non-overlapping KxK patches from NCHW image.
    # TODO(synk): pretrained VGG19 feature stack is not reproduced; replaced by a
    #             deterministic single-conv stand-in with the same output layout
    #             (== reshape(B, 512, 49).permute(0, 2, 1)).
    patches = img.reshape(B, CIN, IMG // K, K, IMG // K, K)
    patches = jnp.transpose(patches, (0, 2, 4, 1, 3, 5)).reshape(B * P, CIN * K * K)
    return _fused_forward(x_seq, patches, params)


# ---------------------------------- parameters --------------------------------------
def init_params(key):
    ks = jax.random.split(key, 24)

    def nrm(k, shape, scale=0.1):
        return (scale * jax.random.normal(k, shape)).astype(f32)

    p = {}
    # TODO(synk): original copies a pre-built GloVe/zeros weights_matrix into the
    #             embedding; a deterministic random table plays that role here.
    p['emb'] = nrm(ks[0], (V, E), 0.5)
    # BiLSTM, packed for the fused kernel:
    #   wih: (E, 8H), columns = [fwd i,f,g,o | rev i,f,g,o]  (pre-transposed)
    #   whh: (8, H, H) per-gate recurrent weights, same order
    #   b8 : (1, 8H) = b_ih + b_hh, same column order
    p['wih'] = nrm(ks[1], (E, 8 * H))
    p['whh'] = nrm(ks[2], (8, H, H))
    p['b8'] = nrm(ks[3], (1, 8 * H))
    # attention_net
    p['ws1'] = nrm(ks[4], (H2, AS)); p['bs1'] = nrm(ks[5], (1, AS))
    p['ws2'] = nrm(ks[6], (AS, R)); p['bs2'] = nrm(ks[7], (1, R))
    # conv stand-in
    p['conv_w'] = nrm(ks[8], (CIN * K * K, H2)); p['conv_b'] = nrm(ks[9], (1, H2))
    # l_1
    p['l1_w'] = nrm(ks[10], (R * H2, DH)); p['l1_b'] = nrm(ks[11], (1, DH))
    # batched parameters (torch.rand -> uniform [0, 1)); W_f stored squeezed (B, DH)
    # (== torch shape (B, DH, 1), used only as the vector in the gamma bmm).
    p['W_b'] = jax.random.uniform(ks[12], (B, H2, H2), dtype=f32)
    p['W_F'] = jax.random.uniform(ks[13], (B, DH, DH), dtype=f32)
    p['W_f'] = jax.random.uniform(ks[14], (B, DH), dtype=f32)
    # atmf dense chain
    p['a1_w'] = nrm(ks[15], (DH, A1)); p['a1_b'] = nrm(ks[16], (1, A1))
    p['a2_w'] = nrm(ks[17], (A1, A2)); p['a2_b'] = nrm(ks[18], (1, A2))
    p['a3_w'] = nrm(ks[19], (A2, A3)); p['a3_b'] = nrm(ks[20], (1, A3))
    p['a4_w'] = nrm(ks[21], (A3, A4)); p['a4_b'] = nrm(ks[22], (1, A4))
    return p


if __name__ == "__main__":
    key = jax.random.PRNGKey(0)
    k_img, k_tok = jax.random.split(key)
    params = init_params(jax.random.PRNGKey(42))
    img = jax.random.normal(k_img, (B, CIN, IMG, IMG), dtype=f32)          # NCHW
    tokens = jax.random.randint(k_tok, (B, S), 0, V)                       # (B, S) int32

    fwd = jax.jit(functools.partial(memo_lstm_forward, params))
    out = jax.block_until_ready(fwd(img, tokens))

    assert out.shape == (B, DH), out.shape
    assert bool(jnp.all(jnp.isfinite(out)))
    print("KERNEL_OK")
</pallas_src>

<mosaic_0001>
module attributes {stable_mosaic.version = 11 : i64} {
  func.func @_memo_fused_kernel(%arg0: memref<8x2x16xf32, #tpu.memory_space<vmem>>, %arg1: memref<32x64xf32, #tpu.memory_space<vmem>>, %arg2: memref<16x256xf32, #tpu.memory_space<vmem>>, %arg3: memref<8x32x32xf32, #tpu.memory_space<vmem>>, %arg4: memref<1x256xf32, #tpu.memory_space<vmem>>, %arg5: memref<64x16xf32, #tpu.memory_space<vmem>>, %arg6: memref<1x16xf32, #tpu.memory_space<vmem>>, %arg7: memref<16x4xf32, #tpu.memory_space<vmem>>, %arg8: memref<1x4xf32, #tpu.memory_space<vmem>>, %arg9: memref<64x64xf32, #tpu.memory_space<vmem>>, %arg10: memref<1x64xf32, #tpu.memory_space<vmem>>, %arg11: memref<2x64x64xf32, #tpu.memory_space<vmem>>, %arg12: memref<256x64xf32, #tpu.memory_space<vmem>>, %arg13: memref<1x64xf32, #tpu.memory_space<vmem>>, %arg14: memref<2x64x64xf32, #tpu.memory_space<vmem>>, %arg15: memref<2x64xf32, #tpu.memory_space<vmem>>, %arg16: memref<64x32xf32, #tpu.memory_space<vmem>>, %arg17: memref<1x32xf32, #tpu.memory_space<vmem>>, %arg18: memref<32x16xf32, #tpu.memory_space<vmem>>, %arg19: memref<1x16xf32, #tpu.memory_space<vmem>>, %arg20: memref<16x8xf32, #tpu.memory_space<vmem>>, %arg21: memref<1x8xf32, #tpu.memory_space<vmem>>, %arg22: memref<8x1xf32, #tpu.memory_space<vmem>>, %arg23: memref<1x1xf32, #tpu.memory_space<vmem>>, %arg24: memref<2x64xf32, #tpu.memory_space<vmem>>) attributes {dimension_semantics = [], scalar_prefetch = 0 : i64, scratch_operands = 0 : i64, tpu.core_type = #tpu.core_type<tc>} {
    %c0 = arith.constant 0 : index
    %c0_0 = arith.constant 0 : index
    %c0_1 = arith.constant 0 : index
    %0 = vector.load %arg0[%c0, %c0_0, %c0_1] : memref<8x2x16xf32, #tpu.memory_space<vmem>>, vector<8x2x16xf32>
    %1 = vector.shape_cast %0 : vector<8x2x16xf32> to vector<16x16xf32>
    %c0_2 = arith.constant 0 : index
    %c0_3 = arith.constant 0 : index
    %2 = vector.load %arg2[%c0_2, %c0_3] : memref<16x256xf32, #tpu.memory_space<vmem>>, vector<16x256xf32>
    %cst = arith.constant dense<0.000000e+00> : vector<16x256xf32>
    %3 = tpu.matmul %1, %2, %cst {dimension_numbers = #tpu.dot_dimension_numbers<[1], [0], [0], [1], [0, 0, 1, 1], [], []>} : vector<16x16xf32>, vector<16x256xf32>, vector<16x256xf32> -> vector<16x256xf32>
    %c0_4 = arith.constant 0 : index
    %c0_5 = arith.constant 0 : index
    %4 = vector.load %arg4[%c0_4, %c0_5] : memref<1x256xf32, #tpu.memory_space<vmem>>, vector<1x256xf32>
    %5 = vector.broadcast %4 : vector<1x256xf32> to vector<16x256xf32>
    %6 = arith.addf %3, %5 : vector<16x256xf32>
    %7 = vector.extract_strided_slice %6 {offsets = [0, 0], sizes = [16, 32], strides = [1, 1]} : vector<16x256xf32> to vector<16x32xf32>
    %8 = vector.extract_strided_slice %6 {offsets = [0, 32], sizes = [16, 32], strides = [1, 1]} : vector<16x256xf32> to vector<16x32xf32>
    %9 = vector.extract_strided_slice %6 {offsets = [0, 64], sizes = [16, 32], strides = [1, 1]} : vector<16x256xf32> to vector<16x32xf32>
    %10 = vector.extract_strided_slice %6 {offsets = [0, 96], sizes = [16, 32], strides = [1, 1]} : vector<16x256xf32> to vector<16x32xf32>
    %11 = vector.extract_strided_slice %6 {offsets = [0, 128], sizes = [16, 32], strides = [1, 1]} : vector<16x256xf32> to vector<16x32xf32>
    %12 = vector.extract_strided_slice %6 {offsets = [0, 160], sizes = [16, 32], strides = [1, 1]} : vector<16x256xf32> to vector<16x32xf32>
    %13 = vector.extract_strided_slice %6 {offsets = [0, 192], sizes = [16, 32], strides = [1, 1]} : vector<16x256xf32> to vector<16x32xf32>
    %14 = vector.extract_strided_slice %6 {offsets = [0, 224], sizes = [16, 32], strides = [1, 1]} : vector<16x256xf32> to vector<16x32xf32>
    %c0_6 = arith.constant 0 : index
    %c0_7 = arith.constant 0 : index
    %c0_8 = arith.constant 0 : index
    %15 = vector.load %arg3[%c0_6, %c0_7, %c0_8] : memref<8x32x32xf32, #tpu.memory_space<vmem>>, vector<1x32x32xf32>
    %16 = vector.shape_cast %15 : vector<1x32x32xf32> to vector<32x32xf32>
    %c1 = arith.constant 1 : index
    %c0_9 = arith.constant 0 : index
    %c0_10 = arith.constant 0 : index
    %17 = vector.load %arg3[%c1, %c0_9, %c0_10] : memref<8x32x32xf32, #tpu.memory_space<vmem>>, vector<1x32x32xf32>
    %18 = vector.shape_cast %17 : vector<1x32x32xf32> to vector<32x32xf32>
    %c2 = arith.constant 2 : index
    %c0_11 = arith.constant 0 : index
    %c0_12 = arith.constant 0 : index
    %19 = vector.load %arg3[%c2, %c0_11, %c0_12] : memref<8x32x32xf32, #tpu.memory_space<vmem>>, vector<1x32x32xf32>
    %20 = vector.shape_cast %19 : vector<1x32x32xf32> to vector<32x32xf32>
    %c3 = arith.constant 3 : index
    %c0_13 = arith.constant 0 : index
    %c0_14 = arith.constant 0 : index
    %21 = vector.load %arg3[%c3, %c0_13, %c0_14] : memref<8x32x32xf32, #tpu.memory_space<vmem>>, vector<1x32x32xf32>
    %22 = vector.shape_cast %21 : vector<1x32x32xf32> to vector<32x32xf32>
    %c4 = arith.constant 4 : index
    %c0_15 = arith.constant 0 : index
    %c0_16 = arith.constant 0 : index
    %23 = vector.load %arg3[%c4, %c0_15, %c0_16] : memref<8x32x32xf32, #tpu.memory_space<vmem>>, vector<1x32x32xf32>
    %24 = vector.shape_cast %23 : vector<1x32x32xf32> to vector<32x32xf32>
    %c5 = arith.constant 5 : index
    %c0_17 = arith.constant 0 : index
    %c0_18 = arith.constant 0 : index
    %25 = vector.load %arg3[%c5, %c0_17, %c0_18] : memref<8x32x32xf32, #tpu.memory_space<vmem>>, vector<1x32x32xf32>
    %26 = vector.shape_cast %25 : vector<1x32x32xf32> to vector<32x32xf32>
    %c6 = arith.constant 6 : index
    %c0_19 = arith.constant 0 : index
    %c0_20 = arith.constant 0 : index
    %27 = vector.load %arg3[%c6, %c0_19, %c0_20] : memref<8x32x32xf32, #tpu.memory_space<vmem>>, vector<1x32x32xf32>
    %28 = vector.shape_cast %27 : vector<1x32x32xf32> to vector<32x32xf32>
    %c7 = arith.constant 7 : index
    %c0_21 = arith.constant 0 : index
    %c0_22 = arith.constant 0 : index
    %29 = vector.load %arg3[%c7, %c0_21, %c0_22] : memref<8x32x32xf32, #tpu.memory_space<vmem>>, vector<1x32x32xf32>
    %30 = vector.shape_cast %29 : vector<1x32x32xf32> to vector<32x32xf32>
    %cst_23 = arith.constant 0.000000e+00 : f32
    %31 = vector.broadcast %cst_23 : f32 to vector<2x32xf32>
    %cst_24 = arith.constant 0.000000e+00 : f32
    %32 = vector.broadcast %cst_24 : f32 to vector<2x32xf32>
    %cst_25 = arith.constant 0.000000e+00 : f32
    %33 = vector.broadcast %cst_25 : f32 to vector<2x32xf32>
    %cst_26 = arith.constant 0.000000e+00 : f32
    %34 = vector.broadcast %cst_26 : f32 to vector<2x32xf32>
    %35 = vector.extract_strided_slice %7 {offsets = [0, 0], sizes = [2, 32], strides = [1, 1]} : vector<16x32xf32> to vector<2x32xf32>
    %36 = vector.extract_strided_slice %8 {offsets = [0, 0], sizes = [2, 32], strides = [1, 1]} : vector<16x32xf32> to vector<2x32xf32>
    %37 = vector.extract_strided_slice %9 {offsets = [0, 0], sizes = [2, 32], strides = [1, 1]} : vector<16x32xf32> to vector<2x32xf32>
    %38 = vector.extract_strided_slice %10 {offsets = [0, 0], sizes = [2, 32], strides = [1, 1]} : vector<16x32xf32> to vector<2x32xf32>
    %cst_27 = arith.constant dense<0.000000e+00> : vector<2x32xf32>
    %39 = tpu.matmul %31, %16, %cst_27 {dimension_numbers = #tpu.dot_dimension_numbers<[1], [0], [0], [1], [0, 0, 1, 1], [], []>} : vector<2x32xf32>, vector<32x32xf32>, vector<2x32xf32> -> vector<2x32xf32>
    %40 = arith.addf %35, %39 : vector<2x32xf32>
    %cst_28 = arith.constant 5.000000e-01 : f32
    %41 = vector.broadcast %cst_28 : f32 to vector<2x32xf32>
    %42 = arith.mulf %41, %40 : vector<2x32xf32>
    %43 = math.tanh %42 : vector<2x32xf32>
    %cst_29 = arith.constant 5.000000e-01 : f32
    %44 = vector.broadcast %cst_29 : f32 to vector<2x32xf32>
    %45 = arith.mulf %44, %43 : vector<2x32xf32>
    %cst_30 = arith.constant 5.000000e-01 : f32
    %46 = vector.broadcast %cst_30 : f32 to vector<2x32xf32>
    %47 = arith.addf %45, %46 : vector<2x32xf32>
    %cst_31 = arith.constant dense<0.000000e+00> : vector<2x32xf32>
    %48 = tpu.matmul %31, %18, %cst_31 {dimension_numbers = #tpu.dot_dimension_numbers<[1], [0], [0], [1], [0, 0, 1, 1], [], []>} : vector<2x32xf32>, vector<32x32xf32>, vector<2x32xf32> -> vector<2x32xf32>
    %49 = arith.addf %36, %48 : vector<2x32xf32>
    %cst_32 = arith.constant 5.000000e-01 : f32
    %50 = vector.broadcast %cst_32 : f32 to vector<2x32xf32>
    %51 = arith.mulf %50, %49 : vector<2x32xf32>
    %52 = math.tanh %51 : vector<2x32xf32>
    %cst_33 = arith.constant 5.000000e-01 : f32
    %53 = vector.broadcast %cst_33 : f32 to vector<2x32xf32>
    %54 = arith.mulf %53, %52 : vector<2x32xf32>
    %cst_34 = arith.constant 5.000000e-01 : f32
    %55 = vector.broadcast %cst_34 : f32 to vector<2x32xf32>
    %56 = arith.addf %54, %55 : vector<2x32xf32>
    %cst_35 = arith.constant dense<0.000000e+00> : vector<2x32xf32>
    %57 = tpu.matmul %31, %20, %cst_35 {dimension_numbers = #tpu.dot_dimension_numbers<[1], [0], [0], [1], [0, 0, 1, 1], [], []>} : vector<2x32xf32>, vector<32x32xf32>, vector<2x32xf32> -> vector<2x32xf32>
    %58 = arith.addf %37, %57 : vector<2x32xf32>
    %59 = math.tanh %58 : vector<2x32xf32>
    %cst_36 = arith.constant dense<0.000000e+00> : vector<2x32xf32>
    %60 = tpu.matmul %31, %22, %cst_36 {dimension_numbers = #tpu.dot_dimension_numbers<[1], [0], [0], [1], [0, 0, 1, 1], [], []>} : vector<2x32xf32>, vector<32x32xf32>, vector<2x32xf32> -> vector<2x32xf32>
    %61 = arith.addf %38, %60 : vector<2x32xf32>
    %cst_37 = arith.constant 5.000000e-01 : f32
    %62 = vector.broadcast %cst_37 : f32 to vector<2x32xf32>
    %63 = arith.mulf %62, %61 : vector<2x32xf32>
    %64 = math.tanh %63 : vector<2x32xf32>
    %cst_38 = arith.constant 5.000000e-01 : f32
    %65 = vector.broadcast %cst_38 : f32 to vector<2x32xf32>
    %66 = arith.mulf %65, %64 : vector<2x32xf32>
    %cst_39 = arith.constant 5.000000e-01 : f32
    %67 = vector.broadcast %cst_39 : f32 to vector<2x32xf32>
    %68 = arith.addf %66, %67 : vector<2x32xf32>
    %69 = arith.mulf %56, %32 : vector<2x32xf32>
    %70 = arith.mulf %47, %59 : vector<2x32xf32>
    %71 = arith.addf %69, %70 : vector<2x32xf32>
    %72 = math.tanh %71 : vector<2x32xf32>
    %73 = arith.mulf %68, %72 : vector<2x32xf32>
    %74 = vector.extract_strided_slice %11 {offsets = [14, 0], sizes = [2, 32], strides = [1, 1]} : vector<16x32xf32> to vector<2x32xf32>
    %75 = vector.extract_strided_slice %12 {offsets = [14, 0], sizes = [2, 32], strides = [1, 1]} : vector<16x32xf32> to vector<2x32xf32>
    %76 = vector.extract_strided_slice %13 {offsets = [14, 0], sizes = [2, 32], strides = [1, 1]} : vector<16x32xf32> to vector<2x32xf32>
    %77 = vector.extract_strided_slice %14 {offsets = [14, 0], sizes = [2, 32], strides = [1, 1]} : vector<16x32xf32> to vector<2x32xf32>
    %cst_40 = arith.constant dense<0.000000e+00> : vector<2x32xf32>
    %78 = tpu.matmul %33, %24, %cst_40 {dimension_numbers = #tpu.dot_dimension_numbers<[1], [0], [0], [1], [0, 0, 1, 1], [], []>} : vector<2x32xf32>, vector<32x32xf32>, vector<2x32xf32> -> vector<2x32xf32>
    %79 = arith.addf %74, %78 : vector<2x32xf32>
    %cst_41 = arith.constant 5.000000e-01 : f32
    %80 = vector.broadcast %cst_41 : f32 to vector<2x32xf32>
    %81 = arith.mulf %80, %79 : vector<2x32xf32>
    %82 = math.tanh %81 : vector<2x32xf32>
    %cst_42 = arith.constant 5.000000e-01 : f32
    %83 = vector.broadcast %cst_42 : f32 to vector<2x32xf32>
    %84 = arith.mulf %83, %82 : vector<2x32xf32>
    %cst_43 = arith.constant 5.000000e-01 : f32
    %85 = vector.broadcast %cst_43 : f32 to vector<2x32xf32>
    %86 = arith.addf %84, %85 : vector<2x32xf32>
    %cst_44 = arith.constant dense<0.000000e+00> : vector<2x32xf32>
    %87 = tpu.matmul %33, %26, %cst_44 {dimension_numbers = #tpu.dot_dimension_numbers<[1], [0], [0], [1], [0, 0, 1, 1], [], []>} : vector<2x32xf32>, vector<32x32xf32>, vector<2x32xf32> -> vector<2x32xf32>
    %88 = arith.addf %75, %87 : vector<2x32xf32>
    %cst_45 = arith.constant 5.000000e-01 : f32
    %89 = vector.broadcast %cst_45 : f32 to vector<2x32xf32>
    %90 = arith.mulf %89, %88 : vector<2x32xf32>
    %91 = math.tanh %90 : vector<2x32xf32>
    %cst_46 = arith.constant 5.000000e-01 : f32
    %92 = vector.broadcast %cst_46 : f32 to vector<2x32xf32>
    %93 = arith.mulf %92, %91 : vector<2x32xf32>
    %cst_47 = arith.constant 5.000000e-01 : f32
    %94 = vector.broadcast %cst_47 : f32 to vector<2x32xf32>
    %95 = arith.addf %93, %94 : vector<2x32xf32>
    %cst_48 = arith.constant dense<0.000000e+00> : vector<2x32xf32>
    %96 = tpu.matmul %33, %28, %cst_48 {dimension_numbers = #tpu.dot_dimension_numbers<[1], [0], [0], [1], [0, 0, 1, 1], [], []>} : vector<2x32xf32>, vector<32x32xf32>, vector<2x32xf32> -> vector<2x32xf32>
    %97 = arith.addf %76, %96 : vector<2x32xf32>
    %98 = math.tanh %97 : vector<2x32xf32>
    %cst_49 = arith.constant dense<0.000000e+00> : vector<2x32xf32>
    %99 = tpu.matmul %33, %30, %cst_49 {dimension_numbers = #tpu.dot_dimension_numbers<[1], [0], [0], [1], [0, 0, 1, 1], [], []>} : vector<2x32xf32>, vector<32x32xf32>, vector<2x32xf32> -> vector<2x32xf32>
    %100 = arith.addf %77, %99 : vector<2x32xf32>
    %cst_50 = arith.constant 5.000000e-01 : f32
    %101 = vector.broadcast %cst_50 : f32 to vector<2x32xf32>
    %102 = arith.mulf %101, %100 : vector<2x32xf32>
    %103 = math.tanh %102 : vector<2x32xf32>
    %cst_51 = arith.constant 5.000000e-01 : f32
    %104 = vector.broadcast %cst_51 : f32 to vector<2x32xf32>
    %105 = arith.mulf %104, %103 : vector<2x32xf32>
    %cst_52 = arith.constant 5.000000e-01 : f32
    %106 = vector.broadcast %cst_52 : f32 to vector<2x32xf32>
    %107 = arith.addf %105, %106 : vector<2x32xf32>
    %108 = arith.mulf %95, %34 : vector<2x32xf32>
    %109 = arith.mulf %86, %98 : vector<2x32xf32>
    %110 = arith.addf %108, %109 : vector<2x32xf32>
    %111 = math.tanh %110 : vector<2x32xf32>
    %112 = arith.mulf %107, %111 : vector<2x32xf32>
    %113 = vector.extract_strided_slice %7 {offsets = [2, 0], sizes = [2, 32], strides = [1, 1]} : vector<16x32xf32> to vector<2x32xf32>
    %114 = vector.extract_strided_slice %8 {offsets = [2, 0], sizes = [2, 32], strides = [1, 1]} : vector<16x32xf32> to vector<2x32xf32>
    %115 = vector.extract_strided_slice %9 {offsets = [2, 0], sizes = [2, 32], strides = [1, 1]} : vector<16x32xf32> to vector<2x32xf32>
    %116 = vector.extract_strided_slice %10 {offsets = [2, 0], sizes = [2, 32], strides = [1, 1]} : vector<16x32xf32> to vector<2x32xf32>
    %cst_53 = arith.constant dense<0.000000e+00> : vector<2x32xf32>
    %117 = tpu.matmul %73, %16, %cst_53 {dimension_numbers = #tpu.dot_dimension_numbers<[1], [0], [0], [1], [0, 0, 1, 1], [], []>} : vector<2x32xf32>, vector<32x32xf32>, vector<2x32xf32> -> vector<2x32xf32>
    %118 = arith.addf %113, %117 : vector<2x32xf32>
    %cst_54 = arith.constant 5.000000e-01 : f32
    %119 = vector.broadcast %cst_54 : f32 to vector<2x32xf32>
    %120 = arith.mulf %119, %118 : vector<2x32xf32>
    %121 = math.tanh %120 : vector<2x32xf32>
    %cst_55 = arith.constant 5.000000e-01 : f32
    %122 = vector.broadcast %cst_55 : f32 to vector<2x32xf32>
    %123 = arith.mulf %122, %121 : vector<2x32xf32>
    %cst_56 = arith.constant 5.000000e-01 : f32
    %124 = vector.broadcast %cst_56 : f32 to vector<2x32xf32>
    %125 = arith.addf %123, %124 : vector<2x32xf32>
    %cst_57 = arith.constant dense<0.000000e+00> : vector<2x32xf32>
    %126 = tpu.matmul %73, %18, %cst_57 {dimension_numbers = #tpu.dot_dimension_numbers<[1], [0], [0], [1], [0, 0, 1, 1], [], []>} : vector<2x32xf32>, vector<32x32xf32>, vector<2x32xf32> -> vector<2x32xf32>
    %127 = arith.addf %114, %126 : vector<2x32xf32>
    %cst_58 = arith.constant 5.000000e-01 : f32
    %128 = vector.broadcast %cst_58 : f32 to vector<2x32xf32>
    %129 = arith.mulf %128, %127 : vector<2x32xf32>
    %130 = math.tanh %129 : vector<2x32xf32>
    %cst_59 = arith.constant 5.000000e-01 : f32
    %131 = vector.broadcast %cst_59 : f32 to vector<2x32xf32>
    %132 = arith.mulf %131, %130 : vector<2x32xf32>
    %cst_60 = arith.constant 5.000000e-01 : f32
    %133 = vector.broadcast %cst_60 : f32 to vector<2x32xf32>
    %134 = arith.addf %132, %133 : vector<2x32xf32>
    %cst_61 = arith.constant dense<0.000000e+00> : vector<2x32xf32>
    %135 = tpu.matmul %73, %20, %cst_61 {dimension_numbers = #tpu.dot_dimension_numbers<[1], [0], [0], [1], [0, 0, 1, 1], [], []>} : vector<2x32xf32>, vector<32x32xf32>, vector<2x32xf32> -> vector<2x32xf32>
    %136 = arith.addf %115, %135 : vector<2x32xf32>
    %137 = math.tanh %136 : vector<2x32xf32>
    %cst_62 = arith.constant dense<0.000000e+00> : vector<2x32xf32>
    %138 = tpu.matmul %73, %22, %cst_62 {dimension_numbers = #tpu.dot_dimension_numbers<[1], [0], [0], [1], [0, 0, 1, 1], [], []>} : vector<2x32xf32>, vector<32x32xf32>, vector<2x32xf32> -> vector<2x32xf32>
    %139 = arith.addf %116, %138 : vector<2x32xf32>
    %cst_63 = arith.constant 5.000000e-01 : f32
    %140 = vector.broadcast %cst_63 : f32 to vector<2x32xf32>
    %141 = arith.mulf %140, %139 : vector<2x32xf32>
    %142 = math.tanh %141 : vector<2x32xf32>
    %cst_64 = arith.constant 5.000000e-01 : f32
    %143 = vector.broadcast %cst_64 : f32 to vector<2x32xf32>
    %144 = arith.mulf %143, %142 : vector<2x32xf32>
    %cst_65 = arith.constant 5.000000e-01 : f32
    %145 = vector.broadcast %cst_65 : f32 to vector<2x32xf32>
    %146 = arith.addf %144, %145 : vector<2x32xf32>
    %147 = arith.mulf %134, %71 : vector<2x32xf32>
    %148 = arith.mulf %125, %137 : vector<2x32xf32>
    %149 = arith.addf %147, %148 : vector<2x32xf32>
    %150 = math.tanh %149 : vector<2x32xf32>
    %151 = arith.mulf %146, %150 : vector<2x32xf32>
    %152 = vector.extract_strided_slice %11 {offsets = [12, 0], sizes = [2, 32], strides = [1, 1]} : vector<16x32xf32> to vector<2x32xf32>
    %153 = vector.extract_strided_slice %12 {offsets = [12, 0], sizes = [2, 32], strides = [1, 1]} : vector<16x32xf32> to vector<2x32xf32>
    %154 = vector.extract_strided_slice %13 {offsets = [12, 0], sizes = [2, 32], strides = [1, 1]} : vector<16x32xf32> to vector<2x32xf32>
    %155 = vector.extract_strided_slice %14 {offsets = [12, 0], sizes = [2, 32], strides = [1, 1]} : vector<16x32xf32> to vector<2x32xf32>
    %cst_66 = arith.constant dense<0.000000e+00> : vector<2x32xf32>
    %156 = tpu.matmul %112, %24, %cst_66 {dimension_numbers = #tpu.dot_dimension_numbers<[1], [0], [0], [1], [0, 0, 1, 1], [], []>} : vector<2x32xf32>, vector<32x32xf32>, vector<2x32xf32> -> vector<2x32xf32>
    %157 = arith.addf %152, %156 : vector<2x32xf32>
    %cst_67 = arith.constant 5.000000e-01 : f32
    %158 = vector.broadcast %cst_67 : f32 to vector<2x32xf32>
    %159 = arith.mulf %158, %157 : vector<2x32xf32>
    %160 = math.tanh %159 : vector<2x32xf32>
    %cst_68 = arith.constant 5.000000e-01 : f32
    %161 = vector.broadcast %cst_68 : f32 to vector<2x32xf32>
    %162 = arith.mulf %161, %160 : vector<2x32xf32>
    %cst_69 = arith.constant 5.000000e-01 : f32
    %163 = vector.broadcast %cst_69 : f32 to vector<2x32xf32>
    %164 = arith.addf %162, %163 : vector<2x32xf32>
    %cst_70 = arith.constant dense<0.000000e+00> : vector<2x32xf32>
    %165 = tpu.matmul %112, %26, %cst_70 {dimension_numbers = #tpu.dot_dimension_numbers<[1], [0], [0], [1], [0, 0, 1, 1], [], []>} : vector<2x32xf32>, vector<32x32xf32>, vector<2x32xf32> -> vector<2x32xf32>
    %166 = arith.addf %153, %165 : vector<2x32xf32>
    %cst_71 = arith.constant 5.000000e-01 : f32
    %167 = vector.broadcast %cst_71 : f32 to vector<2x32xf32>
    %168 = arith.mulf %167, %166 : vector<2x32xf32>
    %169 = math.tanh %168 : vector<2x32xf32>
    %cst_72 = arith.constant 5.000000e-01 : f32
    %170 = vector.broadcast %cst_72 : f32 to vector<2x32xf32>
    %171 = arith.mulf %170, %169 : vector<2x32xf32>
    %cst_73 = arith.constant 5.000000e-01 : f32
    %172 = vector.broadcast %cst_73 : f32 to vector<2x32xf32>
    %173 = arith.addf %171, %172 : vector<2x32xf32>
    %cst_74 = arith.constant dense<0.000000e+00> : vector<2x32xf32>
    %174 = tpu.matmul %112, %28, %cst_74 {dimension_numbers = #tpu.dot_dimension_numbers<[1], [0], [0], [1], [0, 0, 1, 1], [], []>} : vector<2x32xf32>, vector<32x32xf32>, vector<2x32xf32> -> vector<2x32xf32>
    %175 = arith.addf %154, %174 : vector<2x32xf32>
    %176 = math.tanh %175 : vector<2x32xf32>
    %cst_75 = arith.constant dense<0.000000e+00> : vector<2x32xf32>
    %177 = tpu.matmul %112, %30, %cst_75 {dimension_numbers = #tpu.dot_dimension_numbers<[1], [0], [0], [1], [0, 0, 1, 1], [], []>} : vector<2x32xf32>, vector<32x32xf32>, vector<2x32xf32> -> vector<2x32xf32>
    %178 = arith.addf %155, %177 : vector<2x32xf32>
    %cst_76 = arith.constant 5.000000e-01 : f32
    %179 = vector.broadcast %cst_76 : f32 to vector<2x32xf32>
    %180 = arith.mulf %179, %178 : vector<2x32xf32>
    %181 = math.tanh %180 : vector<2x32xf32>
    %cst_77 = arith.constant 5.000000e-01 : f32
    %182 = vector.broadcast %cst_77 : f32 to vector<2x32xf32>
    %183 = arith.mulf %182, %181 : vector<2x32xf32>
    %cst_78 = arith.constant 5.000000e-01 : f32
    %184 = vector.broadcast %cst_78 : f32 to vector<2x32xf32>
    %185 = arith.addf %183, %184 : vector<2x32xf32>
    %186 = arith.mulf %173, %110 : vector<2x32xf32>
    %187 = arith.mulf %164, %176 : vector<2x32xf32>
    %188 = arith.addf %186, %187 : vector<2x32xf32>
    %189 = math.tanh %188 : vector<2x32xf32>
    %190 = arith.mulf %185, %189 : vector<2x32xf32>
    %191 = vector.extract_strided_slice %7 {offsets = [4, 0], sizes = [2, 32], strides = [1, 1]} : vector<16x32xf32> to vector<2x32xf32>
    %192 = vector.extract_strided_slice %8 {offsets = [4, 0], sizes = [2, 32], strides = [1, 1]} : vector<16x32xf32> to vector<2x32xf32>
    %193 = vector.extract_strided_slice %9 {offsets = [4, 0], sizes = [2, 32], strides = [1, 1]} : vector<16x32xf32> to vector<2x32xf32>
    %194 = vector.extract_strided_slice %10 {offsets = [4, 0], sizes = [2, 32], strides = [1, 1]} : vector<16x32xf32> to vector<2x32xf32>
    %cst_79 = arith.constant dense<0.000000e+00> : vector<2x32xf32>
    %195 = tpu.matmul %151, %16, %cst_79 {dimension_numbers = #tpu.dot_dimension_numbers<[1], [0], [0], [1], [0, 0, 1, 1], [], []>} : vector<2x32xf32>, vector<32x32xf32>, vector<2x32xf32> -> vector<2x32xf32>
    %196 = arith.addf %191, %195 : vector<2x32xf32>
    %cst_80 = arith.constant 5.000000e-01 : f32
    %197 = vector.broadcast %cst_80 : f32 to vector<2x32xf32>
    %198 = arith.mulf %197, %196 : vector<2x32xf32>
    %199 = math.tanh %198 : vector<2x32xf32>
    %cst_81 = arith.constant 5.000000e-01 : f32
    %200 = vector.broadcast %cst_81 : f32 to vector<2x32xf32>
    %201 = arith.mulf %200, %199 : vector<2x32xf32>
    %cst_82 = arith.constant 5.000000e-01 : f32
    %202 = vector.broadcast %cst_82 : f32 to vector<2x32xf32>
    %203 = arith.addf %201, %202 : vector<2x32xf32>
    %cst_83 = arith.constant dense<0.000000e+00> : vector<2x32xf32>
    %204 = tpu.matmul %151, %18, %cst_83 {dimension_numbers = #tpu.dot_dimension_numbers<[1], [0], [0], [1], [0, 0, 1, 1], [], []>} : vector<2x32xf32>, vector<32x32xf32>, vector<2x32xf32> -> vector<2x32xf32>
    %205 = arith.addf %192, %204 : vector<2x32xf32>
    %cst_84 = arith.constant 5.000000e-01 : f32
    %206 = vector.broadcast %cst_84 : f32 to vector<2x32xf32>
    %207 = arith.mulf %206, %205 : vector<2x32xf32>
    %208 = math.tanh %207 : vector<2x32xf32>
    %cst_85 = arith.constant 5.000000e-01 : f32
    %209 = vector.broadcast %cst_85 : f32 to vector<2x32xf32>
    %210 = arith.mulf %209, %208 : vector<2x32xf32>
    %cst_86 = arith.constant 5.000000e-01 : f32
    %211 = vector.broadcast %cst_86 : f32 to vector<2x32xf32>
    %212 = arith.addf %210, %211 : vector<2x32xf32>
    %cst_87 = arith.constant dense<0.000000e+00> : vector<2x32xf32>
    %213 = tpu.matmul %151, %20, %cst_87 {dimension_numbers = #tpu.dot_dimension_numbers<[1], [0], [0], [1], [0, 0, 1, 1], [], []>} : vector<2x32xf32>, vector<32x32xf32>, vector<2x32xf32> -> vector<2x32xf32>
    %214 = arith.addf %193, %213 : vector<2x32xf32>
    %215 = math.tanh %214 : vector<2x32xf32>
    %cst_88 = arith.constant dense<0.000000e+00> : vector<2x32xf32>
    %216 = tpu.matmul %151, %22, %cst_88 {dimension_numbers = #tpu.dot_dimension_numbers<[1], [0], [0], [1], [0, 0, 1, 1], [], []>} : vector<2x32xf32>, vector<32x32xf32>, vector<2x32xf32> -> vector<2x32xf32>
    %217 = arith.addf %194, %216 : vector<2x32xf32>
    %cst_89 = arith.constant 5.000000e-01 : f32
    %218 = vector.broadcast %cst_89 : f32 to vector<2x32xf32>
    %219 = arith.mulf %218, %217 : vector<2x32xf32>
    %220 = math.tanh %219 : vector<2x32xf32>
    %cst_90 = arith.constant 5.000000e-01 : f32
    %221 = vector.broadcast %cst_90 : f32 to vector<2x32xf32>
    %222 = arith.mulf %221, %220 : vector<2x32xf32>
    %cst_91 = arith.constant 5.000000e-01 : f32
    %223 = vector.broadcast %cst_91 : f32 to vector<2x32xf32>
    %224 = arith.addf %222, %223 : vector<2x32xf32>
    %225 = arith.mulf %212, %149 : vector<2x32xf32>
    %226 = arith.mulf %203, %215 : vector<2x32xf32>
    %227 = arith.addf %225, %226 : vector<2x32xf32>
    %228 = math.tanh %227 : vector<2x32xf32>
    %229 = arith.mulf %224, %228 : vector<2x32xf32>
    %230 = vector.extract_strided_slice %11 {offsets = [10, 0], sizes = [2, 32], strides = [1, 1]} : vector<16x32xf32> to vector<2x32xf32>
    %231 = vector.extract_strided_slice %12 {offsets = [10, 0], sizes = [2, 32], strides = [1, 1]} : vector<16x32xf32> to vector<2x32xf32>
    %232 = vector.extract_strided_slice %13 {offsets = [10, 0], sizes = [2, 32], strides = [1, 1]} : vector<16x32xf32> to vector<2x32xf32>
    %233 = vector.extract_strided_slice %14 {offsets = [10, 0], sizes = [2, 32], strides = [1, 1]} : vector<16x32xf32> to vector<2x32xf32>
    %cst_92 = arith.constant dense<0.000000e+00> : vector<2x32xf32>
    %234 = tpu.matmul %190, %24, %cst_92 {dimension_numbers = #tpu.dot_dimension_numbers<[1], [0], [0], [1], [0, 0, 1, 1], [], []>} : vector<2x32xf32>, vector<32x32xf32>, vector<2x32xf32> -> vector<2x32xf32>
    %235 = arith.addf %230, %234 : vector<2x32xf32>
    %cst_93 = arith.constant 5.000000e-01 : f32
    %236 = vector.broadcast %cst_93 : f32 to vector<2x32xf32>
    %237 = arith.mulf %236, %235 : vector<2x32xf32>
    %238 = math.tanh %237 : vector<2x32xf32>
    %cst_94 = arith.constant 5.000000e-01 : f32
    %239 = vector.broadcast %cst_94 : f32 to vector<2x32xf32>
    %240 = arith.mulf %239, %238 : vector<2x32xf32>
    %cst_95 = arith.constant 5.000000e-01 : f32
    %241 = vector.broadcast %cst_95 : f32 to vector<2x32xf32>
    %242 = arith.addf %240, %241 : vector<2x32xf32>
    %cst_96 = arith.constant dense<0.000000e+00> : vector<2x32xf32>
    %243 = tpu.matmul %190, %26, %cst_96 {dimension_numbers = #tpu.dot_dimension_numbers<[1], [0], [0], [1], [0, 0, 1, 1], [], []>} : vector<2x32xf32>, vector<32x32xf32>, vector<2x32xf32> -> vector<2x32xf32>
    %244 = arith.addf %231, %243 : vector<2x32xf32>
    %cst_97 = arith.constant 5.000000e-01 : f32
    %245 = vector.broadcast %cst_97 : f32 to vector<2x32xf32>
    %246 = arith.mulf %245, %244 : vector<2x32xf32>
    %247 = math.tanh %246 : vector<2x32xf32>
    %cst_98 = arith.constant 5.000000e-01 : f32
    %248 = vector.broadcast %cst_98 : f32 to vector<2x32xf32>
    %249 = arith.mulf %248, %247 : vector<2x32xf32>
    %cst_99 = arith.constant 5.000000e-01 : f32
    %250 = vector.broadcast %cst_99 : f32 to vector<2x32xf32>
    %251 = arith.addf %249, %250 : vector<2x32xf32>
    %cst_100 = arith.constant dense<0.000000e+00> : vector<2x32xf32>
    %252 = tpu.matmul %190, %28, %cst_100 {dimension_numbers = #tpu.dot_dimension_numbers<[1], [0], [0], [1], [0, 0, 1, 1], [], []>} : vector<2x32xf32>, vector<32x32xf32>, vector<2x32xf32> -> vector<2x32xf32>
    %253 = arith.addf %232, %252 : vector<2x32xf32>
    %254 = math.tanh %253 : vector<2x32xf32>
    %cst_101 = arith.constant dense<0.000000e+00> : vector<2x32xf32>
    %255 = tpu.matmul %190, %30, %cst_101 {dimension_numbers = #tpu.dot_dimension_numbers<[1], [0], [0], [1], [0, 0, 1, 1], [], []>} : vector<2x32xf32>, vector<32x32xf32>, vector<2x32xf32> -> vector<2x32xf32>
    %256 = arith.addf %233, %255 : vector<2x32xf32>
    %cst_102 = arith.constant 5.000000e-01 : f32
    %257 = vector.broadcast %cst_102 : f32 to vector<2x32xf32>
    %258 = arith.mulf %257, %256 : vector<2x32xf32>
    %259 = math.tanh %258 : vector<2x32xf32>
    %cst_103 = arith.constant 5.000000e-01 : f32
    %260 = vector.broadcast %cst_103 : f32 to vector<2x32xf32>
    %261 = arith.mulf %260, %259 : vector<2x32xf32>
    %cst_104 = arith.constant 5.000000e-01 : f32
    %262 = vector.broadcast %cst_104 : f32 to vector<2x32xf32>
    %263 = arith.addf %261, %262 : vector<2x32xf32>
    %264 = arith.mulf %251, %188 : vector<2x32xf32>
    %265 = arith.mulf %242, %254 : vector<2x32xf32>
    %266 = arith.addf %264, %265 : vector<2x32xf32>
    %267 = math.tanh %266 : vector<2x32xf32>
    %268 = arith.mulf %263, %267 : vector<2x32xf32>
    %269 = vector.extract_strided_slice %7 {offsets = [6, 0], sizes = [2, 32], strides = [1, 1]} : vector<16x32xf32> to vector<2x32xf32>
    %270 = vector.extract_strided_slice %8 {offsets = [6, 0], sizes = [2, 32], strides = [1, 1]} : vector<16x32xf32> to vector<2x32xf32>
    %271 = vector.extract_strided_slice %9 {offsets = [6, 0], sizes = [2, 32], strides = [1, 1]} : vector<16x32xf32> to vector<2x32xf32>
    %272 = vector.extract_strided_slice %10 {offsets = [6, 0], sizes = [2, 32], strides = [1, 1]} : vector<16x32xf32> to vector<2x32xf32>
    %cst_105 = arith.constant dense<0.000000e+00> : vector<2x32xf32>
    %273 = tpu.matmul %229, %16, %cst_105 {dimension_numbers = #tpu.dot_dimension_numbers<[1], [0], [0], [1], [0, 0, 1, 1], [], []>} : vector<2x32xf32>, vector<32x32xf32>, vector<2x32xf32> -> vector<2x32xf32>
    %274 = arith.addf %269, %273 : vector<2x32xf32>
    %cst_106 = arith.constant 5.000000e-01 : f32
    %275 = vector.broadcast %cst_106 : f32 to vector<2x32xf32>
    %276 = arith.mulf %275, %274 : vector<2x32xf32>
    %277 = math.tanh %276 : vector<2x32xf32>
    %cst_107 = arith.constant 5.000000e-01 : f32
    %278 = vector.broadcast %cst_107 : f32 to vector<2x32xf32>
    %279 = arith.mulf %278, %277 : vector<2x32xf32>
    %cst_108 = arith.constant 5.000000e-01 : f32
    %280 = vector.broadcast %cst_108 : f32 to vector<2x32xf32>
    %281 = arith.addf %279, %280 : vector<2x32xf32>
    %cst_109 = arith.constant dense<0.000000e+00> : vector<2x32xf32>
    %282 = tpu.matmul %229, %18, %cst_109 {dimension_numbers = #tpu.dot_dimension_numbers<[1], [0], [0], [1], [0, 0, 1, 1], [], []>} : vector<2x32xf32>, vector<32x32xf32>, vector<2x32xf32> -> vector<2x32xf32>
    %283 = arith.addf %270, %282 : vector<2x32xf32>
    %cst_110 = arith.constant 5.000000e-01 : f32
    %284 = vector.broadcast %cst_110 : f32 to vector<2x32xf32>
    %285 = arith.mulf %284, %283 : vector<2x32xf32>
    %286 = math.tanh %285 : vector<2x32xf32>
    %cst_111 = arith.constant 5.000000e-01 : f32
    %287 = vector.broadcast %cst_111 : f32 to vector<2x32xf32>
    %288 = arith.mulf %287, %286 : vector<2x32xf32>
    %cst_112 = arith.constant 5.000000e-01 : f32
    %289 = vector.broadcast %cst_112 : f32 to vector<2x32xf32>
    %290 = arith.addf %288, %289 : vector<2x32xf32>
    %cst_113 = arith.constant dense<0.000000e+00> : vector<2x32xf32>
    %291 = tpu.matmul %229, %20, %cst_113 {dimension_numbers = #tpu.dot_dimension_numbers<[1], [0], [0], [1], [0, 0, 1, 1], [], []>} : vector<2x32xf32>, vector<32x32xf32>, vector<2x32xf32> -> vector<2x32xf32>
    %292 = arith.addf %271, %291 : vector<2x32xf32>
    %293 = math.tanh %292 : vector<2x32xf32>
    %cst_114 = arith.constant dense<0.000000e+00> : vector<2x32xf32>
    %294 = tpu.matmul %229, %22, %cst_114 {dimension_numbers = #tpu.dot_dimension_numbers<[1], [0], [0], [1], [0, 0, 1, 1], [], []>} : vector<2x32xf32>, vector<32x32xf32>, vector<2x32xf32> -> vector<2x32xf32>
    %295 = arith.addf %272, %294 : vector<2x32xf32>
    %cst_115 = arith.constant 5.000000e-01 : f32
    %296 = vector.broadcast %cst_115 : f32 to vector<2x32xf32>
    %297 = arith.mulf %296, %295 : vector<2x32xf32>
    %298 = math.tanh %297 : vector<2x32xf32>
    %cst_116 = arith.constant 5.000000e-01 : f32
    %299 = vector.broadcast %cst_116 : f32 to vector<2x32xf32>
    %300 = arith.mulf %299, %298 : vector<2x32xf32>
    %cst_117 = arith.constant 5.000000e-01 : f32
    %301 = vector.broadcast %cst_117 : f32 to vector<2x32xf32>
    %302 = arith.addf %300, %301 : vector<2x32xf32>
    %303 = arith.mulf %290, %227 : vector<2x32xf32>
    %304 = arith.mulf %281, %293 : vector<2x32xf32>
    %305 = arith.addf %303, %304 : vector<2x32xf32>
    %306 = math.tanh %305 : vector<2x32xf32>
    %307 = arith.mulf %302, %306 : vector<2x32xf32>
    %308 = vector.extract_strided_slice %11 {offsets = [8, 0], sizes = [2, 32], strides = [1, 1]} : vector<16x32xf32> to vector<2x32xf32>
    %309 = vector.extract_strided_slice %12 {offsets = [8, 0], sizes = [2, 32], strides = [1, 1]} : vector<16x32xf32> to vector<2x32xf32>
    %310 = vector.extract_strided_slice %13 {offsets = [8, 0], sizes = [2, 32], strides = [1, 1]} : vector<16x32xf32> to vector<2x32xf32>
    %311 = vector.extract_strided_slice %14 {offsets = [8, 0], sizes = [2, 32], strides = [1, 1]} : vector<16x32xf32> to vector<2x32xf32>
    %cst_118 = arith.constant dense<0.000000e+00> : vector<2x32xf32>
    %312 = tpu.matmul %268, %24, %cst_118 {dimension_numbers = #tpu.dot_dimension_numbers<[1], [0], [0], [1], [0, 0, 1, 1], [], []>} : vector<2x32xf32>, vector<32x32xf32>, vector<2x32xf32> -> vector<2x32xf32>
    %313 = arith.addf %308, %312 : vector<2x32xf32>
    %cst_119 = arith.constant 5.000000e-01 : f32
    %314 = vector.broadcast %cst_119 : f32 to vector<2x32xf32>
    %315 = arith.mulf %314, %313 : vector<2x32xf32>
    %316 = math.tanh %315 : vector<2x32xf32>
    %cst_120 = arith.constant 5.000000e-01 : f32
    %317 = vector.broadcast %cst_120 : f32 to vector<2x32xf32>
    %318 = arith.mulf %317, %316 : vector<2x32xf32>
    %cst_121 = arith.constant 5.000000e-01 : f32
    %319 = vector.broadcast %cst_121 : f32 to vector<2x32xf32>
    %320 = arith.addf %318, %319 : vector<2x32xf32>
    %cst_122 = arith.constant dense<0.000000e+00> : vector<2x32xf32>
    %321 = tpu.matmul %268, %26, %cst_122 {dimension_numbers = #tpu.dot_dimension_numbers<[1], [0], [0], [1], [0, 0, 1, 1], [], []>} : vector<2x32xf32>, vector<32x32xf32>, vector<2x32xf32> -> vector<2x32xf32>
    %322 = arith.addf %309, %321 : vector<2x32xf32>
    %cst_123 = arith.constant 5.000000e-01 : f32
    %323 = vector.broadcast %cst_123 : f32 to vector<2x32xf32>
    %324 = arith.mulf %323, %322 : vector<2x32xf32>
    %325 = math.tanh %324 : vector<2x32xf32>
    %cst_124 = arith.constant 5.000000e-01 : f32
    %326 = vector.broadcast %cst_124 : f32 to vector<2x32xf32>
    %327 = arith.mulf %326, %325 : vector<2x32xf32>
    %cst_125 = arith.constant 5.000000e-01 : f32
    %328 = vector.broadcast %cst_125 : f32 to vector<2x32xf32>
    %329 = arith.addf %327, %328 : vector<2x32xf32>
    %cst_126 = arith.constant dense<0.000000e+00> : vector<2x32xf32>
    %330 = tpu.matmul %268, %28, %cst_126 {dimension_numbers = #tpu.dot_dimension_numbers<[1], [0], [0], [1], [0, 0, 1, 1], [], []>} : vector<2x32xf32>, vector<32x32xf32>, vector<2x32xf32> -> vector<2x32xf32>
    %331 = arith.addf %310, %330 : vector<2x32xf32>
    %332 = math.tanh %331 : vector<2x32xf32>
    %cst_127 = arith.constant dense<0.000000e+00> : vector<2x32xf32>
    %333 = tpu.matmul %268, %30, %cst_127 {dimension_numbers = #tpu.dot_dimension_numbers<[1], [0], [0], [1], [0, 0, 1, 1], [], []>} : vector<2x32xf32>, vector<32x32xf32>, vector<2x32xf32> -> vector<2x32xf32>
    %334 = arith.addf %311, %333 : vector<2x32xf32>
    %cst_128 = arith.constant 5.000000e-01 : f32
    %335 = vector.broadcast %cst_128 : f32 to vector<2x32xf32>
    %336 = arith.mulf %335, %334 : vector<2x32xf32>
    %337 = math.tanh %336 : vector<2x32xf32>
    %cst_129 = arith.constant 5.000000e-01 : f32
    %338 = vector.broadcast %cst_129 : f32 to vector<2x32xf32>
    %339 = arith.mulf %338, %337 : vector<2x32xf32>
    %cst_130 = arith.constant 5.000000e-01 : f32
    %340 = vector.broadcast %cst_130 : f32 to vector<2x32xf32>
    %341 = arith.addf %339, %340 : vector<2x32xf32>
    %342 = arith.mulf %329, %266 : vector<2x32xf32>
    %343 = arith.mulf %320, %332 : vector<2x32xf32>
    %344 = arith.addf %342, %343 : vector<2x32xf32>
    %345 = math.tanh %344 : vector<2x32xf32>
    %346 = arith.mulf %341, %345 : vector<2x32xf32>
    %347 = vector.extract_strided_slice %7 {offsets = [8, 0], sizes = [2, 32], strides = [1, 1]} : vector<16x32xf32> to vector<2x32xf32>
    %348 = vector.extract_strided_slice %8 {offsets = [8, 0], sizes = [2, 32], strides = [1, 1]} : vector<16x32xf32> to vector<2x32xf32>
    %349 = vector.extract_strided_slice %9 {offsets = [8, 0], sizes = [2, 32], strides = [1, 1]} : vector<16x32xf32> to vector<2x32xf32>
    %350 = vector.extract_strided_slice %10 {offsets = [8, 0], sizes = [2, 32], strides = [1, 1]} : vector<16x32xf32> to vector<2x32xf32>
    %cst_131 = arith.constant dense<0.000000e+00> : vector<2x32xf32>
    %351 = tpu.matmul %307, %16, %cst_131 {dimension_numbers = #tpu.dot_dimension_numbers<[1], [0], [0], [1], [0, 0, 1, 1], [], []>} : vector<2x32xf32>, vector<32x32xf32>, vector<2x32xf32> -> vector<2x32xf32>
    %352 = arith.addf %347, %351 : vector<2x32xf32>
    %cst_132 = arith.constant 5.000000e-01 : f32
    %353 = vector.broadcast %cst_132 : f32 to vector<2x32xf32>
    %354 = arith.mulf %353, %352 : vector<2x32xf32>
    %355 = math.tanh %354 : vector<2x32xf32>
    %cst_133 = arith.constant 5.000000e-01 : f32
    %356 = vector.broadcast %cst_133 : f32 to vector<2x32xf32>
    %357 = arith.mulf %356, %355 : vector<2x32xf32>
    %cst_134 = arith.constant 5.000000e-01 : f32
    %358 = vector.broadcast %cst_134 : f32 to vector<2x32xf32>
    %359 = arith.addf %357, %358 : vector<2x32xf32>
    %cst_135 = arith.constant dense<0.000000e+00> : vector<2x32xf32>
    %360 = tpu.matmul %307, %18, %cst_135 {dimension_numbers = #tpu.dot_dimension_numbers<[1], [0], [0], [1], [0, 0, 1, 1], [], []>} : vector<2x32xf32>, vector<32x32xf32>, vector<2x32xf32> -> vector<2x32xf32>
    %361 = arith.addf %348, %360 : vector<2x32xf32>
    %cst_136 = arith.constant 5.000000e-01 : f32
    %362 = vector.broadcast %cst_136 : f32 to vector<2x32xf32>
    %363 = arith.mulf %362, %361 : vector<2x32xf32>
    %364 = math.tanh %363 : vector<2x32xf32>
    %cst_137 = arith.constant 5.000000e-01 : f32
    %365 = vector.broadcast %cst_137 : f32 to vector<2x32xf32>
    %366 = arith.mulf %365, %364 : vector<2x32xf32>
    %cst_138 = arith.constant 5.000000e-01 : f32
    %367 = vector.broadcast %cst_138 : f32 to vector<2x32xf32>
    %368 = arith.addf %366, %367 : vector<2x32xf32>
    %cst_139 = arith.constant dense<0.000000e+00> : vector<2x32xf32>
    %369 = tpu.matmul %307, %20, %cst_139 {dimension_numbers = #tpu.dot_dimension_numbers<[1], [0], [0], [1], [0, 0, 1, 1], [], []>} : vector<2x32xf32>, vector<32x32xf32>, vector<2x32xf32> -> vector<2x32xf32>
    %370 = arith.addf %349, %369 : vector<2x32xf32>
    %371 = math.tanh %370 : vector<2x32xf32>
    %cst_140 = arith.constant dense<0.000000e+00> : vector<2x32xf32>
    %372 = tpu.matmul %307, %22, %cst_140 {dimension_numbers = #tpu.dot_dimension_numbers<[1], [0], [0], [1], [0, 0, 1, 1], [], []>} : vector<2x32xf32>, vector<32x32xf32>, vector<2x32xf32> -> vector<2x32xf32>
    %373 = arith.addf %350, %372 : vector<2x32xf32>
    %cst_141 = arith.constant 5.000000e-01 : f32
    %374 = vector.broadcast %cst_141 : f32 to vector<2x32xf32>
    %375 = arith.mulf %374, %373 : vector<2x32xf32>
    %376 = math.tanh %375 : vector<2x32xf32>
    %cst_142 = arith.constant 5.000000e-01 : f32
    %377 = vector.broadcast %cst_142 : f32 to vector<2x32xf32>
    %378 = arith.mulf %377, %376 : vector<2x32xf32>
    %cst_143 = arith.constant 5.000000e-01 : f32
    %379 = vector.broadcast %cst_143 : f32 to vector<2x32xf32>
    %380 = arith.addf %378, %379 : vector<2x32xf32>
    %381 = arith.mulf %368, %305 : vector<2x32xf32>
    %382 = arith.mulf %359, %371 : vector<2x32xf32>
    %383 = arith.addf %381, %382 : vector<2x32xf32>
    %384 = math.tanh %383 : vector<2x32xf32>
    %385 = arith.mulf %380, %384 : vector<2x32xf32>
    %386 = vector.extract_strided_slice %11 {offsets = [6, 0], sizes = [2, 32], strides = [1, 1]} : vector<16x32xf32> to vector<2x32xf32>
    %387 = vector.extract_strided_slice %12 {offsets = [6, 0], sizes = [2, 32], strides = [1, 1]} : vector<16x32xf32> to vector<2x32xf32>
    %388 = vector.extract_strided_slice %13 {offsets = [6, 0], sizes = [2, 32], strides = [1, 1]} : vector<16x32xf32> to vector<2x32xf32>
    %389 = vector.extract_strided_slice %14 {offsets = [6, 0], sizes = [2, 32], strides = [1, 1]} : vector<16x32xf32> to vector<2x32xf32>
    %cst_144 = arith.constant dense<0.000000e+00> : vector<2x32xf32>
    %390 = tpu.matmul %346, %24, %cst_144 {dimension_numbers = #tpu.dot_dimension_numbers<[1], [0], [0], [1], [0, 0, 1, 1], [], []>} : vector<2x32xf32>, vector<32x32xf32>, vector<2x32xf32> -> vector<2x32xf32>
    %391 = arith.addf %386, %390 : vector<2x32xf32>
    %cst_145 = arith.constant 5.000000e-01 : f32
    %392 = vector.broadcast %cst_145 : f32 to vector<2x32xf32>
    %393 = arith.mulf %392, %391 : vector<2x32xf32>
    %394 = math.tanh %393 : vector<2x32xf32>
    %cst_146 = arith.constant 5.000000e-01 : f32
    %395 = vector.broadcast %cst_146 : f32 to vector<2x32xf32>
    %396 = arith.mulf %395, %394 : vector<2x32xf32>
    %cst_147 = arith.constant 5.000000e-01 : f32
    %397 = vector.broadcast %cst_147 : f32 to vector<2x32xf32>
    %398 = arith.addf %396, %397 : vector<2x32xf32>
    %cst_148 = arith.constant dense<0.000000e+00> : vector<2x32xf32>
    %399 = tpu.matmul %346, %26, %cst_148 {dimension_numbers = #tpu.dot_dimension_numbers<[1], [0], [0], [1], [0, 0, 1, 1], [], []>} : vector<2x32xf32>, vector<32x32xf32>, vector<2x32xf32> -> vector<2x32xf32>
    %400 = arith.addf %387, %399 : vector<2x32xf32>
    %cst_149 = arith.constant 5.000000e-01 : f32
    %401 = vector.broadcast %cst_149 : f32 to vector<2x32xf32>
    %402 = arith.mulf %401, %400 : vector<2x32xf32>
    %403 = math.tanh %402 : vector<2x32xf32>
    %cst_150 = arith.constant 5.000000e-01 : f32
    %404 = vector.broadcast %cst_150 : f32 to vector<2x32xf32>
    %405 = arith.mulf %404, %403 : vector<2x32xf32>
    %cst_151 = arith.constant 5.000000e-01 : f32
    %406 = vector.broadcast %cst_151 : f32 to vector<2x32xf32>
    %407 = arith.addf %405, %406 : vector<2x32xf32>
    %cst_152 = arith.constant dense<0.000000e+00> : vector<2x32xf32>
    %408 = tpu.matmul %346, %28, %cst_152 {dimension_numbers = #tpu.dot_dimension_numbers<[1], [0], [0], [1], [0, 0, 1, 1], [], []>} : vector<2x32xf32>, vector<32x32xf32>, vector<2x32xf32> -> vector<2x32xf32>
    %409 = arith.addf %388, %408 : vector<2x32xf32>
    %410 = math.tanh %409 : vector<2x32xf32>
    %cst_153 = arith.constant dense<0.000000e+00> : vector<2x32xf32>
    %411 = tpu.matmul %346, %30, %cst_153 {dimension_numbers = #tpu.dot_dimension_numbers<[1], [0], [0], [1], [0, 0, 1, 1], [], []>} : vector<2x32xf32>, vector<32x32xf32>, vector<2x32xf32> -> vector<2x32xf32>
    %412 = arith.addf %389, %411 : vector<2x32xf32>
    %cst_154 = arith.constant 5.000000e-01 : f32
    %413 = vector.broadcast %cst_154 : f32 to vector<2x32xf32>
    %414 = arith.mulf %413, %412 : vector<2x32xf32>
    %415 = math.tanh %414 : vector<2x32xf32>
    %cst_155 = arith.constant 5.000000e-01 : f32
    %416 = vector.broadcast %cst_155 : f32 to vector<2x32xf32>
    %417 = arith.mulf %416, %415 : vector<2x32xf32>
    %cst_156 = arith.constant 5.000000e-01 : f32
    %418 = vector.broadcast %cst_156 : f32 to vector<2x32xf32>
    %419 = arith.addf %417, %418 : vector<2x32xf32>
    %420 = arith.mulf %407, %344 : vector<2x32xf32>
    %421 = arith.mulf %398, %410 : vector<2x32xf32>
    %422 = arith.addf %420, %421 : vector<2x32xf32>
    %423 = math.tanh %422 : vector<2x32xf32>
    %424 = arith.mulf %419, %423 : vector<2x32xf32>
    %425 = vector.extract_strided_slice %7 {offsets = [10, 0], sizes = [2, 32], strides = [1, 1]} : vector<16x32xf32> to vector<2x32xf32>
    %426 = vector.extract_strided_slice %8 {offsets = [10, 0], sizes = [2, 32], strides = [1, 1]} : vector<16x32xf32> to vector<2x32xf32>
    %427 = vector.extract_strided_slice %9 {offsets = [10, 0], sizes = [2, 32], strides = [1, 1]} : vector<16x32xf32> to vector<2x32xf32>
    %428 = vector.extract_strided_slice %10 {offsets = [10, 0], sizes = [2, 32], strides = [1, 1]} : vector<16x32xf32> to vector<2x32xf32>
    %cst_157 = arith.constant dense<0.000000e+00> : vector<2x32xf32>
    %429 = tpu.matmul %385, %16, %cst_157 {dimension_numbers = #tpu.dot_dimension_numbers<[1], [0], [0], [1], [0, 0, 1, 1], [], []>} : vector<2x32xf32>, vector<32x32xf32>, vector<2x32xf32> -> vector<2x32xf32>
    %430 = arith.addf %425, %429 : vector<2x32xf32>
    %cst_158 = arith.constant 5.000000e-01 : f32
    %431 = vector.broadcast %cst_158 : f32 to vector<2x32xf32>
    %432 = arith.mulf %431, %430 : vector<2x32xf32>
    %433 = math.tanh %432 : vector<2x32xf32>
    %cst_159 = arith.constant 5.000000e-01 : f32
    %434 = vector.broadcast %cst_159 : f32 to vector<2x32xf32>
    %435 = arith.mulf %434, %433 : vector<2x32xf32>
    %cst_160 = arith.constant 5.000000e-01 : f32
    %436 = vector.broadcast %cst_160 : f32 to vector<2x32xf32>
    %437 = arith.addf %435, %436 : vector<2x32xf32>
    %cst_161 = arith.constant dense<0.000000e+00> : vector<2x32xf32>
    %438 = tpu.matmul %385, %18, %cst_161 {dimension_numbers = #tpu.dot_dimension_numbers<[1], [0], [0], [1], [0, 0, 1, 1], [], []>} : vector<2x32xf32>, vector<32x32xf32>, vector<2x32xf32> -> vector<2x32xf32>
    %439 = arith.addf %426, %438 : vector<2x32xf32>
    %cst_162 = arith.constant 5.000000e-01 : f32
    %440 = vector.broadcast %cst_162 : f32 to vector<2x32xf32>
    %441 = arith.mulf %440, %439 : vector<2x32xf32>
    %442 = math.tanh %441 : vector<2x32xf32>
    %cst_163 = arith.constant 5.000000e-01 : f32
    %443 = vector.broadcast %cst_163 : f32 to vector<2x32xf32>
    %444 = arith.mulf %443, %442 : vector<2x32xf32>
    %cst_164 = arith.constant 5.000000e-01 : f32
    %445 = vector.broadcast %cst_164 : f32 to vector<2x32xf32>
    %446 = arith.addf %444, %445 : vector<2x32xf32>
    %cst_165 = arith.constant dense<0.000000e+00> : vector<2x32xf32>
    %447 = tpu.matmul %385, %20, %cst_165 {dimension_numbers = #tpu.dot_dimension_numbers<[1], [0], [0], [1], [0, 0, 1, 1], [], []>} : vector<2x32xf32>, vector<32x32xf32>, vector<2x32xf32> -> vector<2x32xf32>
    %448 = arith.addf %427, %447 : vector<2x32xf32>
    %449 = math.tanh %448 : vector<2x32xf32>
    %cst_166 = arith.constant dense<0.000000e+00> : vector<2x32xf32>
    %450 = tpu.matmul %385, %22, %cst_166 {dimension_numbers = #tpu.dot_dimension_numbers<[1], [0], [0], [1], [0, 0, 1, 1], [], []>} : vector<2x32xf32>, vector<32x32xf32>, vector<2x32xf32> -> vector<2x32xf32>
    %451 = arith.addf %428, %450 : vector<2x32xf32>
    %cst_167 = arith.constant 5.000000e-01 : f32
    %452 = vector.broadcast %cst_167 : f32 to vector<2x32xf32>
    %453 = arith.mulf %452, %451 : vector<2x32xf32>
    %454 = math.tanh %453 : vector<2x32xf32>
    %cst_168 = arith.constant 5.000000e-01 : f32
    %455 = vector.broadcast %cst_168 : f32 to vector<2x32xf32>
    %456 = arith.mulf %455, %454 : vector<2x32xf32>
    %cst_169 = arith.constant 5.000000e-01 : f32
    %457 = vector.broadcast %cst_169 : f32 to vector<2x32xf32>
    %458 = arith.addf %456, %457 : vector<2x32xf32>
    %459 = arith.mulf %446, %383 : vector<2x32xf32>
    %460 = arith.mulf %437, %449 : vector<2x32xf32>
    %461 = arith.addf %459, %460 : vector<2x32xf32>
    %462 = math.tanh %461 : vector<2x32xf32>
    %463 = arith.mulf %458, %462 : vector<2x32xf32>
    %464 = vector.extract_strided_slice %11 {offsets = [4, 0], sizes = [2, 32], strides = [1, 1]} : vector<16x32xf32> to vector<2x32xf32>
    %465 = vector.extract_strided_slice %12 {offsets = [4, 0], sizes = [2, 32], strides = [1, 1]} : vector<16x32xf32> to vector<2x32xf32>
    %466 = vector.extract_strided_slice %13 {offsets = [4, 0], sizes = [2, 32], strides = [1, 1]} : vector<16x32xf32> to vector<2x32xf32>
    %467 = vector.extract_strided_slice %14 {offsets = [4, 0], sizes = [2, 32], strides = [1, 1]} : vector<16x32xf32> to vector<2x32xf32>
    %cst_170 = arith.constant dense<0.000000e+00> : vector<2x32xf32>
    %468 = tpu.matmul %424, %24, %cst_170 {dimension_numbers = #tpu.dot_dimension_numbers<[1], [0], [0], [1], [0, 0, 1, 1], [], []>} : vector<2x32xf32>, vector<32x32xf32>, vector<2x32xf32> -> vector<2x32xf32>
    %469 = arith.addf %464, %468 : vector<2x32xf32>
    %cst_171 = arith.constant 5.000000e-01 : f32
    %470 = vector.broadcast %cst_171 : f32 to vector<2x32xf32>
    %471 = arith.mulf %470, %469 : vector<2x32xf32>
    %472 = math.tanh %471 : vector<2x32xf32>
    %cst_172 = arith.constant 5.000000e-01 : f32
    %473 = vector.broadcast %cst_172 : f32 to vector<2x32xf32>
    %474 = arith.mulf %473, %472 : vector<2x32xf32>
    %cst_173 = arith.constant 5.000000e-01 : f32
    %475 = vector.broadcast %cst_173 : f32 to vector<2x32xf32>
    %476 = arith.addf %474, %475 : vector<2x32xf32>
    %cst_174 = arith.constant dense<0.000000e+00> : vector<2x32xf32>
    %477 = tpu.matmul %424, %26, %cst_174 {dimension_numbers = #tpu.dot_dimension_numbers<[1], [0], [0], [1], [0, 0, 1, 1], [], []>} : vector<2x32xf32>, vector<32x32xf32>, vector<2x32xf32> -> vector<2x32xf32>
    %478 = arith.addf %465, %477 : vector<2x32xf32>
    %cst_175 = arith.constant 5.000000e-01 : f32
    %479 = vector.broadcast %cst_175 : f32 to vector<2x32xf32>
    %480 = arith.mulf %479, %478 : vector<2x32xf32>
    %481 = math.tanh %480 : vector<2x32xf32>
    %cst_176 = arith.constant 5.000000e-01 : f32
    %482 = vector.broadcast %cst_176 : f32 to vector<2x32xf32>
    %483 = arith.mulf %482, %481 : vector<2x32xf32>
    %cst_177 = arith.constant 5.000000e-01 : f32
    %484 = vector.broadcast %cst_177 : f32 to vector<2x32xf32>
    %485 = arith.addf %483, %484 : vector<2x32xf32>
    %cst_178 = arith.constant dense<0.000000e+00> : vector<2x32xf32>
    %486 = tpu.matmul %424, %28, %cst_178 {dimension_numbers = #tpu.dot_dimension_numbers<[1], [0], [0], [1], [0, 0, 1, 1], [], []>} : vector<2x32xf32>, vector<32x32xf32>, vector<2x32xf32> -> vector<2x32xf32>
    %487 = arith.addf %466, %486 : vector<2x32xf32>
    %488 = math.tanh %487 : vector<2x32xf32>
    %cst_179 = arith.constant dense<0.000000e+00> : vector<2x32xf32>
    %489 = tpu.matmul %424, %30, %cst_179 {dimension_numbers = #tpu.dot_dimension_numbers<[1], [0], [0], [1], [0, 0, 1, 1], [], []>} : vector<2x32xf32>, vector<32x32xf32>, vector<2x32xf32> -> vector<2x32xf32>
    %490 = arith.addf %467, %489 : vector<2x32xf32>
    %cst_180 = arith.constant 5.000000e-01 : f32
    %491 = vector.broadcast %cst_180 : f32 to vector<2x32xf32>
    %492 = arith.mulf %491, %490 : vector<2x32xf32>
    %493 = math.tanh %492 : vector<2x32xf32>
    %cst_181 = arith.constant 5.000000e-01 : f32
    %494 = vector.broadcast %cst_181 : f32 to vector<2x32xf32>
    %495 = arith.mulf %494, %493 : vector<2x32xf32>
    %cst_182 = arith.constant 5.000000e-01 : f32
    %496 = vector.broadcast %cst_182 : f32 to vector<2x32xf32>
    %497 = arith.addf %495, %496 : vector<2x32xf32>
    %498 = arith.mulf %485, %422 : vector<2x32xf32>
    %499 = arith.mulf %476, %488 : vector<2x32xf32>
    %500 = arith.addf %498, %499 : vector<2x32xf32>
    %501 = math.tanh %500 : vector<2x32xf32>
    %502 = arith.mulf %497, %501 : vector<2x32xf32>
    %503 = vector.extract_strided_slice %7 {offsets = [12, 0], sizes = [2, 32], strides = [1, 1]} : vector<16x32xf32> to vector<2x32xf32>
    %504 = vector.extract_strided_slice %8 {offsets = [12, 0], sizes = [2, 32], strides = [1, 1]} : vector<16x32xf32> to vector<2x32xf32>
    %505 = vector.extract_strided_slice %9 {offsets = [12, 0], sizes = [2, 32], strides = [1, 1]} : vector<16x32xf32> to vector<2x32xf32>
    %506 = vector.extract_strided_slice %10 {offsets = [12, 0], sizes = [2, 32], strides = [1, 1]} : vector<16x32xf32> to vector<2x32xf32>
    %cst_183 = arith.constant dense<0.000000e+00> : vector<2x32xf32>
    %507 = tpu.matmul %463, %16, %cst_183 {dimension_numbers = #tpu.dot_dimension_numbers<[1], [0], [0], [1], [0, 0, 1, 1], [], []>} : vector<2x32xf32>, vector<32x32xf32>, vector<2x32xf32> -> vector<2x32xf32>
    %508 = arith.addf %503, %507 : vector<2x32xf32>
    %cst_184 = arith.constant 5.000000e-01 : f32
    %509 = vector.broadcast %cst_184 : f32 to vector<2x32xf32>
    %510 = arith.mulf %509, %508 : vector<2x32xf32>
    %511 = math.tanh %510 : vector<2x32xf32>
    %cst_185 = arith.constant 5.000000e-01 : f32
    %512 = vector.broadcast %cst_185 : f32 to vector<2x32xf32>
    %513 = arith.mulf %512, %511 : vector<2x32xf32>
    %cst_186 = arith.constant 5.000000e-01 : f32
    %514 = vector.broadcast %cst_186 : f32 to vector<2x32xf32>
    %515 = arith.addf %513, %514 : vector<2x32xf32>
    %cst_187 = arith.constant dense<0.000000e+00> : vector<2x32xf32>
    %516 = tpu.matmul %463, %18, %cst_187 {dimension_numbers = #tpu.dot_dimension_numbers<[1], [0], [0], [1], [0, 0, 1, 1], [], []>} : vector<2x32xf32>, vector<32x32xf32>, vector<2x32xf32> -> vector<2x32xf32>
    %517 = arith.addf %504, %516 : vector<2x32xf32>
    %cst_188 = arith.constant 5.000000e-01 : f32
    %518 = vector.broadcast %cst_188 : f32 to vector<2x32xf32>
    %519 = arith.mulf %518, %517 : vector<2x32xf32>
    %520 = math.tanh %519 : vector<2x32xf32>
    %cst_189 = arith.constant 5.000000e-01 : f32
    %521 = vector.broadcast %cst_189 : f32 to vector<2x32xf32>
    %522 = arith.mulf %521, %520 : vector<2x32xf32>
    %cst_190 = arith.constant 5.000000e-01 : f32
    %523 = vector.broadcast %cst_190 : f32 to vector<2x32xf32>
    %524 = arith.addf %522, %523 : vector<2x32xf32>
    %cst_191 = arith.constant dense<0.000000e+00> : vector<2x32xf32>
    %525 = tpu.matmul %463, %20, %cst_191 {dimension_numbers = #tpu.dot_dimension_numbers<[1], [0], [0], [1], [0, 0, 1, 1], [], []>} : vector<2x32xf32>, vector<32x32xf32>, vector<2x32xf32> -> vector<2x32xf32>
    %526 = arith.addf %505, %525 : vector<2x32xf32>
    %527 = math.tanh %526 : vector<2x32xf32>
    %cst_192 = arith.constant dense<0.000000e+00> : vector<2x32xf32>
    %528 = tpu.matmul %463, %22, %cst_192 {dimension_numbers = #tpu.dot_dimension_numbers<[1], [0], [0], [1], [0, 0, 1, 1], [], []>} : vector<2x32xf32>, vector<32x32xf32>, vector<2x32xf32> -> vector<2x32xf32>
    %529 = arith.addf %506, %528 : vector<2x32xf32>
    %cst_193 = arith.constant 5.000000e-01 : f32
    %530 = vector.broadcast %cst_193 : f32 to vector<2x32xf32>
    %531 = arith.mulf %530, %529 : vector<2x32xf32>
    %532 = math.tanh %531 : vector<2x32xf32>
    %cst_194 = arith.constant 5.000000e-01 : f32
    %533 = vector.broadcast %cst_194 : f32 to vector<2x32xf32>
    %534 = arith.mulf %533, %532 : vector<2x32xf32>
    %cst_195 = arith.constant 5.000000e-01 : f32
    %535 = vector.broadcast %cst_195 : f32 to vector<2x32xf32>
    %536 = arith.addf %534, %535 : vector<2x32xf32>
    %537 = arith.mulf %524, %461 : vector<2x32xf32>
    %538 = arith.mulf %515, %527 : vector<2x32xf32>
    %539 = arith.addf %537, %538 : vector<2x32xf32>
    %540 = math.tanh %539 : vector<2x32xf32>
    %541 = arith.mulf %536, %540 : vector<2x32xf32>
    %542 = vector.extract_strided_slice %11 {offsets = [2, 0], sizes = [2, 32], strides = [1, 1]} : vector<16x32xf32> to vector<2x32xf32>
    %543 = vector.extract_strided_slice %12 {offsets = [2, 0], sizes = [2, 32], strides = [1, 1]} : vector<16x32xf32> to vector<2x32xf32>
    %544 = vector.extract_strided_slice %13 {offsets = [2, 0], sizes = [2, 32], strides = [1, 1]} : vector<16x32xf32> to vector<2x32xf32>
    %545 = vector.extract_strided_slice %14 {offsets = [2, 0], sizes = [2, 32], strides = [1, 1]} : vector<16x32xf32> to vector<2x32xf32>
    %cst_196 = arith.constant dense<0.000000e+00> : vector<2x32xf32>
    %546 = tpu.matmul %502, %24, %cst_196 {dimension_numbers = #tpu.dot_dimension_numbers<[1], [0], [0], [1], [0, 0, 1, 1], [], []>} : vector<2x32xf32>, vector<32x32xf32>, vector<2x32xf32> -> vector<2x32xf32>
    %547 = arith.addf %542, %546 : vector<2x32xf32>
    %cst_197 = arith.constant 5.000000e-01 : f32
    %548 = vector.broadcast %cst_197 : f32 to vector<2x32xf32>
    %549 = arith.mulf %548, %547 : vector<2x32xf32>
    %550 = math.tanh %549 : vector<2x32xf32>
    %cst_198 = arith.constant 5.000000e-01 : f32
    %551 = vector.broadcast %cst_198 : f32 to vector<2x32xf32>
    %552 = arith.mulf %551, %550 : vector<2x32xf32>
    %cst_199 = arith.constant 5.000000e-01 : f32
    %553 = vector.broadcast %cst_199 : f32 to vector<2x32xf32>
    %554 = arith.addf %552, %553 : vector<2x32xf32>
    %cst_200 = arith.constant dense<0.000000e+00> : vector<2x32xf32>
    %555 = tpu.matmul %502, %26, %cst_200 {dimension_numbers = #tpu.dot_dimension_numbers<[1], [0], [0], [1], [0, 0, 1, 1], [], []>} : vector<2x32xf32>, vector<32x32xf32>, vector<2x32xf32> -> vector<2x32xf32>
    %556 = arith.addf %543, %555 : vector<2x32xf32>
    %cst_201 = arith.constant 5.000000e-01 : f32
    %557 = vector.broadcast %cst_201 : f32 to vector<2x32xf32>
    %558 = arith.mulf %557, %556 : vector<2x32xf32>
    %559 = math.tanh %558 : vector<2x32xf32>
    %cst_202 = arith.constant 5.000000e-01 : f32
    %560 = vector.broadcast %cst_202 : f32 to vector<2x32xf32>
    %561 = arith.mulf %560, %559 : vector<2x32xf32>
    %cst_203 = arith.constant 5.000000e-01 : f32
    %562 = vector.broadcast %cst_203 : f32 to vector<2x32xf32>
    %563 = arith.addf %561, %562 : vector<2x32xf32>
    %cst_204 = arith.constant dense<0.000000e+00> : vector<2x32xf32>
    %564 = tpu.matmul %502, %28, %cst_204 {dimension_numbers = #tpu.dot_dimension_numbers<[1], [0], [0], [1], [0, 0, 1, 1], [], []>} : vector<2x32xf32>, vector<32x32xf32>, vector<2x32xf32> -> vector<2x32xf32>
    %565 = arith.addf %544, %564 : vector<2x32xf32>
    %566 = math.tanh %565 : vector<2x32xf32>
    %cst_205 = arith.constant dense<0.000000e+00> : vector<2x32xf32>
    %567 = tpu.matmul %502, %30, %cst_205 {dimension_numbers = #tpu.dot_dimension_numbers<[1], [0], [0], [1], [0, 0, 1, 1], [], []>} : vector<2x32xf32>, vector<32x32xf32>, vector<2x32xf32> -> vector<2x32xf32>
    %568 = arith.addf %545, %567 : vector<2x32xf32>
    %cst_206 = arith.constant 5.000000e-01 : f32
    %569 = vector.broadcast %cst_206 : f32 to vector<2x32xf32>
    %570 = arith.mulf %569, %568 : vector<2x32xf32>
    %571 = math.tanh %570 : vector<2x32xf32>
    %cst_207 = arith.constant 5.000000e-01 : f32
    %572 = vector.broadcast %cst_207 : f32 to vector<2x32xf32>
    %573 = arith.mulf %572, %571 : vector<2x32xf32>
    %cst_208 = arith.constant 5.000000e-01 : f32
    %574 = vector.broadcast %cst_208 : f32 to vector<2x32xf32>
    %575 = arith.addf %573, %574 : vector<2x32xf32>
    %576 = arith.mulf %563, %500 : vector<2x32xf32>
    %577 = arith.mulf %554, %566 : vector<2x32xf32>
    %578 = arith.addf %576, %577 : vector<2x32xf32>
    %579 = math.tanh %578 : vector<2x32xf32>
    %580 = arith.mulf %575, %579 : vector<2x32xf32>
    %581 = vector.extract_strided_slice %7 {offsets = [14, 0], sizes = [2, 32], strides = [1, 1]} : vector<16x32xf32> to vector<2x32xf32>
    %582 = vector.extract_strided_slice %8 {offsets = [14, 0], sizes = [2, 32], strides = [1, 1]} : vector<16x32xf32> to vector<2x32xf32>
    %583 = vector.extract_strided_slice %9 {offsets = [14, 0], sizes = [2, 32], strides = [1, 1]} : vector<16x32xf32> to vector<2x32xf32>
    %584 = vector.extract_strided_slice %10 {offsets = [14, 0], sizes = [2, 32], strides = [1, 1]} : vector<16x32xf32> to vector<2x32xf32>
    %cst_209 = arith.constant dense<0.000000e+00> : vector<2x32xf32>
    %585 = tpu.matmul %541, %16, %cst_209 {dimension_numbers = #tpu.dot_dimension_numbers<[1], [0], [0], [1], [0, 0, 1, 1], [], []>} : vector<2x32xf32>, vector<32x32xf32>, vector<2x32xf32> -> vector<2x32xf32>
    %586 = arith.addf %581, %585 : vector<2x32xf32>
    %cst_210 = arith.constant 5.000000e-01 : f32
    %587 = vector.broadcast %cst_210 : f32 to vector<2x32xf32>
    %588 = arith.mulf %587, %586 : vector<2x32xf32>
    %589 = math.tanh %588 : vector<2x32xf32>
    %cst_211 = arith.constant 5.000000e-01 : f32
    %590 = vector.broadcast %cst_211 : f32 to vector<2x32xf32>
    %591 = arith.mulf %590, %589 : vector<2x32xf32>
    %cst_212 = arith.constant 5.000000e-01 : f32
    %592 = vector.broadcast %cst_212 : f32 to vector<2x32xf32>
    %593 = arith.addf %591, %592 : vector<2x32xf32>
    %cst_213 = arith.constant dense<0.000000e+00> : vector<2x32xf32>
    %594 = tpu.matmul %541, %18, %cst_213 {dimension_numbers = #tpu.dot_dimension_numbers<[1], [0], [0], [1], [0, 0, 1, 1], [], []>} : vector<2x32xf32>, vector<32x32xf32>, vector<2x32xf32> -> vector<2x32xf32>
    %595 = arith.addf %582, %594 : vector<2x32xf32>
    %cst_214 = arith.constant 5.000000e-01 : f32
    %596 = vector.broadcast %cst_214 : f32 to vector<2x32xf32>
    %597 = arith.mulf %596, %595 : vector<2x32xf32>
    %598 = math.tanh %597 : vector<2x32xf32>
    %cst_215 = arith.constant 5.000000e-01 : f32
    %599 = vector.broadcast %cst_215 : f32 to vector<2x32xf32>
    %600 = arith.mulf %599, %598 : vector<2x32xf32>
    %cst_216 = arith.constant 5.000000e-01 : f32
    %601 = vector.broadcast %cst_216 : f32 to vector<2x32xf32>
    %602 = arith.addf %600, %601 : vector<2x32xf32>
    %cst_217 = arith.constant dense<0.000000e+00> : vector<2x32xf32>
    %603 = tpu.matmul %541, %20, %cst_217 {dimension_numbers = #tpu.dot_dimension_numbers<[1], [0], [0], [1], [0, 0, 1, 1], [], []>} : vector<2x32xf32>, vector<32x32xf32>, vector<2x32xf32> -> vector<2x32xf32>
    %604 = arith.addf %583, %603 : vector<2x32xf32>
    %605 = math.tanh %604 : vector<2x32xf32>
    %cst_218 = arith.constant dense<0.000000e+00> : vector<2x32xf32>
    %606 = tpu.matmul %541, %22, %cst_218 {dimension_numbers = #tpu.dot_dimension_numbers<[1], [0], [0], [1], [0, 0, 1, 1], [], []>} : vector<2x32xf32>, vector<32x32xf32>, vector<2x32xf32> -> vector<2x32xf32>
    %607 = arith.addf %584, %606 : vector<2x32xf32>
    %cst_219 = arith.constant 5.000000e-01 : f32
    %608 = vector.broadcast %cst_219 : f32 to vector<2x32xf32>
    %609 = arith.mulf %608, %607 : vector<2x32xf32>
    %610 = math.tanh %609 : vector<2x32xf32>
    %cst_220 = arith.constant 5.000000e-01 : f32
    %611 = vector.broadcast %cst_220 : f32 to vector<2x32xf32>
    %612 = arith.mulf %611, %610 : vector<2x32xf32>
    %cst_221 = arith.constant 5.000000e-01 : f32
    %613 = vector.broadcast %cst_221 : f32 to vector<2x32xf32>
    %614 = arith.addf %612, %613 : vector<2x32xf32>
    %615 = arith.mulf %602, %539 : vector<2x32xf32>
    %616 = arith.mulf %593, %605 : vector<2x32xf32>
    %617 = arith.addf %615, %616 : vector<2x32xf32>
    %618 = math.tanh %617 : vector<2x32xf32>
    %619 = arith.mulf %614, %618 : vector<2x32xf32>
    %620 = vector.extract_strided_slice %11 {offsets = [0, 0], sizes = [2, 32], strides = [1, 1]} : vector<16x32xf32> to vector<2x32xf32>
    %621 = vector.extract_strided_slice %12 {offsets = [0, 0], sizes = [2, 32], strides = [1, 1]} : vector<16x32xf32> to vector<2x32xf32>
    %622 = vector.extract_strided_slice %13 {offsets = [0, 0], sizes = [2, 32], strides = [1, 1]} : vector<16x32xf32> to vector<2x32xf32>
    %623 = vector.extract_strided_slice %14 {offsets = [0, 0], sizes = [2, 32], strides = [1, 1]} : vector<16x32xf32> to vector<2x32xf32>
    %cst_222 = arith.constant dense<0.000000e+00> : vector<2x32xf32>
    %624 = tpu.matmul %580, %24, %cst_222 {dimension_numbers = #tpu.dot_dimension_numbers<[1], [0], [0], [1], [0, 0, 1, 1], [], []>} : vector<2x32xf32>, vector<32x32xf32>, vector<2x32xf32> -> vector<2x32xf32>
    %625 = arith.addf %620, %624 : vector<2x32xf32>
    %cst_223 = arith.constant 5.000000e-01 : f32
    %626 = vector.broadcast %cst_223 : f32 to vector<2x32xf32>
    %627 = arith.mulf %626, %625 : vector<2x32xf32>
    %628 = math.tanh %627 : vector<2x32xf32>
    %cst_224 = arith.constant 5.000000e-01 : f32
    %629 = vector.broadcast %cst_224 : f32 to vector<2x32xf32>
    %630 = arith.mulf %629, %628 : vector<2x32xf32>
    %cst_225 = arith.constant 5.000000e-01 : f32
    %631 = vector.broadcast %cst_225 : f32 to vector<2x32xf32>
    %632 = arith.addf %630, %631 : vector<2x32xf32>
    %cst_226 = arith.constant dense<0.000000e+00> : vector<2x32xf32>
    %633 = tpu.matmul %580, %26, %cst_226 {dimension_numbers = #tpu.dot_dimension_numbers<[1], [0], [0], [1], [0, 0, 1, 1], [], []>} : vector<2x32xf32>, vector<32x32xf32>, vector<2x32xf32> -> vector<2x32xf32>
    %634 = arith.addf %621, %633 : vector<2x32xf32>
    %cst_227 = arith.constant 5.000000e-01 : f32
    %635 = vector.broadcast %cst_227 : f32 to vector<2x32xf32>
    %636 = arith.mulf %635, %634 : vector<2x32xf32>
    %637 = math.tanh %636 : vector<2x32xf32>
    %cst_228 = arith.constant 5.000000e-01 : f32
    %638 = vector.broadcast %cst_228 : f32 to vector<2x32xf32>
    %639 = arith.mulf %638, %637 : vector<2x32xf32>
    %cst_229 = arith.constant 5.000000e-01 : f32
    %640 = vector.broadcast %cst_229 : f32 to vector<2x32xf32>
    %641 = arith.addf %639, %640 : vector<2x32xf32>
    %cst_230 = arith.constant dense<0.000000e+00> : vector<2x32xf32>
    %642 = tpu.matmul %580, %28, %cst_230 {dimension_numbers = #tpu.dot_dimension_numbers<[1], [0], [0], [1], [0, 0, 1, 1], [], []>} : vector<2x32xf32>, vector<32x32xf32>, vector<2x32xf32> -> vector<2x32xf32>
    %643 = arith.addf %622, %642 : vector<2x32xf32>
    %644 = math.tanh %643 : vector<2x32xf32>
    %cst_231 = arith.constant dense<0.000000e+00> : vector<2x32xf32>
    %645 = tpu.matmul %580, %30, %cst_231 {dimension_numbers = #tpu.dot_dimension_numbers<[1], [0], [0], [1], [0, 0, 1, 1], [], []>} : vector<2x32xf32>, vector<32x32xf32>, vector<2x32xf32> -> vector<2x32xf32>
    %646 = arith.addf %623, %645 : vector<2x32xf32>
    %cst_232 = arith.constant 5.000000e-01 : f32
    %647 = vector.broadcast %cst_232 : f32 to vector<2x32xf32>
    %648 = arith.mulf %647, %646 : vector<2x32xf32>
    %649 = math.tanh %648 : vector<2x32xf32>
    %cst_233 = arith.constant 5.000000e-01 : f32
    %650 = vector.broadcast %cst_233 : f32 to vector<2x32xf32>
    %651 = arith.mulf %650, %649 : vector<2x32xf32>
    %cst_234 = arith.constant 5.000000e-01 : f32
    %652 = vector.broadcast %cst_234 : f32 to vector<2x32xf32>
    %653 = arith.addf %651, %652 : vector<2x32xf32>
    %654 = arith.mulf %641, %578 : vector<2x32xf32>
    %655 = arith.mulf %632, %644 : vector<2x32xf32>
    %656 = arith.addf %654, %655 : vector<2x32xf32>
    %657 = math.tanh %656 : vector<2x32xf32>
    %658 = arith.mulf %653, %657 : vector<2x32xf32>
    %659 = vector.shape_cast %73 : vector<2x32xf32> to vector<2x1x32xf32>
    %660 = vector.shape_cast %151 : vector<2x32xf32> to vector<2x1x32xf32>
    %661 = vector.shape_cast %229 : vector<2x32xf32> to vector<2x1x32xf32>
    %662 = vector.shape_cast %307 : vector<2x32xf32> to vector<2x1x32xf32>
    %663 = vector.shape_cast %385 : vector<2x32xf32> to vector<2x1x32xf32>
    %664 = vector.shape_cast %463 : vector<2x32xf32> to vector<2x1x32xf32>
    %665 = vector.shape_cast %541 : vector<2x32xf32> to vector<2x1x32xf32>
    %666 = vector.shape_cast %619 : vector<2x32xf32> to vector<2x1x32xf32>
    %667 = tpu.concatenate %659, %660, %661, %662, %663, %664, %665, %666 in 1 : vector<2x1x32xf32>, vector<2x1x32xf32>, vector<2x1x32xf32>, vector<2x1x32xf32>, vector<2x1x32xf32>, vector<2x1x32xf32>, vector<2x1x32xf32>, vector<2x1x32xf32> -> vector<2x8x32xf32>
    %668 = vector.shape_cast %658 : vector<2x32xf32> to vector<2x1x32xf32>
    %669 = vector.shape_cast %580 : vector<2x32xf32> to vector<2x1x32xf32>
    %670 = vector.shape_cast %502 : vector<2x32xf32> to vector<2x1x32xf32>
    %671 = vector.shape_cast %424 : vector<2x32xf32> to vector<2x1x32xf32>
    %672 = vector.shape_cast %346 : vector<2x32xf32> to vector<2x1x32xf32>
    %673 = vector.shape_cast %268 : vector<2x32xf32> to vector<2x1x32xf32>
    %674 = vector.shape_cast %190 : vector<2x32xf32> to vector<2x1x32xf32>
    %675 = vector.shape_cast %112 : vector<2x32xf32> to vector<2x1x32xf32>
    %676 = tpu.concatenate %668, %669, %670, %671, %672, %673, %674, %675 in 1 : vector<2x1x32xf32>, vector<2x1x32xf32>, vector<2x1x32xf32>, vector<2x1x32xf32>, vector<2x1x32xf32>, vector<2x1x32xf32>, vector<2x1x32xf32>, vector<2x1x32xf32> -> vector<2x8x32xf32>
    %677 = tpu.concatenate %667, %676 in 2 : vector<2x8x32xf32>, vector<2x8x32xf32> -> vector<2x8x64xf32>
    %c0_235 = arith.constant 0 : index
    %c0_236 = arith.constant 0 : index
    %678 = vector.load %arg5[%c0_235, %c0_236] : memref<64x16xf32, #tpu.memory_space<vmem>>, vector<64x16xf32>
    %c0_237 = arith.constant 0 : index
    %c0_238 = arith.constant 0 : index
    %679 = vector.load %arg6[%c0_237, %c0_238] : memref<1x16xf32, #tpu.memory_space<vmem>>, vector<1x16xf32>
    %c0_239 = arith.constant 0 : index
    %c0_240 = arith.constant 0 : index
    %680 = vector.load %arg7[%c0_239, %c0_240] : memref<16x4xf32, #tpu.memory_space<vmem>>, vector<16x4xf32>
    %c0_241 = arith.constant 0 : index
    %c0_242 = arith.constant 0 : index
    %681 = vector.load %arg8[%c0_241, %c0_242] : memref<1x4xf32, #tpu.memory_space<vmem>>, vector<1x4xf32>
    %682 = vector.shape_cast %677 : vector<2x8x64xf32> to vector<16x64xf32>
    %cst_243 = arith.constant dense<0.000000e+00> : vector<16x16xf32>
    %683 = tpu.matmul %682, %678, %cst_243 {dimension_numbers = #tpu.dot_dimension_numbers<[1], [0], [0], [1], [0, 0, 1, 1], [], []>} : vector<16x64xf32>, vector<64x16xf32>, vector<16x16xf32> -> vector<16x16xf32>
    %684 = vector.broadcast %679 : vector<1x16xf32> to vector<16x16xf32>
    %685 = arith.addf %683, %684 : vector<16x16xf32>
    %686 = math.tanh %685 : vector<16x16xf32>
    %cst_244 = arith.constant dense<0.000000e+00> : vector<16x4xf32>
    %687 = tpu.matmul %686, %680, %cst_244 {dimension_numbers = #tpu.dot_dimension_numbers<[1], [0], [0], [1], [0, 0, 1, 1], [], []>} : vector<16x16xf32>, vector<16x4xf32>, vector<16x4xf32> -> vector<16x4xf32>
    %688 = vector.broadcast %681 : vector<1x4xf32> to vector<16x4xf32>
    %689 = arith.addf %687, %688 : vector<16x4xf32>
    %690 = vector.shape_cast %689 : vector<16x4xf32> to vector<2x8x4xf32>
    %cst_245 = arith.constant dense<0xFF800000> : vector<2x4xf32>
    %691 = vector.multi_reduction <maximumf>, %690, %cst_245 [1] : vector<2x8x4xf32> to vector<2x4xf32>
    %692 = vector.shape_cast %691 : vector<2x4xf32> to vector<2x1x4xf32>
    %693 = vector.broadcast %692 : vector<2x1x4xf32> to vector<2x8x4xf32>
    %694 = arith.subf %690, %693 : vector<2x8x4xf32>
    %695 = math.exp %694 : vector<2x8x4xf32>
    %cst_246 = arith.constant dense<0.000000e+00> : vector<2x4xf32>
    %696 = vector.multi_reduction <add>, %695, %cst_246 [1] : vector<2x8x4xf32> to vector<2x4xf32>
    %697 = vector.shape_cast %696 : vector<2x4xf32> to vector<2x1x4xf32>
    %698 = tpu.reciprocal %697 {approx = true} : vector<2x1x4xf32> -> vector<2x1x4xf32>
    %699 = vector.broadcast %698 : vector<2x1x4xf32> to vector<2x8x4xf32>
    %700 = arith.mulf %695, %699 : vector<2x8x4xf32>
    "tpu.trace_start"() <{level = 10 : i32, message = "bnr,bnh->brh"}> : () -> ()
    %cst_247 = arith.constant dense<0.000000e+00> : vector<2x4x64xf32>
    %701 = tpu.matmul %700, %677, %cst_247 {dimension_numbers = #tpu.dot_dimension_numbers<[1], [1], [2], [2], [0, 0, 0, 2, 1, 2], [0], [0]>} : vector<2x8x4xf32>, vector<2x8x64xf32>, vector<2x4x64xf32> -> vector<2x4x64xf32>
    "tpu.trace_stop"() : () -> ()
    %702 = vector.shape_cast %701 : vector<2x4x64xf32> to vector<2x256xf32>
    %c0_248 = arith.constant 0 : index
    %c0_249 = arith.constant 0 : index
    %703 = vector.load %arg1[%c0_248, %c0_249] : memref<32x64xf32, #tpu.memory_space<vmem>>, vector<32x64xf32>
    %c0_250 = arith.constant 0 : index
    %c0_251 = arith.constant 0 : index
    %704 = vector.load %arg9[%c0_250, %c0_251] : memref<64x64xf32, #tpu.memory_space<vmem>>, vector<64x64xf32>
    %cst_252 = arith.constant dense<0.000000e+00> : vector<32x64xf32>
    %705 = tpu.matmul %703, %704, %cst_252 {dimension_numbers = #tpu.dot_dimension_numbers<[1], [0], [0], [1], [0, 0, 1, 1], [], []>} : vector<32x64xf32>, vector<64x64xf32>, vector<32x64xf32> -> vector<32x64xf32>
    %c0_253 = arith.constant 0 : index
    %c0_254 = arith.constant 0 : index
    %706 = vector.load %arg10[%c0_253, %c0_254] : memref<1x64xf32, #tpu.memory_space<vmem>>, vector<1x64xf32>
    %707 = vector.broadcast %706 : vector<1x64xf32> to vector<32x64xf32>
    %708 = arith.addf %705, %707 : vector<32x64xf32>
    %cst_255 = arith.constant 0.000000e+00 : f32
    %709 = vector.broadcast %cst_255 : f32 to vector<32x64xf32>
    %710 = arith.maximumf %708, %709 : vector<32x64xf32>
    %711 = vector.shape_cast %710 : vector<32x64xf32> to vector<2x16x64xf32>
    %c0_256 = arith.constant 0 : index
    %c0_257 = arith.constant 0 : index
    %c0_258 = arith.constant 0 : index
    %712 = vector.load %arg11[%c0_256, %c0_257, %c0_258] : memref<2x64x64xf32, #tpu.memory_space<vmem>>, vector<2x64x64xf32>
    "tpu.trace_start"() <{level = 10 : i32, message = "bsh,bhk->bsk"}> : () -> ()
    %cst_259 = arith.constant dense<0.000000e+00> : vector<2x8x64xf32>
    %713 = tpu.matmul %677, %712, %cst_259 {dimension_numbers = #tpu.dot_dimension_numbers<[2], [1], [1], [2], [0, 0, 0, 1, 1, 2], [0], [0]>} : vector<2x8x64xf32>, vector<2x64x64xf32>, vector<2x8x64xf32> -> vector<2x8x64xf32>
    "tpu.trace_stop"() : () -> ()
    "tpu.trace_start"() <{level = 10 : i32, message = "bsk,bpk->bsp"}> : () -> ()
    %cst_260 = arith.constant dense<0.000000e+00> : vector<2x8x16xf32>
    %714 = tpu.matmul %713, %711, %cst_260 {dimension_numbers = #tpu.dot_dimension_numbers<[2], [2], [1], [1], [0, 0, 0, 1, 1, 1], [0], [0]>} : vector<2x8x64xf32>, vector<2x16x64xf32>, vector<2x8x16xf32> -> vector<2x8x16xf32>
    "tpu.trace_stop"() : () -> ()
    %cst_261 = arith.constant dense<0.000000e+00> : vector<2x16xf32>
    %715 = vector.multi_reduction <add>, %714, %cst_261 [1] : vector<2x8x16xf32> to vector<2x16xf32>
    %716 = vector.shape_cast %715 : vector<2x16xf32> to vector<2x1x16xf32>
    %717 = vector.broadcast %716 : vector<2x1x16xf32> to vector<2x8x16xf32>
    %718 = arith.divf %714, %717 : vector<2x8x16xf32>
    "tpu.trace_start"() <{level = 10 : i32, message = "bsp,bsh->bph"}> : () -> ()
    %cst_262 = arith.constant dense<0.000000e+00> : vector<2x16x64xf32>
    %719 = tpu.matmul %718, %677, %cst_262 {dimension_numbers = #tpu.dot_dimension_numbers<[1], [1], [2], [2], [0, 0, 0, 2, 1, 2], [0], [0]>} : vector<2x8x16xf32>, vector<2x8x64xf32>, vector<2x16x64xf32> -> vector<2x16x64xf32>
    "tpu.trace_stop"() : () -> ()
    %720 = arith.mulf %711, %719 : vector<2x16x64xf32>
    %cst_263 = arith.constant dense<0.000000e+00> : vector<2x16xf32>
    %721 = vector.multi_reduction <add>, %720, %cst_263 [2] : vector<2x16x64xf32> to vector<2x16xf32>
    %722 = vector.shape_cast %721 : vector<2x16xf32> to vector<2x16x1xf32>
    %723 = arith.mulf %711, %711 : vector<2x16x64xf32>
    %cst_264 = arith.constant dense<0.000000e+00> : vector<2x16xf32>
    %724 = vector.multi_reduction <add>, %723, %cst_264 [2] : vector<2x16x64xf32> to vector<2x16xf32>
    %725 = vector.shape_cast %724 : vector<2x16xf32> to vector<2x16x1xf32>
    %726 = arith.mulf %719, %719 : vector<2x16x64xf32>
    %cst_265 = arith.constant dense<0.000000e+00> : vector<2x16xf32>
    %727 = vector.multi_reduction <add>, %726, %cst_265 [2] : vector<2x16x64xf32> to vector<2x16xf32>
    %728 = vector.shape_cast %727 : vector<2x16xf32> to vector<2x16x1xf32>
    %cst_266 = arith.constant 9.99999996E-13 : f32
    %729 = vector.broadcast %cst_266 : f32 to vector<2x16x1xf32>
    %730 = arith.maximumf %725, %729 : vector<2x16x1xf32>
    %731 = math.rsqrt %730 : vector<2x16x1xf32>
    %732 = arith.mulf %722, %731 : vector<2x16x1xf32>
    %cst_267 = arith.constant 9.99999996E-13 : f32
    %733 = vector.broadcast %cst_267 : f32 to vector<2x16x1xf32>
    %734 = arith.maximumf %728, %733 : vector<2x16x1xf32>
    %735 = math.rsqrt %734 : vector<2x16x1xf32>
    %736 = arith.mulf %732, %735 : vector<2x16x1xf32>
    %cst_268 = arith.constant 1.000000e+00 : f32
    %737 = vector.broadcast %cst_268 : f32 to vector<2x16x1xf32>
    %738 = arith.subf %737, %736 : vector<2x16x1xf32>
    %739 = vector.broadcast %738 : vector<2x16x1xf32> to vector<2x16x64xf32>
    %740 = arith.mulf %719, %739 : vector<2x16x64xf32>
    %741 = vector.shape_cast %740 : vector<2x16x64xf32> to vector<32x64xf32>
    %cst_269 = arith.constant dense<0.000000e+00> : vector<32x16xf32>
    %742 = tpu.matmul %741, %678, %cst_269 {dimension_numbers = #tpu.dot_dimension_numbers<[1], [0], [0], [1], [0, 0, 1, 1], [], []>} : vector<32x64xf32>, vector<64x16xf32>, vector<32x16xf32> -> vector<32x16xf32>
    %743 = vector.broadcast %679 : vector<1x16xf32> to vector<32x16xf32>
    %744 = arith.addf %742, %743 : vector<32x16xf32>
    %745 = math.tanh %744 : vector<32x16xf32>
    %cst_270 = arith.constant dense<0.000000e+00> : vector<32x4xf32>
    %746 = tpu.matmul %745, %680, %cst_270 {dimension_numbers = #tpu.dot_dimension_numbers<[1], [0], [0], [1], [0, 0, 1, 1], [], []>} : vector<32x16xf32>, vector<16x4xf32>, vector<32x4xf32> -> vector<32x4xf32>
    %747 = vector.broadcast %681 : vector<1x4xf32> to vector<32x4xf32>
    %748 = arith.addf %746, %747 : vector<32x4xf32>
    %749 = vector.shape_cast %748 : vector<32x4xf32> to vector<2x16x4xf32>
    %cst_271 = arith.constant dense<0xFF800000> : vector<2x4xf32>
    %750 = vector.multi_reduction <maximumf>, %749, %cst_271 [1] : vector<2x16x4xf32> to vector<2x4xf32>
    %751 = vector.shape_cast %750 : vector<2x4xf32> to vector<2x1x4xf32>
    %752 = vector.broadcast %751 : vector<2x1x4xf32> to vector<2x16x4xf32>
    %753 = arith.subf %749, %752 : vector<2x16x4xf32>
    %754 = math.exp %753 : vector<2x16x4xf32>
    %cst_272 = arith.constant dense<0.000000e+00> : vector<2x4xf32>
    %755 = vector.multi_reduction <add>, %754, %cst_272 [1] : vector<2x16x4xf32> to vector<2x4xf32>
    %756 = vector.shape_cast %755 : vector<2x4xf32> to vector<2x1x4xf32>
    %757 = tpu.reciprocal %756 {approx = true} : vector<2x1x4xf32> -> vector<2x1x4xf32>
    %758 = vector.broadcast %757 : vector<2x1x4xf32> to vector<2x16x4xf32>
    %759 = arith.mulf %754, %758 : vector<2x16x4xf32>
    "tpu.trace_start"() <{level = 10 : i32, message = "bnr,bnh->brh"}> : () -> ()
    %cst_273 = arith.constant dense<0.000000e+00> : vector<2x4x64xf32>
    %760 = tpu.matmul %759, %740, %cst_273 {dimension_numbers = #tpu.dot_dimension_numbers<[1], [1], [2], [2], [0, 0, 0, 2, 1, 2], [0], [0]>} : vector<2x16x4xf32>, vector<2x16x64xf32>, vector<2x4x64xf32> -> vector<2x4x64xf32>
    "tpu.trace_stop"() : () -> ()
    %761 = vector.shape_cast %760 : vector<2x4x64xf32> to vector<2x256xf32>
    %762 = tpu.concatenate %702, %761 in 0 : vector<2x256xf32>, vector<2x256xf32> -> vector<4x256xf32>
    %c0_274 = arith.constant 0 : index
    %c0_275 = arith.constant 0 : index
    %763 = vector.load %arg12[%c0_274, %c0_275] : memref<256x64xf32, #tpu.memory_space<vmem>>, vector<256x64xf32>
    %cst_276 = arith.constant dense<0.000000e+00> : vector<4x64xf32>
    %764 = tpu.matmul %762, %763, %cst_276 {dimension_numbers = #tpu.dot_dimension_numbers<[1], [0], [0], [1], [0, 0, 1, 1], [], []>} : vector<4x256xf32>, vector<256x64xf32>, vector<4x64xf32> -> vector<4x64xf32>
    %c0_277 = arith.constant 0 : index
    %c0_278 = arith.constant 0 : index
    %765 = vector.load %arg13[%c0_277, %c0_278] : memref<1x64xf32, #tpu.memory_space<vmem>>, vector<1x64xf32>
    %766 = vector.broadcast %765 : vector<1x64xf32> to vector<4x64xf32>
    %767 = arith.addf %764, %766 : vector<4x64xf32>
    %768 = vector.extract_strided_slice %767 {offsets = [0, 0], sizes = [2, 64], strides = [1, 1]} : vector<4x64xf32> to vector<2x64xf32>
    %769 = vector.extract_strided_slice %767 {offsets = [2, 0], sizes = [2, 64], strides = [1, 1]} : vector<4x64xf32> to vector<2x64xf32>
    %c0_279 = arith.constant 0 : index
    %c0_280 = arith.constant 0 : index
    %770 = vector.load %arg16[%c0_279, %c0_280] : memref<64x32xf32, #tpu.memory_space<vmem>>, vector<64x32xf32>
    %cst_281 = arith.constant dense<0.000000e+00> : vector<4x32xf32>
    %771 = tpu.matmul %767, %770, %cst_281 {dimension_numbers = #tpu.dot_dimension_numbers<[1], [0], [0], [1], [0, 0, 1, 1], [], []>} : vector<4x64xf32>, vector<64x32xf32>, vector<4x32xf32> -> vector<4x32xf32>
    %c0_282 = arith.constant 0 : index
    %c0_283 = arith.constant 0 : index
    %772 = vector.load %arg17[%c0_282, %c0_283] : memref<1x32xf32, #tpu.memory_space<vmem>>, vector<1x32xf32>
    %773 = vector.broadcast %772 : vector<1x32xf32> to vector<4x32xf32>
    %774 = arith.addf %771, %773 : vector<4x32xf32>
    %c0_284 = arith.constant 0 : index
    %c0_285 = arith.constant 0 : index
    %775 = vector.load %arg18[%c0_284, %c0_285] : memref<32x16xf32, #tpu.memory_space<vmem>>, vector<32x16xf32>
    %cst_286 = arith.constant dense<0.000000e+00> : vector<4x16xf32>
    %776 = tpu.matmul %774, %775, %cst_286 {dimension_numbers = #tpu.dot_dimension_numbers<[1], [0], [0], [1], [0, 0, 1, 1], [], []>} : vector<4x32xf32>, vector<32x16xf32>, vector<4x16xf32> -> vector<4x16xf32>
    %c0_287 = arith.constant 0 : index
    %c0_288 = arith.constant 0 : index
    %777 = vector.load %arg19[%c0_287, %c0_288] : memref<1x16xf32, #tpu.memory_space<vmem>>, vector<1x16xf32>
    %778 = vector.broadcast %777 : vector<1x16xf32> to vector<4x16xf32>
    %779 = arith.addf %776, %778 : vector<4x16xf32>
    %c0_289 = arith.constant 0 : index
    %c0_290 = arith.constant 0 : index
    %780 = vector.load %arg20[%c0_289, %c0_290] : memref<16x8xf32, #tpu.memory_space<vmem>>, vector<16x8xf32>
    %cst_291 = arith.constant dense<0.000000e+00> : vector<4x8xf32>
    %781 = tpu.matmul %779, %780, %cst_291 {dimension_numbers = #tpu.dot_dimension_numbers<[1], [0], [0], [1], [0, 0, 1, 1], [], []>} : vector<4x16xf32>, vector<16x8xf32>, vector<4x8xf32> -> vector<4x8xf32>
    %c0_292 = arith.constant 0 : index
    %c0_293 = arith.constant 0 : index
    %782 = vector.load %arg21[%c0_292, %c0_293] : memref<1x8xf32, #tpu.memory_space<vmem>>, vector<1x8xf32>
    %783 = vector.broadcast %782 : vector<1x8xf32> to vector<4x8xf32>
    %784 = arith.addf %781, %783 : vector<4x8xf32>
    %c0_294 = arith.constant 0 : index
    %c0_295 = arith.constant 0 : index
    %785 = vector.load %arg22[%c0_294, %c0_295] : memref<8x1xf32, #tpu.memory_space<vmem>>, vector<8x1xf32>
    %cst_296 = arith.constant dense<0.000000e+00> : vector<4x1xf32>
    %786 = tpu.matmul %784, %785, %cst_296 {dimension_numbers = #tpu.dot_dimension_numbers<[1], [0], [0], [1], [0, 0, 1, 1], [], []>} : vector<4x8xf32>, vector<8x1xf32>, vector<4x1xf32> -> vector<4x1xf32>
    %c0_297 = arith.constant 0 : index
    %c0_298 = arith.constant 0 : index
    %787 = vector.load %arg23[%c0_297, %c0_298] : memref<1x1xf32, #tpu.memory_space<vmem>>, vector<1x1xf32>
    %788 = vector.broadcast %787 : vector<1x1xf32> to vector<4x1xf32>
    %789 = arith.addf %786, %788 : vector<4x1xf32>
    %790 = vector.extract_strided_slice %789 {offsets = [0, 0], sizes = [2, 1], strides = [1, 1]} : vector<4x1xf32> to vector<2x1xf32>
    %791 = vector.extract_strided_slice %789 {offsets = [2, 0], sizes = [2, 1], strides = [1, 1]} : vector<4x1xf32> to vector<2x1xf32>
    %792 = tpu.concatenate %790, %791 in 1 : vector<2x1xf32>, vector<2x1xf32> -> vector<2x2xf32>
    %cst_299 = arith.constant dense<0xFF800000> : vector<2xf32>
    %793 = vector.multi_reduction <maximumf>, %792, %cst_299 [1] : vector<2x2xf32> to vector<2xf32>
    %794 = vector.shape_cast %793 : vector<2xf32> to vector<2x1xf32>
    %795 = vector.broadcast %794 : vector<2x1xf32> to vector<2x2xf32>
    %796 = arith.subf %792, %795 : vector<2x2xf32>
    %797 = math.exp %796 : vector<2x2xf32>
    %cst_300 = arith.constant dense<0.000000e+00> : vector<2xf32>
    %798 = vector.multi_reduction <add>, %797, %cst_300 [1] : vector<2x2xf32> to vector<2xf32>
    %799 = vector.shape_cast %798 : vector<2xf32> to vector<2x1xf32>
    %800 = tpu.reciprocal %799 {approx = true} : vector<2x1xf32> -> vector<2x1xf32>
    %801 = vector.broadcast %800 : vector<2x1xf32> to vector<2x2xf32>
    %802 = arith.mulf %797, %801 : vector<2x2xf32>
    %cst_301 = arith.constant 1.000000e+00 : f32
    %803 = vector.broadcast %cst_301 : f32 to vector<2x2xf32>
    %804 = arith.addf %802, %803 : vector<2x2xf32>
    %805 = vector.shape_cast %768 : vector<2x64xf32> to vector<2x64x1xf32>
    %806 = vector.shape_cast %769 : vector<2x64xf32> to vector<2x64x1xf32>
    %807 = tpu.concatenate %805, %806 in 2 : vector<2x64x1xf32>, vector<2x64x1xf32> -> vector<2x64x2xf32>
    %808 = vector.shape_cast %804 : vector<2x2xf32> to vector<2x1x2xf32>
    %809 = vector.broadcast %808 : vector<2x1x2xf32> to vector<2x64x2xf32>
    %810 = arith.mulf %807, %809 : vector<2x64x2xf32>
    %c0_302 = arith.constant 0 : index
    %c0_303 = arith.constant 0 : index
    %c0_304 = arith.constant 0 : index
    %811 = vector.load %arg14[%c0_302, %c0_303, %c0_304] : memref<2x64x64xf32, #tpu.memory_space<vmem>>, vector<2x64x64xf32>
    "tpu.trace_start"() <{level = 10 : i32, message = "bij,bjc->bic"}> : () -> ()
    %cst_305 = arith.constant dense<0.000000e+00> : vector<2x64x2xf32>
    %812 = tpu.matmul %811, %810, %cst_305 {dimension_numbers = #tpu.dot_dimension_numbers<[2], [1], [1], [2], [0, 0, 0, 1, 1, 2], [0], [0]>} : vector<2x64x64xf32>, vector<2x64x2xf32>, vector<2x64x2xf32> -> vector<2x64x2xf32>
    "tpu.trace_stop"() : () -> ()
    %813 = math.tanh %812 : vector<2x64x2xf32>
    %cst_306 = arith.constant dense<0xFF800000> : vector<2x64xf32>
    %814 = vector.multi_reduction <maximumf>, %813, %cst_306 [2] : vector<2x64x2xf32> to vector<2x64xf32>
    %815 = vector.shape_cast %814 : vector<2x64xf32> to vector<2x64x1xf32>
    %816 = vector.broadcast %815 : vector<2x64x1xf32> to vector<2x64x2xf32>
    %817 = arith.subf %813, %816 : vector<2x64x2xf32>
    %818 = math.exp %817 : vector<2x64x2xf32>
    %cst_307 = arith.constant dense<0.000000e+00> : vector<2x64xf32>
    %819 = vector.multi_reduction <add>, %818, %cst_307 [2] : vector<2x64x2xf32> to vector<2x64xf32>
    %820 = vector.shape_cast %819 : vector<2x64xf32> to vector<2x64x1xf32>
    %821 = tpu.reciprocal %820 {approx = true} : vector<2x64x1xf32> -> vector<2x64x1xf32>
    %822 = vector.broadcast %821 : vector<2x64x1xf32> to vector<2x64x2xf32>
    %823 = arith.mulf %818, %822 : vector<2x64x2xf32>
    %c0_308 = arith.constant 0 : index
    %c0_309 = arith.constant 0 : index
    %824 = vector.load %arg15[%c0_308, %c0_309] : memref<2x64xf32, #tpu.memory_space<vmem>>, vector<2x64xf32>
    %825 = vector.shape_cast %824 : vector<2x64xf32> to vector<2x64x1xf32>
    %826 = vector.broadcast %825 : vector<2x64x1xf32> to vector<2x64x2xf32>
    %827 = arith.mulf %826, %823 : vector<2x64x2xf32>
    %cst_310 = arith.constant dense<0.000000e+00> : vector<2x2xf32>
    %828 = vector.multi_reduction <add>, %827, %cst_310 [1] : vector<2x64x2xf32> to vector<2x2xf32>
    %829 = vector.shape_cast %828 : vector<2x2xf32> to vector<2x1x2xf32>
    %830 = vector.broadcast %829 : vector<2x1x2xf32> to vector<2x64x2xf32>
    %831 = arith.mulf %810, %830 : vector<2x64x2xf32>
    %cst_311 = arith.constant dense<0.000000e+00> : vector<2x64xf32>
    %832 = vector.multi_reduction <add>, %831, %cst_311 [2] : vector<2x64x2xf32> to vector<2x64xf32>
    %c0_312 = arith.constant 0 : index
    %c0_313 = arith.constant 0 : index
    %833 = vector.load %arg24[%c0_312, %c0_313] : memref<2x64xf32, #tpu.memory_space<vmem>>, vector<2x64xf32>
    tpu.vector_store %arg24[%c0_312, %c0_313], %832 {strides = array<i32>} : memref<2x64xf32, #tpu.memory_space<vmem>>, vector<2x64xf32>,
    return
  }
}

</mosaic_0001>

<llo_original>
// kernel: memo_lstm_forward.1
$region0: #{memo_lstm_forward.1}
  #allocation0 [shape = 'u32[]', space=smem, size = 0x4, offset = 0x4, fixed_abs, tag = 'smem constant byte address 0x4 - core index']
  #allocation1 [shape = 'u32[144,128]{1,0:T(1,128)}', space=vmem, size = 0x12000, scoped, tag = 'internal scratch']
  #allocation2 [shape = 'f32[1,1]{1,0:T(1,128)S(1)}', space=vmem, size = 0x200, scoped, tag = 'scoped memory for memo_lstm_forward.1']
  %s0 = inlined_call_operand.vmem [shape: f32[8,2,16], index: 0, kind: input, shape index: {}]
  %s1 = inlined_call_operand.vmem [shape: f32[32,64], index: 1, kind: input, shape index: {}]
  %s2 = inlined_call_operand.vmem [shape: f32[16,256], index: 2, kind: input, shape index: {}]
  %s3 = inlined_call_operand.vmem [shape: f32[8,32,32], index: 3, kind: input, shape index: {}]
  %s4 = inlined_call_operand.vmem [shape: f32[1,256], index: 4, kind: input, shape index: {}]
  %s5 = inlined_call_operand.vmem [shape: f32[64,16], index: 5, kind: input, shape index: {}]
  %s6 = inlined_call_operand.vmem [shape: f32[1,16], index: 6, kind: input, shape index: {}]
  %s7 = inlined_call_operand.vmem [shape: f32[16,4], index: 7, kind: input, shape index: {}]
  %s8 = inlined_call_operand.vmem [shape: f32[1,4], index: 8, kind: input, shape index: {}]
  %s9 = inlined_call_operand.vmem [shape: f32[64,64], index: 9, kind: input, shape index: {}]
  %s10 = inlined_call_operand.vmem [shape: f32[1,64], index: 10, kind: input, shape index: {}]
  %s11 = inlined_call_operand.vmem [shape: f32[2,64,64], index: 11, kind: input, shape index: {}]
  %s12 = inlined_call_operand.vmem [shape: f32[256,64], index: 12, kind: input, shape index: {}]
  %s13 = inlined_call_operand.vmem [shape: f32[1,64], index: 13, kind: input, shape index: {}]
  %s14 = inlined_call_operand.vmem [shape: f32[2,64,64], index: 14, kind: input, shape index: {}]
  %s15 = inlined_call_operand.vmem [shape: f32[2,64], index: 15, kind: input, shape index: {}]
  %s16 = inlined_call_operand.vmem [shape: f32[64,32], index: 16, kind: input, shape index: {}]
  %s17 = inlined_call_operand.vmem [shape: f32[1,32], index: 17, kind: input, shape index: {}]
  %s18 = inlined_call_operand.vmem [shape: f32[32,16], index: 18, kind: input, shape index: {}]
  %s19 = inlined_call_operand.vmem [shape: f32[1,16], index: 19, kind: input, shape index: {}]
  %s20 = inlined_call_operand.vmem [shape: f32[16,8], index: 20, kind: input, shape index: {}]
  %s21 = inlined_call_operand.vmem [shape: f32[1,8], index: 21, kind: input, shape index: {}]
  %s22 = inlined_call_operand.vmem [shape: f32[8,1], index: 22, kind: input, shape index: {}]
  %s23 = inlined_call_operand.<no memory space> [shape: f32[1,1], index: 23, kind: input, shape index: {}]
  %s24 = inlined_call_operand.hbm [shape: f32[2,64], index: 24, kind: output, shape index: {}]
  %s25 = sld [smem:[#allocation0]]
  $region106: #{memo_lstm_forward.1} parent=0
    _
  %s27 = ssub.s32 1, %s25
  %s28 = scalar_select 0, %s27, %s25
  %v29 = vstv %s23
  %30 = vst [vmem:[#allocation2] sm:$0x1] %v29
  $region1: #{memo_lstm_forward.1} parent=0
    #allocation3 [shape = 'u8[1024]{0}', space=vmem, size = 0x400, scoped, tag = 'output window, operand 0, single buffered']
    #allocation4 [shape = 's32[1]{0}', space=sflag, size = 0x4, scoped, tag = 'scoped memory for memo_lstm_forward.1']
    %31 = vsyncpa [#allocation4], 0
    // Predicated region
    $region2: #{memo_lstm_forward.1} parent=1 // pred_check
      _
    $region3: #{memo_lstm_forward.1} parent=1 // pred_check_branch
      %33 = sbr.rel (0) target = $region5
    $region4: #{memo_lstm_forward.1} parent=1 // pred_region
      _
    $region5: #{memo_lstm_forward.1} parent=1 // pred_fallthru
      _
    // Predicated region
    $region6: #{memo_lstm_forward.1} parent=1 // pred_check
      _
    $region7: #{memo_lstm_forward.1} parent=1 // pred_check_branch
      %35 = sbr.rel (0) target = $region9
    $region8: #{memo_lstm_forward.1} parent=1 // pred_region
      _
    $region9: #{memo_lstm_forward.1} parent=1 // pred_fallthru
      _
    // Predicated region
    $region10: #{memo_lstm_forward.1} parent=1 // pred_check
      _
    $region11: #{memo_lstm_forward.1} parent=1 // pred_check_branch
      %37 = sbr.rel (0) target = $region13
    $region12: #{memo_lstm_forward.1} parent=1 // pred_region
      _
    $region13: #{memo_lstm_forward.1} parent=1 // pred_fallthru
      _
    // Predicated region
    $region14: #{memo_lstm_forward.1} parent=1 // pred_check
      _
    $region15: #{memo_lstm_forward.1} parent=1 // pred_check_branch
      %39 = sbr.rel (0) target = $region17
    $region16: #{memo_lstm_forward.1} parent=1 // pred_region
      _
    $region17: #{memo_lstm_forward.1} parent=1 // pred_fallthru
      _
    // Predicated region
    $region18: #{memo_lstm_forward.1} parent=1 // pred_check
      _
    $region19: #{memo_lstm_forward.1} parent=1 // pred_check_branch
      %41 = sbr.rel (0) target = $region21
    $region20: #{memo_lstm_forward.1} parent=1 // pred_region
      _
    $region21: #{memo_lstm_forward.1} parent=1 // pred_fallthru
      _
    // Predicated region
    $region22: #{memo_lstm_forward.1} parent=1 // pred_check
      _
    $region23: #{memo_lstm_forward.1} parent=1 // pred_check_branch
      %43 = sbr.rel (0) target = $region25
    $region24: #{memo_lstm_forward.1} parent=1 // pred_region
      _
    $region25: #{memo_lstm_forward.1} parent=1 // pred_fallthru
      _
    // Predicated region
    $region26: #{memo_lstm_forward.1} parent=1 // pred_check
      _
    $region27: #{memo_lstm_forward.1} parent=1 // pred_check_branch
      %45 = sbr.rel (0) target = $region29
    $region28: #{memo_lstm_forward.1} parent=1 // pred_region
      _
    $region29: #{memo_lstm_forward.1} parent=1 // pred_fallthru
      _
    // Predicated region
    $region30: #{memo_lstm_forward.1} parent=1 // pred_check
      _
    $region31: #{memo_lstm_forward.1} parent=1 // pred_check_branch
      %47 = sbr.rel (0) target = $region33
    $region32: #{memo_lstm_forward.1} parent=1 // pred_region
      _
    $region33: #{memo_lstm_forward.1} parent=1 // pred_fallthru
      _
    // Predicated region
    $region34: #{memo_lstm_forward.1} parent=1 // pred_check
      _
    $region35: #{memo_lstm_forward.1} parent=1 // pred_check_branch
      %49 = sbr.rel (0) target = $region37
    $region36: #{memo_lstm_forward.1} parent=1 // pred_region
      _
    $region37: #{memo_lstm_forward.1} parent=1 // pred_fallthru
      _
    // Predicated region
    $region38: #{memo_lstm_forward.1} parent=1 // pred_check
      _
    $region39: #{memo_lstm_forward.1} parent=1 // pred_check_branch
      %51 = sbr.rel (0) target = $region41
    $region40: #{memo_lstm_forward.1} parent=1 // pred_region
      _
    $region41: #{memo_lstm_forward.1} parent=1 // pred_fallthru
      _
    // Predicated region
    $region42: #{memo_lstm_forward.1} parent=1 // pred_check
      _
    $region43: #{memo_lstm_forward.1} parent=1 // pred_check_branch
      %53 = sbr.rel (0) target = $region45
    $region44: #{memo_lstm_forward.1} parent=1 // pred_region
      _
    $region45: #{memo_lstm_forward.1} parent=1 // pred_fallthru
      _
    // Predicated region
    $region46: #{memo_lstm_forward.1} parent=1 // pred_check
      _
    $region47: #{memo_lstm_forward.1} parent=1 // pred_check_branch
      %55 = sbr.rel (0) target = $region49
    $region48: #{memo_lstm_forward.1} parent=1 // pred_region
      _
    $region49: #{memo_lstm_forward.1} parent=1 // pred_fallthru
      _
    // Predicated region
    $region50: #{memo_lstm_forward.1} parent=1 // pred_check
      _
    $region51: #{memo_lstm_forward.1} parent=1 // pred_check_branch
      %57 = sbr.rel (0) target = $region53
    $region52: #{memo_lstm_forward.1} parent=1 // pred_region
      _
    $region53: #{memo_lstm_forward.1} parent=1 // pred_fallthru
      _
    // Predicated region
    $region54: #{memo_lstm_forward.1} parent=1 // pred_check
      _
    $region55: #{memo_lstm_forward.1} parent=1 // pred_check_branch
      %59 = sbr.rel (0) target = $region57
    $region56: #{memo_lstm_forward.1} parent=1 // pred_region
      _
    $region57: #{memo_lstm_forward.1} parent=1 // pred_fallthru
      _
    // Predicated region
    $region58: #{memo_lstm_forward.1} parent=1 // pred_check
      _
    $region59: #{memo_lstm_forward.1} parent=1 // pred_check_branch
      %61 = sbr.rel (0) target = $region61
    $region60: #{memo_lstm_forward.1} parent=1 // pred_region
      _
    $region61: #{memo_lstm_forward.1} parent=1 // pred_fallthru
      _
    // Predicated region
    $region62: #{memo_lstm_forward.1} parent=1 // pred_check
      _
    $region63: #{memo_lstm_forward.1} parent=1 // pred_check_branch
      %63 = sbr.rel (0) target = $region65
    $region64: #{memo_lstm_forward.1} parent=1 // pred_region
      _
    $region65: #{memo_lstm_forward.1} parent=1 // pred_fallthru
      _
    // Predicated region
    $region66: #{memo_lstm_forward.1} parent=1 // pred_check
      _
    $region67: #{memo_lstm_forward.1} parent=1 // pred_check_branch
      %65 = sbr.rel (0) target = $region69
    $region68: #{memo_lstm_forward.1} parent=1 // pred_region
      _
    $region69: #{memo_lstm_forward.1} parent=1 // pred_fallthru
      _
    // Predicated region
    $region70: #{memo_lstm_forward.1} parent=1 // pred_check
      _
    $region71: #{memo_lstm_forward.1} parent=1 // pred_check_branch
      %67 = sbr.rel (0) target = $region73
    $region72: #{memo_lstm_forward.1} parent=1 // pred_region
      _
    $region73: #{memo_lstm_forward.1} parent=1 // pred_fallthru
      _
    // Predicated region
    $region74: #{memo_lstm_forward.1} parent=1 // pred_check
      _
    $region75: #{memo_lstm_forward.1} parent=1 // pred_check_branch
      %69 = sbr.rel (0) target = $region77
    $region76: #{memo_lstm_forward.1} parent=1 // pred_region
      _
    $region77: #{memo_lstm_forward.1} parent=1 // pred_fallthru
      _
    // Predicated region
    $region78: #{memo_lstm_forward.1} parent=1 // pred_check
      _
    $region79: #{memo_lstm_forward.1} parent=1 // pred_check_branch
      %71 = sbr.rel (0) target = $region81
    $region80: #{memo_lstm_forward.1} parent=1 // pred_region
      _
    $region81: #{memo_lstm_forward.1} parent=1 // pred_fallthru
      _
    // Predicated region
    $region82: #{memo_lstm_forward.1} parent=1 // pred_check
      _
    $region83: #{memo_lstm_forward.1} parent=1 // pred_check_branch
      %73 = sbr.rel (0) target = $region85
    $region84: #{memo_lstm_forward.1} parent=1 // pred_region
      _
    $region85: #{memo_lstm_forward.1} parent=1 // pred_fallthru
      _
    // Predicated region
    $region86: #{memo_lstm_forward.1} parent=1 // pred_check
      _
    $region87: #{memo_lstm_forward.1} parent=1 // pred_check_branch
      %75 = sbr.rel (0) target = $region89
    $region88: #{memo_lstm_forward.1} parent=1 // pred_region
      _
    $region89: #{memo_lstm_forward.1} parent=1 // pred_fallthru
      _
    // Predicated region
    $region90: #{memo_lstm_forward.1} parent=1 // pred_check
      _
    $region91: #{memo_lstm_forward.1} parent=1 // pred_check_branch
      %77 = sbr.rel (0) target = $region93
    $region92: #{memo_lstm_forward.1} parent=1 // pred_region
      _
    $region93: #{memo_lstm_forward.1} parent=1 // pred_fallthru
      _
    // Predicated region
    $region94: #{memo_lstm_forward.1} parent=1 // pred_check
      _
    $region95: #{memo_lstm_forward.1} parent=1 // pred_check_branch
      %79 = sbr.rel (0) target = $region97
    $region96: #{memo_lstm_forward.1} parent=1 // pred_region
      _
    $region97: #{memo_lstm_forward.1} parent=1 // pred_fallthru
      _
    %v80 = vld [vmem:[%s0] sm:$0x3]
    %v81 = vld [vmem:[%s0 + $0x2] sm:$0x3]
    %v82 = vld [vmem:[%s0 + $0x4] sm:$0x3]
    %v83 = vld [vmem:[%s0 + $0x6] sm:$0x3]
    %v84 = vld [vmem:[%s0 + $0x8] sm:$0x3]
    %v85 = vld [vmem:[%s0 + $0xa] sm:$0x3]
    %v86 = vld [vmem:[%s0 + $0xc] sm:$0x3]
    %v87 = vld [vmem:[%s0 + $0xe] sm:$0x3]
    %v88 = vld [vmem:[%s2] sm:$0xff]
    %v89 = vld [vmem:[%s2 + $0x8] sm:$0xff]
    %v90 = vld [vmem:[%s2 + $0x10] sm:$0xff]
    %v91 = vld [vmem:[%s2 + $0x18] sm:$0xff]
    %v92 = vld [vmem:[%s4] sm:$0x3]
    %v94 = vlaneseq
    %v95 = vshrl.u32 %v94, 7
    %v96 = vsub.s32 0, %v95
    %v97 = vrot.slane %v92, %v96
    %v98 = vlaneseq
    %v99 = vshrl.u32 %v98, 7
    %v100 = vsub.s32 1, %v99
    %v101 = vrot.slane %v92, %v100
    %v112 = vcombine.low %v80, %v81
    %v113 = vcombine.low %v82, %v83
    %v115 = vunpack.c.l.s4 1983009808
    %v116 = vunpack.c.0.s8 %v115
    %v117 = vlaneseq
    %v118 = vshrl.u32 %v117, 7
    %v119 = vsub.s32 %v116, %v118
    %v120 = vrot.slane %v112, %v119
    %v122 = vunpack.c.l.s4 1983009808
    %v123 = vunpack.c.0.s8 %v122
    %v124 = vlaneseq
    %v125 = vshrl.u32 %v124, 7
    %v126 = vsub.s32 %v123, %v125
    %v127 = vrot.slane %v113, %v126
    %v128 = vcombine.low %v120, %v127
    %v129 = vcombine.low %v84, %v85
    %v130 = vcombine.low %v86, %v87
    %v132 = vunpack.c.l.s4 1983009808
    %v133 = vunpack.c.0.s8 %v132
    %v134 = vlaneseq
    %v135 = vshrl.u32 %v134, 7
    %v136 = vsub.s32 %v133, %v135
    %v137 = vrot.slane %v129, %v136
    %v139 = vunpack.c.l.s4 1983009808
    %v140 = vunpack.c.0.s8 %v139
    %v141 = vlaneseq
    %v142 = vshrl.u32 %v141, 7
    %v143 = vsub.s32 %v140, %v142
    %v144 = vrot.slane %v130, %v143
    %v145 = vcombine.low %v137, %v144
    %vm146 = vcmask 130048
    %v147 = vsel %vm146, %v128, 0
    %v149 = vsel %vm146, %v145, 0
    %151 = vmatprep.subr.mxu0 %v89
    %152 = vmatpush1.msra.mxu0 %v88
    %153 = vmatprep.subr.mxu0 %v91
    %154 = vmatpush1.msra.mxu0 %v90
    %155 = vmatprep.subr.mxu0 0.0
    %156 = vmatpush1.msra.mxu0 0.0
    %157 = vmatprep.subr.mxu0 0.0
    %158 = vmatpush1.msra.mxu0 0.0
    %159 = vmatprep.subr.mxu0 0.0
    %160 = vmatpush1.msra.mxu0 0.0
    %161 = vmatprep.subr.mxu0 0.0
    %162 = vmatpush1.msra.mxu0 0.0
    %163 = vmatprep.subr.mxu0 0.0
    %164 = vmatpush1.msra.mxu0 0.0
    %165 = vmatprep.subr.mxu0 0.0
    %166 = vmatpush1.msra.mxu0 0.0
    %167 = vmatprep.subr.mxu0 0.0
    %168 = vmatpush1.msra.mxu0 0.0
    %169 = vmatprep.subr.mxu0 0.0
    %170 = vmatpush1.msra.mxu0 0.0
    %171 = vmatprep.subr.mxu0 0.0
    %172 = vmatpush1.msra.mxu0 0.0
    %173 = vmatprep.subr.mxu0 0.0
    %174 = vmatpush1.msra.mxu0 0.0
    %175 = vmatprep.subr.mxu0 0.0
    %176 = vmatpush1.msra.mxu0 0.0
    %177 = vmatprep.subr.mxu0 0.0
    %178 = vmatpush1.msra.mxu0 0.0
    %179 = vmatprep.subr.mxu0 0.0
    %180 = vmatpush1.msra.mxu0 0.0
    %181 = vmatprep.subr.mxu0 0.0
    %182 = vmatpush1.msra.mxu0 0.0
    %183 = vmatprep.subr.mxu0 0.0
    %184 = vmatpush1.msra.mxu0 0.0
    %185 = vmatprep.subr.mxu0 0.0
    %186 = vmatpush1.msra.mxu0 0.0
    %187 = vmatprep.subr.mxu0 0.0
    %188 = vmatpush1.msra.mxu0 0.0
    %189 = vmatprep.subr.mxu0 0.0
    %190 = vmatpush1.msra.mxu0 0.0
    %191 = vmatprep.subr.mxu0 0.0
    %192 = vmatpush1.msra.mxu0 0.0
    %193 = vmatprep.subr.mxu0 0.0
    %194 = vmatpush1.msra.mxu0 0.0
    %195 = vmatprep.subr.mxu0 0.0
    %196 = vmatpush1.msra.mxu0 0.0
    %197 = vmatprep.subr.mxu0 0.0
    %198 = vmatpush1.msra.mxu0 0.0
    %199 = vmatprep.subr.mxu0 0.0
    %200 = vmatpush1.msra.mxu0 0.0
    %201 = vmatprep.subr.mxu0 0.0
    %202 = vmatpush1.msra.mxu0 0.0
    %203 = vmatprep.subr.mxu0 0.0
    %204 = vmatpush1.msra.mxu0 0.0
    %205 = vmatprep.subr.mxu0 0.0
    %206 = vmatpush1.msra.mxu0 0.0
    %207 = vmatprep.subr.mxu0 0.0
    %208 = vmatpush1.msra.mxu0 0.0
    %209 = vmatprep.subr.mxu0 0.0
    %210 = vmatpush1.msra.mxu0 0.0
    %211 = vmatprep.subr.mxu0 0.0
    %212 = vmatpush1.msra.mxu0 0.0
    %213 = vmatprep.subr.mxu0 0.0
    %214 = vmatpush1.msra.mxu0 0.0
    %215 = vmatprep.mubr.f32.mxu0 0.0
    %216 = vmatmul.mubr.f32.gmra.mrb[0].mxu0 %v147
    %v217 = vpop.f32.mrb[0].mxu0
    %v218 = vadd.f32 %v97, %v217
    %v219 = vpop.f32.mrb[0].mxu0
    %v220 = vadd.f32 %v101, %v219
    %221 = vmatprep.mubr.f32.mxu0 0.0
    %222 = vmatmul.mubr.f32.gmra.mrb[0].mxu0 %v149
    %v223 = vpop.f32.mrb[0].mxu0
    %v224 = vadd.f32 %v97, %v223
    %v225 = vpop.f32.mrb[0].mxu0
    %v226 = vadd.f32 %v101, %v225
    %227 = vdwg.mxu0
    %v228 = vld [vmem:[%s3] sm:$0xff]
    %v229 = vld [vmem:[%s3 + $0x8] sm:$0xff]
    %v230 = vld [vmem:[%s3 + $0x10] sm:$0xff]
    %v231 = vld [vmem:[%s3 + $0x18] sm:$0xff]
    %s232 = scalar_lea.vmem %s3, 32
    %v233 = vld [vmem:[%s232] sm:$0xff]
    %v234 = vld [vmem:[%s232 + $0x8] sm:$0xff]
    %v235 = vld [vmem:[%s232 + $0x10] sm:$0xff]
    %v236 = vld [vmem:[%s232 + $0x18] sm:$0xff]
    %s237 = scalar_lea.vmem %s3, 64
    %v238 = vld [vmem:[%s237] sm:$0xff]
    %v239 = vld [vmem:[%s237 + $0x8] sm:$0xff]
    %v240 = vld [vmem:[%s237 + $0x10] sm:$0xff]
    %v241 = vld [vmem:[%s237 + $0x18] sm:$0xff]
    %s242 = scalar_lea.vmem %s3, 96
    %v243 = vld [vmem:[%s242] sm:$0xff]
    %v244 = vld [vmem:[%s242 + $0x8] sm:$0xff]
    %v245 = vld [vmem:[%s242 + $0x10] sm:$0xff]
    %v246 = vld [vmem:[%s242 + $0x18] sm:$0xff]
    %s247 = scalar_lea.vmem %s3, 128
    %v248 = vld [vmem:[%s247] sm:$0xff]
    %v249 = vld [vmem:[%s247 + $0x8] sm:$0xff]
    %v250 = vld [vmem:[%s247 + $0x10] sm:$0xff]
    %v251 = vld [vmem:[%s247 + $0x18] sm:$0xff]
    %s252 = scalar_lea.vmem %s3, 160
    %v253 = vld [vmem:[%s252] sm:$0xff]
    %v254 = vld [vmem:[%s252 + $0x8] sm:$0xff]
    %v255 = vld [vmem:[%s252 + $0x10] sm:$0xff]
    %v256 = vld [vmem:[%s252 + $0x18] sm:$0xff]
    %s257 = scalar_lea.vmem %s3, 192
    %v258 = vld [vmem:[%s257] sm:$0xff]
    %v259 = vld [vmem:[%s257 + $0x8] sm:$0xff]
    %v260 = vld [vmem:[%s257 + $0x10] sm:$0xff]
    %v261 = vld [vmem:[%s257 + $0x18] sm:$0xff]
    %s262 = scalar_lea.vmem %s3, 224
    %v263 = vld [vmem:[%s262] sm:$0xff]
    %v264 = vld [vmem:[%s262 + $0x8] sm:$0xff]
    %v265 = vld [vmem:[%s262 + $0x10] sm:$0xff]
    %v266 = vld [vmem:[%s262 + $0x18] sm:$0xff]
    %vm267 = vcmask 261120
    %v269 = vsel %vm267, 0.0, 0
    %271 = vmatprep.subr.mxu0 0.0
    %272 = vmatpush1.msra.mxu0 %v228
    %273 = vmatprep.subr.mxu0 0.0
    %274 = vmatpush1.msra.mxu0 %v229
    %275 = vmatprep.subr.mxu0 0.0
    %276 = vmatpush1.msra.mxu0 %v230
    %277 = vmatprep.subr.mxu0 0.0
    %278 = vmatpush1.msra.mxu0 %v231
    %279 = vmatprep.subr.mxu0 0.0
    %280 = vmatpush1.msra.mxu0 0.0
    %281 = vmatprep.subr.mxu0 0.0
    %282 = vmatpush1.msra.mxu0 0.0
    %283 = vmatprep.subr.mxu0 0.0
    %284 = vmatpush1.msra.mxu0 0.0
    %285 = vmatprep.subr.mxu0 0.0
    %286 = vmatpush1.msra.mxu0 0.0
    %287 = vmatprep.subr.mxu0 0.0
    %288 = vmatpush1.msra.mxu0 0.0
    %289 = vmatprep.subr.mxu0 0.0
    %290 = vmatpush1.msra.mxu0 0.0
    %291 = vmatprep.subr.mxu0 0.0
    %292 = vmatpush1.msra.mxu0 0.0
    %293 = vmatprep.subr.mxu0 0.0
    %294 = vmatpush1.msra.mxu0 0.0
    %295 = vmatprep.subr.mxu0 0.0
    %296 = vmatpush1.msra.mxu0 0.0
    %297 = vmatprep.subr.mxu0 0.0
    %298 = vmatpush1.msra.mxu0 0.0
    %299 = vmatprep.subr.mxu0 0.0
    %300 = vmatpush1.msra.mxu0 0.0
    %301 = vmatprep.subr.mxu0 0.0
    %302 = vmatpush1.msra.mxu0 0.0
    %303 = vmatprep.subr.mxu0 0.0
    %304 = vmatpush1.msra.mxu0 0.0
    %305 = vmatprep.subr.mxu0 0.0
    %306 = vmatpush1.msra.mxu0 0.0
    %307 = vmatprep.subr.mxu0 0.0
    %308 = vmatpush1.msra.mxu0 0.0
    %309 = vmatprep.subr.mxu0 0.0
    %310 = vmatpush1.msra.mxu0 0.0
    %311 = vmatprep.subr.mxu0 0.0
    %312 = vmatpush1.msra.mxu0 0.0
    %313 = vmatprep.subr.mxu0 0.0
    %314 = vmatpush1.msra.mxu0 0.0
    %315 = vmatprep.subr.mxu0 0.0
    %316 = vmatpush1.msra.mxu0 0.0
    %317 = vmatprep.subr.mxu0 0.0
    %318 = vmatpush1.msra.mxu0 0.0
    %319 = vmatprep.subr.mxu0 0.0
    %320 = vmatpush1.msra.mxu0 0.0
    %321 = vmatprep.subr.mxu0 0.0
    %322 = vmatpush1.msra.mxu0 0.0
    %323 = vmatprep.subr.mxu0 0.0
    %324 = vmatpush1.msra.mxu0 0.0
    %325 = vmatprep.subr.mxu0 0.0
    %326 = vmatpush1.msra.mxu0 0.0
    %327 = vmatprep.subr.mxu0 0.0
    %328 = vmatpush1.msra.mxu0 0.0
    %329 = vmatprep.subr.mxu0 0.0
    %330 = vmatpush1.msra.mxu0 0.0
    %331 = vmatprep.subr.mxu0 0.0
    %332 = vmatpush1.msra.mxu0 0.0
    %333 = vmatprep.subr.mxu0 0.0
    %334 = vmatpush1.msra.mxu0 0.0
    %335 = vmatprep.mubr.f32.mxu0 0.0
    %336 = vmatmul.mubr.f32.gmra.mrb[0].mxu0 %v269
    %v337 = vpop.f32.mrb[0].mxu0
    %v338 = vadd.f32 0.0, %v337
    %v339 = vpop.f32.mrb[0].mxu0
    %340 = vdwg.mxu0
    %v341 = vadd.f32 %v218, %v338
    %v342 = vmul.f32 %v341, 0.5
    %v343 = vtanh.pop %v342
    %v344 = vmul.f32 %v343, 0.5
    %v345 = vadd.f32 %v344, 0.5
    %346 = vmatprep.subr.mxu0 0.0
    %347 = vmatpush1.msra.mxu0 %v233
    %348 = vmatprep.subr.mxu0 0.0
    %349 = vmatpush1.msra.mxu0 %v234
    %350 = vmatprep.subr.mxu0 0.0
    %351 = vmatpush1.msra.mxu0 %v235
    %352 = vmatprep.subr.mxu0 0.0
    %353 = vmatpush1.msra.mxu0 %v236
    %354 = vmatprep.subr.mxu0 0.0
    %355 = vmatpush1.msra.mxu0 0.0
    %356 = vmatprep.subr.mxu0 0.0
    %357 = vmatpush1.msra.mxu0 0.0
    %358 = vmatprep.subr.mxu0 0.0
    %359 = vmatpush1.msra.mxu0 0.0
    %360 = vmatprep.subr.mxu0 0.0
    %361 = vmatpush1.msra.mxu0 0.0
    %362 = vmatprep.subr.mxu0 0.0
    %363 = vmatpush1.msra.mxu0 0.0
    %364 = vmatprep.subr.mxu0 0.0
    %365 = vmatpush1.msra.mxu0 0.0
    %366 = vmatprep.subr.mxu0 0.0
    %367 = vmatpush1.msra.mxu0 0.0
    %368 = vmatprep.subr.mxu0 0.0
    %369 = vmatpush1.msra.mxu0 0.0
    %370 = vmatprep.subr.mxu0 0.0
    %371 = vmatpush1.msra.mxu0 0.0
    %372 = vmatprep.subr.mxu0 0.0
    %373 = vmatpush1.msra.mxu0 0.0
    %374 = vmatprep.subr.mxu0 0.0
    %375 = vmatpush1.msra.mxu0 0.0
    %376 = vmatprep.subr.mxu0 0.0
    %377 = vmatpush1.msra.mxu0 0.0
    %378 = vmatprep.subr.mxu0 0.0
    %379 = vmatpush1.msra.mxu0 0.0
    %380 = vmatprep.subr.mxu0 0.0
    %381 = vmatpush1.msra.mxu0 0.0
    %382 = vmatprep.subr.mxu0 0.0
    %383 = vmatpush1.msra.mxu0 0.0
    %384 = vmatprep.subr.mxu0 0.0
    %385 = vmatpush1.msra.mxu0 0.0
    %386 = vmatprep.subr.mxu0 0.0
    %387 = vmatpush1.msra.mxu0 0.0
    %388 = vmatprep.subr.mxu0 0.0
    %389 = vmatpush1.msra.mxu0 0.0
    %390 = vmatprep.subr.mxu0 0.0
    %391 = vmatpush1.msra.mxu0 0.0
    %392 = vmatprep.subr.mxu0 0.0
    %393 = vmatpush1.msra.mxu0 0.0
    %394 = vmatprep.subr.mxu0 0.0
    %395 = vmatpush1.msra.mxu0 0.0
    %396 = vmatprep.subr.mxu0 0.0
    %397 = vmatpush1.msra.mxu0 0.0
    %398 = vmatprep.subr.mxu0 0.0
    %399 = vmatpush1.msra.mxu0 0.0
    %400 = vmatprep.subr.mxu0 0.0
    %401 = vmatpush1.msra.mxu0 0.0
    %402 = vmatprep.subr.mxu0 0.0
    %403 = vmatpush1.msra.mxu0 0.0
    %404 = vmatprep.subr.mxu0 0.0
    %405 = vmatpush1.msra.mxu0 0.0
    %406 = vmatprep.subr.mxu0 0.0
    %407 = vmatpush1.msra.mxu0 0.0
    %408 = vmatprep.subr.mxu0 0.0
    %409 = vmatpush1.msra.mxu0 0.0
    %410 = vmatprep.mubr.f32.mxu0 0.0
    %411 = vmatmul.mubr.f32.gmra.mrb[0].mxu0 %v269
    %v412 = vpop.f32.mrb[0].mxu0
    %v413 = vadd.f32 0.0, %v412
    %v414 = vpop.f32.mrb[0].mxu0
    %415 = vdwg.mxu0
    %417 = vrot.lane.b32.xlu0 %v413, 32
    %v418 = vpop.permute.xlu0 %417
    %v420 = vadd.f32 %v218, %v418
    %v421 = vmul.f32 %v420, 0.5
    %v422 = vtanh.pop %v421
    %v423 = vmul.f32 %v422, 0.5
    %v424 = vadd.f32 %v423, 0.5
    %425 = vmatprep.subr.mxu0 0.0
    %426 = vmatpush1.msra.mxu0 %v238
    %427 = vmatprep.subr.mxu0 0.0
    %428 = vmatpush1.msra.mxu0 %v239
    %429 = vmatprep.subr.mxu0 0.0
    %430 = vmatpush1.msra.mxu0 %v240
    %431 = vmatprep.subr.mxu0 0.0
    %432 = vmatpush1.msra.mxu0 %v241
    %433 = vmatprep.subr.mxu0 0.0
    %434 = vmatpush1.msra.mxu0 0.0
    %435 = vmatprep.subr.mxu0 0.0
    %436 = vmatpush1.msra.mxu0 0.0
    %437 = vmatprep.subr.mxu0 0.0
    %438 = vmatpush1.msra.mxu0 0.0
    %439 = vmatprep.subr.mxu0 0.0
    %440 = vmatpush1.msra.mxu0 0.0
    %441 = vmatprep.subr.mxu0 0.0
    %442 = vmatpush1.msra.mxu0 0.0
    %443 = vmatprep.subr.mxu0 0.0
    %444 = vmatpush1.msra.mxu0 0.0
    %445 = vmatprep.subr.mxu0 0.0
    %446 = vmatpush1.msra.mxu0 0.0
    %447 = vmatprep.subr.mxu0 0.0
    %448 = vmatpush1.msra.mxu0 0.0
    %449 = vmatprep.subr.mxu0 0.0
    %450 = vmatpush1.msra.mxu0 0.0
    %451 = vmatprep.subr.mxu0 0.0
    %452 = vmatpush1.msra.mxu0 0.0
    %453 = vmatprep.subr.mxu0 0.0
    %454 = vmatpush1.msra.mxu0 0.0
    %455 = vmatprep.subr.mxu0 0.0
    %456 = vmatpush1.msra.mxu0 0.0
    %457 = vmatprep.subr.mxu0 0.0
    %458 = vmatpush1.msra.mxu0 0.0
    %459 = vmatprep.subr.mxu0 0.0
    %460 = vmatpush1.msra.mxu0 0.0
    %461 = vmatprep.subr.mxu0 0.0
    %462 = vmatpush1.msra.mxu0 0.0
    %463 = vmatprep.subr.mxu0 0.0
    %464 = vmatpush1.msra.mxu0 0.0
    %465 = vmatprep.subr.mxu0 0.0
    %466 = vmatpush1.msra.mxu0 0.0
    %467 = vmatprep.subr.mxu0 0.0
    %468 = vmatpush1.msra.mxu0 0.0
    %469 = vmatprep.subr.mxu0 0.0
    %470 = vmatpush1.msra.mxu0 0.0
    %471 = vmatprep.subr.mxu0 0.0
    %472 = vmatpush1.msra.mxu0 0.0
    %473 = vmatprep.subr.mxu0 0.0
    %474 = vmatpush1.msra.mxu0 0.0
    %475 = vmatprep.subr.mxu0 0.0
    %476 = vmatpush1.msra.mxu0 0.0
    %477 = vmatprep.subr.mxu0 0.0
    %478 = vmatpush1.msra.mxu0 0.0
    %479 = vmatprep.subr.mxu0 0.0
    %480 = vmatpush1.msra.mxu0 0.0
    %481 = vmatprep.subr.mxu0 0.0
    %482 = vmatpush1.msra.mxu0 0.0
    %483 = vmatprep.subr.mxu0 0.0
    %484 = vmatpush1.msra.mxu0 0.0
    %485 = vmatprep.subr.mxu0 0.0
    %486 = vmatpush1.msra.mxu0 0.0
    %487 = vmatprep.subr.mxu0 0.0
    %488 = vmatpush1.msra.mxu0 0.0
    %489 = vmatprep.mubr.f32.mxu0 0.0
    %490 = vmatmul.mubr.f32.gmra.mrb[0].mxu0 %v269
    %v491 = vpop.f32.mrb[0].mxu0
    %v492 = vadd.f32 0.0, %v491
    %v493 = vpop.f32.mrb[0].mxu0
    %494 = vdwg.mxu0
    %496 = vrot.lane.b32.xlu0 %v492, 64
    %v497 = vpop.permute.xlu0 %496
    %v499 = vadd.f32 %v218, %v497
    %v500 = vtanh.pop %v499
    %501 = vmatprep.subr.mxu0 0.0
    %502 = vmatpush1.msra.mxu0 %v243
    %503 = vmatprep.subr.mxu0 0.0
    %504 = vmatpush1.msra.mxu0 %v244
    %505 = vmatprep.subr.mxu0 0.0
    %506 = vmatpush1.msra.mxu0 %v245
    %507 = vmatprep.subr.mxu0 0.0
    %508 = vmatpush1.msra.mxu0 %v246
    %509 = vmatprep.subr.mxu0 0.0
    %510 = vmatpush1.msra.mxu0 0.0
    %511 = vmatprep.subr.mxu0 0.0
    %512 = vmatpush1.msra.mxu0 0.0
    %513 = vmatprep.subr.mxu0 0.0
    %514 = vmatpush1.msra.mxu0 0.0
    %515 = vmatprep.subr.mxu0 0.0
    %516 = vmatpush1.msra.mxu0 0.0
    %517 = vmatprep.subr.mxu0 0.0
    %518 = vmatpush1.msra.mxu0 0.0
    %519 = vmatprep.subr.mxu0 0.0
    %520 = vmatpush1.msra.mxu0 0.0
    %521 = vmatprep.subr.mxu0 0.0
    %522 = vmatpush1.msra.mxu0 0.0
    %523 = vmatprep.subr.mxu0 0.0
    %524 = vmatpush1.msra.mxu0 0.0
    %525 = vmatprep.subr.mxu0 0.0
    %526 = vmatpush1.msra.mxu0 0.0
    %527 = vmatprep.subr.mxu0 0.0
    %528 = vmatpush1.msra.mxu0 0.0
    %529 = vmatprep.subr.mxu0 0.0
    %530 = vmatpush1.msra.mxu0 0.0
    %531 = vmatprep.subr.mxu0 0.0
    %532 = vmatpush1.msra.mxu0 0.0
    %533 = vmatprep.subr.mxu0 0.0
    %534 = vmatpush1.msra.mxu0 0.0
    %535 = vmatprep.subr.mxu0 0.0
    %536 = vmatpush1.msra.mxu0 0.0
    %537 = vmatprep.subr.mxu0 0.0
    %538 = vmatpush1.msra.mxu0 0.0
    %539 = vmatprep.subr.mxu0 0.0
    %540 = vmatpush1.msra.mxu0 0.0
    %541 = vmatprep.subr.mxu0 0.0
    %542 = vmatpush1.msra.mxu0 0.0
    %543 = vmatprep.subr.mxu0 0.0
    %544 = vmatpush1.msra.mxu0 0.0
    %545 = vmatprep.subr.mxu0 0.0
    %546 = vmatpush1.msra.mxu0 0.0
    %547 = vmatprep.subr.mxu0 0.0
    %548 = vmatpush1.msra.mxu0 0.0
    %549 = vmatprep.subr.mxu0 0.0
    %550 = vmatpush1.msra.mxu0 0.0
    %551 = vmatprep.subr.mxu0 0.0
    %552 = vmatpush1.msra.mxu0 0.0
    %553 = vmatprep.subr.mxu0 0.0
    %554 = vmatpush1.msra.mxu0 0.0
    %555 = vmatprep.subr.mxu0 0.0
    %556 = vmatpush1.msra.mxu0 0.0
    %557 = vmatprep.subr.mxu0 0.0
    %558 = vmatpush1.msra.mxu0 0.0
    %559 = vmatprep.subr.mxu0 0.0
    %560 = vmatpush1.msra.mxu0 0.0
    %561 = vmatprep.subr.mxu0 0.0
    %562 = vmatpush1.msra.mxu0 0.0
    %563 = vmatprep.subr.mxu0 0.0
    %564 = vmatpush1.msra.mxu0 0.0
    %565 = vmatprep.mubr.f32.mxu0 0.0
    %566 = vmatmul.mubr.f32.gmra.mrb[0].mxu0 %v269
    %v567 = vpop.f32.mrb[0].mxu0
    %v568 = vadd.f32 0.0, %v567
    %v569 = vpop.f32.mrb[0].mxu0
    %570 = vdwg.mxu0
    %572 = vrot.lane.b32.xlu0 %v568, 96
    %v573 = vpop.permute.xlu0 %572
    %v575 = vadd.f32 %v218, %v573
    %v576 = vmul.f32 %v575, 0.5
    %v577 = vtanh.pop %v576
    %v578 = vmul.f32 %v577, 0.5
    %v579 = vadd.f32 %v578, 0.5
    %v580 = vmul.f32 %v424, 0.0
    %582 = vrot.lane.b32.xlu0 %v500, 64
    %v583 = vpop.permute.xlu0 %582
    %v585 = vmul.f32 %v345, %v583
    %587 = vrot.lane.b32.xlu0 %v585, 32
    %v588 = vpop.permute.xlu0 %587
    %v590 = vadd.f32 %v580, %v588
    %v591 = vtanh.pop %v590
    %593 = vrot.lane.b32.xlu0 %v591, 64
    %v594 = vpop.permute.xlu0 %593
    %v596 = vmul.f32 %v579, %v594
    %597 = vmatprep.subr.mxu0 0.0
    %598 = vmatpush1.msra.mxu0 %v248
    %599 = vmatprep.subr.mxu0 0.0
    %600 = vmatpush1.msra.mxu0 %v249
    %601 = vmatprep.subr.mxu0 0.0
    %602 = vmatpush1.msra.mxu0 %v250
    %603 = vmatprep.subr.mxu0 0.0
    %604 = vmatpush1.msra.mxu0 %v251
    %605 = vmatprep.subr.mxu0 0.0
    %606 = vmatpush1.msra.mxu0 0.0
    %607 = vmatprep.subr.mxu0 0.0
    %608 = vmatpush1.msra.mxu0 0.0
    %609 = vmatprep.subr.mxu0 0.0
    %610 = vmatpush1.msra.mxu0 0.0
    %611 = vmatprep.subr.mxu0 0.0
    %612 = vmatpush1.msra.mxu0 0.0
    %613 = vmatprep.subr.mxu0 0.0
    %614 = vmatpush1.msra.mxu0 0.0
    %615 = vmatprep.subr.mxu0 0.0
    %616 = vmatpush1.msra.mxu0 0.0
    %617 = vmatprep.subr.mxu0 0.0
    %618 = vmatpush1.msra.mxu0 0.0
    %619 = vmatprep.subr.mxu0 0.0
    %620 = vmatpush1.msra.mxu0 0.0
    %621 = vmatprep.subr.mxu0 0.0
    %622 = vmatpush1.msra.mxu0 0.0
    %623 = vmatprep.subr.mxu0 0.0
    %624 = vmatpush1.msra.mxu0 0.0
    %625 = vmatprep.subr.mxu0 0.0
    %626 = vmatpush1.msra.mxu0 0.0
    %627 = vmatprep.subr.mxu0 0.0
    %628 = vmatpush1.msra.mxu0 0.0
    %629 = vmatprep.subr.mxu0 0.0
    %630 = vmatpush1.msra.mxu0 0.0
    %631 = vmatprep.subr.mxu0 0.0
    %632 = vmatpush1.msra.mxu0 0.0
    %633 = vmatprep.subr.mxu0 0.0
    %634 = vmatpush1.msra.mxu0 0.0
    %635 = vmatprep.subr.mxu0 0.0
    %636 = vmatpush1.msra.mxu0 0.0
    %637 = vmatprep.subr.mxu0 0.0
    %638 = vmatpush1.msra.mxu0 0.0
    %639 = vmatprep.subr.mxu0 0.0
    %640 = vmatpush1.msra.mxu0 0.0
    %641 = vmatprep.subr.mxu0 0.0
    %642 = vmatpush1.msra.mxu0 0.0
    %643 = vmatprep.subr.mxu0 0.0
    %644 = vmatpush1.msra.mxu0 0.0
    %645 = vmatprep.subr.mxu0 0.0
    %646 = vmatpush1.msra.mxu0 0.0
    %647 = vmatprep.subr.mxu0 0.0
    %648 = vmatpush1.msra.mxu0 0.0
    %649 = vmatprep.subr.mxu0 0.0
    %650 = vmatpush1.msra.mxu0 0.0
    %651 = vmatprep.subr.mxu0 0.0
    %652 = vmatpush1.msra.mxu0 0.0
    %653 = vmatprep.subr.mxu0 0.0
    %654 = vmatpush1.msra.mxu0 0.0
    %655 = vmatprep.subr.mxu0 0.0
    %656 = vmatpush1.msra.mxu0 0.0
    %657 = vmatprep.subr.mxu0 0.0
    %658 = vmatpush1.msra.mxu0 0.0
    %659 = vmatprep.subr.mxu0 0.0
    %660 = vmatpush1.msra.mxu0 0.0
    %661 = vmatprep.mubr.f32.mxu0 0.0
    %662 = vmatmul.mubr.f32.gmra.mrb[0].mxu0 %v269
    %v663 = vpop.f32.mrb[0].mxu0
    %v664 = vadd.f32 0.0, %v663
    %v665 = vpop.f32.mrb[0].mxu0
    %666 = vdwg.mxu0
    %v668 = vrot.slane %v664, 2
    %v670 = vadd.f32 %v226, %v668
    %v671 = vmul.f32 %v670, 0.5
    %v672 = vtanh.pop %v671
    %v673 = vmul.f32 %v672, 0.5
    %v674 = vadd.f32 %v673, 0.5
    %675 = vmatprep.subr.mxu0 0.0
    %676 = vmatpush1.msra.mxu0 %v253
    %677 = vmatprep.subr.mxu0 0.0
    %678 = vmatpush1.msra.mxu0 %v254
    %679 = vmatprep.subr.mxu0 0.0
    %680 = vmatpush1.msra.mxu0 %v255
    %681 = vmatprep.subr.mxu0 0.0
    %682 = vmatpush1.msra.mxu0 %v256
    %683 = vmatprep.subr.mxu0 0.0
    %684 = vmatpush1.msra.mxu0 0.0
    %685 = vmatprep.subr.mxu0 0.0
    %686 = vmatpush1.msra.mxu0 0.0
    %687 = vmatprep.subr.mxu0 0.0
    %688 = vmatpush1.msra.mxu0 0.0
    %689 = vmatprep.subr.mxu0 0.0
    %690 = vmatpush1.msra.mxu0 0.0
    %691 = vmatprep.subr.mxu0 0.0
    %692 = vmatpush1.msra.mxu0 0.0
    %693 = vmatprep.subr.mxu0 0.0
    %694 = vmatpush1.msra.mxu0 0.0
    %695 = vmatprep.subr.mxu0 0.0
    %696 = vmatpush1.msra.mxu0 0.0
    %697 = vmatprep.subr.mxu0 0.0
    %698 = vmatpush1.msra.mxu0 0.0
    %699 = vmatprep.subr.mxu0 0.0
    %700 = vmatpush1.msra.mxu0 0.0
    %701 = vmatprep.subr.mxu0 0.0
    %702 = vmatpush1.msra.mxu0 0.0
    %703 = vmatprep.subr.mxu0 0.0
    %704 = vmatpush1.msra.mxu0 0.0
    %705 = vmatprep.subr.mxu0 0.0
    %706 = vmatpush1.msra.mxu0 0.0
    %707 = vmatprep.subr.mxu0 0.0
    %708 = vmatpush1.msra.mxu0 0.0
    %709 = vmatprep.subr.mxu0 0.0
    %710 = vmatpush1.msra.mxu0 0.0
    %711 = vmatprep.subr.mxu0 0.0
    %712 = vmatpush1.msra.mxu0 0.0
    %713 = vmatprep.subr.mxu0 0.0
    %714 = vmatpush1.msra.mxu0 0.0
    %715 = vmatprep.subr.mxu0 0.0
    %716 = vmatpush1.msra.mxu0 0.0
    %717 = vmatprep.subr.mxu0 0.0
    %718 = vmatpush1.msra.mxu0 0.0
    %719 = vmatprep.subr.mxu0 0.0
    %720 = vmatpush1.msra.mxu0 0.0
    %721 = vmatprep.subr.mxu0 0.0
    %722 = vmatpush1.msra.mxu0 0.0
    %723 = vmatprep.subr.mxu0 0.0
    %724 = vmatpush1.msra.mxu0 0.0
    %725 = vmatprep.subr.mxu0 0.0
    %726 = vmatpush1.msra.mxu0 0.0
    %727 = vmatprep.subr.mxu0 0.0
    %728 = vmatpush1.msra.mxu0 0.0
    %729 = vmatprep.subr.mxu0 0.0
    %730 = vmatpush1.msra.mxu0 0.0
    %731 = vmatprep.subr.mxu0 0.0
    %732 = vmatpush1.msra.mxu0 0.0
    %733 = vmatprep.subr.mxu0 0.0
    %734 = vmatpush1.msra.mxu0 0.0
    %735 = vmatprep.subr.mxu0 0.0
    %736 = vmatpush1.msra.mxu0 0.0
    %737 = vmatprep.subr.mxu0 0.0
    %738 = vmatpush1.msra.mxu0 0.0
    %739 = vmatprep.mubr.f32.mxu0 0.0
    %740 = vmatmul.mubr.f32.gmra.mrb[0].mxu0 %v269
    %v741 = vpop.f32.mrb[0].mxu0
    %v742 = vadd.f32 0.0, %v741
    %v743 = vpop.f32.mrb[0].mxu0
    %744 = vdwg.mxu0
    %v746 = vrot.slane %v742, 2
    %747 = vrot.lane.b32.xlu0 %v746, 32
    %v748 = vpop.permute.xlu0 %747
    %v750 = vadd.f32 %v226, %v748
    %v751 = vmul.f32 %v750, 0.5
    %v752 = vtanh.pop %v751
    %v753 = vmul.f32 %v752, 0.5
    %v754 = vadd.f32 %v753, 0.5
    %755 = vmatprep.subr.mxu0 0.0
    %756 = vmatpush1.msra.mxu0 %v258
    %757 = vmatprep.subr.mxu0 0.0
    %758 = vmatpush1.msra.mxu0 %v259
    %759 = vmatprep.subr.mxu0 0.0
    %760 = vmatpush1.msra.mxu0 %v260
    %761 = vmatprep.subr.mxu0 0.0
    %762 = vmatpush1.msra.mxu0 %v261
    %763 = vmatprep.subr.mxu0 0.0
    %764 = vmatpush1.msra.mxu0 0.0
    %765 = vmatprep.subr.mxu0 0.0
    %766 = vmatpush1.msra.mxu0 0.0
    %767 = vmatprep.subr.mxu0 0.0
    %768 = vmatpush1.msra.mxu0 0.0
    %769 = vmatprep.subr.mxu0 0.0
    %770 = vmatpush1.msra.mxu0 0.0
    %771 = vmatprep.subr.mxu0 0.0
    %772 = vmatpush1.msra.mxu0 0.0
    %773 = vmatprep.subr.mxu0 0.0
    %774 = vmatpush1.msra.mxu0 0.0
    %775 = vmatprep.subr.mxu0 0.0
    %776 = vmatpush1.msra.mxu0 0.0
    %777 = vmatprep.subr.mxu0 0.0
    %778 = vmatpush1.msra.mxu0 0.0
    %779 = vmatprep.subr.mxu0 0.0
    %780 = vmatpush1.msra.mxu0 0.0
    %781 = vmatprep.subr.mxu0 0.0
    %782 = vmatpush1.msra.mxu0 0.0
    %783 = vmatprep.subr.mxu0 0.0
    %784 = vmatpush1.msra.mxu0 0.0
    %785 = vmatprep.subr.mxu0 0.0
    %786 = vmatpush1.msra.mxu0 0.0
    %787 = vmatprep.subr.mxu0 0.0
    %788 = vmatpush1.msra.mxu0 0.0
    %789 = vmatprep.subr.mxu0 0.0
    %790 = vmatpush1.msra.mxu0 0.0
    %791 = vmatprep.subr.mxu0 0.0
    %792 = vmatpush1.msra.mxu0 0.0
    %793 = vmatprep.subr.mxu0 0.0
    %794 = vmatpush1.msra.mxu0 0.0
    %795 = vmatprep.subr.mxu0 0.0
    %796 = vmatpush1.msra.mxu0 0.0
    %797 = vmatprep.subr.mxu0 0.0
    %798 = vmatpush1.msra.mxu0 0.0
    %799 = vmatprep.subr.mxu0 0.0
    %800 = vmatpush1.msra.mxu0 0.0
    %801 = vmatprep.subr.mxu0 0.0
    %802 = vmatpush1.msra.mxu0 0.0
    %803 = vmatprep.subr.mxu0 0.0
    %804 = vmatpush1.msra.mxu0 0.0
    %805 = vmatprep.subr.mxu0 0.0
    %806 = vmatpush1.msra.mxu0 0.0
    %807 = vmatprep.subr.mxu0 0.0
    %808 = vmatpush1.msra.mxu0 0.0
    %809 = vmatprep.subr.mxu0 0.0
    %810 = vmatpush1.msra.mxu0 0.0
    %811 = vmatprep.subr.mxu0 0.0
    %812 = vmatpush1.msra.mxu0 0.0
    %813 = vmatprep.subr.mxu0 0.0
    %814 = vmatpush1.msra.mxu0 0.0
    %815 = vmatprep.subr.mxu0 0.0
    %816 = vmatpush1.msra.mxu0 0.0
    %817 = vmatprep.subr.mxu0 0.0
    %818 = vmatpush1.msra.mxu0 0.0
    %819 = vmatprep.mubr.f32.mxu0 0.0
    %820 = vmatmul.mubr.f32.gmra.mrb[0].mxu0 %v269
    %v821 = vpop.f32.mrb[0].mxu0
    %v822 = vadd.f32 0.0, %v821
    %v823 = vpop.f32.mrb[0].mxu0
    %824 = vdwg.mxu0
    %v826 = vrot.slane %v822, 2
    %827 = vrot.lane.b32.xlu0 %v826, 64
    %v828 = vpop.permute.xlu0 %827
    %v830 = vadd.f32 %v226, %v828
    %v831 = vtanh.pop %v830
    %832 = vmatprep.subr.mxu0 0.0
    %833 = vmatpush1.msra.mxu0 %v263
    %834 = vmatprep.subr.mxu0 0.0
    %835 = vmatpush1.msra.mxu0 %v264
    %836 = vmatprep.subr.mxu0 0.0
    %837 = vmatpush1.msra.mxu0 %v265
    %838 = vmatprep.subr.mxu0 0.0
    %839 = vmatpush1.msra.mxu0 %v266
    %840 = vmatprep.subr.mxu0 0.0
    %841 = vmatpush1.msra.mxu0 0.0
    %842 = vmatprep.subr.mxu0 0.0
    %843 = vmatpush1.msra.mxu0 0.0
    %844 = vmatprep.subr.mxu0 0.0
    %845 = vmatpush1.msra.mxu0 0.0
    %846 = vmatprep.subr.mxu0 0.0
    %847 = vmatpush1.msra.mxu0 0.0
    %848 = vmatprep.subr.mxu0 0.0
    %849 = vmatpush1.msra.mxu0 0.0
    %850 = vmatprep.subr.mxu0 0.0
    %851 = vmatpush1.msra.mxu0 0.0
    %852 = vmatprep.subr.mxu0 0.0
    %853 = vmatpush1.msra.mxu0 0.0
    %854 = vmatprep.subr.mxu0 0.0
    %855 = vmatpush1.msra.mxu0 0.0
    %856 = vmatprep.subr.mxu0 0.0
    %857 = vmatpush1.msra.mxu0 0.0
    %858 = vmatprep.subr.mxu0 0.0
    %859 = vmatpush1.msra.mxu0 0.0
    %860 = vmatprep.subr.mxu0 0.0
    %861 = vmatpush1.msra.mxu0 0.0
    %862 = vmatprep.subr.mxu0 0.0
    %863 = vmatpush1.msra.mxu0 0.0
    %864 = vmatprep.subr.mxu0 0.0
    %865 = vmatpush1.msra.mxu0 0.0
    %866 = vmatprep.subr.mxu0 0.0
    %867 = vmatpush1.msra.mxu0 0.0
    %868 = vmatprep.subr.mxu0 0.0
    %869 = vmatpush1.msra.mxu0 0.0
    %870 = vmatprep.subr.mxu0 0.0
    %871 = vmatpush1.msra.mxu0 0.0
    %872 = vmatprep.subr.mxu0 0.0
    %873 = vmatpush1.msra.mxu0 0.0
    %874 = vmatprep.subr.mxu0 0.0
    %875 = vmatpush1.msra.mxu0 0.0
    %876 = vmatprep.subr.mxu0 0.0
    %877 = vmatpush1.msra.mxu0 0.0
    %878 = vmatprep.subr.mxu0 0.0
    %879 = vmatpush1.msra.mxu0 0.0
    %880 = vmatprep.subr.mxu0 0.0
    %881 = vmatpush1.msra.mxu0 0.0
    %882 = vmatprep.subr.mxu0 0.0
    %883 = vmatpush1.msra.mxu0 0.0
    %884 = vmatprep.subr.mxu0 0.0
    %885 = vmatpush1.msra.mxu0 0.0
    %886 = vmatprep.subr.mxu0 0.0
    %887 = vmatpush1.msra.mxu0 0.0
    %888 = vmatprep.subr.mxu0 0.0
    %889 = vmatpush1.msra.mxu0 0.0
    %890 = vmatprep.subr.mxu0 0.0
    %891 = vmatpush1.msra.mxu0 0.0
    %892 = vmatprep.subr.mxu0 0.0
    %893 = vmatpush1.msra.mxu0 0.0
    %894 = vmatprep.subr.mxu0 0.0
    %895 = vmatpush1.msra.mxu0 0.0
    %896 = vmatprep.mubr.f32.mxu0 0.0
    %897 = vmatmul.mubr.f32.gmra.mrb[0].mxu0 %v269
    %v898 = vpop.f32.mrb[0].mxu0
    %v899 = vadd.f32 0.0, %v898
    %v900 = vpop.f32.mrb[0].mxu0
    %901 = vdwg.mxu0
    %v903 = vrot.slane %v899, 2
    %904 = vrot.lane.b32.xlu0 %v903, 96
    %v905 = vpop.permute.xlu0 %904
    %v907 = vadd.f32 %v226, %v905
    %v908 = vmul.f32 %v907, 0.5
    %v909 = vtanh.pop %v908
    %v910 = vmul.f32 %v909, 0.5
    %v911 = vadd.f32 %v910, 0.5
    %v912 = vmul.f32 %v754, 0.0
    %914 = vrot.lane.b32.xlu0 %v831, 64
    %v915 = vpop.permute.xlu0 %914
    %v917 = vmul.f32 %v674, %v915
    %919 = vrot.lane.b32.xlu0 %v917, 32
    %v920 = vpop.permute.xlu0 %919
    %v922 = vadd.f32 %v912, %v920
    %v923 = vtanh.pop %v922
    %925 = vrot.lane.b32.xlu0 %v923, 64
    %v926 = vpop.permute.xlu0 %925
    %v928 = vmul.f32 %v911, %v926
    %930 = vrot.lane.b32.xlu0 %v596, 32
    %v931 = vpop.permute.xlu0 %930
    %v932 = vsel %vm267, %v931, 0
    %934 = vmatprep.subr.mxu0 0.0
    %935 = vmatpush1.msra.mxu0 %v228
    %936 = vmatprep.subr.mxu0 0.0
    %937 = vmatpush1.msra.mxu0 %v229
    %938 = vmatprep.subr.mxu0 0.0
    %939 = vmatpush1.msra.mxu0 %v230
    %940 = vmatprep.subr.mxu0 0.0
    %941 = vmatpush1.msra.mxu0 %v231
    %942 = vmatprep.subr.mxu0 0.0
    %943 = vmatpush1.msra.mxu0 0.0
    %944 = vmatprep.subr.mxu0 0.0
    %945 = vmatpush1.msra.mxu0 0.0
    %946 = vmatprep.subr.mxu0 0.0
    %947 = vmatpush1.msra.mxu0 0.0
    %948 = vmatprep.subr.mxu0 0.0
    %949 = vmatpush1.msra.mxu0 0.0
    %950 = vmatprep.subr.mxu0 0.0
    %951 = vmatpush1.msra.mxu0 0.0
    %952 = vmatprep.subr.mxu0 0.0
    %953 = vmatpush1.msra.mxu0 0.0
    %954 = vmatprep.subr.mxu0 0.0
    %955 = vmatpush1.msra.mxu0 0.0
    %956 = vmatprep.subr.mxu0 0.0
    %957 = vmatpush1.msra.mxu0 0.0
    %958 = vmatprep.subr.mxu0 0.0
    %959 = vmatpush1.msra.mxu0 0.0
    %960 = vmatprep.subr.mxu0 0.0
    %961 = vmatpush1.msra.mxu0 0.0
    %962 = vmatprep.subr.mxu0 0.0
    %963 = vmatpush1.msra.mxu0 0.0
    %964 = vmatprep.subr.mxu0 0.0
    %965 = vmatpush1.msra.mxu0 0.0
    %966 = vmatprep.subr.mxu0 0.0
    %967 = vmatpush1.msra.mxu0 0.0
    %968 = vmatprep.subr.mxu0 0.0
    %969 = vmatpush1.msra.mxu0 0.0
    %970 = vmatprep.subr.mxu0 0.0
    %971 = vmatpush1.msra.mxu0 0.0
    %972 = vmatprep.subr.mxu0 0.0
    %973 = vmatpush1.msra.mxu0 0.0
    %974 = vmatprep.subr.mxu0 0.0
    %975 = vmatpush1.msra.mxu0 0.0
    %976 = vmatprep.subr.mxu0 0.0
    %977 = vmatpush1.msra.mxu0 0.0
    %978 = vmatprep.subr.mxu0 0.0
    %979 = vmatpush1.msra.mxu0 0.0
    %980 = vmatprep.subr.mxu0 0.0
    %981 = vmatpush1.msra.mxu0 0.0
    %982 = vmatprep.subr.mxu0 0.0
    %983 = vmatpush1.msra.mxu0 0.0
    %984 = vmatprep.subr.mxu0 0.0
    %985 = vmatpush1.msra.mxu0 0.0
    %986 = vmatprep.subr.mxu0 0.0
    %987 = vmatpush1.msra.mxu0 0.0
    %988 = vmatprep.subr.mxu0 0.0
    %989 = vmatpush1.msra.mxu0 0.0
    %990 = vmatprep.subr.mxu0 0.0
    %991 = vmatpush1.msra.mxu0 0.0
    %992 = vmatprep.subr.mxu0 0.0
    %993 = vmatpush1.msra.mxu0 0.0
    %994 = vmatprep.subr.mxu0 0.0
    %995 = vmatpush1.msra.mxu0 0.0
    %996 = vmatprep.subr.mxu0 0.0
    %997 = vmatpush1.msra.mxu0 0.0
    %998 = vmatprep.mubr.f32.mxu0 0.0
    %999 = vmatmul.mubr.f32.gmra.mrb[0].mxu0 %v932
    %v1000 = vpop.f32.mrb[0].mxu0
    %v1001 = vadd.f32 0.0, %v1000
    %v1002 = vpop.f32.mrb[0].mxu0
    %1003 = vdwg.mxu0
    %v1005 = vrot.slane %v1001, 6
    %v1007 = vadd.f32 %v218, %v1005
    %v1008 = vmul.f32 %v1007, 0.5
    %v1009 = vtanh.pop %v1008
    %v1010 = vmul.f32 %v1009, 0.5
    %v1011 = vadd.f32 %v1010, 0.5
    %1012 = vmatprep.subr.mxu0 0.0
    %1013 = vmatpush1.msra.mxu0 %v233
    %1014 = vmatprep.subr.mxu0 0.0
    %1015 = vmatpush1.msra.mxu0 %v234
    %1016 = vmatprep.subr.mxu0 0.0
    %1017 = vmatpush1.msra.mxu0 %v235
    %1018 = vmatprep.subr.mxu0 0.0
    %1019 = vmatpush1.msra.mxu0 %v236
    %1020 = vmatprep.subr.mxu0 0.0
    %1021 = vmatpush1.msra.mxu0 0.0
    %1022 = vmatprep.subr.mxu0 0.0
    %1023 = vmatpush1.msra.mxu0 0.0
    %1024 = vmatprep.subr.mxu0 0.0
    %1025 = vmatpush1.msra.mxu0 0.0
    %1026 = vmatprep.subr.mxu0 0.0
    %1027 = vmatpush1.msra.mxu0 0.0
    %1028 = vmatprep.subr.mxu0 0.0
    %1029 = vmatpush1.msra.mxu0 0.0
    %1030 = vmatprep.subr.mxu0 0.0
    %1031 = vmatpush1.msra.mxu0 0.0
    %1032 = vmatprep.subr.mxu0 0.0
    %1033 = vmatpush1.msra.mxu0 0.0
    %1034 = vmatprep.subr.mxu0 0.0
    %1035 = vmatpush1.msra.mxu0 0.0
    %1036 = vmatprep.subr.mxu0 0.0
    %1037 = vmatpush1.msra.mxu0 0.0
    %1038 = vmatprep.subr.mxu0 0.0
    %1039 = vmatpush1.msra.mxu0 0.0
    %1040 = vmatprep.subr.mxu0 0.0
    %1041 = vmatpush1.msra.mxu0 0.0
    %1042 = vmatprep.subr.mxu0 0.0
    %1043 = vmatpush1.msra.mxu0 0.0
    %1044 = vmatprep.subr.mxu0 0.0
    %1045 = vmatpush1.msra.mxu0 0.0
    %1046 = vmatprep.subr.mxu0 0.0
    %1047 = vmatpush1.msra.mxu0 0.0
    %1048 = vmatprep.subr.mxu0 0.0
    %1049 = vmatpush1.msra.mxu0 0.0
    %1050 = vmatprep.subr.mxu0 0.0
    %1051 = vmatpush1.msra.mxu0 0.0
    %1052 = vmatprep.subr.mxu0 0.0
    %1053 = vmatpush1.msra.mxu0 0.0
    %1054 = vmatprep.subr.mxu0 0.0
    %1055 = vmatpush1.msra.mxu0 0.0
    %1056 = vmatprep.subr.mxu0 0.0
    %1057 = vmatpush1.msra.mxu0 0.0
    %1058 = vmatprep.subr.mxu0 0.0
    %1059 = vmatpush1.msra.mxu0 0.0
    %1060 = vmatprep.subr.mxu0 0.0
    %1061 = vmatpush1.msra.mxu0 0.0
    %1062 = vmatprep.subr.mxu0 0.0
    %1063 = vmatpush1.msra.mxu0 0.0
    %1064 = vmatprep.subr.mxu0 0.0
    %1065 = vmatpush1.msra.mxu0 0.0
    %1066 = vmatprep.subr.mxu0 0.0
    %1067 = vmatpush1.msra.mxu0 0.0
    %1068 = vmatprep.subr.mxu0 0.0
    %1069 = vmatpush1.msra.mxu0 0.0
    %1070 = vmatprep.subr.mxu0 0.0
    %1071 = vmatpush1.msra.mxu0 0.0
    %1072 = vmatprep.subr.mxu0 0.0
    %1073 = vmatpush1.msra.mxu0 0.0
    %1074 = vmatprep.subr.mxu0 0.0
    %1075 = vmatpush1.msra.mxu0 0.0
    %1076 = vmatprep.mubr.f32.mxu0 0.0
    %1077 = vmatmul.mubr.f32.gmra.mrb[0].mxu0 %v932
    %v1078 = vpop.f32.mrb[0].mxu0
    %v1079 = vadd.f32 0.0, %v1078
    %v1080 = vpop.f32.mrb[0].mxu0
    %1081 = vdwg.mxu0
    %v1083 = vrot.slane %v1079, 6
    %1084 = vrot.lane.b32.xlu0 %v1083, 32
    %v1085 = vpop.permute.xlu0 %1084
    %v1087 = vadd.f32 %v218, %v1085
    %v1088 = vmul.f32 %v1087, 0.5
    %v1089 = vtanh.pop %v1088
    %v1090 = vmul.f32 %v1089, 0.5
    %v1091 = vadd.f32 %v1090, 0.5
    %1092 = vmatprep.subr.mxu0 0.0
    %1093 = vmatpush1.msra.mxu0 %v238
    %1094 = vmatprep.subr.mxu0 0.0
    %1095 = vmatpush1.msra.mxu0 %v239
    %1096 = vmatprep.subr.mxu0 0.0
    %1097 = vmatpush1.msra.mxu0 %v240
    %1098 = vmatprep.subr.mxu0 0.0
    %1099 = vmatpush1.msra.mxu0 %v241
    %1100 = vmatprep.subr.mxu0 0.0
    %1101 = vmatpush1.msra.mxu0 0.0
    %1102 = vmatprep.subr.mxu0 0.0
    %1103 = vmatpush1.msra.mxu0 0.0
    %1104 = vmatprep.subr.mxu0 0.0
    %1105 = vmatpush1.msra.mxu0 0.0
    %1106 = vmatprep.subr.mxu0 0.0
    %1107 = vmatpush1.msra.mxu0 0.0
    %1108 = vmatprep.subr.mxu0 0.0
    %1109 = vmatpush1.msra.mxu0 0.0
    %1110 = vmatprep.subr.mxu0 0.0
    %1111 = vmatpush1.msra.mxu0 0.0
    %1112 = vmatprep.subr.mxu0 0.0
    %1113 = vmatpush1.msra.mxu0 0.0
    %1114 = vmatprep.subr.mxu0 0.0
    %1115 = vmatpush1.msra.mxu0 0.0
    %1116 = vmatprep.subr.mxu0 0.0
    %1117 = vmatpush1.msra.mxu0 0.0
    %1118 = vmatprep.subr.mxu0 0.0
    %1119 = vmatpush1.msra.mxu0 0.0
    %1120 = vmatprep.subr.mxu0 0.0
    %1121 = vmatpush1.msra.mxu0 0.0
    %1122 = vmatprep.subr.mxu0 0.0
    %1123 = vmatpush1.msra.mxu0 0.0
    %1124 = vmatprep.subr.mxu0 0.0
    %1125 = vmatpush1.msra.mxu0 0.0
    %1126 = vmatprep.subr.mxu0 0.0
    %1127 = vmatpush1.msra.mxu0 0.0
    %1128 = vmatprep.subr.mxu0 0.0
    %1129 = vmatpush1.msra.mxu0 0.0
    %1130 = vmatprep.subr.mxu0 0.0
    %1131 = vmatpush1.msra.mxu0 0.0
    %1132 = vmatprep.subr.mxu0 0.0
    %1133 = vmatpush1.msra.mxu0 0.0
    %1134 = vmatprep.subr.mxu0 0.0
    %1135 = vmatpush1.msra.mxu0 0.0
    %1136 = vmatprep.subr.mxu0 0.0
    %1137 = vmatpush1.msra.mxu0 0.0
    %1138 = vmatprep.subr.mxu0 0.0
    %1139 = vmatpush1.msra.mxu0 0.0
    %1140 = vmatprep.subr.mxu0 0.0
    %1141 = vmatpush1.msra.mxu0 0.0
    %1142 = vmatprep.subr.mxu0 0.0
    %1143 = vmatpush1.msra.mxu0 0.0
    %1144 = vmatprep.subr.mxu0 0.0
    %1145 = vmatpush1.msra.mxu0 0.0
    %1146 = vmatprep.subr.mxu0 0.0
    %1147 = vmatpush1.msra.mxu0 0.0
    %1148 = vmatprep.subr.mxu0 0.0
    %1149 = vmatpush1.msra.mxu0 0.0
    %1150 = vmatprep.subr.mxu0 0.0
    %1151 = vmatpush1.msra.mxu0 0.0
    %1152 = vmatprep.subr.mxu0 0.0
    %1153 = vmatpush1.msra.mxu0 0.0
    %1154 = vmatprep.subr.mxu0 0.0
    %1155 = vmatpush1.msra.mxu0 0.0
    %1156 = vmatprep.mubr.f32.mxu0 0.0
    %1157 = vmatmul.mubr.f32.gmra.mrb[0].mxu0 %v932
    %v1158 = vpop.f32.mrb[0].mxu0
    %v1159 = vadd.f32 0.0, %v1158
    %v1160 = vpop.f32.mrb[0].mxu0
    %1161 = vdwg.mxu0
    %v1163 = vrot.slane %v1159, 6
    %1164 = vrot.lane.b32.xlu0 %v1163, 64
    %v1165 = vpop.permute.xlu0 %1164
    %v1167 = vadd.f32 %v218, %v1165
    %v1168 = vtanh.pop %v1167
    %1169 = vmatprep.subr.mxu0 0.0
    %1170 = vmatpush1.msra.mxu0 %v243
    %1171 = vmatprep.subr.mxu0 0.0
    %1172 = vmatpush1.msra.mxu0 %v244
    %1173 = vmatprep.subr.mxu0 0.0
    %1174 = vmatpush1.msra.mxu0 %v245
    %1175 = vmatprep.subr.mxu0 0.0
    %1176 = vmatpush1.msra.mxu0 %v246
    %1177 = vmatprep.subr.mxu0 0.0
    %1178 = vmatpush1.msra.mxu0 0.0
    %1179 = vmatprep.subr.mxu0 0.0
    %1180 = vmatpush1.msra.mxu0 0.0
    %1181 = vmatprep.subr.mxu0 0.0
    %1182 = vmatpush1.msra.mxu0 0.0
    %1183 = vmatprep.subr.mxu0 0.0
    %1184 = vmatpush1.msra.mxu0 0.0
    %1185 = vmatprep.subr.mxu0 0.0
    %1186 = vmatpush1.msra.mxu0 0.0
    %1187 = vmatprep.subr.mxu0 0.0
    %1188 = vmatpush1.msra.mxu0 0.0
    %1189 = vmatprep.subr.mxu0 0.0
    %1190 = vmatpush1.msra.mxu0 0.0
    %1191 = vmatprep.subr.mxu0 0.0
    %1192 = vmatpush1.msra.mxu0 0.0
    %1193 = vmatprep.subr.mxu0 0.0
    %1194 = vmatpush1.msra.mxu0 0.0
    %1195 = vmatprep.subr.mxu0 0.0
    %1196 = vmatpush1.msra.mxu0 0.0
    %1197 = vmatprep.subr.mxu0 0.0
    %1198 = vmatpush1.msra.mxu0 0.0
    %1199 = vmatprep.subr.mxu0 0.0
    %1200 = vmatpush1.msra.mxu0 0.0
    %1201 = vmatprep.subr.mxu0 0.0
    %1202 = vmatpush1.msra.mxu0 0.0
    %1203 = vmatprep.subr.mxu0 0.0
    %1204 = vmatpush1.msra.mxu0 0.0
    %1205 = vmatprep.subr.mxu0 0.0
    %1206 = vmatpush1.msra.mxu0 0.0
    %1207 = vmatprep.subr.mxu0 0.0
    %1208 = vmatpush1.msra.mxu0 0.0
    %1209 = vmatprep.subr.mxu0 0.0
    %1210 = vmatpush1.msra.mxu0 0.0
    %1211 = vmatprep.subr.mxu0 0.0
    %1212 = vmatpush1.msra.mxu0 0.0
    %1213 = vmatprep.subr.mxu0 0.0
    %1214 = vmatpush1.msra.mxu0 0.0
    %1215 = vmatprep.subr.mxu0 0.0
    %1216 = vmatpush1.msra.mxu0 0.0
    %1217 = vmatprep.subr.mxu0 0.0
    %1218 = vmatpush1.msra.mxu0 0.0
    %1219 = vmatprep.subr.mxu0 0.0
    %1220 = vmatpush1.msra.mxu0 0.0
    %1221 = vmatprep.subr.mxu0 0.0
    %1222 = vmatpush1.msra.mxu0 0.0
    %1223 = vmatprep.subr.mxu0 0.0
    %1224 = vmatpush1.msra.mxu0 0.0
    %1225 = vmatprep.subr.mxu0 0.0
    %1226 = vmatpush1.msra.mxu0 0.0
    %1227 = vmatprep.subr.mxu0 0.0
    %1228 = vmatpush1.msra.mxu0 0.0
    %1229 = vmatprep.subr.mxu0 0.0
    %1230 = vmatpush1.msra.mxu0 0.0
    %1231 = vmatprep.subr.mxu0 0.0
    %1232 = vmatpush1.msra.mxu0 0.0
    %1233 = vmatprep.mubr.f32.mxu0 0.0
    %1234 = vmatmul.mubr.f32.gmra.mrb[0].mxu0 %v932
    %v1235 = vpop.f32.mrb[0].mxu0
    %v1236 = vadd.f32 0.0, %v1235
    %v1237 = vpop.f32.mrb[0].mxu0
    %1238 = vdwg.mxu0
    %v1240 = vrot.slane %v1236, 6
    %1241 = vrot.lane.b32.xlu0 %v1240, 96
    %v1242 = vpop.permute.xlu0 %1241
    %v1244 = vadd.f32 %v218, %v1242
    %v1245 = vmul.f32 %v1244, 0.5
    %v1246 = vtanh.pop %v1245
    %v1247 = vmul.f32 %v1246, 0.5
    %v1248 = vadd.f32 %v1247, 0.5
    %v1250 = vrot.slane %v590, 6
    %v1252 = vmul.f32 %v1091, %v1250
    %1254 = vrot.lane.b32.xlu0 %v1168, 64
    %v1255 = vpop.permute.xlu0 %1254
    %v1257 = vmul.f32 %v1011, %v1255
    %1259 = vrot.lane.b32.xlu0 %v1257, 32
    %v1260 = vpop.permute.xlu0 %1259
    %v1262 = vadd.f32 %v1252, %v1260
    %v1263 = vtanh.pop %v1262
    %1265 = vrot.lane.b32.xlu0 %v1263, 64
    %v1266 = vpop.permute.xlu0 %1265
    %v1268 = vmul.f32 %v1248, %v1266
    %v1270 = vrot.slane %v928, 6
    %1271 = vrot.lane.b32.xlu0 %v1270, 32
    %v1272 = vpop.permute.xlu0 %1271
    %v1273 = vsel %vm267, %v1272, 0
    %1275 = vmatprep.subr.mxu0 0.0
    %1276 = vmatpush1.msra.mxu0 %v248
    %1277 = vmatprep.subr.mxu0 0.0
    %1278 = vmatpush1.msra.mxu0 %v249
    %1279 = vmatprep.subr.mxu0 0.0
    %1280 = vmatpush1.msra.mxu0 %v250
    %1281 = vmatprep.subr.mxu0 0.0
    %1282 = vmatpush1.msra.mxu0 %v251
    %1283 = vmatprep.subr.mxu0 0.0
    %1284 = vmatpush1.msra.mxu0 0.0
    %1285 = vmatprep.subr.mxu0 0.0
    %1286 = vmatpush1.msra.mxu0 0.0
    %1287 = vmatprep.subr.mxu0 0.0
    %1288 = vmatpush1.msra.mxu0 0.0
    %1289 = vmatprep.subr.mxu0 0.0
    %1290 = vmatpush1.msra.mxu0 0.0
    %1291 = vmatprep.subr.mxu0 0.0
    %1292 = vmatpush1.msra.mxu0 0.0
    %1293 = vmatprep.subr.mxu0 0.0
    %1294 = vmatpush1.msra.mxu0 0.0
    %1295 = vmatprep.subr.mxu0 0.0
    %1296 = vmatpush1.msra.mxu0 0.0
    %1297 = vmatprep.subr.mxu0 0.0
    %1298 = vmatpush1.msra.mxu0 0.0
    %1299 = vmatprep.subr.mxu0 0.0
    %1300 = vmatpush1.msra.mxu0 0.0
    %1301 = vmatprep.subr.mxu0 0.0
    %1302 = vmatpush1.msra.mxu0 0.0
    %1303 = vmatprep.subr.mxu0 0.0
    %1304 = vmatpush1.msra.mxu0 0.0
    %1305 = vmatprep.subr.mxu0 0.0
    %1306 = vmatpush1.msra.mxu0 0.0
    %1307 = vmatprep.subr.mxu0 0.0
    %1308 = vmatpush1.msra.mxu0 0.0
    %1309 = vmatprep.subr.mxu0 0.0
    %1310 = vmatpush1.msra.mxu0 0.0
    %1311 = vmatprep.subr.mxu0 0.0
    %1312 = vmatpush1.msra.mxu0 0.0
    %1313 = vmatprep.subr.mxu0 0.0
    %1314 = vmatpush1.msra.mxu0 0.0
    %1315 = vmatprep.subr.mxu0 0.0
    %1316 = vmatpush1.msra.mxu0 0.0
    %1317 = vmatprep.subr.mxu0 0.0
    %1318 = vmatpush1.msra.mxu0 0.0
    %1319 = vmatprep.subr.mxu0 0.0
    %1320 = vmatpush1.msra.mxu0 0.0
    %1321 = vmatprep.subr.mxu0 0.0
    %1322 = vmatpush1.msra.mxu0 0.0
    %1323 = vmatprep.subr.mxu0 0.0
    %1324 = vmatpush1.msra.mxu0 0.0
    %1325 = vmatprep.subr.mxu0 0.0
    %1326 = vmatpush1.msra.mxu0 0.0
    %1327 = vmatprep.subr.mxu0 0.0
    %1328 = vmatpush1.msra.mxu0 0.0
    %1329 = vmatprep.subr.mxu0 0.0
    %1330 = vmatpush1.msra.mxu0 0.0
    %1331 = vmatprep.subr.mxu0 0.0
    %1332 = vmatpush1.msra.mxu0 0.0
    %1333 = vmatprep.subr.mxu0 0.0
    %1334 = vmatpush1.msra.mxu0 0.0
    %1335 = vmatprep.subr.mxu0 0.0
    %1336 = vmatpush1.msra.mxu0 0.0
    %1337 = vmatprep.subr.mxu0 0.0
    %1338 = vmatpush1.msra.mxu0 0.0
    %1339 = vmatprep.mubr.f32.mxu0 0.0
    %1340 = vmatmul.mubr.f32.gmra.mrb[0].mxu0 %v1273
    %v1341 = vpop.f32.mrb[0].mxu0
    %v1342 = vadd.f32 0.0, %v1341
    %v1343 = vpop.f32.mrb[0].mxu0
    %1344 = vdwg.mxu0
    %v1346 = vrot.slane %v1342, 4
    %v1348 = vadd.f32 %v226, %v1346
    %v1349 = vmul.f32 %v1348, 0.5
    %v1350 = vtanh.pop %v1349
    %v1351 = vmul.f32 %v1350, 0.5
    %v1352 = vadd.f32 %v1351, 0.5
    %1353 = vmatprep.subr.mxu0 0.0
    %1354 = vmatpush1.msra.mxu0 %v253
    %1355 = vmatprep.subr.mxu0 0.0
    %1356 = vmatpush1.msra.mxu0 %v254
    %1357 = vmatprep.subr.mxu0 0.0
    %1358 = vmatpush1.msra.mxu0 %v255
    %1359 = vmatprep.subr.mxu0 0.0
    %1360 = vmatpush1.msra.mxu0 %v256
    %1361 = vmatprep.subr.mxu0 0.0
    %1362 = vmatpush1.msra.mxu0 0.0
    %1363 = vmatprep.subr.mxu0 0.0
    %1364 = vmatpush1.msra.mxu0 0.0
    %1365 = vmatprep.subr.mxu0 0.0
    %1366 = vmatpush1.msra.mxu0 0.0
    %1367 = vmatprep.subr.mxu0 0.0
    %1368 = vmatpush1.msra.mxu0 0.0
    %1369 = vmatprep.subr.mxu0 0.0
    %1370 = vmatpush1.msra.mxu0 0.0
    %1371 = vmatprep.subr.mxu0 0.0
    %1372 = vmatpush1.msra.mxu0 0.0
    %1373 = vmatprep.subr.mxu0 0.0
    %1374 = vmatpush1.msra.mxu0 0.0
    %1375 = vmatprep.subr.mxu0 0.0
    %1376 = vmatpush1.msra.mxu0 0.0
    %1377 = vmatprep.subr.mxu0 0.0
    %1378 = vmatpush1.msra.mxu0 0.0
    %1379 = vmatprep.subr.mxu0 0.0
    %1380 = vmatpush1.msra.mxu0 0.0
    %1381 = vmatprep.subr.mxu0 0.0
    %1382 = vmatpush1.msra.mxu0 0.0
    %1383 = vmatprep.subr.mxu0 0.0
    %1384 = vmatpush1.msra.mxu0 0.0
    %1385 = vmatprep.subr.mxu0 0.0
    %1386 = vmatpush1.msra.mxu0 0.0
    %1387 = vmatprep.subr.mxu0 0.0
    %1388 = vmatpush1.msra.mxu0 0.0
    %1389 = vmatprep.subr.mxu0 0.0
    %1390 = vmatpush1.msra.mxu0 0.0
    %1391 = vmatprep.subr.mxu0 0.0
    %1392 = vmatpush1.msra.mxu0 0.0
    %1393 = vmatprep.subr.mxu0 0.0
    %1394 = vmatpush1.msra.mxu0 0.0
    %1395 = vmatprep.subr.mxu0 0.0
    %1396 = vmatpush1.msra.mxu0 0.0
    %1397 = vmatprep.subr.mxu0 0.0
    %1398 = vmatpush1.msra.mxu0 0.0
    %1399 = vmatprep.subr.mxu0 0.0
    %1400 = vmatpush1.msra.mxu0 0.0
    %1401 = vmatprep.subr.mxu0 0.0
    %1402 = vmatpush1.msra.mxu0 0.0
    %1403 = vmatprep.subr.mxu0 0.0
    %1404 = vmatpush1.msra.mxu0 0.0
    %1405 = vmatprep.subr.mxu0 0.0
    %1406 = vmatpush1.msra.mxu0 0.0
    %1407 = vmatprep.subr.mxu0 0.0
    %1408 = vmatpush1.msra.mxu0 0.0
    %1409 = vmatprep.subr.mxu0 0.0
    %1410 = vmatpush1.msra.mxu0 0.0
    %1411 = vmatprep.subr.mxu0 0.0
    %1412 = vmatpush1.msra.mxu0 0.0
    %1413 = vmatprep.subr.mxu0 0.0
    %1414 = vmatpush1.msra.mxu0 0.0
    %1415 = vmatprep.subr.mxu0 0.0
    %1416 = vmatpush1.msra.mxu0 0.0
    %1417 = vmatprep.mubr.f32.mxu0 0.0
    %1418 = vmatmul.mubr.f32.gmra.mrb[0].mxu0 %v1273
    %v1419 = vpop.f32.mrb[0].mxu0
    %v1420 = vadd.f32 0.0, %v1419
    %v1421 = vpop.f32.mrb[0].mxu0
    %1422 = vdwg.mxu0
    %v1424 = vrot.slane %v1420, 4
    %1425 = vrot.lane.b32.xlu0 %v1424, 32
    %v1426 = vpop.permute.xlu0 %1425
    %v1428 = vadd.f32 %v226, %v1426
    %v1429 = vmul.f32 %v1428, 0.5
    %v1430 = vtanh.pop %v1429
    %v1431 = vmul.f32 %v1430, 0.5
    %v1432 = vadd.f32 %v1431, 0.5
    %1433 = vmatprep.subr.mxu0 0.0
    %1434 = vmatpush1.msra.mxu0 %v258
    %1435 = vmatprep.subr.mxu0 0.0
    %1436 = vmatpush1.msra.mxu0 %v259
    %1437 = vmatprep.subr.mxu0 0.0
    %1438 = vmatpush1.msra.mxu0 %v260
    %1439 = vmatprep.subr.mxu0 0.0
    %1440 = vmatpush1.msra.mxu0 %v261
    %1441 = vmatprep.subr.mxu0 0.0
    %1442 = vmatpush1.msra.mxu0 0.0
    %1443 = vmatprep.subr.mxu0 0.0
    %1444 = vmatpush1.msra.mxu0 0.0
    %1445 = vmatprep.subr.mxu0 0.0
    %1446 = vmatpush1.msra.mxu0 0.0
    %1447 = vmatprep.subr.mxu0 0.0
    %1448 = vmatpush1.msra.mxu0 0.0
    %1449 = vmatprep.subr.mxu0 0.0
    %1450 = vmatpush1.msra.mxu0 0.0
    %1451 = vmatprep.subr.mxu0 0.0
    %1452 = vmatpush1.msra.mxu0 0.0
    %1453 = vmatprep.subr.mxu0 0.0
    %1454 = vmatpush1.msra.mxu0 0.0
    %1455 = vmatprep.subr.mxu0 0.0
    %1456 = vmatpush1.msra.mxu0 0.0
    %1457 = vmatprep.subr.mxu0 0.0
    %1458 = vmatpush1.msra.mxu0 0.0
    %1459 = vmatprep.subr.mxu0 0.0
    %1460 = vmatpush1.msra.mxu0 0.0
    %1461 = vmatprep.subr.mxu0 0.0
    %1462 = vmatpush1.msra.mxu0 0.0
    %1463 = vmatprep.subr.mxu0 0.0
    %1464 = vmatpush1.msra.mxu0 0.0
    %1465 = vmatprep.subr.mxu0 0.0
    %1466 = vmatpush1.msra.mxu0 0.0
    %1467 = vmatprep.subr.mxu0 0.0
    %1468 = vmatpush1.msra.mxu0 0.0
    %1469 = vmatprep.subr.mxu0 0.0
    %1470 = vmatpush1.msra.mxu0 0.0
    %1471 = vmatprep.subr.mxu0 0.0
    %1472 = vmatpush1.msra.mxu0 0.0
    %1473 = vmatprep.subr.mxu0 0.0
    %1474 = vmatpush1.msra.mxu0 0.0
    %1475 = vmatprep.subr.mxu0 0.0
    %1476 = vmatpush1.msra.mxu0 0.0
    %1477 = vmatprep.subr.mxu0 0.0
    %1478 = vmatpush1.msra.mxu0 0.0
    %1479 = vmatprep.subr.mxu0 0.0
    %1480 = vmatpush1.msra.mxu0 0.0
    %1481 = vmatprep.subr.mxu0 0.0
    %1482 = vmatpush1.msra.mxu0 0.0
    %1483 = vmatprep.subr.mxu0 0.0
    %1484 = vmatpush1.msra.mxu0 0.0
    %1485 = vmatprep.subr.mxu0 0.0
    %1486 = vmatpush1.msra.mxu0 0.0
    %1487 = vmatprep.subr.mxu0 0.0
    %1488 = vmatpush1.msra.mxu0 0.0
    %1489 = vmatprep.subr.mxu0 0.0
    %1490 = vmatpush1.msra.mxu0 0.0
    %1491 = vmatprep.subr.mxu0 0.0
    %1492 = vmatpush1.msra.mxu0 0.0
    %1493 = vmatprep.subr.mxu0 0.0
    %1494 = vmatpush1.msra.mxu0 0.0
    %1495 = vmatprep.subr.mxu0 0.0
    %1496 = vmatpush1.msra.mxu0 0.0
    %1497 = vmatprep.mubr.f32.mxu0 0.0
    %1498 = vmatmul.mubr.f32.gmra.mrb[0].mxu0 %v1273
    %v1499 = vpop.f32.mrb[0].mxu0
    %v1500 = vadd.f32 0.0, %v1499
    %v1501 = vpop.f32.mrb[0].mxu0
    %1502 = vdwg.mxu0
    %v1504 = vrot.slane %v1500, 4
    %1505 = vrot.lane.b32.xlu0 %v1504, 64
    %v1506 = vpop.permute.xlu0 %1505
    %v1508 = vadd.f32 %v226, %v1506
    %v1509 = vtanh.pop %v1508
    %1510 = vmatprep.subr.mxu0 0.0
    %1511 = vmatpush1.msra.mxu0 %v263
    %1512 = vmatprep.subr.mxu0 0.0
    %1513 = vmatpush1.msra.mxu0 %v264
    %1514 = vmatprep.subr.mxu0 0.0
    %1515 = vmatpush1.msra.mxu0 %v265
    %1516 = vmatprep.subr.mxu0 0.0
    %1517 = vmatpush1.msra.mxu0 %v266
    %1518 = vmatprep.subr.mxu0 0.0
    %1519 = vmatpush1.msra.mxu0 0.0
    %1520 = vmatprep.subr.mxu0 0.0
    %1521 = vmatpush1.msra.mxu0 0.0
    %1522 = vmatprep.subr.mxu0 0.0
    %1523 = vmatpush1.msra.mxu0 0.0
    %1524 = vmatprep.subr.mxu0 0.0
    %1525 = vmatpush1.msra.mxu0 0.0
    %1526 = vmatprep.subr.mxu0 0.0
    %1527 = vmatpush1.msra.mxu0 0.0
    %1528 = vmatprep.subr.mxu0 0.0
    %1529 = vmatpush1.msra.mxu0 0.0
    %1530 = vmatprep.subr.mxu0 0.0
    %1531 = vmatpush1.msra.mxu0 0.0
    %1532 = vmatprep.subr.mxu0 0.0
    %1533 = vmatpush1.msra.mxu0 0.0
    %1534 = vmatprep.subr.mxu0 0.0
    %1535 = vmatpush1.msra.mxu0 0.0
    %1536 = vmatprep.subr.mxu0 0.0
    %1537 = vmatpush1.msra.mxu0 0.0
    %1538 = vmatprep.subr.mxu0 0.0
    %1539 = vmatpush1.msra.mxu0 0.0
    %1540 = vmatprep.subr.mxu0 0.0
    %1541 = vmatpush1.msra.mxu0 0.0
    %1542 = vmatprep.subr.mxu0 0.0
    %1543 = vmatpush1.msra.mxu0 0.0
    %1544 = vmatprep.subr.mxu0 0.0
    %1545 = vmatpush1.msra.mxu0 0.0
    %1546 = vmatprep.subr.mxu0 0.0
    %1547 = vmatpush1.msra.mxu0 0.0
    %1548 = vmatprep.subr.mxu0 0.0
    %1549 = vmatpush1.msra.mxu0 0.0
    %1550 = vmatprep.subr.mxu0 0.0
    %1551 = vmatpush1.msra.mxu0 0.0
    %1552 = vmatprep.subr.mxu0 0.0
    %1553 = vmatpush1.msra.mxu0 0.0
    %1554 = vmatprep.subr.mxu0 0.0
    %1555 = vmatpush1.msra.mxu0 0.0
    %1556 = vmatprep.subr.mxu0 0.0
    %1557 = vmatpush1.msra.mxu0 0.0
    %1558 = vmatprep.subr.mxu0 0.0
    %1559 = vmatpush1.msra.mxu0 0.0
    %1560 = vmatprep.subr.mxu0 0.0
    %1561 = vmatpush1.msra.mxu0 0.0
    %1562 = vmatprep.subr.mxu0 0.0
    %1563 = vmatpush1.msra.mxu0 0.0
    %1564 = vmatprep.subr.mxu0 0.0
    %1565 = vmatpush1.msra.mxu0 0.0
    %1566 = vmatprep.subr.mxu0 0.0
    %1567 = vmatpush1.msra.mxu0 0.0
    %1568 = vmatprep.subr.mxu0 0.0
    %1569 = vmatpush1.msra.mxu0 0.0
    %1570 = vmatprep.subr.mxu0 0.0
    %1571 = vmatpush1.msra.mxu0 0.0
    %1572 = vmatprep.subr.mxu0 0.0
    %1573 = vmatpush1.msra.mxu0 0.0
    %1574 = vmatprep.mubr.f32.mxu0 0.0
    %1575 = vmatmul.mubr.f32.gmra.mrb[0].mxu0 %v1273
    %v1576 = vpop.f32.mrb[0].mxu0
    %v1577 = vadd.f32 0.0, %v1576
    %v1578 = vpop.f32.mrb[0].mxu0
    %1579 = vdwg.mxu0
    %v1581 = vrot.slane %v1577, 4
    %1582 = vrot.lane.b32.xlu0 %v1581, 96
    %v1583 = vpop.permute.xlu0 %1582
    %v1585 = vadd.f32 %v226, %v1583
    %v1586 = vmul.f32 %v1585, 0.5
    %v1587 = vtanh.pop %v1586
    %v1588 = vmul.f32 %v1587, 0.5
    %v1589 = vadd.f32 %v1588, 0.5
    %v1591 = vrot.slane %v922, 2
    %v1593 = vmul.f32 %v1432, %v1591
    %1595 = vrot.lane.b32.xlu0 %v1509, 64
    %v1596 = vpop.permute.xlu0 %1595
    %v1598 = vmul.f32 %v1352, %v1596
    %1600 = vrot.lane.b32.xlu0 %v1598, 32
    %v1601 = vpop.permute.xlu0 %1600
    %v1603 = vadd.f32 %v1593, %v1601
    %v1604 = vtanh.pop %v1603
    %1606 = vrot.lane.b32.xlu0 %v1604, 64
    %v1607 = vpop.permute.xlu0 %1606
    %v1609 = vmul.f32 %v1589, %v1607
    %v1611 = vrot.slane %v1268, 2
    %1612 = vrot.lane.b32.xlu0 %v1611, 32
    %v1613 = vpop.permute.xlu0 %1612
    %v1614 = vsel %vm267, %v1613, 0
    %1616 = vmatprep.subr.mxu0 0.0
    %1617 = vmatpush1.msra.mxu0 %v228
    %1618 = vmatprep.subr.mxu0 0.0
    %1619 = vmatpush1.msra.mxu0 %v229
    %1620 = vmatprep.subr.mxu0 0.0
    %1621 = vmatpush1.msra.mxu0 %v230
    %1622 = vmatprep.subr.mxu0 0.0
    %1623 = vmatpush1.msra.mxu0 %v231
    %1624 = vmatprep.subr.mxu0 0.0
    %1625 = vmatpush1.msra.mxu0 0.0
    %1626 = vmatprep.subr.mxu0 0.0
    %1627 = vmatpush1.msra.mxu0 0.0
    %1628 = vmatprep.subr.mxu0 0.0
    %1629 = vmatpush1.msra.mxu0 0.0
    %1630 = vmatprep.subr.mxu0 0.0
    %1631 = vmatpush1.msra.mxu0 0.0
    %1632 = vmatprep.subr.mxu0 0.0
    %1633 = vmatpush1.msra.mxu0 0.0
    %1634 = vmatprep.subr.mxu0 0.0
    %1635 = vmatpush1.msra.mxu0 0.0
    %1636 = vmatprep.subr.mxu0 0.0
    %1637 = vmatpush1.msra.mxu0 0.0
    %1638 = vmatprep.subr.mxu0 0.0
    %1639 = vmatpush1.msra.mxu0 0.0
    %1640 = vmatprep.subr.mxu0 0.0
    %1641 = vmatpush1.msra.mxu0 0.0
    %1642 = vmatprep.subr.mxu0 0.0
    %1643 = vmatpush1.msra.mxu0 0.0
    %1644 = vmatprep.subr.mxu0 0.0
    %1645 = vmatpush1.msra.mxu0 0.0
    %1646 = vmatprep.subr.mxu0 0.0
    %1647 = vmatpush1.msra.mxu0 0.0
    %1648 = vmatprep.subr.mxu0 0.0
    %1649 = vmatpush1.msra.mxu0 0.0
    %1650 = vmatprep.subr.mxu0 0.0
    %1651 = vmatpush1.msra.mxu0 0.0
    %1652 = vmatprep.subr.mxu0 0.0
    %1653 = vmatpush1.msra.mxu0 0.0
    %1654 = vmatprep.subr.mxu0 0.0
    %1655 = vmatpush1.msra.mxu0 0.0
    %1656 = vmatprep.subr.mxu0 0.0
    %1657 = vmatpush1.msra.mxu0 0.0
    %1658 = vmatprep.subr.mxu0 0.0
    %1659 = vmatpush1.msra.mxu0 0.0
    %1660 = vmatprep.subr.mxu0 0.0
    %1661 = vmatpush1.msra.mxu0 0.0
    %1662 = vmatprep.subr.mxu0 0.0
    %1663 = vmatpush1.msra.mxu0 0.0
    %1664 = vmatprep.subr.mxu0 0.0
    %1665 = vmatpush1.msra.mxu0 0.0
    %1666 = vmatprep.subr.mxu0 0.0
    %1667 = vmatpush1.msra.mxu0 0.0
    %1668 = vmatprep.subr.mxu0 0.0
    %1669 = vmatpush1.msra.mxu0 0.0
    %1670 = vmatprep.subr.mxu0 0.0
    %1671 = vmatpush1.msra.mxu0 0.0
    %1672 = vmatprep.subr.mxu0 0.0
    %1673 = vmatpush1.msra.mxu0 0.0
    %1674 = vmatprep.subr.mxu0 0.0
    %1675 = vmatpush1.msra.mxu0 0.0
    %1676 = vmatprep.subr.mxu0 0.0
    %1677 = vmatpush1.msra.mxu0 0.0
    %1678 = vmatprep.subr.mxu0 0.0
    %1679 = vmatpush1.msra.mxu0 0.0
    %1680 = vmatprep.mubr.f32.mxu0 0.0
    %1681 = vmatmul.mubr.f32.gmra.mrb[0].mxu0 %v1614
    %v1682 = vpop.f32.mrb[0].mxu0
    %v1683 = vadd.f32 0.0, %v1682
    %v1684 = vpop.f32.mrb[0].mxu0
    %1685 = vdwg.mxu0
    %v1687 = vrot.slane %v1683, 4
    %v1689 = vadd.f32 %v218, %v1687
    %v1690 = vmul.f32 %v1689, 0.5
    %v1691 = vtanh.pop %v1690
    %v1692 = vmul.f32 %v1691, 0.5
    %v1693 = vadd.f32 %v1692, 0.5
    %1694 = vmatprep.subr.mxu0 0.0
    %1695 = vmatpush1.msra.mxu0 %v233
    %1696 = vmatprep.subr.mxu0 0.0
    %1697 = vmatpush1.msra.mxu0 %v234
    %1698 = vmatprep.subr.mxu0 0.0
    %1699 = vmatpush1.msra.mxu0 %v235
    %1700 = vmatprep.subr.mxu0 0.0
    %1701 = vmatpush1.msra.mxu0 %v236
    %1702 = vmatprep.subr.mxu0 0.0
    %1703 = vmatpush1.msra.mxu0 0.0
    %1704 = vmatprep.subr.mxu0 0.0
    %1705 = vmatpush1.msra.mxu0 0.0
    %1706 = vmatprep.subr.mxu0 0.0
    %1707 = vmatpush1.msra.mxu0 0.0
    %1708 = vmatprep.subr.mxu0 0.0
    %1709 = vmatpush1.msra.mxu0 0.0
    %1710 = vmatprep.subr.mxu0 0.0
    %1711 = vmatpush1.msra.mxu0 0.0
    %1712 = vmatprep.subr.mxu0 0.0
    %1713 = vmatpush1.msra.mxu0 0.0
    %1714 = vmatprep.subr.mxu0 0.0
    %1715 = vmatpush1.msra.mxu0 0.0
    %1716 = vmatprep.subr.mxu0 0.0
    %1717 = vmatpush1.msra.mxu0 0.0
    %1718 = vmatprep.subr.mxu0 0.0
    %1719 = vmatpush1.msra.mxu0 0.0
    %1720 = vmatprep.subr.mxu0 0.0
    %1721 = vmatpush1.msra.mxu0 0.0
    %1722 = vmatprep.subr.mxu0 0.0
    %1723 = vmatpush1.msra.mxu0 0.0
    %1724 = vmatprep.subr.mxu0 0.0
    %1725 = vmatpush1.msra.mxu0 0.0
    %1726 = vmatprep.subr.mxu0 0.0
    %1727 = vmatpush1.msra.mxu0 0.0
    %1728 = vmatprep.subr.mxu0 0.0
    %1729 = vmatpush1.msra.mxu0 0.0
    %1730 = vmatprep.subr.mxu0 0.0
    %1731 = vmatpush1.msra.mxu0 0.0
    %1732 = vmatprep.subr.mxu0 0.0
    %1733 = vmatpush1.msra.mxu0 0.0
    %1734 = vmatprep.subr.mxu0 0.0
    %1735 = vmatpush1.msra.mxu0 0.0
    %1736 = vmatprep.subr.mxu0 0.0
    %1737 = vmatpush1.msra.mxu0 0.0
    %1738 = vmatprep.subr.mxu0 0.0
    %1739 = vmatpush1.msra.mxu0 0.0
    %1740 = vmatprep.subr.mxu0 0.0
    %1741 = vmatpush1.msra.mxu0 0.0
    %1742 = vmatprep.subr.mxu0 0.0
    %1743 = vmatpush1.msra.mxu0 0.0
    %1744 = vmatprep.subr.mxu0 0.0
    %1745 = vmatpush1.msra.mxu0 0.0
    %1746 = vmatprep.subr.mxu0 0.0
    %1747 = vmatpush1.msra.mxu0 0.0
    %1748 = vmatprep.subr.mxu0 0.0
    %1749 = vmatpush1.msra.mxu0 0.0
    %1750 = vmatprep.subr.mxu0 0.0
    %1751 = vmatpush1.msra.mxu0 0.0
    %1752 = vmatprep.subr.mxu0 0.0
    %1753 = vmatpush1.msra.mxu0 0.0
    %1754 = vmatprep.subr.mxu0 0.0
    %1755 = vmatpush1.msra.mxu0 0.0
    %1756 = vmatprep.subr.mxu0 0.0
    %1757 = vmatpush1.msra.mxu0 0.0
    %1758 = vmatprep.mubr.f32.mxu0 0.0
    %1759 = vmatmul.mubr.f32.gmra.mrb[0].mxu0 %v1614
    %v1760 = vpop.f32.mrb[0].mxu0
    %v1761 = vadd.f32 0.0, %v1760
    %v1762 = vpop.f32.mrb[0].mxu0
    %1763 = vdwg.mxu0
    %v1765 = vrot.slane %v1761, 4
    %1766 = vrot.lane.b32.xlu0 %v1765, 32
    %v1767 = vpop.permute.xlu0 %1766
    %v1769 = vadd.f32 %v218, %v1767
    %v1770 = vmul.f32 %v1769, 0.5
    %v1771 = vtanh.pop %v1770
    %v1772 = vmul.f32 %v1771, 0.5
    %v1773 = vadd.f32 %v1772, 0.5
    %1774 = vmatprep.subr.mxu0 0.0
    %1775 = vmatpush1.msra.mxu0 %v238
    %1776 = vmatprep.subr.mxu0 0.0
    %1777 = vmatpush1.msra.mxu0 %v239
    %1778 = vmatprep.subr.mxu0 0.0
    %1779 = vmatpush1.msra.mxu0 %v240
    %1780 = vmatprep.subr.mxu0 0.0
    %1781 = vmatpush1.msra.mxu0 %v241
    %1782 = vmatprep.subr.mxu0 0.0
    %1783 = vmatpush1.msra.mxu0 0.0
    %1784 = vmatprep.subr.mxu0 0.0
    %1785 = vmatpush1.msra.mxu0 0.0
    %1786 = vmatprep.subr.mxu0 0.0
    %1787 = vmatpush1.msra.mxu0 0.0
    %1788 = vmatprep.subr.mxu0 0.0
    %1789 = vmatpush1.msra.mxu0 0.0
    %1790 = vmatprep.subr.mxu0 0.0
    %1791 = vmatpush1.msra.mxu0 0.0
    %1792 = vmatprep.subr.mxu0 0.0
    %1793 = vmatpush1.msra.mxu0 0.0
    %1794 = vmatprep.subr.mxu0 0.0
    %1795 = vmatpush1.msra.mxu0 0.0
    %1796 = vmatprep.subr.mxu0 0.0
    %1797 = vmatpush1.msra.mxu0 0.0
    %1798 = vmatprep.subr.mxu0 0.0
    %1799 = vmatpush1.msra.mxu0 0.0
    %1800 = vmatprep.subr.mxu0 0.0
    %1801 = vmatpush1.msra.mxu0 0.0
    %1802 = vmatprep.subr.mxu0 0.0
    %1803 = vmatpush1.msra.mxu0 0.0
    %1804 = vmatprep.subr.mxu0 0.0
    %1805 = vmatpush1.msra.mxu0 0.0
    %1806 = vmatprep.subr.mxu0 0.0
    %1807 = vmatpush1.msra.mxu0 0.0
    %1808 = vmatprep.subr.mxu0 0.0
    %1809 = vmatpush1.msra.mxu0 0.0
    %1810 = vmatprep.subr.mxu0 0.0
    %1811 = vmatpush1.msra.mxu0 0.0
    %1812 = vmatprep.subr.mxu0 0.0
    %1813 = vmatpush1.msra.mxu0 0.0
    %1814 = vmatprep.subr.mxu0 0.0
    %1815 = vmatpush1.msra.mxu0 0.0
    %1816 = vmatprep.subr.mxu0 0.0
    %1817 = vmatpush1.msra.mxu0 0.0
    %1818 = vmatprep.subr.mxu0 0.0
    %1819 = vmatpush1.msra.mxu0 0.0
    %1820 = vmatprep.subr.mxu0 0.0
    %1821 = vmatpush1.msra.mxu0 0.0
    %1822 = vmatprep.subr.mxu0 0.0
    %1823 = vmatpush1.msra.mxu0 0.0
    %1824 = vmatprep.subr.mxu0 0.0
    %1825 = vmatpush1.msra.mxu0 0.0
    %1826 = vmatprep.subr.mxu0 0.0
    %1827 = vmatpush1.msra.mxu0 0.0
    %1828 = vmatprep.subr.mxu0 0.0
    %1829 = vmatpush1.msra.mxu0 0.0
    %1830 = vmatprep.subr.mxu0 0.0
    %1831 = vmatpush1.msra.mxu0 0.0
    %1832 = vmatprep.subr.mxu0 0.0
    %1833 = vmatpush1.msra.mxu0 0.0
    %1834 = vmatprep.subr.mxu0 0.0
    %1835 = vmatpush1.msra.mxu0 0.0
    %1836 = vmatprep.subr.mxu0 0.0
    %1837 = vmatpush1.msra.mxu0 0.0
    %1838 = vmatprep.mubr.f32.mxu0 0.0
    %1839 = vmatmul.mubr.f32.gmra.mrb[0].mxu0 %v1614
    %v1840 = vpop.f32.mrb[0].mxu0
    %v1841 = vadd.f32 0.0, %v1840
    %v1842 = vpop.f32.mrb[0].mxu0
    %1843 = vdwg.mxu0
    %v1845 = vrot.slane %v1841, 4
    %1846 = vrot.lane.b32.xlu0 %v1845, 64
    %v1847 = vpop.permute.xlu0 %1846
    %v1849 = vadd.f32 %v218, %v1847
    %v1850 = vtanh.pop %v1849
    %1851 = vmatprep.subr.mxu0 0.0
    %1852 = vmatpush1.msra.mxu0 %v243
    %1853 = vmatprep.subr.mxu0 0.0
    %1854 = vmatpush1.msra.mxu0 %v244
    %1855 = vmatprep.subr.mxu0 0.0
    %1856 = vmatpush1.msra.mxu0 %v245
    %1857 = vmatprep.subr.mxu0 0.0
    %1858 = vmatpush1.msra.mxu0 %v246
    %1859 = vmatprep.subr.mxu0 0.0
    %1860 = vmatpush1.msra.mxu0 0.0
    %1861 = vmatprep.subr.mxu0 0.0
    %1862 = vmatpush1.msra.mxu0 0.0
    %1863 = vmatprep.subr.mxu0 0.0
    %1864 = vmatpush1.msra.mxu0 0.0
    %1865 = vmatprep.subr.mxu0 0.0
    %1866 = vmatpush1.msra.mxu0 0.0
    %1867 = vmatprep.subr.mxu0 0.0
    %1868 = vmatpush1.msra.mxu0 0.0
    %1869 = vmatprep.subr.mxu0 0.0
    %1870 = vmatpush1.msra.mxu0 0.0
    %1871 = vmatprep.subr.mxu0 0.0
    %1872 = vmatpush1.msra.mxu0 0.0
    %1873 = vmatprep.subr.mxu0 0.0
    %1874 = vmatpush1.msra.mxu0 0.0
    %1875 = vmatprep.subr.mxu0 0.0
    %1876 = vmatpush1.msra.mxu0 0.0
    %1877 = vmatprep.subr.mxu0 0.0
    %1878 = vmatpush1.msra.mxu0 0.0
    %1879 = vmatprep.subr.mxu0 0.0
    %1880 = vmatpush1.msra.mxu0 0.0
    %1881 = vmatprep.subr.mxu0 0.0
    %1882 = vmatpush1.msra.mxu0 0.0
    %1883 = vmatprep.subr.mxu0 0.0
    %1884 = vmatpush1.msra.mxu0 0.0
    %1885 = vmatprep.subr.mxu0 0.0
    %1886 = vmatpush1.msra.mxu0 0.0
    %1887 = vmatprep.subr.mxu0 0.0
    %1888 = vmatpush1.msra.mxu0 0.0
    %1889 = vmatprep.subr.mxu0 0.0
    %1890 = vmatpush1.msra.mxu0 0.0
    %1891 = vmatprep.subr.mxu0 0.0
    %1892 = vmatpush1.msra.mxu0 0.0
    %1893 = vmatprep.subr.mxu0 0.0
    %1894 = vmatpush1.msra.mxu0 0.0
    %1895 = vmatprep.subr.mxu0 0.0
    %1896 = vmatpush1.msra.mxu0 0.0
    %1897 = vmatprep.subr.mxu0 0.0
    %1898 = vmatpush1.msra.mxu0 0.0
    %1899 = vmatprep.subr.mxu0 0.0
    %1900 = vmatpush1.msra.mxu0 0.0
    %1901 = vmatprep.subr.mxu0 0.0
    %1902 = vmatpush1.msra.mxu0 0.0
    %1903 = vmatprep.subr.mxu0 0.0
    %1904 = vmatpush1.msra.mxu0 0.0
    %1905 = vmatprep.subr.mxu0 0.0
    %1906 = vmatpush1.msra.mxu0 0.0
    %1907 = vmatprep.subr.mxu0 0.0
    %1908 = vmatpush1.msra.mxu0 0.0
    %1909 = vmatprep.subr.mxu0 0.0
    %1910 = vmatpush1.msra.mxu0 0.0
    %1911 = vmatprep.subr.mxu0 0.0
    %1912 = vmatpush1.msra.mxu0 0.0
    %1913 = vmatprep.subr.mxu0 0.0
    %1914 = vmatpush1.msra.mxu0 0.0
    %1915 = vmatprep.mubr.f32.mxu0 0.0
    %1916 = vmatmul.mubr.f32.gmra.mrb[0].mxu0 %v1614
    %v1917 = vpop.f32.mrb[0].mxu0
    %v1918 = vadd.f32 0.0, %v1917
    %v1919 = vpop.f32.mrb[0].mxu0
    %1920 = vdwg.mxu0
    %v1922 = vrot.slane %v1918, 4
    %1923 = vrot.lane.b32.xlu0 %v1922, 96
    %v1924 = vpop.permute.xlu0 %1923
    %v1926 = vadd.f32 %v218, %v1924
    %v1927 = vmul.f32 %v1926, 0.5
    %v1928 = vtanh.pop %v1927
    %v1929 = vmul.f32 %v1928, 0.5
    %v1930 = vadd.f32 %v1929, 0.5
    %v1932 = vrot.slane %v1262, 6
    %v1934 = vmul.f32 %v1773, %v1932
    %1936 = vrot.lane.b32.xlu0 %v1850, 64
    %v1937 = vpop.permute.xlu0 %1936
    %v1939 = vmul.f32 %v1693, %v1937
    %1941 = vrot.lane.b32.xlu0 %v1939, 32
    %v1942 = vpop.permute.xlu0 %1941
    %v1944 = vadd.f32 %v1934, %v1942
    %v1945 = vtanh.pop %v1944
    %1947 = vrot.lane.b32.xlu0 %v1945, 64
    %v1948 = vpop.permute.xlu0 %1947
    %v1950 = vmul.f32 %v1930, %v1948
    %v1952 = vrot.slane %v1609, 4
    %1953 = vrot.lane.b32.xlu0 %v1952, 32
    %v1954 = vpop.permute.xlu0 %1953
    %v1955 = vsel %vm267, %v1954, 0
    %1957 = vmatprep.subr.mxu0 0.0
    %1958 = vmatpush1.msra.mxu0 %v248
    %1959 = vmatprep.subr.mxu0 0.0
    %1960 = vmatpush1.msra.mxu0 %v249
    %1961 = vmatprep.subr.mxu0 0.0
    %1962 = vmatpush1.msra.mxu0 %v250
    %1963 = vmatprep.subr.mxu0 0.0
    %1964 = vmatpush1.msra.mxu0 %v251
    %1965 = vmatprep.subr.mxu0 0.0
    %1966 = vmatpush1.msra.mxu0 0.0
    %1967 = vmatprep.subr.mxu0 0.0
    %1968 = vmatpush1.msra.mxu0 0.0
    %1969 = vmatprep.subr.mxu0 0.0
    %1970 = vmatpush1.msra.mxu0 0.0
    %1971 = vmatprep.subr.mxu0 0.0
    %1972 = vmatpush1.msra.mxu0 0.0
    %1973 = vmatprep.subr.mxu0 0.0
    %1974 = vmatpush1.msra.mxu0 0.0
    %1975 = vmatprep.subr.mxu0 0.0
    %1976 = vmatpush1.msra.mxu0 0.0
    %1977 = vmatprep.subr.mxu0 0.0
    %1978 = vmatpush1.msra.mxu0 0.0
    %1979 = vmatprep.subr.mxu0 0.0
    %1980 = vmatpush1.msra.mxu0 0.0
    %1981 = vmatprep.subr.mxu0 0.0
    %1982 = vmatpush1.msra.mxu0 0.0
    %1983 = vmatprep.subr.mxu0 0.0
    %1984 = vmatpush1.msra.mxu0 0.0
    %1985 = vmatprep.subr.mxu0 0.0
    %1986 = vmatpush1.msra.mxu0 0.0
    %1987 = vmatprep.subr.mxu0 0.0
    %1988 = vmatpush1.msra.mxu0 0.0
    %1989 = vmatprep.subr.mxu0 0.0
    %1990 = vmatpush1.msra.mxu0 0.0
    %1991 = vmatprep.subr.mxu0 0.0
    %1992 = vmatpush1.msra.mxu0 0.0
    %1993 = vmatprep.subr.mxu0 0.0
    %1994 = vmatpush1.msra.mxu0 0.0
    %1995 = vmatprep.subr.mxu0 0.0
    %1996 = vmatpush1.msra.mxu0 0.0
    %1997 = vmatprep.subr.mxu0 0.0
    %1998 = vmatpush1.msra.mxu0 0.0
    %1999 = vmatprep.subr.mxu0 0.0
    %2000 = vmatpush1.msra.mxu0 0.0
    %2001 = vmatprep.subr.mxu0 0.0
    %2002 = vmatpush1.msra.mxu0 0.0
    %2003 = vmatprep.subr.mxu0 0.0
    %2004 = vmatpush1.msra.mxu0 0.0
    %2005 = vmatprep.subr.mxu0 0.0
    %2006 = vmatpush1.msra.mxu0 0.0
    %2007 = vmatprep.subr.mxu0 0.0
    %2008 = vmatpush1.msra.mxu0 0.0
    %2009 = vmatprep.subr.mxu0 0.0
    %2010 = vmatpush1.msra.mxu0 0.0
    %2011 = vmatprep.subr.mxu0 0.0
    %2012 = vmatpush1.msra.mxu0 0.0
    %2013 = vmatprep.subr.mxu0 0.0
    %2014 = vmatpush1.msra.mxu0 0.0
    %2015 = vmatprep.subr.mxu0 0.0
    %2016 = vmatpush1.msra.mxu0 0.0
    %2017 = vmatprep.subr.mxu0 0.0
    %2018 = vmatpush1.msra.mxu0 0.0
    %2019 = vmatprep.subr.mxu0 0.0
    %2020 = vmatpush1.msra.mxu0 0.0
    %2021 = vmatprep.mubr.f32.mxu0 0.0
    %2022 = vmatmul.mubr.f32.gmra.mrb[0].mxu0 %v1955
    %v2023 = vpop.f32.mrb[0].mxu0
    %v2024 = vadd.f32 0.0, %v2023
    %v2025 = vpop.f32.mrb[0].mxu0
    %2026 = vdwg.mxu0
    %v2028 = vrot.slane %v2024, 6
    %v2030 = vadd.f32 %v226, %v2028
    %v2031 = vmul.f32 %v2030, 0.5
    %v2032 = vtanh.pop %v2031
    %v2033 = vmul.f32 %v2032, 0.5
    %v2034 = vadd.f32 %v2033, 0.5
    %2035 = vmatprep.subr.mxu0 0.0
    %2036 = vmatpush1.msra.mxu0 %v253
    %2037 = vmatprep.subr.mxu0 0.0
    %2038 = vmatpush1.msra.mxu0 %v254
    %2039 = vmatprep.subr.mxu0 0.0
    %2040 = vmatpush1.msra.mxu0 %v255
    %2041 = vmatprep.subr.mxu0 0.0
    %2042 = vmatpush1.msra.mxu0 %v256
    %2043 = vmatprep.subr.mxu0 0.0
    %2044 = vmatpush1.msra.mxu0 0.0
    %2045 = vmatprep.subr.mxu0 0.0
    %2046 = vmatpush1.msra.mxu0 0.0
    %2047 = vmatprep.subr.mxu0 0.0
    %2048 = vmatpush1.msra.mxu0 0.0
    %2049 = vmatprep.subr.mxu0 0.0
    %2050 = vmatpush1.msra.mxu0 0.0
    %2051 = vmatprep.subr.mxu0 0.0
    %2052 = vmatpush1.msra.mxu0 0.0
    %2053 = vmatprep.subr.mxu0 0.0
    %2054 = vmatpush1.msra.mxu0 0.0
    %2055 = vmatprep.subr.mxu0 0.0
    %2056 = vmatpush1.msra.mxu0 0.0
    %2057 = vmatprep.subr.mxu0 0.0
    %2058 = vmatpush1.msra.mxu0 0.0
    %2059 = vmatprep.subr.mxu0 0.0
    %2060 = vmatpush1.msra.mxu0 0.0
    %2061 = vmatprep.subr.mxu0 0.0
    %2062 = vmatpush1.msra.mxu0 0.0
    %2063 = vmatprep.subr.mxu0 0.0
    %2064 = vmatpush1.msra.mxu0 0.0
    %2065 = vmatprep.subr.mxu0 0.0
    %2066 = vmatpush1.msra.mxu0 0.0
    %2067 = vmatprep.subr.mxu0 0.0
    %2068 = vmatpush1.msra.mxu0 0.0
    %2069 = vmatprep.subr.mxu0 0.0
    %2070 = vmatpush1.msra.mxu0 0.0
    %2071 = vmatprep.subr.mxu0 0.0
    %2072 = vmatpush1.msra.mxu0 0.0
    %2073 = vmatprep.subr.mxu0 0.0
    %2074 = vmatpush1.msra.mxu0 0.0
    %2075 = vmatprep.subr.mxu0 0.0
    %2076 = vmatpush1.msra.mxu0 0.0
    %2077 = vmatprep.subr.mxu0 0.0
    %2078 = vmatpush1.msra.mxu0 0.0
    %2079 = vmatprep.subr.mxu0 0.0
    %2080 = vmatpush1.msra.mxu0 0.0
    %2081 = vmatprep.subr.mxu0 0.0
    %2082 = vmatpush1.msra.mxu0 0.0
    %2083 = vmatprep.subr.mxu0 0.0
    %2084 = vmatpush1.msra.mxu0 0.0
    %2085 = vmatprep.subr.mxu0 0.0
    %2086 = vmatpush1.msra.mxu0 0.0
    %2087 = vmatprep.subr.mxu0 0.0
    %2088 = vmatpush1.msra.mxu0 0.0
    %2089 = vmatprep.subr.mxu0 0.0
    %2090 = vmatpush1.msra.mxu0 0.0
    %2091 = vmatprep.subr.mxu0 0.0
    %2092 = vmatpush1.msra.mxu0 0.0
    %2093 = vmatprep.subr.mxu0 0.0
    %2094 = vmatpush1.msra.mxu0 0.0
    %2095 = vmatprep.subr.mxu0 0.0
    %2096 = vmatpush1.msra.mxu0 0.0
    %2097 = vmatprep.subr.mxu0 0.0
    %2098 = vmatpush1.msra.mxu0 0.0
    %2099 = vmatprep.mubr.f32.mxu0 0.0
    %2100 = vmatmul.mubr.f32.gmra.mrb[0].mxu0 %v1955
    %v2101 = vpop.f32.mrb[0].mxu0
    %v2102 = vadd.f32 0.0, %v2101
    %v2103 = vpop.f32.mrb[0].mxu0
    %2104 = vdwg.mxu0
    %v2106 = vrot.slane %v2102, 6
    %2107 = vrot.lane.b32.xlu0 %v2106, 32
    %v2108 = vpop.permute.xlu0 %2107
    %v2110 = vadd.f32 %v226, %v2108
    %v2111 = vmul.f32 %v2110, 0.5
    %v2112 = vtanh.pop %v2111
    %v2113 = vmul.f32 %v2112, 0.5
    %v2114 = vadd.f32 %v2113, 0.5
    %2115 = vmatprep.subr.mxu0 0.0
    %2116 = vmatpush1.msra.mxu0 %v258
    %2117 = vmatprep.subr.mxu0 0.0
    %2118 = vmatpush1.msra.mxu0 %v259
    %2119 = vmatprep.subr.mxu0 0.0
    %2120 = vmatpush1.msra.mxu0 %v260
    %2121 = vmatprep.subr.mxu0 0.0
    %2122 = vmatpush1.msra.mxu0 %v261
    %2123 = vmatprep.subr.mxu0 0.0
    %2124 = vmatpush1.msra.mxu0 0.0
    %2125 = vmatprep.subr.mxu0 0.0
    %2126 = vmatpush1.msra.mxu0 0.0
    %2127 = vmatprep.subr.mxu0 0.0
    %2128 = vmatpush1.msra.mxu0 0.0
    %2129 = vmatprep.subr.mxu0 0.0
    %2130 = vmatpush1.msra.mxu0 0.0
    %2131 = vmatprep.subr.mxu0 0.0
    %2132 = vmatpush1.msra.mxu0 0.0
    %2133 = vmatprep.subr.mxu0 0.0
    %2134 = vmatpush1.msra.mxu0 0.0
    %2135 = vmatprep.subr.mxu0 0.0
    %2136 = vmatpush1.msra.mxu0 0.0
    %2137 = vmatprep.subr.mxu0 0.0
    %2138 = vmatpush1.msra.mxu0 0.0
    %2139 = vmatprep.subr.mxu0 0.0
    %2140 = vmatpush1.msra.mxu0 0.0
    %2141 = vmatprep.subr.mxu0 0.0
    %2142 = vmatpush1.msra.mxu0 0.0
    %2143 = vmatprep.subr.mxu0 0.0
    %2144 = vmatpush1.msra.mxu0 0.0
    %2145 = vmatprep.subr.mxu0 0.0
    %2146 = vmatpush1.msra.mxu0 0.0
    %2147 = vmatprep.subr.mxu0 0.0
    %2148 = vmatpush1.msra.mxu0 0.0
    %2149 = vmatprep.subr.mxu0 0.0
    %2150 = vmatpush1.msra.mxu0 0.0
    %2151 = vmatprep.subr.mxu0 0.0
    %2152 = vmatpush1.msra.mxu0 0.0
    %2153 = vmatprep.subr.mxu0 0.0
    %2154 = vmatpush1.msra.mxu0 0.0
    %2155 = vmatprep.subr.mxu0 0.0
    %2156 = vmatpush1.msra.mxu0 0.0
    %2157 = vmatprep.subr.mxu0 0.0
    %2158 = vmatpush1.msra.mxu0 0.0
    %2159 = vmatprep.subr.mxu0 0.0
    %2160 = vmatpush1.msra.mxu0 0.0
    %2161 = vmatprep.subr.mxu0 0.0
    %2162 = vmatpush1.msra.mxu0 0.0
    %2163 = vmatprep.subr.mxu0 0.0
    %2164 = vmatpush1.msra.mxu0 0.0
    %2165 = vmatprep.subr.mxu0 0.0
    %2166 = vmatpush1.msra.mxu0 0.0
    %2167 = vmatprep.subr.mxu0 0.0
    %2168 = vmatpush1.msra.mxu0 0.0
    %2169 = vmatprep.subr.mxu0 0.0
    %2170 = vmatpush1.msra.mxu0 0.0
    %2171 = vmatprep.subr.mxu0 0.0
    %2172 = vmatpush1.msra.mxu0 0.0
    %2173 = vmatprep.subr.mxu0 0.0
    %2174 = vmatpush1.msra.mxu0 0.0
    %2175 = vmatprep.subr.mxu0 0.0
    %2176 = vmatpush1.msra.mxu0 0.0
    %2177 = vmatprep.subr.mxu0 0.0
    %2178 = vmatpush1.msra.mxu0 0.0
    %2179 = vmatprep.mubr.f32.mxu0 0.0
    %2180 = vmatmul.mubr.f32.gmra.mrb[0].mxu0 %v1955
    %v2181 = vpop.f32.mrb[0].mxu0
    %v2182 = vadd.f32 0.0, %v2181
    %v2183 = vpop.f32.mrb[0].mxu0
    %2184 = vdwg.mxu0
    %v2186 = vrot.slane %v2182, 6
    %2187 = vrot.lane.b32.xlu0 %v2186, 64
    %v2188 = vpop.permute.xlu0 %2187
    %v2190 = vadd.f32 %v226, %v2188
    %v2191 = vtanh.pop %v2190
    %2192 = vmatprep.subr.mxu0 0.0
    %2193 = vmatpush1.msra.mxu0 %v263
    %2194 = vmatprep.subr.mxu0 0.0
    %2195 = vmatpush1.msra.mxu0 %v264
    %2196 = vmatprep.subr.mxu0 0.0
    %2197 = vmatpush1.msra.mxu0 %v265
    %2198 = vmatprep.subr.mxu0 0.0
    %2199 = vmatpush1.msra.mxu0 %v266
    %2200 = vmatprep.subr.mxu0 0.0
    %2201 = vmatpush1.msra.mxu0 0.0
    %2202 = vmatprep.subr.mxu0 0.0
    %2203 = vmatpush1.msra.mxu0 0.0
    %2204 = vmatprep.subr.mxu0 0.0
    %2205 = vmatpush1.msra.mxu0 0.0
    %2206 = vmatprep.subr.mxu0 0.0
    %2207 = vmatpush1.msra.mxu0 0.0
    %2208 = vmatprep.subr.mxu0 0.0
    %2209 = vmatpush1.msra.mxu0 0.0
    %2210 = vmatprep.subr.mxu0 0.0
    %2211 = vmatpush1.msra.mxu0 0.0
    %2212 = vmatprep.subr.mxu0 0.0
    %2213 = vmatpush1.msra.mxu0 0.0
    %2214 = vmatprep.subr.mxu0 0.0
    %2215 = vmatpush1.msra.mxu0 0.0
    %2216 = vmatprep.subr.mxu0 0.0
    %2217 = vmatpush1.msra.mxu0 0.0
    %2218 = vmatprep.subr.mxu0 0.0
    %2219 = vmatpush1.msra.mxu0 0.0
    %2220 = vmatprep.subr.mxu0 0.0
    %2221 = vmatpush1.msra.mxu0 0.0
    %2222 = vmatprep.subr.mxu0 0.0
    %2223 = vmatpush1.msra.mxu0 0.0
    %2224 = vmatprep.subr.mxu0 0.0
    %2225 = vmatpush1.msra.mxu0 0.0
    %2226 = vmatprep.subr.mxu0 0.0
    %2227 = vmatpush1.msra.mxu0 0.0
    %2228 = vmatprep.subr.mxu0 0.0
    %2229 = vmatpush1.msra.mxu0 0.0
    %2230 = vmatprep.subr.mxu0 0.0
    %2231 = vmatpush1.msra.mxu0 0.0
    %2232 = vmatprep.subr.mxu0 0.0
    %2233 = vmatpush1.msra.mxu0 0.0
    %2234 = vmatprep.subr.mxu0 0.0
    %2235 = vmatpush1.msra.mxu0 0.0
    %2236 = vmatprep.subr.mxu0 0.0
    %2237 = vmatpush1.msra.mxu0 0.0
    %2238 = vmatprep.subr.mxu0 0.0
    %2239 = vmatpush1.msra.mxu0 0.0
    %2240 = vmatprep.subr.mxu0 0.0
    %2241 = vmatpush1.msra.mxu0 0.0
    %2242 = vmatprep.subr.mxu0 0.0
    %2243 = vmatpush1.msra.mxu0 0.0
    %2244 = vmatprep.subr.mxu0 0.0
    %2245 = vmatpush1.msra.mxu0 0.0
    %2246 = vmatprep.subr.mxu0 0.0
    %2247 = vmatpush1.msra.mxu0 0.0
    %2248 = vmatprep.subr.mxu0 0.0
    %2249 = vmatpush1.msra.mxu0 0.0
    %2250 = vmatprep.subr.mxu0 0.0
    %2251 = vmatpush1.msra.mxu0 0.0
    %2252 = vmatprep.subr.mxu0 0.0
    %2253 = vmatpush1.msra.mxu0 0.0
    %2254 = vmatprep.subr.mxu0 0.0
    %2255 = vmatpush1.msra.mxu0 0.0
    %2256 = vmatprep.mubr.f32.mxu0 0.0
    %2257 = vmatmul.mubr.f32.gmra.mrb[0].mxu0 %v1955
    %v2258 = vpop.f32.mrb[0].mxu0
    %v2259 = vadd.f32 0.0, %v2258
    %v2260 = vpop.f32.mrb[0].mxu0
    %2261 = vdwg.mxu0
    %v2263 = vrot.slane %v2259, 6
    %2264 = vrot.lane.b32.xlu0 %v2263, 96
    %v2265 = vpop.permute.xlu0 %2264
    %v2267 = vadd.f32 %v226, %v2265
    %v2268 = vmul.f32 %v2267, 0.5
    %v2269 = vtanh.pop %v2268
    %v2270 = vmul.f32 %v2269, 0.5
    %v2271 = vadd.f32 %v2270, 0.5
    %v2273 = vrot.slane %v1603, 2
    %v2275 = vmul.f32 %v2114, %v2273
    %2277 = vrot.lane.b32.xlu0 %v2191, 64
    %v2278 = vpop.permute.xlu0 %2277
    %v2280 = vmul.f32 %v2034, %v2278
    %2282 = vrot.lane.b32.xlu0 %v2280, 32
    %v2283 = vpop.permute.xlu0 %2282
    %v2285 = vadd.f32 %v2275, %v2283
    %v2286 = vtanh.pop %v2285
    %2288 = vrot.lane.b32.xlu0 %v2286, 64
    %v2289 = vpop.permute.xlu0 %2288
    %v2291 = vmul.f32 %v2271, %v2289
    %v2293 = vrot.slane %v1950, 4
    %2294 = vrot.lane.b32.xlu0 %v2293, 32
    %v2295 = vpop.permute.xlu0 %2294
    %v2296 = vsel %vm267, %v2295, 0
    %2298 = vmatprep.subr.mxu0 0.0
    %2299 = vmatpush1.msra.mxu0 %v228
    %2300 = vmatprep.subr.mxu0 0.0
    %2301 = vmatpush1.msra.mxu0 %v229
    %2302 = vmatprep.subr.mxu0 0.0
    %2303 = vmatpush1.msra.mxu0 %v230
    %2304 = vmatprep.subr.mxu0 0.0
    %2305 = vmatpush1.msra.mxu0 %v231
    %2306 = vmatprep.subr.mxu0 0.0
    %2307 = vmatpush1.msra.mxu0 0.0
    %2308 = vmatprep.subr.mxu0 0.0
    %2309 = vmatpush1.msra.mxu0 0.0
    %2310 = vmatprep.subr.mxu0 0.0
    %2311 = vmatpush1.msra.mxu0 0.0
    %2312 = vmatprep.subr.mxu0 0.0
    %2313 = vmatpush1.msra.mxu0 0.0
    %2314 = vmatprep.subr.mxu0 0.0
    %2315 = vmatpush1.msra.mxu0 0.0
    %2316 = vmatprep.subr.mxu0 0.0
    %2317 = vmatpush1.msra.mxu0 0.0
    %2318 = vmatprep.subr.mxu0 0.0
    %2319 = vmatpush1.msra.mxu0 0.0
    %2320 = vmatprep.subr.mxu0 0.0
    %2321 = vmatpush1.msra.mxu0 0.0
    %2322 = vmatprep.subr.mxu0 0.0
    %2323 = vmatpush1.msra.mxu0 0.0
    %2324 = vmatprep.subr.mxu0 0.0
    %2325 = vmatpush1.msra.mxu0 0.0
    %2326 = vmatprep.subr.mxu0 0.0
    %2327 = vmatpush1.msra.mxu0 0.0
    %2328 = vmatprep.subr.mxu0 0.0
    %2329 = vmatpush1.msra.mxu0 0.0
    %2330 = vmatprep.subr.mxu0 0.0
    %2331 = vmatpush1.msra.mxu0 0.0
    %2332 = vmatprep.subr.mxu0 0.0
    %2333 = vmatpush1.msra.mxu0 0.0
    %2334 = vmatprep.subr.mxu0 0.0
    %2335 = vmatpush1.msra.mxu0 0.0
    %2336 = vmatprep.subr.mxu0 0.0
    %2337 = vmatpush1.msra.mxu0 0.0
    %2338 = vmatprep.subr.mxu0 0.0
    %2339 = vmatpush1.msra.mxu0 0.0
    %2340 = vmatprep.subr.mxu0 0.0
    %2341 = vmatpush1.msra.mxu0 0.0
    %2342 = vmatprep.subr.mxu0 0.0
    %2343 = vmatpush1.msra.mxu0 0.0
    %2344 = vmatprep.subr.mxu0 0.0
    %2345 = vmatpush1.msra.mxu0 0.0
    %2346 = vmatprep.subr.mxu0 0.0
    %2347 = vmatpush1.msra.mxu0 0.0
    %2348 = vmatprep.subr.mxu0 0.0
    %2349 = vmatpush1.msra.mxu0 0.0
    %2350 = vmatprep.subr.mxu0 0.0
    %2351 = vmatpush1.msra.mxu0 0.0
    %2352 = vmatprep.subr.mxu0 0.0
    %2353 = vmatpush1.msra.mxu0 0.0
    %2354 = vmatprep.subr.mxu0 0.0
    %2355 = vmatpush1.msra.mxu0 0.0
    %2356 = vmatprep.subr.mxu0 0.0
    %2357 = vmatpush1.msra.mxu0 0.0
    %2358 = vmatprep.subr.mxu0 0.0
    %2359 = vmatpush1.msra.mxu0 0.0
    %2360 = vmatprep.subr.mxu0 0.0
    %2361 = vmatpush1.msra.mxu0 0.0
    %2362 = vmatprep.mubr.f32.mxu0 0.0
    %2363 = vmatmul.mubr.f32.gmra.mrb[0].mxu0 %v2296
    %v2364 = vpop.f32.mrb[0].mxu0
    %v2365 = vadd.f32 0.0, %v2364
    %v2366 = vpop.f32.mrb[0].mxu0
    %2367 = vdwg.mxu0
    %v2369 = vrot.slane %v2365, 2
    %v2371 = vadd.f32 %v218, %v2369
    %v2372 = vmul.f32 %v2371, 0.5
    %v2373 = vtanh.pop %v2372
    %v2374 = vmul.f32 %v2373, 0.5
    %v2375 = vadd.f32 %v2374, 0.5
    %2376 = vmatprep.subr.mxu0 0.0
    %2377 = vmatpush1.msra.mxu0 %v233
    %2378 = vmatprep.subr.mxu0 0.0
    %2379 = vmatpush1.msra.mxu0 %v234
    %2380 = vmatprep.subr.mxu0 0.0
    %2381 = vmatpush1.msra.mxu0 %v235
    %2382 = vmatprep.subr.mxu0 0.0
    %2383 = vmatpush1.msra.mxu0 %v236
    %2384 = vmatprep.subr.mxu0 0.0
    %2385 = vmatpush1.msra.mxu0 0.0
    %2386 = vmatprep.subr.mxu0 0.0
    %2387 = vmatpush1.msra.mxu0 0.0
    %2388 = vmatprep.subr.mxu0 0.0
    %2389 = vmatpush1.msra.mxu0 0.0
    %2390 = vmatprep.subr.mxu0 0.0
    %2391 = vmatpush1.msra.mxu0 0.0
    %2392 = vmatprep.subr.mxu0 0.0
    %2393 = vmatpush1.msra.mxu0 0.0
    %2394 = vmatprep.subr.mxu0 0.0
    %2395 = vmatpush1.msra.mxu0 0.0
    %2396 = vmatprep.subr.mxu0 0.0
    %2397 = vmatpush1.msra.mxu0 0.0
    %2398 = vmatprep.subr.mxu0 0.0
    %2399 = vmatpush1.msra.mxu0 0.0
    %2400 = vmatprep.subr.mxu0 0.0
    %2401 = vmatpush1.msra.mxu0 0.0
    %2402 = vmatprep.subr.mxu0 0.0
    %2403 = vmatpush1.msra.mxu0 0.0
    %2404 = vmatprep.subr.mxu0 0.0
    %2405 = vmatpush1.msra.mxu0 0.0
    %2406 = vmatprep.subr.mxu0 0.0
    %2407 = vmatpush1.msra.mxu0 0.0
    %2408 = vmatprep.subr.mxu0 0.0
    %2409 = vmatpush1.msra.mxu0 0.0
    %2410 = vmatprep.subr.mxu0 0.0
    %2411 = vmatpush1.msra.mxu0 0.0
    %2412 = vmatprep.subr.mxu0 0.0
    %2413 = vmatpush1.msra.mxu0 0.0
    %2414 = vmatprep.subr.mxu0 0.0
    %2415 = vmatpush1.msra.mxu0 0.0
    %2416 = vmatprep.subr.mxu0 0.0
    %2417 = vmatpush1.msra.mxu0 0.0
    %2418 = vmatprep.subr.mxu0 0.0
    %2419 = vmatpush1.msra.mxu0 0.0
    %2420 = vmatprep.subr.mxu0 0.0
    %2421 = vmatpush1.msra.mxu0 0.0
    %2422 = vmatprep.subr.mxu0 0.0
    %2423 = vmatpush1.msra.mxu0 0.0
    %2424 = vmatprep.subr.mxu0 0.0
    %2425 = vmatpush1.msra.mxu0 0.0
    %2426 = vmatprep.subr.mxu0 0.0
    %2427 = vmatpush1.msra.mxu0 0.0
    %2428 = vmatprep.subr.mxu0 0.0
    %2429 = vmatpush1.msra.mxu0 0.0
    %2430 = vmatprep.subr.mxu0 0.0
    %2431 = vmatpush1.msra.mxu0 0.0
    %2432 = vmatprep.subr.mxu0 0.0
    %2433 = vmatpush1.msra.mxu0 0.0
    %2434 = vmatprep.subr.mxu0 0.0
    %2435 = vmatpush1.msra.mxu0 0.0
    %2436 = vmatprep.subr.mxu0 0.0
    %2437 = vmatpush1.msra.mxu0 0.0
    %2438 = vmatprep.subr.mxu0 0.0
    %2439 = vmatpush1.msra.mxu0 0.0
    %2440 = vmatprep.mubr.f32.mxu0 0.0
    %2441 = vmatmul.mubr.f32.gmra.mrb[0].mxu0 %v2296
    %v2442 = vpop.f32.mrb[0].mxu0
    %v2443 = vadd.f32 0.0, %v2442
    %v2444 = vpop.f32.mrb[0].mxu0
    %2445 = vdwg.mxu0
    %v2447 = vrot.slane %v2443, 2
    %2448 = vrot.lane.b32.xlu0 %v2447, 32
    %v2449 = vpop.permute.xlu0 %2448
    %v2451 = vadd.f32 %v218, %v2449
    %v2452 = vmul.f32 %v2451, 0.5
    %v2453 = vtanh.pop %v2452
    %v2454 = vmul.f32 %v2453, 0.5
    %v2455 = vadd.f32 %v2454, 0.5
    %2456 = vmatprep.subr.mxu0 0.0
    %2457 = vmatpush1.msra.mxu0 %v238
    %2458 = vmatprep.subr.mxu0 0.0
    %2459 = vmatpush1.msra.mxu0 %v239
    %2460 = vmatprep.subr.mxu0 0.0
    %2461 = vmatpush1.msra.mxu0 %v240
    %2462 = vmatprep.subr.mxu0 0.0
    %2463 = vmatpush1.msra.mxu0 %v241
    %2464 = vmatprep.subr.mxu0 0.0
    %2465 = vmatpush1.msra.mxu0 0.0
    %2466 = vmatprep.subr.mxu0 0.0
    %2467 = vmatpush1.msra.mxu0 0.0
    %2468 = vmatprep.subr.mxu0 0.0
    %2469 = vmatpush1.msra.mxu0 0.0
    %2470 = vmatprep.subr.mxu0 0.0
    %2471 = vmatpush1.msra.mxu0 0.0
    %2472 = vmatprep.subr.mxu0 0.0
    %2473 = vmatpush1.msra.mxu0 0.0
    %2474 = vmatprep.subr.mxu0 0.0
    %2475 = vmatpush1.msra.mxu0 0.0
    %2476 = vmatprep.subr.mxu0 0.0
    %2477 = vmatpush1.msra.mxu0 0.0
    %2478 = vmatprep.subr.mxu0 0.0
    %2479 = vmatpush1.msra.mxu0 0.0
    %2480 = vmatprep.subr.mxu0 0.0
    %2481 = vmatpush1.msra.mxu0 0.0
    %2482 = vmatprep.subr.mxu0 0.0
    %2483 = vmatpush1.msra.mxu0 0.0
    %2484 = vmatprep.subr.mxu0 0.0
    %2485 = vmatpush1.msra.mxu0 0.0
    %2486 = vmatprep.subr.mxu0 0.0
    %2487 = vmatpush1.msra.mxu0 0.0
    %2488 = vmatprep.subr.mxu0 0.0
    %2489 = vmatpush1.msra.mxu0 0.0
    %2490 = vmatprep.subr.mxu0 0.0
    %2491 = vmatpush1.msra.mxu0 0.0
    %2492 = vmatprep.subr.mxu0 0.0
    %2493 = vmatpush1.msra.mxu0 0.0
    %2494 = vmatprep.subr.mxu0 0.0
    %2495 = vmatpush1.msra.mxu0 0.0
    %2496 = vmatprep.subr.mxu0 0.0
    %2497 = vmatpush1.msra.mxu0 0.0
    %2498 = vmatprep.subr.mxu0 0.0
    %2499 = vmatpush1.msra.mxu0 0.0
    %2500 = vmatprep.subr.mxu0 0.0
    %2501 = vmatpush1.msra.mxu0 0.0
    %2502 = vmatprep.subr.mxu0 0.0
    %2503 = vmatpush1.msra.mxu0 0.0
    %2504 = vmatprep.subr.mxu0 0.0
    %2505 = vmatpush1.msra.mxu0 0.0
    %2506 = vmatprep.subr.mxu0 0.0
    %2507 = vmatpush1.msra.mxu0 0.0
    %2508 = vmatprep.subr.mxu0 0.0
    %2509 = vmatpush1.msra.mxu0 0.0
    %2510 = vmatprep.subr.mxu0 0.0
    %2511 = vmatpush1.msra.mxu0 0.0
    %2512 = vmatprep.subr.mxu0 0.0
    %2513 = vmatpush1.msra.mxu0 0.0
    %2514 = vmatprep.subr.mxu0 0.0
    %2515 = vmatpush1.msra.mxu0 0.0
    %2516 = vmatprep.subr.mxu0 0.0
    %2517 = vmatpush1.msra.mxu0 0.0
    %2518 = vmatprep.subr.mxu0 0.0
    %2519 = vmatpush1.msra.mxu0 0.0
    %2520 = vmatprep.mubr.f32.mxu0 0.0
    %2521 = vmatmul.mubr.f32.gmra.mrb[0].mxu0 %v2296
    %v2522 = vpop.f32.mrb[0].mxu0
    %v2523 = vadd.f32 0.0, %v2522
    %v2524 = vpop.f32.mrb[0].mxu0
    %2525 = vdwg.mxu0
    %v2527 = vrot.slane %v2523, 2
    %2528 = vrot.lane.b32.xlu0 %v2527, 64
    %v2529 = vpop.permute.xlu0 %2528
    %v2531 = vadd.f32 %v218, %v2529
    %v2532 = vtanh.pop %v2531
    %2533 = vmatprep.subr.mxu0 0.0
    %2534 = vmatpush1.msra.mxu0 %v243
    %2535 = vmatprep.subr.mxu0 0.0
    %2536 = vmatpush1.msra.mxu0 %v244
    %2537 = vmatprep.subr.mxu0 0.0
    %2538 = vmatpush1.msra.mxu0 %v245
    %2539 = vmatprep.subr.mxu0 0.0
    %2540 = vmatpush1.msra.mxu0 %v246
    %2541 = vmatprep.subr.mxu0 0.0
    %2542 = vmatpush1.msra.mxu0 0.0
    %2543 = vmatprep.subr.mxu0 0.0
    %2544 = vmatpush1.msra.mxu0 0.0
    %2545 = vmatprep.subr.mxu0 0.0
    %2546 = vmatpush1.msra.mxu0 0.0
    %2547 = vmatprep.subr.mxu0 0.0
    %2548 = vmatpush1.msra.mxu0 0.0
    %2549 = vmatprep.subr.mxu0 0.0
    %2550 = vmatpush1.msra.mxu0 0.0
    %2551 = vmatprep.subr.mxu0 0.0
    %2552 = vmatpush1.msra.mxu0 0.0
    %2553 = vmatprep.subr.mxu0 0.0
    %2554 = vmatpush1.msra.mxu0 0.0
    %2555 = vmatprep.subr.mxu0 0.0
    %2556 = vmatpush1.msra.mxu0 0.0
    %2557 = vmatprep.subr.mxu0 0.0
    %2558 = vmatpush1.msra.mxu0 0.0
    %2559 = vmatprep.subr.mxu0 0.0
    %2560 = vmatpush1.msra.mxu0 0.0
    %2561 = vmatprep.subr.mxu0 0.0
    %2562 = vmatpush1.msra.mxu0 0.0
    %2563 = vmatprep.subr.mxu0 0.0
    %2564 = vmatpush1.msra.mxu0 0.0
    %2565 = vmatprep.subr.mxu0 0.0
    %2566 = vmatpush1.msra.mxu0 0.0
    %2567 = vmatprep.subr.mxu0 0.0
    %2568 = vmatpush1.msra.mxu0 0.0
    %2569 = vmatprep.subr.mxu0 0.0
    %2570 = vmatpush1.msra.mxu0 0.0
    %2571 = vmatprep.subr.mxu0 0.0
    %2572 = vmatpush1.msra.mxu0 0.0
    %2573 = vmatprep.subr.mxu0 0.0
    %2574 = vmatpush1.msra.mxu0 0.0
    %2575 = vmatprep.subr.mxu0 0.0
    %2576 = vmatpush1.msra.mxu0 0.0
    %2577 = vmatprep.subr.mxu0 0.0
    %2578 = vmatpush1.msra.mxu0 0.0
    %2579 = vmatprep.subr.mxu0 0.0
    %2580 = vmatpush1.msra.mxu0 0.0
    %2581 = vmatprep.subr.mxu0 0.0
    %2582 = vmatpush1.msra.mxu0 0.0
    %2583 = vmatprep.subr.mxu0 0.0
    %2584 = vmatpush1.msra.mxu0 0.0
    %2585 = vmatprep.subr.mxu0 0.0
    %2586 = vmatpush1.msra.mxu0 0.0
    %2587 = vmatprep.subr.mxu0 0.0
    %2588 = vmatpush1.msra.mxu0 0.0
    %2589 = vmatprep.subr.mxu0 0.0
    %2590 = vmatpush1.msra.mxu0 0.0
    %2591 = vmatprep.subr.mxu0 0.0
    %2592 = vmatpush1.msra.mxu0 0.0
    %2593 = vmatprep.subr.mxu0 0.0
    %2594 = vmatpush1.msra.mxu0 0.0
    %2595 = vmatprep.subr.mxu0 0.0
    %2596 = vmatpush1.msra.mxu0 0.0
    %2597 = vmatprep.mubr.f32.mxu0 0.0
    %2598 = vmatmul.mubr.f32.gmra.mrb[0].mxu0 %v2296
    %v2599 = vpop.f32.mrb[0].mxu0
    %v2600 = vadd.f32 0.0, %v2599
    %v2601 = vpop.f32.mrb[0].mxu0
    %2602 = vdwg.mxu0
    %v2604 = vrot.slane %v2600, 2
    %2605 = vrot.lane.b32.xlu0 %v2604, 96
    %v2606 = vpop.permute.xlu0 %2605
    %v2608 = vadd.f32 %v218, %v2606
    %v2609 = vmul.f32 %v2608, 0.5
    %v2610 = vtanh.pop %v2609
    %v2611 = vmul.f32 %v2610, 0.5
    %v2612 = vadd.f32 %v2611, 0.5
    %v2614 = vrot.slane %v1944, 6
    %v2616 = vmul.f32 %v2455, %v2614
    %2618 = vrot.lane.b32.xlu0 %v2532, 64
    %v2619 = vpop.permute.xlu0 %2618
    %v2621 = vmul.f32 %v2375, %v2619
    %2623 = vrot.lane.b32.xlu0 %v2621, 32
    %v2624 = vpop.permute.xlu0 %2623
    %v2626 = vadd.f32 %v2616, %v2624
    %v2627 = vtanh.pop %v2626
    %2629 = vrot.lane.b32.xlu0 %v2627, 64
    %v2630 = vpop.permute.xlu0 %2629
    %v2632 = vmul.f32 %v2612, %v2630
    %v2634 = vrot.slane %v2291, 2
    %2635 = vrot.lane.b32.xlu0 %v2634, 32
    %v2636 = vpop.permute.xlu0 %2635
    %v2637 = vsel %vm267, %v2636, 0
    %2639 = vmatprep.subr.mxu0 0.0
    %2640 = vmatpush1.msra.mxu0 %v248
    %2641 = vmatprep.subr.mxu0 0.0
    %2642 = vmatpush1.msra.mxu0 %v249
    %2643 = vmatprep.subr.mxu0 0.0
    %2644 = vmatpush1.msra.mxu0 %v250
    %2645 = vmatprep.subr.mxu0 0.0
    %2646 = vmatpush1.msra.mxu0 %v251
    %2647 = vmatprep.subr.mxu0 0.0
    %2648 = vmatpush1.msra.mxu0 0.0
    %2649 = vmatprep.subr.mxu0 0.0
    %2650 = vmatpush1.msra.mxu0 0.0
    %2651 = vmatprep.subr.mxu0 0.0
    %2652 = vmatpush1.msra.mxu0 0.0
    %2653 = vmatprep.subr.mxu0 0.0
    %2654 = vmatpush1.msra.mxu0 0.0
    %2655 = vmatprep.subr.mxu0 0.0
    %2656 = vmatpush1.msra.mxu0 0.0
    %2657 = vmatprep.subr.mxu0 0.0
    %2658 = vmatpush1.msra.mxu0 0.0
    %2659 = vmatprep.subr.mxu0 0.0
    %2660 = vmatpush1.msra.mxu0 0.0
    %2661 = vmatprep.subr.mxu0 0.0
    %2662 = vmatpush1.msra.mxu0 0.0
    %2663 = vmatprep.subr.mxu0 0.0
    %2664 = vmatpush1.msra.mxu0 0.0
    %2665 = vmatprep.subr.mxu0 0.0
    %2666 = vmatpush1.msra.mxu0 0.0
    %2667 = vmatprep.subr.mxu0 0.0
    %2668 = vmatpush1.msra.mxu0 0.0
    %2669 = vmatprep.subr.mxu0 0.0
    %2670 = vmatpush1.msra.mxu0 0.0
    %2671 = vmatprep.subr.mxu0 0.0
    %2672 = vmatpush1.msra.mxu0 0.0
    %2673 = vmatprep.subr.mxu0 0.0
    %2674 = vmatpush1.msra.mxu0 0.0
    %2675 = vmatprep.subr.mxu0 0.0
    %2676 = vmatpush1.msra.mxu0 0.0
    %2677 = vmatprep.subr.mxu0 0.0
    %2678 = vmatpush1.msra.mxu0 0.0
    %2679 = vmatprep.subr.mxu0 0.0
    %2680 = vmatpush1.msra.mxu0 0.0
    %2681 = vmatprep.subr.mxu0 0.0
    %2682 = vmatpush1.msra.mxu0 0.0
    %2683 = vmatprep.subr.mxu0 0.0
    %2684 = vmatpush1.msra.mxu0 0.0
    %2685 = vmatprep.subr.mxu0 0.0
    %2686 = vmatpush1.msra.mxu0 0.0
    %2687 = vmatprep.subr.mxu0 0.0
    %2688 = vmatpush1.msra.mxu0 0.0
    %2689 = vmatprep.subr.mxu0 0.0
    %2690 = vmatpush1.msra.mxu0 0.0
    %2691 = vmatprep.subr.mxu0 0.0
    %2692 = vmatpush1.msra.mxu0 0.0
    %2693 = vmatprep.subr.mxu0 0.0
    %2694 = vmatpush1.msra.mxu0 0.0
    %2695 = vmatprep.subr.mxu0 0.0
    %2696 = vmatpush1.msra.mxu0 0.0
    %2697 = vmatprep.subr.mxu0 0.0
    %2698 = vmatpush1.msra.mxu0 0.0
    %2699 = vmatprep.subr.mxu0 0.0
    %2700 = vmatpush1.msra.mxu0 0.0
    %2701 = vmatprep.subr.mxu0 0.0
    %2702 = vmatpush1.msra.mxu0 0.0
    %2703 = vmatprep.mubr.f32.mxu0 0.0
    %2704 = vmatmul.mubr.f32.gmra.mrb[0].mxu0 %v2637
    %v2705 = vpop.f32.mrb[0].mxu0
    %v2706 = vadd.f32 0.0, %v2705
    %v2707 = vpop.f32.mrb[0].mxu0
    %2708 = vdwg.mxu0
    %v2709 = vadd.f32 %v226, %v2706
    %v2710 = vmul.f32 %v2709, 0.5
    %v2711 = vtanh.pop %v2710
    %v2712 = vmul.f32 %v2711, 0.5
    %v2713 = vadd.f32 %v2712, 0.5
    %2714 = vmatprep.subr.mxu0 0.0
    %2715 = vmatpush1.msra.mxu0 %v253
    %2716 = vmatprep.subr.mxu0 0.0
    %2717 = vmatpush1.msra.mxu0 %v254
    %2718 = vmatprep.subr.mxu0 0.0
    %2719 = vmatpush1.msra.mxu0 %v255
    %2720 = vmatprep.subr.mxu0 0.0
    %2721 = vmatpush1.msra.mxu0 %v256
    %2722 = vmatprep.subr.mxu0 0.0
    %2723 = vmatpush1.msra.mxu0 0.0
    %2724 = vmatprep.subr.mxu0 0.0
    %2725 = vmatpush1.msra.mxu0 0.0
    %2726 = vmatprep.subr.mxu0 0.0
    %2727 = vmatpush1.msra.mxu0 0.0
    %2728 = vmatprep.subr.mxu0 0.0
    %2729 = vmatpush1.msra.mxu0 0.0
    %2730 = vmatprep.subr.mxu0 0.0
    %2731 = vmatpush1.msra.mxu0 0.0
    %2732 = vmatprep.subr.mxu0 0.0
    %2733 = vmatpush1.msra.mxu0 0.0
    %2734 = vmatprep.subr.mxu0 0.0
    %2735 = vmatpush1.msra.mxu0 0.0
    %2736 = vmatprep.subr.mxu0 0.0
    %2737 = vmatpush1.msra.mxu0 0.0
    %2738 = vmatprep.subr.mxu0 0.0
    %2739 = vmatpush1.msra.mxu0 0.0
    %2740 = vmatprep.subr.mxu0 0.0
    %2741 = vmatpush1.msra.mxu0 0.0
    %2742 = vmatprep.subr.mxu0 0.0
    %2743 = vmatpush1.msra.mxu0 0.0
    %2744 = vmatprep.subr.mxu0 0.0
    %2745 = vmatpush1.msra.mxu0 0.0
    %2746 = vmatprep.subr.mxu0 0.0
    %2747 = vmatpush1.msra.mxu0 0.0
    %2748 = vmatprep.subr.mxu0 0.0
    %2749 = vmatpush1.msra.mxu0 0.0
    %2750 = vmatprep.subr.mxu0 0.0
    %2751 = vmatpush1.msra.mxu0 0.0
    %2752 = vmatprep.subr.mxu0 0.0
    %2753 = vmatpush1.msra.mxu0 0.0
    %2754 = vmatprep.subr.mxu0 0.0
    %2755 = vmatpush1.msra.mxu0 0.0
    %2756 = vmatprep.subr.mxu0 0.0
    %2757 = vmatpush1.msra.mxu0 0.0
    %2758 = vmatprep.subr.mxu0 0.0
    %2759 = vmatpush1.msra.mxu0 0.0
    %2760 = vmatprep.subr.mxu0 0.0
    %2761 = vmatpush1.msra.mxu0 0.0
    %2762 = vmatprep.subr.mxu0 0.0
    %2763 = vmatpush1.msra.mxu0 0.0
    %2764 = vmatprep.subr.mxu0 0.0
    %2765 = vmatpush1.msra.mxu0 0.0
    %2766 = vmatprep.subr.mxu0 0.0
    %2767 = vmatpush1.msra.mxu0 0.0
    %2768 = vmatprep.subr.mxu0 0.0
    %2769 = vmatpush1.msra.mxu0 0.0
    %2770 = vmatprep.subr.mxu0 0.0
    %2771 = vmatpush1.msra.mxu0 0.0
    %2772 = vmatprep.subr.mxu0 0.0
    %2773 = vmatpush1.msra.mxu0 0.0
    %2774 = vmatprep.subr.mxu0 0.0
    %2775 = vmatpush1.msra.mxu0 0.0
    %2776 = vmatprep.subr.mxu0 0.0
    %2777 = vmatpush1.msra.mxu0 0.0
    %2778 = vmatprep.mubr.f32.mxu0 0.0
    %2779 = vmatmul.mubr.f32.gmra.mrb[0].mxu0 %v2637
    %v2780 = vpop.f32.mrb[0].mxu0
    %v2781 = vadd.f32 0.0, %v2780
    %v2782 = vpop.f32.mrb[0].mxu0
    %2783 = vdwg.mxu0
    %2785 = vrot.lane.b32.xlu0 %v2781, 32
    %v2786 = vpop.permute.xlu0 %2785
    %v2788 = vadd.f32 %v226, %v2786
    %v2789 = vmul.f32 %v2788, 0.5
    %v2790 = vtanh.pop %v2789
    %v2791 = vmul.f32 %v2790, 0.5
    %v2792 = vadd.f32 %v2791, 0.5
    %2793 = vmatprep.subr.mxu0 0.0
    %2794 = vmatpush1.msra.mxu0 %v258
    %2795 = vmatprep.subr.mxu0 0.0
    %2796 = vmatpush1.msra.mxu0 %v259
    %2797 = vmatprep.subr.mxu0 0.0
    %2798 = vmatpush1.msra.mxu0 %v260
    %2799 = vmatprep.subr.mxu0 0.0
    %2800 = vmatpush1.msra.mxu0 %v261
    %2801 = vmatprep.subr.mxu0 0.0
    %2802 = vmatpush1.msra.mxu0 0.0
    %2803 = vmatprep.subr.mxu0 0.0
    %2804 = vmatpush1.msra.mxu0 0.0
    %2805 = vmatprep.subr.mxu0 0.0
    %2806 = vmatpush1.msra.mxu0 0.0
    %2807 = vmatprep.subr.mxu0 0.0
    %2808 = vmatpush1.msra.mxu0 0.0
    %2809 = vmatprep.subr.mxu0 0.0
    %2810 = vmatpush1.msra.mxu0 0.0
    %2811 = vmatprep.subr.mxu0 0.0
    %2812 = vmatpush1.msra.mxu0 0.0
    %2813 = vmatprep.subr.mxu0 0.0
    %2814 = vmatpush1.msra.mxu0 0.0
    %2815 = vmatprep.subr.mxu0 0.0
    %2816 = vmatpush1.msra.mxu0 0.0
    %2817 = vmatprep.subr.mxu0 0.0
    %2818 = vmatpush1.msra.mxu0 0.0
    %2819 = vmatprep.subr.mxu0 0.0
    %2820 = vmatpush1.msra.mxu0 0.0
    %2821 = vmatprep.subr.mxu0 0.0
    %2822 = vmatpush1.msra.mxu0 0.0
    %2823 = vmatprep.subr.mxu0 0.0
    %2824 = vmatpush1.msra.mxu0 0.0
    %2825 = vmatprep.subr.mxu0 0.0
    %2826 = vmatpush1.msra.mxu0 0.0
    %2827 = vmatprep.subr.mxu0 0.0
    %2828 = vmatpush1.msra.mxu0 0.0
    %2829 = vmatprep.subr.mxu0 0.0
    %2830 = vmatpush1.msra.mxu0 0.0
    %2831 = vmatprep.subr.mxu0 0.0
    %2832 = vmatpush1.msra.mxu0 0.0
    %2833 = vmatprep.subr.mxu0 0.0
    %2834 = vmatpush1.msra.mxu0 0.0
    %2835 = vmatprep.subr.mxu0 0.0
    %2836 = vmatpush1.msra.mxu0 0.0
    %2837 = vmatprep.subr.mxu0 0.0
    %2838 = vmatpush1.msra.mxu0 0.0
    %2839 = vmatprep.subr.mxu0 0.0
    %2840 = vmatpush1.msra.mxu0 0.0
    %2841 = vmatprep.subr.mxu0 0.0
    %2842 = vmatpush1.msra.mxu0 0.0
    %2843 = vmatprep.subr.mxu0 0.0
    %2844 = vmatpush1.msra.mxu0 0.0
    %2845 = vmatprep.subr.mxu0 0.0
    %2846 = vmatpush1.msra.mxu0 0.0
    %2847 = vmatprep.subr.mxu0 0.0
    %2848 = vmatpush1.msra.mxu0 0.0
    %2849 = vmatprep.subr.mxu0 0.0
    %2850 = vmatpush1.msra.mxu0 0.0
    %2851 = vmatprep.subr.mxu0 0.0
    %2852 = vmatpush1.msra.mxu0 0.0
    %2853 = vmatprep.subr.mxu0 0.0
    %2854 = vmatpush1.msra.mxu0 0.0
    %2855 = vmatprep.subr.mxu0 0.0
    %2856 = vmatpush1.msra.mxu0 0.0
    %2857 = vmatprep.mubr.f32.mxu0 0.0
    %2858 = vmatmul.mubr.f32.gmra.mrb[0].mxu0 %v2637
    %v2859 = vpop.f32.mrb[0].mxu0
    %v2860 = vadd.f32 0.0, %v2859
    %v2861 = vpop.f32.mrb[0].mxu0
    %2862 = vdwg.mxu0
    %2864 = vrot.lane.b32.xlu0 %v2860, 64
    %v2865 = vpop.permute.xlu0 %2864
    %v2867 = vadd.f32 %v226, %v2865
    %v2868 = vtanh.pop %v2867
    %2869 = vmatprep.subr.mxu0 0.0
    %2870 = vmatpush1.msra.mxu0 %v263
    %2871 = vmatprep.subr.mxu0 0.0
    %2872 = vmatpush1.msra.mxu0 %v264
    %2873 = vmatprep.subr.mxu0 0.0
    %2874 = vmatpush1.msra.mxu0 %v265
    %2875 = vmatprep.subr.mxu0 0.0
    %2876 = vmatpush1.msra.mxu0 %v266
    %2877 = vmatprep.subr.mxu0 0.0
    %2878 = vmatpush1.msra.mxu0 0.0
    %2879 = vmatprep.subr.mxu0 0.0
    %2880 = vmatpush1.msra.mxu0 0.0
    %2881 = vmatprep.subr.mxu0 0.0
    %2882 = vmatpush1.msra.mxu0 0.0
    %2883 = vmatprep.subr.mxu0 0.0
    %2884 = vmatpush1.msra.mxu0 0.0
    %2885 = vmatprep.subr.mxu0 0.0
    %2886 = vmatpush1.msra.mxu0 0.0
    %2887 = vmatprep.subr.mxu0 0.0
    %2888 = vmatpush1.msra.mxu0 0.0
    %2889 = vmatprep.subr.mxu0 0.0
    %2890 = vmatpush1.msra.mxu0 0.0
    %2891 = vmatprep.subr.mxu0 0.0
    %2892 = vmatpush1.msra.mxu0 0.0
    %2893 = vmatprep.subr.mxu0 0.0
    %2894 = vmatpush1.msra.mxu0 0.0
    %2895 = vmatprep.subr.mxu0 0.0
    %2896 = vmatpush1.msra.mxu0 0.0
    %2897 = vmatprep.subr.mxu0 0.0
    %2898 = vmatpush1.msra.mxu0 0.0
    %2899 = vmatprep.subr.mxu0 0.0
    %2900 = vmatpush1.msra.mxu0 0.0
    %2901 = vmatprep.subr.mxu0 0.0
    %2902 = vmatpush1.msra.mxu0 0.0
    %2903 = vmatprep.subr.mxu0 0.0
    %2904 = vmatpush1.msra.mxu0 0.0
    %2905 = vmatprep.subr.mxu0 0.0
    %2906 = vmatpush1.msra.mxu0 0.0
    %2907 = vmatprep.subr.mxu0 0.0
    %2908 = vmatpush1.msra.mxu0 0.0
    %2909 = vmatprep.subr.mxu0 0.0
    %2910 = vmatpush1.msra.mxu0 0.0
    %2911 = vmatprep.subr.mxu0 0.0
    %2912 = vmatpush1.msra.mxu0 0.0
    %2913 = vmatprep.subr.mxu0 0.0
    %2914 = vmatpush1.msra.mxu0 0.0
    %2915 = vmatprep.subr.mxu0 0.0
    %2916 = vmatpush1.msra.mxu0 0.0
    %2917 = vmatprep.subr.mxu0 0.0
    %2918 = vmatpush1.msra.mxu0 0.0
    %2919 = vmatprep.subr.mxu0 0.0
    %2920 = vmatpush1.msra.mxu0 0.0
    %2921 = vmatprep.subr.mxu0 0.0
    %2922 = vmatpush1.msra.mxu0 0.0
    %2923 = vmatprep.subr.mxu0 0.0
    %2924 = vmatpush1.msra.mxu0 0.0
    %2925 = vmatprep.subr.mxu0 0.0
    %2926 = vmatpush1.msra.mxu0 0.0
    %2927 = vmatprep.subr.mxu0 0.0
    %2928 = vmatpush1.msra.mxu0 0.0
    %2929 = vmatprep.subr.mxu0 0.0
    %2930 = vmatpush1.msra.mxu0 0.0
    %2931 = vmatprep.subr.mxu0 0.0
    %2932 = vmatpush1.msra.mxu0 0.0
    %2933 = vmatprep.mubr.f32.mxu0 0.0
    %2934 = vmatmul.mubr.f32.gmra.mrb[0].mxu0 %v2637
    %v2935 = vpop.f32.mrb[0].mxu0
    %v2936 = vadd.f32 0.0, %v2935
    %v2937 = vpop.f32.mrb[0].mxu0
    %2938 = vdwg.mxu0
    %2940 = vrot.lane.b32.xlu0 %v2936, 96
    %v2941 = vpop.permute.xlu0 %2940
    %v2943 = vadd.f32 %v226, %v2941
    %v2944 = vmul.f32 %v2943, 0.5
    %v2945 = vtanh.pop %v2944
    %v2946 = vmul.f32 %v2945, 0.5
    %v2947 = vadd.f32 %v2946, 0.5
    %v2949 = vrot.slane %v2285, 2
    %v2951 = vmul.f32 %v2792, %v2949
    %2953 = vrot.lane.b32.xlu0 %v2868, 64
    %v2954 = vpop.permute.xlu0 %2953
    %v2956 = vmul.f32 %v2713, %v2954
    %2958 = vrot.lane.b32.xlu0 %v2956, 32
    %v2959 = vpop.permute.xlu0 %2958
    %v2961 = vadd.f32 %v2951, %v2959
    %v2962 = vtanh.pop %v2961
    %2964 = vrot.lane.b32.xlu0 %v2962, 64
    %v2965 = vpop.permute.xlu0 %2964
    %v2967 = vmul.f32 %v2947, %v2965
    %v2969 = vrot.slane %v2632, 6
    %2970 = vrot.lane.b32.xlu0 %v2969, 32
    %v2971 = vpop.permute.xlu0 %2970
    %v2972 = vsel %vm267, %v2971, 0
    %2974 = vmatprep.subr.mxu0 0.0
    %2975 = vmatpush1.msra.mxu0 %v228
    %2976 = vmatprep.subr.mxu0 0.0
    %2977 = vmatpush1.msra.mxu0 %v229
    %2978 = vmatprep.subr.mxu0 0.0
    %2979 = vmatpush1.msra.mxu0 %v230
    %2980 = vmatprep.subr.mxu0 0.0
    %2981 = vmatpush1.msra.mxu0 %v231
    %2982 = vmatprep.subr.mxu0 0.0
    %2983 = vmatpush1.msra.mxu0 0.0
    %2984 = vmatprep.subr.mxu0 0.0
    %2985 = vmatpush1.msra.mxu0 0.0
    %2986 = vmatprep.subr.mxu0 0.0
    %2987 = vmatpush1.msra.mxu0 0.0
    %2988 = vmatprep.subr.mxu0 0.0
    %2989 = vmatpush1.msra.mxu0 0.0
    %2990 = vmatprep.subr.mxu0 0.0
    %2991 = vmatpush1.msra.mxu0 0.0
    %2992 = vmatprep.subr.mxu0 0.0
    %2993 = vmatpush1.msra.mxu0 0.0
    %2994 = vmatprep.subr.mxu0 0.0
    %2995 = vmatpush1.msra.mxu0 0.0
    %2996 = vmatprep.subr.mxu0 0.0
    %2997 = vmatpush1.msra.mxu0 0.0
    %2998 = vmatprep.subr.mxu0 0.0
    %2999 = vmatpush1.msra.mxu0 0.0
    %3000 = vmatprep.subr.mxu0 0.0
    %3001 = vmatpush1.msra.mxu0 0.0
    %3002 = vmatprep.subr.mxu0 0.0
    %3003 = vmatpush1.msra.mxu0 0.0
    %3004 = vmatprep.subr.mxu0 0.0
    %3005 = vmatpush1.msra.mxu0 0.0
    %3006 = vmatprep.subr.mxu0 0.0
    %3007 = vmatpush1.msra.mxu0 0.0
    %3008 = vmatprep.subr.mxu0 0.0
    %3009 = vmatpush1.msra.mxu0 0.0
    %3010 = vmatprep.subr.mxu0 0.0
    %3011 = vmatpush1.msra.mxu0 0.0
    %3012 = vmatprep.subr.mxu0 0.0
    %3013 = vmatpush1.msra.mxu0 0.0
    %3014 = vmatprep.subr.mxu0 0.0
    %3015 = vmatpush1.msra.mxu0 0.0
    %3016 = vmatprep.subr.mxu0 0.0
    %3017 = vmatpush1.msra.mxu0 0.0
    %3018 = vmatprep.subr.mxu0 0.0
    %3019 = vmatpush1.msra.mxu0 0.0
    %3020 = vmatprep.subr.mxu0 0.0
    %3021 = vmatpush1.msra.mxu0 0.0
    %3022 = vmatprep.subr.mxu0 0.0
    %3023 = vmatpush1.msra.mxu0 0.0
    %3024 = vmatprep.subr.mxu0 0.0
    %3025 = vmatpush1.msra.mxu0 0.0
    %3026 = vmatprep.subr.mxu0 0.0
    %3027 = vmatpush1.msra.mxu0 0.0
    %3028 = vmatprep.subr.mxu0 0.0
    %3029 = vmatpush1.msra.mxu0 0.0
    %3030 = vmatprep.subr.mxu0 0.0
    %3031 = vmatpush1.msra.mxu0 0.0
    %3032 = vmatprep.subr.mxu0 0.0
    %3033 = vmatpush1.msra.mxu0 0.0
    %3034 = vmatprep.subr.mxu0 0.0
    %3035 = vmatpush1.msra.mxu0 0.0
    %3036 = vmatprep.subr.mxu0 0.0
    %3037 = vmatpush1.msra.mxu0 0.0
    %3038 = vmatprep.mubr.f32.mxu0 0.0
    %3039 = vmatmul.mubr.f32.gmra.mrb[0].mxu0 %v2972
    %v3040 = vpop.f32.mrb[0].mxu0
    %v3041 = vadd.f32 0.0, %v3040
    %v3042 = vpop.f32.mrb[0].mxu0
    %3043 = vdwg.mxu0
    %v3044 = vadd.f32 %v224, %v3041
    %v3045 = vmul.f32 %v3044, 0.5
    %v3046 = vtanh.pop %v3045
    %v3047 = vmul.f32 %v3046, 0.5
    %v3048 = vadd.f32 %v3047, 0.5
    %3049 = vmatprep.subr.mxu0 0.0
    %3050 = vmatpush1.msra.mxu0 %v233
    %3051 = vmatprep.subr.mxu0 0.0
    %3052 = vmatpush1.msra.mxu0 %v234
    %3053 = vmatprep.subr.mxu0 0.0
    %3054 = vmatpush1.msra.mxu0 %v235
    %3055 = vmatprep.subr.mxu0 0.0
    %3056 = vmatpush1.msra.mxu0 %v236
    %3057 = vmatprep.subr.mxu0 0.0
    %3058 = vmatpush1.msra.mxu0 0.0
    %3059 = vmatprep.subr.mxu0 0.0
    %3060 = vmatpush1.msra.mxu0 0.0
    %3061 = vmatprep.subr.mxu0 0.0
    %3062 = vmatpush1.msra.mxu0 0.0
    %3063 = vmatprep.subr.mxu0 0.0
    %3064 = vmatpush1.msra.mxu0 0.0
    %3065 = vmatprep.subr.mxu0 0.0
    %3066 = vmatpush1.msra.mxu0 0.0
    %3067 = vmatprep.subr.mxu0 0.0
    %3068 = vmatpush1.msra.mxu0 0.0
    %3069 = vmatprep.subr.mxu0 0.0
    %3070 = vmatpush1.msra.mxu0 0.0
    %3071 = vmatprep.subr.mxu0 0.0
    %3072 = vmatpush1.msra.mxu0 0.0
    %3073 = vmatprep.subr.mxu0 0.0
    %3074 = vmatpush1.msra.mxu0 0.0
    %3075 = vmatprep.subr.mxu0 0.0
    %3076 = vmatpush1.msra.mxu0 0.0
    %3077 = vmatprep.subr.mxu0 0.0
    %3078 = vmatpush1.msra.mxu0 0.0
    %3079 = vmatprep.subr.mxu0 0.0
    %3080 = vmatpush1.msra.mxu0 0.0
    %3081 = vmatprep.subr.mxu0 0.0
    %3082 = vmatpush1.msra.mxu0 0.0
    %3083 = vmatprep.subr.mxu0 0.0
    %3084 = vmatpush1.msra.mxu0 0.0
    %3085 = vmatprep.subr.mxu0 0.0
    %3086 = vmatpush1.msra.mxu0 0.0
    %3087 = vmatprep.subr.mxu0 0.0
    %3088 = vmatpush1.msra.mxu0 0.0
    %3089 = vmatprep.subr.mxu0 0.0
    %3090 = vmatpush1.msra.mxu0 0.0
    %3091 = vmatprep.subr.mxu0 0.0
    %3092 = vmatpush1.msra.mxu0 0.0
    %3093 = vmatprep.subr.mxu0 0.0
    %3094 = vmatpush1.msra.mxu0 0.0
    %3095 = vmatprep.subr.mxu0 0.0
    %3096 = vmatpush1.msra.mxu0 0.0
    %3097 = vmatprep.subr.mxu0 0.0
    %3098 = vmatpush1.msra.mxu0 0.0
    %3099 = vmatprep.subr.mxu0 0.0
    %3100 = vmatpush1.msra.mxu0 0.0
    %3101 = vmatprep.subr.mxu0 0.0
    %3102 = vmatpush1.msra.mxu0 0.0
    %3103 = vmatprep.subr.mxu0 0.0
    %3104 = vmatpush1.msra.mxu0 0.0
    %3105 = vmatprep.subr.mxu0 0.0
    %3106 = vmatpush1.msra.mxu0 0.0
    %3107 = vmatprep.subr.mxu0 0.0
    %3108 = vmatpush1.msra.mxu0 0.0
    %3109 = vmatprep.subr.mxu0 0.0
    %3110 = vmatpush1.msra.mxu0 0.0
    %3111 = vmatprep.subr.mxu0 0.0
    %3112 = vmatpush1.msra.mxu0 0.0
    %3113 = vmatprep.mubr.f32.mxu0 0.0
    %3114 = vmatmul.mubr.f32.gmra.mrb[0].mxu0 %v2972
    %v3115 = vpop.f32.mrb[0].mxu0
    %v3116 = vadd.f32 0.0, %v3115
    %v3117 = vpop.f32.mrb[0].mxu0
    %3118 = vdwg.mxu0
    %3120 = vrot.lane.b32.xlu0 %v3116, 32
    %v3121 = vpop.permute.xlu0 %3120
    %v3123 = vadd.f32 %v224, %v3121
    %v3124 = vmul.f32 %v3123, 0.5
    %v3125 = vtanh.pop %v3124
    %v3126 = vmul.f32 %v3125, 0.5
    %v3127 = vadd.f32 %v3126, 0.5
    %3128 = vmatprep.subr.mxu0 0.0
    %3129 = vmatpush1.msra.mxu0 %v238
    %3130 = vmatprep.subr.mxu0 0.0
    %3131 = vmatpush1.msra.mxu0 %v239
    %3132 = vmatprep.subr.mxu0 0.0
    %3133 = vmatpush1.msra.mxu0 %v240
    %3134 = vmatprep.subr.mxu0 0.0
    %3135 = vmatpush1.msra.mxu0 %v241
    %3136 = vmatprep.subr.mxu0 0.0
    %3137 = vmatpush1.msra.mxu0 0.0
    %3138 = vmatprep.subr.mxu0 0.0
    %3139 = vmatpush1.msra.mxu0 0.0
    %3140 = vmatprep.subr.mxu0 0.0
    %3141 = vmatpush1.msra.mxu0 0.0
    %3142 = vmatprep.subr.mxu0 0.0
    %3143 = vmatpush1.msra.mxu0 0.0
    %3144 = vmatprep.subr.mxu0 0.0
    %3145 = vmatpush1.msra.mxu0 0.0
    %3146 = vmatprep.subr.mxu0 0.0
    %3147 = vmatpush1.msra.mxu0 0.0
    %3148 = vmatprep.subr.mxu0 0.0
    %3149 = vmatpush1.msra.mxu0 0.0
    %3150 = vmatprep.subr.mxu0 0.0
    %3151 = vmatpush1.msra.mxu0 0.0
    %3152 = vmatprep.subr.mxu0 0.0
    %3153 = vmatpush1.msra.mxu0 0.0
    %3154 = vmatprep.subr.mxu0 0.0
    %3155 = vmatpush1.msra.mxu0 0.0
    %3156 = vmatprep.subr.mxu0 0.0
    %3157 = vmatpush1.msra.mxu0 0.0
    %3158 = vmatprep.subr.mxu0 0.0
    %3159 = vmatpush1.msra.mxu0 0.0
    %3160 = vmatprep.subr.mxu0 0.0
    %3161 = vmatpush1.msra.mxu0 0.0
    %3162 = vmatprep.subr.mxu0 0.0
    %3163 = vmatpush1.msra.mxu0 0.0
    %3164 = vmatprep.subr.mxu0 0.0
    %3165 = vmatpush1.msra.mxu0 0.0
    %3166 = vmatprep.subr.mxu0 0.0
    %3167 = vmatpush1.msra.mxu0 0.0
    %3168 = vmatprep.subr.mxu0 0.0
    %3169 = vmatpush1.msra.mxu0 0.0
    %3170 = vmatprep.subr.mxu0 0.0
    %3171 = vmatpush1.msra.mxu0 0.0
    %3172 = vmatprep.subr.mxu0 0.0
    %3173 = vmatpush1.msra.mxu0 0.0
    %3174 = vmatprep.subr.mxu0 0.0
    %3175 = vmatpush1.msra.mxu0 0.0
    %3176 = vmatprep.subr.mxu0 0.0
    %3177 = vmatpush1.msra.mxu0 0.0
    %3178 = vmatprep.subr.mxu0 0.0
    %3179 = vmatpush1.msra.mxu0 0.0
    %3180 = vmatprep.subr.mxu0 0.0
    %3181 = vmatpush1.msra.mxu0 0.0
    %3182 = vmatprep.subr.mxu0 0.0
    %3183 = vmatpush1.msra.mxu0 0.0
    %3184 = vmatprep.subr.mxu0 0.0
    %3185 = vmatpush1.msra.mxu0 0.0
    %3186 = vmatprep.subr.mxu0 0.0
    %3187 = vmatpush1.msra.mxu0 0.0
    %3188 = vmatprep.subr.mxu0 0.0
    %3189 = vmatpush1.msra.mxu0 0.0
    %3190 = vmatprep.subr.mxu0 0.0
    %3191 = vmatpush1.msra.mxu0 0.0
    %3192 = vmatprep.mubr.f32.mxu0 0.0
    %3193 = vmatmul.mubr.f32.gmra.mrb[0].mxu0 %v2972
    %v3194 = vpop.f32.mrb[0].mxu0
    %v3195 = vadd.f32 0.0, %v3194
    %v3196 = vpop.f32.mrb[0].mxu0
    %3197 = vdwg.mxu0
    %3199 = vrot.lane.b32.xlu0 %v3195, 64
    %v3200 = vpop.permute.xlu0 %3199
    %v3202 = vadd.f32 %v224, %v3200
    %v3203 = vtanh.pop %v3202
    %3204 = vmatprep.subr.mxu0 0.0
    %3205 = vmatpush1.msra.mxu0 %v243
    %3206 = vmatprep.subr.mxu0 0.0
    %3207 = vmatpush1.msra.mxu0 %v244
    %3208 = vmatprep.subr.mxu0 0.0
    %3209 = vmatpush1.msra.mxu0 %v245
    %3210 = vmatprep.subr.mxu0 0.0
    %3211 = vmatpush1.msra.mxu0 %v246
    %3212 = vmatprep.subr.mxu0 0.0
    %3213 = vmatpush1.msra.mxu0 0.0
    %3214 = vmatprep.subr.mxu0 0.0
    %3215 = vmatpush1.msra.mxu0 0.0
    %3216 = vmatprep.subr.mxu0 0.0
    %3217 = vmatpush1.msra.mxu0 0.0
    %3218 = vmatprep.subr.mxu0 0.0
    %3219 = vmatpush1.msra.mxu0 0.0
    %3220 = vmatprep.subr.mxu0 0.0
    %3221 = vmatpush1.msra.mxu0 0.0
    %3222 = vmatprep.subr.mxu0 0.0
    %3223 = vmatpush1.msra.mxu0 0.0
    %3224 = vmatprep.subr.mxu0 0.0
    %3225 = vmatpush1.msra.mxu0 0.0
    %3226 = vmatprep.subr.mxu0 0.0
    %3227 = vmatpush1.msra.mxu0 0.0
    %3228 = vmatprep.subr.mxu0 0.0
    %3229 = vmatpush1.msra.mxu0 0.0
    %3230 = vmatprep.subr.mxu0 0.0
    %3231 = vmatpush1.msra.mxu0 0.0
    %3232 = vmatprep.subr.mxu0 0.0
    %3233 = vmatpush1.msra.mxu0 0.0
    %3234 = vmatprep.subr.mxu0 0.0
    %3235 = vmatpush1.msra.mxu0 0.0
    %3236 = vmatprep.subr.mxu0 0.0
    %3237 = vmatpush1.msra.mxu0 0.0
    %3238 = vmatprep.subr.mxu0 0.0
    %3239 = vmatpush1.msra.mxu0 0.0
    %3240 = vmatprep.subr.mxu0 0.0
    %3241 = vmatpush1.msra.mxu0 0.0
    %3242 = vmatprep.subr.mxu0 0.0
    %3243 = vmatpush1.msra.mxu0 0.0
    %3244 = vmatprep.subr.mxu0 0.0
    %3245 = vmatpush1.msra.mxu0 0.0
    %3246 = vmatprep.subr.mxu0 0.0
    %3247 = vmatpush1.msra.mxu0 0.0
    %3248 = vmatprep.subr.mxu0 0.0
    %3249 = vmatpush1.msra.mxu0 0.0
    %3250 = vmatprep.subr.mxu0 0.0
    %3251 = vmatpush1.msra.mxu0 0.0
    %3252 = vmatprep.subr.mxu0 0.0
    %3253 = vmatpush1.msra.mxu0 0.0
    %3254 = vmatprep.subr.mxu0 0.0
    %3255 = vmatpush1.msra.mxu0 0.0
    %3256 = vmatprep.subr.mxu0 0.0
    %3257 = vmatpush1.msra.mxu0 0.0
    %3258 = vmatprep.subr.mxu0 0.0
    %3259 = vmatpush1.msra.mxu0 0.0
    %3260 = vmatprep.subr.mxu0 0.0
    %3261 = vmatpush1.msra.mxu0 0.0
    %3262 = vmatprep.subr.mxu0 0.0
    %3263 = vmatpush1.msra.mxu0 0.0
    %3264 = vmatprep.subr.mxu0 0.0
    %3265 = vmatpush1.msra.mxu0 0.0
    %3266 = vmatprep.subr.mxu0 0.0
    %3267 = vmatpush1.msra.mxu0 0.0
    %3268 = vmatprep.mubr.f32.mxu0 0.0
    %3269 = vmatmul.mubr.f32.gmra.mrb[0].mxu0 %v2972
    %v3270 = vpop.f32.mrb[0].mxu0
    %v3271 = vadd.f32 0.0, %v3270
    %v3272 = vpop.f32.mrb[0].mxu0
    %3273 = vdwg.mxu0
    %3275 = vrot.lane.b32.xlu0 %v3271, 96
    %v3276 = vpop.permute.xlu0 %3275
    %v3278 = vadd.f32 %v224, %v3276
    %v3279 = vmul.f32 %v3278, 0.5
    %v3280 = vtanh.pop %v3279
    %v3281 = vmul.f32 %v3280, 0.5
    %v3282 = vadd.f32 %v3281, 0.5
    %v3284 = vrot.slane %v2626, 6
    %v3286 = vmul.f32 %v3127, %v3284
    %3288 = vrot.lane.b32.xlu0 %v3203, 64
    %v3289 = vpop.permute.xlu0 %3288
    %v3291 = vmul.f32 %v3048, %v3289
    %3293 = vrot.lane.b32.xlu0 %v3291, 32
    %v3294 = vpop.permute.xlu0 %3293
    %v3296 = vadd.f32 %v3286, %v3294
    %v3297 = vtanh.pop %v3296
    %3299 = vrot.lane.b32.xlu0 %v3297, 64
    %v3300 = vpop.permute.xlu0 %3299
    %v3302 = vmul.f32 %v3282, %v3300
    %3304 = vrot.lane.b32.xlu0 %v2967, 32
    %v3305 = vpop.permute.xlu0 %3304
    %v3306 = vsel %vm267, %v3305, 0
    %3308 = vmatprep.subr.mxu0 0.0
    %3309 = vmatpush1.msra.mxu0 %v248
    %3310 = vmatprep.subr.mxu0 0.0
    %3311 = vmatpush1.msra.mxu0 %v249
    %3312 = vmatprep.subr.mxu0 0.0
    %3313 = vmatpush1.msra.mxu0 %v250
    %3314 = vmatprep.subr.mxu0 0.0
    %3315 = vmatpush1.msra.mxu0 %v251
    %3316 = vmatprep.subr.mxu0 0.0
    %3317 = vmatpush1.msra.mxu0 0.0
    %3318 = vmatprep.subr.mxu0 0.0
    %3319 = vmatpush1.msra.mxu0 0.0
    %3320 = vmatprep.subr.mxu0 0.0
    %3321 = vmatpush1.msra.mxu0 0.0
    %3322 = vmatprep.subr.mxu0 0.0
    %3323 = vmatpush1.msra.mxu0 0.0
    %3324 = vmatprep.subr.mxu0 0.0
    %3325 = vmatpush1.msra.mxu0 0.0
    %3326 = vmatprep.subr.mxu0 0.0
    %3327 = vmatpush1.msra.mxu0 0.0
    %3328 = vmatprep.subr.mxu0 0.0
    %3329 = vmatpush1.msra.mxu0 0.0
    %3330 = vmatprep.subr.mxu0 0.0
    %3331 = vmatpush1.msra.mxu0 0.0
    %3332 = vmatprep.subr.mxu0 0.0
    %3333 = vmatpush1.msra.mxu0 0.0
    %3334 = vmatprep.subr.mxu0 0.0
    %3335 = vmatpush1.msra.mxu0 0.0
    %3336 = vmatprep.subr.mxu0 0.0
    %3337 = vmatpush1.msra.mxu0 0.0
    %3338 = vmatprep.subr.mxu0 0.0
    %3339 = vmatpush1.msra.mxu0 0.0
    %3340 = vmatprep.subr.mxu0 0.0
    %3341 = vmatpush1.msra.mxu0 0.0
    %3342 = vmatprep.subr.mxu0 0.0
    %3343 = vmatpush1.msra.mxu0 0.0
    %3344 = vmatprep.subr.mxu0 0.0
    %3345 = vmatpush1.msra.mxu0 0.0
    %3346 = vmatprep.subr.mxu0 0.0
    %3347 = vmatpush1.msra.mxu0 0.0
    %3348 = vmatprep.subr.mxu0 0.0
    %3349 = vmatpush1.msra.mxu0 0.0
    %3350 = vmatprep.subr.mxu0 0.0
    %3351 = vmatpush1.msra.mxu0 0.0
    %3352 = vmatprep.subr.mxu0 0.0
    %3353 = vmatpush1.msra.mxu0 0.0
    %3354 = vmatprep.subr.mxu0 0.0
    %3355 = vmatpush1.msra.mxu0 0.0
    %3356 = vmatprep.subr.mxu0 0.0
    %3357 = vmatpush1.msra.mxu0 0.0
    %3358 = vmatprep.subr.mxu0 0.0
    %3359 = vmatpush1.msra.mxu0 0.0
    %3360 = vmatprep.subr.mxu0 0.0
    %3361 = vmatpush1.msra.mxu0 0.0
    %3362 = vmatprep.subr.mxu0 0.0
    %3363 = vmatpush1.msra.mxu0 0.0
    %3364 = vmatprep.subr.mxu0 0.0
    %3365 = vmatpush1.msra.mxu0 0.0
    %3366 = vmatprep.subr.mxu0 0.0
    %3367 = vmatpush1.msra.mxu0 0.0
    %3368 = vmatprep.subr.mxu0 0.0
    %3369 = vmatpush1.msra.mxu0 0.0
    %3370 = vmatprep.subr.mxu0 0.0
    %3371 = vmatpush1.msra.mxu0 0.0
    %3372 = vmatprep.mubr.f32.mxu0 0.0
    %3373 = vmatmul.mubr.f32.gmra.mrb[0].mxu0 %v3306
    %v3374 = vpop.f32.mrb[0].mxu0
    %v3375 = vadd.f32 0.0, %v3374
    %v3376 = vpop.f32.mrb[0].mxu0
    %3377 = vdwg.mxu0
    %v3379 = vrot.slane %v3375, 2
    %v3381 = vadd.f32 %v220, %v3379
    %v3382 = vmul.f32 %v3381, 0.5
    %v3383 = vtanh.pop %v3382
    %v3384 = vmul.f32 %v3383, 0.5
    %v3385 = vadd.f32 %v3384, 0.5
    %3386 = vmatprep.subr.mxu0 0.0
    %3387 = vmatpush1.msra.mxu0 %v253
    %3388 = vmatprep.subr.mxu0 0.0
    %3389 = vmatpush1.msra.mxu0 %v254
    %3390 = vmatprep.subr.mxu0 0.0
    %3391 = vmatpush1.msra.mxu0 %v255
    %3392 = vmatprep.subr.mxu0 0.0
    %3393 = vmatpush1.msra.mxu0 %v256
    %3394 = vmatprep.subr.mxu0 0.0
    %3395 = vmatpush1.msra.mxu0 0.0
    %3396 = vmatprep.subr.mxu0 0.0
    %3397 = vmatpush1.msra.mxu0 0.0
    %3398 = vmatprep.subr.mxu0 0.0
    %3399 = vmatpush1.msra.mxu0 0.0
    %3400 = vmatprep.subr.mxu0 0.0
    %3401 = vmatpush1.msra.mxu0 0.0
    %3402 = vmatprep.subr.mxu0 0.0
    %3403 = vmatpush1.msra.mxu0 0.0
    %3404 = vmatprep.subr.mxu0 0.0
    %3405 = vmatpush1.msra.mxu0 0.0
    %3406 = vmatprep.subr.mxu0 0.0
    %3407 = vmatpush1.msra.mxu0 0.0
    %3408 = vmatprep.subr.mxu0 0.0
    %3409 = vmatpush1.msra.mxu0 0.0
    %3410 = vmatprep.subr.mxu0 0.0
    %3411 = vmatpush1.msra.mxu0 0.0
    %3412 = vmatprep.subr.mxu0 0.0
    %3413 = vmatpush1.msra.mxu0 0.0
    %3414 = vmatprep.subr.mxu0 0.0
    %3415 = vmatpush1.msra.mxu0 0.0
    %3416 = vmatprep.subr.mxu0 0.0
    %3417 = vmatpush1.msra.mxu0 0.0
    %3418 = vmatprep.subr.mxu0 0.0
    %3419 = vmatpush1.msra.mxu0 0.0
    %3420 = vmatprep.subr.mxu0 0.0
    %3421 = vmatpush1.msra.mxu0 0.0
    %3422 = vmatprep.subr.mxu0 0.0
    %3423 = vmatpush1.msra.mxu0 0.0
    %3424 = vmatprep.subr.mxu0 0.0
    %3425 = vmatpush1.msra.mxu0 0.0
    %3426 = vmatprep.subr.mxu0 0.0
    %3427 = vmatpush1.msra.mxu0 0.0
    %3428 = vmatprep.subr.mxu0 0.0
    %3429 = vmatpush1.msra.mxu0 0.0
    %3430 = vmatprep.subr.mxu0 0.0
    %3431 = vmatpush1.msra.mxu0 0.0
    %3432 = vmatprep.subr.mxu0 0.0
    %3433 = vmatpush1.msra.mxu0 0.0
    %3434 = vmatprep.subr.mxu0 0.0
    %3435 = vmatpush1.msra.mxu0 0.0
    %3436 = vmatprep.subr.mxu0 0.0
    %3437 = vmatpush1.msra.mxu0 0.0
    %3438 = vmatprep.subr.mxu0 0.0
    %3439 = vmatpush1.msra.mxu0 0.0
    %3440 = vmatprep.subr.mxu0 0.0
    %3441 = vmatpush1.msra.mxu0 0.0
    %3442 = vmatprep.subr.mxu0 0.0
    %3443 = vmatpush1.msra.mxu0 0.0
    %3444 = vmatprep.subr.mxu0 0.0
    %3445 = vmatpush1.msra.mxu0 0.0
    %3446 = vmatprep.subr.mxu0 0.0
    %3447 = vmatpush1.msra.mxu0 0.0
    %3448 = vmatprep.subr.mxu0 0.0
    %3449 = vmatpush1.msra.mxu0 0.0
    %3450 = vmatprep.mubr.f32.mxu0 0.0
    %3451 = vmatmul.mubr.f32.gmra.mrb[0].mxu0 %v3306
    %v3452 = vpop.f32.mrb[0].mxu0
    %v3453 = vadd.f32 0.0, %v3452
    %v3454 = vpop.f32.mrb[0].mxu0
    %3455 = vdwg.mxu0
    %v3457 = vrot.slane %v3453, 2
    %3458 = vrot.lane.b32.xlu0 %v3457, 32
    %v3459 = vpop.permute.xlu0 %3458
    %v3461 = vadd.f32 %v220, %v3459
    %v3462 = vmul.f32 %v3461, 0.5
    %v3463 = vtanh.pop %v3462
    %v3464 = vmul.f32 %v3463, 0.5
    %v3465 = vadd.f32 %v3464, 0.5
    %3466 = vmatprep.subr.mxu0 0.0
    %3467 = vmatpush1.msra.mxu0 %v258
    %3468 = vmatprep.subr.mxu0 0.0
    %3469 = vmatpush1.msra.mxu0 %v259
    %3470 = vmatprep.subr.mxu0 0.0
    %3471 = vmatpush1.msra.mxu0 %v260
    %3472 = vmatprep.subr.mxu0 0.0
    %3473 = vmatpush1.msra.mxu0 %v261
    %3474 = vmatprep.subr.mxu0 0.0
    %3475 = vmatpush1.msra.mxu0 0.0
    %3476 = vmatprep.subr.mxu0 0.0
    %3477 = vmatpush1.msra.mxu0 0.0
    %3478 = vmatprep.subr.mxu0 0.0
    %3479 = vmatpush1.msra.mxu0 0.0
    %3480 = vmatprep.subr.mxu0 0.0
    %3481 = vmatpush1.msra.mxu0 0.0
    %3482 = vmatprep.subr.mxu0 0.0
    %3483 = vmatpush1.msra.mxu0 0.0
    %3484 = vmatprep.subr.mxu0 0.0
    %3485 = vmatpush1.msra.mxu0 0.0
    %3486 = vmatprep.subr.mxu0 0.0
    %3487 = vmatpush1.msra.mxu0 0.0
    %3488 = vmatprep.subr.mxu0 0.0
    %3489 = vmatpush1.msra.mxu0 0.0
    %3490 = vmatprep.subr.mxu0 0.0
    %3491 = vmatpush1.msra.mxu0 0.0
    %3492 = vmatprep.subr.mxu0 0.0
    %3493 = vmatpush1.msra.mxu0 0.0
    %3494 = vmatprep.subr.mxu0 0.0
    %3495 = vmatpush1.msra.mxu0 0.0
    %3496 = vmatprep.subr.mxu0 0.0
    %3497 = vmatpush1.msra.mxu0 0.0
    %3498 = vmatprep.subr.mxu0 0.0
    %3499 = vmatpush1.msra.mxu0 0.0
    %3500 = vmatprep.subr.mxu0 0.0
    %3501 = vmatpush1.msra.mxu0 0.0
    %3502 = vmatprep.subr.mxu0 0.0
    %3503 = vmatpush1.msra.mxu0 0.0
    %3504 = vmatprep.subr.mxu0 0.0
    %3505 = vmatpush1.msra.mxu0 0.0
    %3506 = vmatprep.subr.mxu0 0.0
    %3507 = vmatpush1.msra.mxu0 0.0
    %3508 = vmatprep.subr.mxu0 0.0
    %3509 = vmatpush1.msra.mxu0 0.0
    %3510 = vmatprep.subr.mxu0 0.0
    %3511 = vmatpush1.msra.mxu0 0.0
    %3512 = vmatprep.subr.mxu0 0.0
    %3513 = vmatpush1.msra.mxu0 0.0
    %3514 = vmatprep.subr.mxu0 0.0
    %3515 = vmatpush1.msra.mxu0 0.0
    %3516 = vmatprep.subr.mxu0 0.0
    %3517 = vmatpush1.msra.mxu0 0.0
    %3518 = vmatprep.subr.mxu0 0.0
    %3519 = vmatpush1.msra.mxu0 0.0
    %3520 = vmatprep.subr.mxu0 0.0
    %3521 = vmatpush1.msra.mxu0 0.0
    %3522 = vmatprep.subr.mxu0 0.0
    %3523 = vmatpush1.msra.mxu0 0.0
    %3524 = vmatprep.subr.mxu0 0.0
    %3525 = vmatpush1.msra.mxu0 0.0
    %3526 = vmatprep.subr.mxu0 0.0
    %3527 = vmatpush1.msra.mxu0 0.0
    %3528 = vmatprep.subr.mxu0 0.0
    %3529 = vmatpush1.msra.mxu0 0.0
    %3530 = vmatprep.mubr.f32.mxu0 0.0
    %3531 = vmatmul.mubr.f32.gmra.mrb[0].mxu0 %v3306
    %v3532 = vpop.f32.mrb[0].mxu0
    %v3533 = vadd.f32 0.0, %v3532
    %v3534 = vpop.f32.mrb[0].mxu0
    %3535 = vdwg.mxu0
    %v3537 = vrot.slane %v3533, 2
    %3538 = vrot.lane.b32.xlu0 %v3537, 64
    %v3539 = vpop.permute.xlu0 %3538
    %v3541 = vadd.f32 %v220, %v3539
    %v3542 = vtanh.pop %v3541
    %3543 = vmatprep.subr.mxu0 0.0
    %3544 = vmatpush1.msra.mxu0 %v263
    %3545 = vmatprep.subr.mxu0 0.0
    %3546 = vmatpush1.msra.mxu0 %v264
    %3547 = vmatprep.subr.mxu0 0.0
    %3548 = vmatpush1.msra.mxu0 %v265
    %3549 = vmatprep.subr.mxu0 0.0
    %3550 = vmatpush1.msra.mxu0 %v266
    %3551 = vmatprep.subr.mxu0 0.0
    %3552 = vmatpush1.msra.mxu0 0.0
    %3553 = vmatprep.subr.mxu0 0.0
    %3554 = vmatpush1.msra.mxu0 0.0
    %3555 = vmatprep.subr.mxu0 0.0
    %3556 = vmatpush1.msra.mxu0 0.0
    %3557 = vmatprep.subr.mxu0 0.0
    %3558 = vmatpush1.msra.mxu0 0.0
    %3559 = vmatprep.subr.mxu0 0.0
    %3560 = vmatpush1.msra.mxu0 0.0
    %3561 = vmatprep.subr.mxu0 0.0
    %3562 = vmatpush1.msra.mxu0 0.0
    %3563 = vmatprep.subr.mxu0 0.0
    %3564 = vmatpush1.msra.mxu0 0.0
    %3565 = vmatprep.subr.mxu0 0.0
    %3566 = vmatpush1.msra.mxu0 0.0
    %3567 = vmatprep.subr.mxu0 0.0
    %3568 = vmatpush1.msra.mxu0 0.0
    %3569 = vmatprep.subr.mxu0 0.0
    %3570 = vmatpush1.msra.mxu0 0.0
    %3571 = vmatprep.subr.mxu0 0.0
    %3572 = vmatpush1.msra.mxu0 0.0
    %3573 = vmatprep.subr.mxu0 0.0
    %3574 = vmatpush1.msra.mxu0 0.0
    %3575 = vmatprep.subr.mxu0 0.0
    %3576 = vmatpush1.msra.mxu0 0.0
    %3577 = vmatprep.subr.mxu0 0.0
    %3578 = vmatpush1.msra.mxu0 0.0
    %3579 = vmatprep.subr.mxu0 0.0
    %3580 = vmatpush1.msra.mxu0 0.0
    %3581 = vmatprep.subr.mxu0 0.0
    %3582 = vmatpush1.msra.mxu0 0.0
    %3583 = vmatprep.subr.mxu0 0.0
    %3584 = vmatpush1.msra.mxu0 0.0
    %3585 = vmatprep.subr.mxu0 0.0
    %3586 = vmatpush1.msra.mxu0 0.0
    %3587 = vmatprep.subr.mxu0 0.0
    %3588 = vmatpush1.msra.mxu0 0.0
    %3589 = vmatprep.subr.mxu0 0.0
    %3590 = vmatpush1.msra.mxu0 0.0
    %3591 = vmatprep.subr.mxu0 0.0
    %3592 = vmatpush1.msra.mxu0 0.0
    %3593 = vmatprep.subr.mxu0 0.0
    %3594 = vmatpush1.msra.mxu0 0.0
    %3595 = vmatprep.subr.mxu0 0.0
    %3596 = vmatpush1.msra.mxu0 0.0
    %3597 = vmatprep.subr.mxu0 0.0
    %3598 = vmatpush1.msra.mxu0 0.0
    %3599 = vmatprep.subr.mxu0 0.0
    %3600 = vmatpush1.msra.mxu0 0.0
    %3601 = vmatprep.subr.mxu0 0.0
    %3602 = vmatpush1.msra.mxu0 0.0
    %3603 = vmatprep.subr.mxu0 0.0
    %3604 = vmatpush1.msra.mxu0 0.0
    %3605 = vmatprep.subr.mxu0 0.0
    %3606 = vmatpush1.msra.mxu0 0.0
    %3607 = vmatprep.mubr.f32.mxu0 0.0
    %3608 = vmatmul.mubr.f32.gmra.mrb[0].mxu0 %v3306
    %v3609 = vpop.f32.mrb[0].mxu0
    %v3610 = vadd.f32 0.0, %v3609
    %v3611 = vpop.f32.mrb[0].mxu0
    %3612 = vdwg.mxu0
    %v3614 = vrot.slane %v3610, 2
    %3615 = vrot.lane.b32.xlu0 %v3614, 96
    %v3616 = vpop.permute.xlu0 %3615
    %v3618 = vadd.f32 %v220, %v3616
    %v3619 = vmul.f32 %v3618, 0.5
    %v3620 = vtanh.pop %v3619
    %v3621 = vmul.f32 %v3620, 0.5
    %v3622 = vadd.f32 %v3621, 0.5
    %v3624 = vrot.slane %v2961, 2
    %v3626 = vmul.f32 %v3465, %v3624
    %3628 = vrot.lane.b32.xlu0 %v3542, 64
    %v3629 = vpop.permute.xlu0 %3628
    %v3631 = vmul.f32 %v3385, %v3629
    %3633 = vrot.lane.b32.xlu0 %v3631, 32
    %v3634 = vpop.permute.xlu0 %3633
    %v3636 = vadd.f32 %v3626, %v3634
    %v3637 = vtanh.pop %v3636
    %3639 = vrot.lane.b32.xlu0 %v3637, 64
    %v3640 = vpop.permute.xlu0 %3639
    %v3642 = vmul.f32 %v3622, %v3640
    %3644 = vrot.lane.b32.xlu0 %v3302, 32
    %v3645 = vpop.permute.xlu0 %3644
    %v3646 = vsel %vm267, %v3645, 0
    %3648 = vmatprep.subr.mxu0 0.0
    %3649 = vmatpush1.msra.mxu0 %v228
    %3650 = vmatprep.subr.mxu0 0.0
    %3651 = vmatpush1.msra.mxu0 %v229
    %3652 = vmatprep.subr.mxu0 0.0
    %3653 = vmatpush1.msra.mxu0 %v230
    %3654 = vmatprep.subr.mxu0 0.0
    %3655 = vmatpush1.msra.mxu0 %v231
    %3656 = vmatprep.subr.mxu0 0.0
    %3657 = vmatpush1.msra.mxu0 0.0
    %3658 = vmatprep.subr.mxu0 0.0
    %3659 = vmatpush1.msra.mxu0 0.0
    %3660 = vmatprep.subr.mxu0 0.0
    %3661 = vmatpush1.msra.mxu0 0.0
    %3662 = vmatprep.subr.mxu0 0.0
    %3663 = vmatpush1.msra.mxu0 0.0
    %3664 = vmatprep.subr.mxu0 0.0
    %3665 = vmatpush1.msra.mxu0 0.0
    %3666 = vmatprep.subr.mxu0 0.0
    %3667 = vmatpush1.msra.mxu0 0.0
    %3668 = vmatprep.subr.mxu0 0.0
    %3669 = vmatpush1.msra.mxu0 0.0
    %3670 = vmatprep.subr.mxu0 0.0
    %3671 = vmatpush1.msra.mxu0 0.0
    %3672 = vmatprep.subr.mxu0 0.0
    %3673 = vmatpush1.msra.mxu0 0.0
    %3674 = vmatprep.subr.mxu0 0.0
    %3675 = vmatpush1.msra.mxu0 0.0
    %3676 = vmatprep.subr.mxu0 0.0
    %3677 = vmatpush1.msra.mxu0 0.0
    %3678 = vmatprep.subr.mxu0 0.0
    %3679 = vmatpush1.msra.mxu0 0.0
    %3680 = vmatprep.subr.mxu0 0.0
    %3681 = vmatpush1.msra.mxu0 0.0
    %3682 = vmatprep.subr.mxu0 0.0
    %3683 = vmatpush1.msra.mxu0 0.0
    %3684 = vmatprep.subr.mxu0 0.0
    %3685 = vmatpush1.msra.mxu0 0.0
    %3686 = vmatprep.subr.mxu0 0.0
    %3687 = vmatpush1.msra.mxu0 0.0
    %3688 = vmatprep.subr.mxu0 0.0
    %3689 = vmatpush1.msra.mxu0 0.0
    %3690 = vmatprep.subr.mxu0 0.0
    %3691 = vmatpush1.msra.mxu0 0.0
    %3692 = vmatprep.subr.mxu0 0.0
    %3693 = vmatpush1.msra.mxu0 0.0
    %3694 = vmatprep.subr.mxu0 0.0
    %3695 = vmatpush1.msra.mxu0 0.0
    %3696 = vmatprep.subr.mxu0 0.0
    %3697 = vmatpush1.msra.mxu0 0.0
    %3698 = vmatprep.subr.mxu0 0.0
    %3699 = vmatpush1.msra.mxu0 0.0
    %3700 = vmatprep.subr.mxu0 0.0
    %3701 = vmatpush1.msra.mxu0 0.0
    %3702 = vmatprep.subr.mxu0 0.0
    %3703 = vmatpush1.msra.mxu0 0.0
    %3704 = vmatprep.subr.mxu0 0.0
    %3705 = vmatpush1.msra.mxu0 0.0
    %3706 = vmatprep.subr.mxu0 0.0
    %3707 = vmatpush1.msra.mxu0 0.0
    %3708 = vmatprep.subr.mxu0 0.0
    %3709 = vmatpush1.msra.mxu0 0.0
    %3710 = vmatprep.subr.mxu0 0.0
    %3711 = vmatpush1.msra.mxu0 0.0
    %3712 = vmatprep.mubr.f32.mxu0 0.0
    %3713 = vmatmul.mubr.f32.gmra.mrb[0].mxu0 %v3646
    %v3714 = vpop.f32.mrb[0].mxu0
    %v3715 = vadd.f32 0.0, %v3714
    %v3716 = vpop.f32.mrb[0].mxu0
    %3717 = vdwg.mxu0
    %v3719 = vrot.slane %v3715, 6
    %v3721 = vadd.f32 %v224, %v3719
    %v3722 = vmul.f32 %v3721, 0.5
    %v3723 = vtanh.pop %v3722
    %v3724 = vmul.f32 %v3723, 0.5
    %v3725 = vadd.f32 %v3724, 0.5
    %3726 = vmatprep.subr.mxu0 0.0
    %3727 = vmatpush1.msra.mxu0 %v233
    %3728 = vmatprep.subr.mxu0 0.0
    %3729 = vmatpush1.msra.mxu0 %v234
    %3730 = vmatprep.subr.mxu0 0.0
    %3731 = vmatpush1.msra.mxu0 %v235
    %3732 = vmatprep.subr.mxu0 0.0
    %3733 = vmatpush1.msra.mxu0 %v236
    %3734 = vmatprep.subr.mxu0 0.0
    %3735 = vmatpush1.msra.mxu0 0.0
    %3736 = vmatprep.subr.mxu0 0.0
    %3737 = vmatpush1.msra.mxu0 0.0
    %3738 = vmatprep.subr.mxu0 0.0
    %3739 = vmatpush1.msra.mxu0 0.0
    %3740 = vmatprep.subr.mxu0 0.0
    %3741 = vmatpush1.msra.mxu0 0.0
    %3742 = vmatprep.subr.mxu0 0.0
    %3743 = vmatpush1.msra.mxu0 0.0
    %3744 = vmatprep.subr.mxu0 0.0
    %3745 = vmatpush1.msra.mxu0 0.0
    %3746 = vmatprep.subr.mxu0 0.0
    %3747 = vmatpush1.msra.mxu0 0.0
    %3748 = vmatprep.subr.mxu0 0.0
    %3749 = vmatpush1.msra.mxu0 0.0
    %3750 = vmatprep.subr.mxu0 0.0
    %3751 = vmatpush1.msra.mxu0 0.0
    %3752 = vmatprep.subr.mxu0 0.0
    %3753 = vmatpush1.msra.mxu0 0.0
    %3754 = vmatprep.subr.mxu0 0.0
    %3755 = vmatpush1.msra.mxu0 0.0
    %3756 = vmatprep.subr.mxu0 0.0
    %3757 = vmatpush1.msra.mxu0 0.0
    %3758 = vmatprep.subr.mxu0 0.0
    %3759 = vmatpush1.msra.mxu0 0.0
    %3760 = vmatprep.subr.mxu0 0.0
    %3761 = vmatpush1.msra.mxu0 0.0
    %3762 = vmatprep.subr.mxu0 0.0
    %3763 = vmatpush1.msra.mxu0 0.0
    %3764 = vmatprep.subr.mxu0 0.0
    %3765 = vmatpush1.msra.mxu0 0.0
    %3766 = vmatprep.subr.mxu0 0.0
    %3767 = vmatpush1.msra.mxu0 0.0
    %3768 = vmatprep.subr.mxu0 0.0
    %3769 = vmatpush1.msra.mxu0 0.0
    %3770 = vmatprep.subr.mxu0 0.0
    %3771 = vmatpush1.msra.mxu0 0.0
    %3772 = vmatprep.subr.mxu0 0.0
    %3773 = vmatpush1.msra.mxu0 0.0
    %3774 = vmatprep.subr.mxu0 0.0
    %3775 = vmatpush1.msra.mxu0 0.0
    %3776 = vmatprep.subr.mxu0 0.0
    %3777 = vmatpush1.msra.mxu0 0.0
    %3778 = vmatprep.subr.mxu0 0.0
    %3779 = vmatpush1.msra.mxu0 0.0
    %3780 = vmatprep.subr.mxu0 0.0
    %3781 = vmatpush1.msra.mxu0 0.0
    %3782 = vmatprep.subr.mxu0 0.0
    %3783 = vmatpush1.msra.mxu0 0.0
    %3784 = vmatprep.subr.mxu0 0.0
    %3785 = vmatpush1.msra.mxu0 0.0
    %3786 = vmatprep.subr.mxu0 0.0
    %3787 = vmatpush1.msra.mxu0 0.0
    %3788 = vmatprep.subr.mxu0 0.0
    %3789 = vmatpush1.msra.mxu0 0.0
    %3790 = vmatprep.mubr.f32.mxu0 0.0
    %3791 = vmatmul.mubr.f32.gmra.mrb[0].mxu0 %v3646
    %v3792 = vpop.f32.mrb[0].mxu0
    %v3793 = vadd.f32 0.0, %v3792
    %v3794 = vpop.f32.mrb[0].mxu0
    %3795 = vdwg.mxu0
    %v3797 = vrot.slane %v3793, 6
    %3798 = vrot.lane.b32.xlu0 %v3797, 32
    %v3799 = vpop.permute.xlu0 %3798
    %v3801 = vadd.f32 %v224, %v3799
    %v3802 = vmul.f32 %v3801, 0.5
    %v3803 = vtanh.pop %v3802
    %v3804 = vmul.f32 %v3803, 0.5
    %v3805 = vadd.f32 %v3804, 0.5
    %3806 = vmatprep.subr.mxu0 0.0
    %3807 = vmatpush1.msra.mxu0 %v238
    %3808 = vmatprep.subr.mxu0 0.0
    %3809 = vmatpush1.msra.mxu0 %v239
    %3810 = vmatprep.subr.mxu0 0.0
    %3811 = vmatpush1.msra.mxu0 %v240
    %3812 = vmatprep.subr.mxu0 0.0
    %3813 = vmatpush1.msra.mxu0 %v241
    %3814 = vmatprep.subr.mxu0 0.0
    %3815 = vmatpush1.msra.mxu0 0.0
    %3816 = vmatprep.subr.mxu0 0.0
    %3817 = vmatpush1.msra.mxu0 0.0
    %3818 = vmatprep.subr.mxu0 0.0
    %3819 = vmatpush1.msra.mxu0 0.0
    %3820 = vmatprep.subr.mxu0 0.0
    %3821 = vmatpush1.msra.mxu0 0.0
    %3822 = vmatprep.subr.mxu0 0.0
    %3823 = vmatpush1.msra.mxu0 0.0
    %3824 = vmatprep.subr.mxu0 0.0
    %3825 = vmatpush1.msra.mxu0 0.0
    %3826 = vmatprep.subr.mxu0 0.0
    %3827 = vmatpush1.msra.mxu0 0.0
    %3828 = vmatprep.subr.mxu0 0.0
    %3829 = vmatpush1.msra.mxu0 0.0
    %3830 = vmatprep.subr.mxu0 0.0
    %3831 = vmatpush1.msra.mxu0 0.0
    %3832 = vmatprep.subr.mxu0 0.0
    %3833 = vmatpush1.msra.mxu0 0.0
    %3834 = vmatprep.subr.mxu0 0.0
    %3835 = vmatpush1.msra.mxu0 0.0
    %3836 = vmatprep.subr.mxu0 0.0
    %3837 = vmatpush1.msra.mxu0 0.0
    %3838 = vmatprep.subr.mxu0 0.0
    %3839 = vmatpush1.msra.mxu0 0.0
    %3840 = vmatprep.subr.mxu0 0.0
    %3841 = vmatpush1.msra.mxu0 0.0
    %3842 = vmatprep.subr.mxu0 0.0
    %3843 = vmatpush1.msra.mxu0 0.0
    %3844 = vmatprep.subr.mxu0 0.0
    %3845 = vmatpush1.msra.mxu0 0.0
    %3846 = vmatprep.subr.mxu0 0.0
    %3847 = vmatpush1.msra.mxu0 0.0
    %3848 = vmatprep.subr.mxu0 0.0
    %3849 = vmatpush1.msra.mxu0 0.0
    %3850 = vmatprep.subr.mxu0 0.0
    %3851 = vmatpush1.msra.mxu0 0.0
    %3852 = vmatprep.subr.mxu0 0.0
    %3853 = vmatpush1.msra.mxu0 0.0
    %3854 = vmatprep.subr.mxu0 0.0
    %3855 = vmatpush1.msra.mxu0 0.0
    %3856 = vmatprep.subr.mxu0 0.0
    %3857 = vmatpush1.msra.mxu0 0.0
    %3858 = vmatprep.subr.mxu0 0.0
    %3859 = vmatpush1.msra.mxu0 0.0
    %3860 = vmatprep.subr.mxu0 0.0
    %3861 = vmatpush1.msra.mxu0 0.0
    %3862 = vmatprep.subr.mxu0 0.0
    %3863 = vmatpush1.msra.mxu0 0.0
    %3864 = vmatprep.subr.mxu0 0.0
    %3865 = vmatpush1.msra.mxu0 0.0
    %3866 = vmatprep.subr.mxu0 0.0
    %3867 = vmatpush1.msra.mxu0 0.0
    %3868 = vmatprep.subr.mxu0 0.0
    %3869 = vmatpush1.msra.mxu0 0.0
    %3870 = vmatprep.mubr.f32.mxu0 0.0
    %3871 = vmatmul.mubr.f32.gmra.mrb[0].mxu0 %v3646
    %v3872 = vpop.f32.mrb[0].mxu0
    %v3873 = vadd.f32 0.0, %v3872
    %v3874 = vpop.f32.mrb[0].mxu0
    %3875 = vdwg.mxu0
    %v3877 = vrot.slane %v3873, 6
    %3878 = vrot.lane.b32.xlu0 %v3877, 64
    %v3879 = vpop.permute.xlu0 %3878
    %v3881 = vadd.f32 %v224, %v3879
    %v3882 = vtanh.pop %v3881
    %3883 = vmatprep.subr.mxu0 0.0
    %3884 = vmatpush1.msra.mxu0 %v243
    %3885 = vmatprep.subr.mxu0 0.0
    %3886 = vmatpush1.msra.mxu0 %v244
    %3887 = vmatprep.subr.mxu0 0.0
    %3888 = vmatpush1.msra.mxu0 %v245
    %3889 = vmatprep.subr.mxu0 0.0
    %3890 = vmatpush1.msra.mxu0 %v246
    %3891 = vmatprep.subr.mxu0 0.0
    %3892 = vmatpush1.msra.mxu0 0.0
    %3893 = vmatprep.subr.mxu0 0.0
    %3894 = vmatpush1.msra.mxu0 0.0
    %3895 = vmatprep.subr.mxu0 0.0
    %3896 = vmatpush1.msra.mxu0 0.0
    %3897 = vmatprep.subr.mxu0 0.0
    %3898 = vmatpush1.msra.mxu0 0.0
    %3899 = vmatprep.subr.mxu0 0.0
    %3900 = vmatpush1.msra.mxu0 0.0
    %3901 = vmatprep.subr.mxu0 0.0
    %3902 = vmatpush1.msra.mxu0 0.0
    %3903 = vmatprep.subr.mxu0 0.0
    %3904 = vmatpush1.msra.mxu0 0.0
    %3905 = vmatprep.subr.mxu0 0.0
    %3906 = vmatpush1.msra.mxu0 0.0
    %3907 = vmatprep.subr.mxu0 0.0
    %3908 = vmatpush1.msra.mxu0 0.0
    %3909 = vmatprep.subr.mxu0 0.0
    %3910 = vmatpush1.msra.mxu0 0.0
    %3911 = vmatprep.subr.mxu0 0.0
    %3912 = vmatpush1.msra.mxu0 0.0
    %3913 = vmatprep.subr.mxu0 0.0
    %3914 = vmatpush1.msra.mxu0 0.0
    %3915 = vmatprep.subr.mxu0 0.0
    %3916 = vmatpush1.msra.mxu0 0.0
    %3917 = vmatprep.subr.mxu0 0.0
    %3918 = vmatpush1.msra.mxu0 0.0
    %3919 = vmatprep.subr.mxu0 0.0
    %3920 = vmatpush1.msra.mxu0 0.0
    %3921 = vmatprep.subr.mxu0 0.0
    %3922 = vmatpush1.msra.mxu0 0.0
    %3923 = vmatprep.subr.mxu0 0.0
    %3924 = vmatpush1.msra.mxu0 0.0
    %3925 = vmatprep.subr.mxu0 0.0
    %3926 = vmatpush1.msra.mxu0 0.0
    %3927 = vmatprep.subr.mxu0 0.0
    %3928 = vmatpush1.msra.mxu0 0.0
    %3929 = vmatprep.subr.mxu0 0.0
    %3930 = vmatpush1.msra.mxu0 0.0
    %3931 = vmatprep.subr.mxu0 0.0
    %3932 = vmatpush1.msra.mxu0 0.0
    %3933 = vmatprep.subr.mxu0 0.0
    %3934 = vmatpush1.msra.mxu0 0.0
    %3935 = vmatprep.subr.mxu0 0.0
    %3936 = vmatpush1.msra.mxu0 0.0
    %3937 = vmatprep.subr.mxu0 0.0
    %3938 = vmatpush1.msra.mxu0 0.0
    %3939 = vmatprep.subr.mxu0 0.0
    %3940 = vmatpush1.msra.mxu0 0.0
    %3941 = vmatprep.subr.mxu0 0.0
    %3942 = vmatpush1.msra.mxu0 0.0
    %3943 = vmatprep.subr.mxu0 0.0
    %3944 = vmatpush1.msra.mxu0 0.0
    %3945 = vmatprep.subr.mxu0 0.0
    %3946 = vmatpush1.msra.mxu0 0.0
    %3947 = vmatprep.mubr.f32.mxu0 0.0
    %3948 = vmatmul.mubr.f32.gmra.mrb[0].mxu0 %v3646
    %v3949 = vpop.f32.mrb[0].mxu0
    %v3950 = vadd.f32 0.0, %v3949
    %v3951 = vpop.f32.mrb[0].mxu0
    %3952 = vdwg.mxu0
    %v3954 = vrot.slane %v3950, 6
    %3955 = vrot.lane.b32.xlu0 %v3954, 96
    %v3956 = vpop.permute.xlu0 %3955
    %v3958 = vadd.f32 %v224, %v3956
    %v3959 = vmul.f32 %v3958, 0.5
    %v3960 = vtanh.pop %v3959
    %v3961 = vmul.f32 %v3960, 0.5
    %v3962 = vadd.f32 %v3961, 0.5
    %v3964 = vrot.slane %v3296, 6
    %v3966 = vmul.f32 %v3805, %v3964
    %3968 = vrot.lane.b32.xlu0 %v3882, 64
    %v3969 = vpop.permute.xlu0 %3968
    %v3971 = vmul.f32 %v3725, %v3969
    %3973 = vrot.lane.b32.xlu0 %v3971, 32
    %v3974 = vpop.permute.xlu0 %3973
    %v3976 = vadd.f32 %v3966, %v3974
    %v3977 = vtanh.pop %v3976
    %3979 = vrot.lane.b32.xlu0 %v3977, 64
    %v3980 = vpop.permute.xlu0 %3979
    %v3982 = vmul.f32 %v3962, %v3980
    %v3984 = vrot.slane %v3642, 6
    %3985 = vrot.lane.b32.xlu0 %v3984, 32
    %v3986 = vpop.permute.xlu0 %3985
    %v3987 = vsel %vm267, %v3986, 0
    %3989 = vmatprep.subr.mxu0 0.0
    %3990 = vmatpush1.msra.mxu0 %v248
    %3991 = vmatprep.subr.mxu0 0.0
    %3992 = vmatpush1.msra.mxu0 %v249
    %3993 = vmatprep.subr.mxu0 0.0
    %3994 = vmatpush1.msra.mxu0 %v250
    %3995 = vmatprep.subr.mxu0 0.0
    %3996 = vmatpush1.msra.mxu0 %v251
    %3997 = vmatprep.subr.mxu0 0.0
    %3998 = vmatpush1.msra.mxu0 0.0
    %3999 = vmatprep.subr.mxu0 0.0
    %4000 = vmatpush1.msra.mxu0 0.0
    %4001 = vmatprep.subr.mxu0 0.0
    %4002 = vmatpush1.msra.mxu0 0.0
    %4003 = vmatprep.subr.mxu0 0.0
    %4004 = vmatpush1.msra.mxu0 0.0
    %4005 = vmatprep.subr.mxu0 0.0
    %4006 = vmatpush1.msra.mxu0 0.0
    %4007 = vmatprep.subr.mxu0 0.0
    %4008 = vmatpush1.msra.mxu0 0.0
    %4009 = vmatprep.subr.mxu0 0.0
    %4010 = vmatpush1.msra.mxu0 0.0
    %4011 = vmatprep.subr.mxu0 0.0
    %4012 = vmatpush1.msra.mxu0 0.0
    %4013 = vmatprep.subr.mxu0 0.0
    %4014 = vmatpush1.msra.mxu0 0.0
    %4015 = vmatprep.subr.mxu0 0.0
    %4016 = vmatpush1.msra.mxu0 0.0
    %4017 = vmatprep.subr.mxu0 0.0
    %4018 = vmatpush1.msra.mxu0 0.0
    %4019 = vmatprep.subr.mxu0 0.0
    %4020 = vmatpush1.msra.mxu0 0.0
    %4021 = vmatprep.subr.mxu0 0.0
    %4022 = vmatpush1.msra.mxu0 0.0
    %4023 = vmatprep.subr.mxu0 0.0
    %4024 = vmatpush1.msra.mxu0 0.0
    %4025 = vmatprep.subr.mxu0 0.0
    %4026 = vmatpush1.msra.mxu0 0.0
    %4027 = vmatprep.subr.mxu0 0.0
    %4028 = vmatpush1.msra.mxu0 0.0
    %4029 = vmatprep.subr.mxu0 0.0
    %4030 = vmatpush1.msra.mxu0 0.0
    %4031 = vmatprep.subr.mxu0 0.0
    %4032 = vmatpush1.msra.mxu0 0.0
    %4033 = vmatprep.subr.mxu0 0.0
    %4034 = vmatpush1.msra.mxu0 0.0
    %4035 = vmatprep.subr.mxu0 0.0
    %4036 = vmatpush1.msra.mxu0 0.0
    %4037 = vmatprep.subr.mxu0 0.0
    %4038 = vmatpush1.msra.mxu0 0.0
    %4039 = vmatprep.subr.mxu0 0.0
    %4040 = vmatpush1.msra.mxu0 0.0
    %4041 = vmatprep.subr.mxu0 0.0
    %4042 = vmatpush1.msra.mxu0 0.0
    %4043 = vmatprep.subr.mxu0 0.0
    %4044 = vmatpush1.msra.mxu0 0.0
    %4045 = vmatprep.subr.mxu0 0.0
    %4046 = vmatpush1.msra.mxu0 0.0
    %4047 = vmatprep.subr.mxu0 0.0
    %4048 = vmatpush1.msra.mxu0 0.0
    %4049 = vmatprep.subr.mxu0 0.0
    %4050 = vmatpush1.msra.mxu0 0.0
    %4051 = vmatprep.subr.mxu0 0.0
    %4052 = vmatpush1.msra.mxu0 0.0
    %4053 = vmatprep.mubr.f32.mxu0 0.0
    %4054 = vmatmul.mubr.f32.gmra.mrb[0].mxu0 %v3987
    %v4055 = vpop.f32.mrb[0].mxu0
    %v4056 = vadd.f32 0.0, %v4055
    %v4057 = vpop.f32.mrb[0].mxu0
    %4058 = vdwg.mxu0
    %v4060 = vrot.slane %v4056, 4
    %v4062 = vadd.f32 %v220, %v4060
    %v4063 = vmul.f32 %v4062, 0.5
    %v4064 = vtanh.pop %v4063
    %v4065 = vmul.f32 %v4064, 0.5
    %v4066 = vadd.f32 %v4065, 0.5
    %4067 = vmatprep.subr.mxu0 0.0
    %4068 = vmatpush1.msra.mxu0 %v253
    %4069 = vmatprep.subr.mxu0 0.0
    %4070 = vmatpush1.msra.mxu0 %v254
    %4071 = vmatprep.subr.mxu0 0.0
    %4072 = vmatpush1.msra.mxu0 %v255
    %4073 = vmatprep.subr.mxu0 0.0
    %4074 = vmatpush1.msra.mxu0 %v256
    %4075 = vmatprep.subr.mxu0 0.0
    %4076 = vmatpush1.msra.mxu0 0.0
    %4077 = vmatprep.subr.mxu0 0.0
    %4078 = vmatpush1.msra.mxu0 0.0
    %4079 = vmatprep.subr.mxu0 0.0
    %4080 = vmatpush1.msra.mxu0 0.0
    %4081 = vmatprep.subr.mxu0 0.0
    %4082 = vmatpush1.msra.mxu0 0.0
    %4083 = vmatprep.subr.mxu0 0.0
    %4084 = vmatpush1.msra.mxu0 0.0
    %4085 = vmatprep.subr.mxu0 0.0
    %4086 = vmatpush1.msra.mxu0 0.0
    %4087 = vmatprep.subr.mxu0 0.0
    %4088 = vmatpush1.msra.mxu0 0.0
    %4089 = vmatprep.subr.mxu0 0.0
    %4090 = vmatpush1.msra.mxu0 0.0
    %4091 = vmatprep.subr.mxu0 0.0
    %4092 = vmatpush1.msra.mxu0 0.0
    %4093 = vmatprep.subr.mxu0 0.0
    %4094 = vmatpush1.msra.mxu0 0.0
    %4095 = vmatprep.subr.mxu0 0.0
    %4096 = vmatpush1.msra.mxu0 0.0
    %4097 = vmatprep.subr.mxu0 0.0
    %4098 = vmatpush1.msra.mxu0 0.0
    %4099 = vmatprep.subr.mxu0 0.0
    %4100 = vmatpush1.msra.mxu0 0.0
    %4101 = vmatprep.subr.mxu0 0.0
    %4102 = vmatpush1.msra.mxu0 0.0
    %4103 = vmatprep.subr.mxu0 0.0
    %4104 = vmatpush1.msra.mxu0 0.0
    %4105 = vmatprep.subr.mxu0 0.0
    %4106 = vmatpush1.msra.mxu0 0.0
    %4107 = vmatprep.subr.mxu0 0.0
    %4108 = vmatpush1.msra.mxu0 0.0
    %4109 = vmatprep.subr.mxu0 0.0
    %4110 = vmatpush1.msra.mxu0 0.0
    %4111 = vmatprep.subr.mxu0 0.0
    %4112 = vmatpush1.msra.mxu0 0.0
    %4113 = vmatprep.subr.mxu0 0.0
    %4114 = vmatpush1.msra.mxu0 0.0
    %4115 = vmatprep.subr.mxu0 0.0
    %4116 = vmatpush1.msra.mxu0 0.0
    %4117 = vmatprep.subr.mxu0 0.0
    %4118 = vmatpush1.msra.mxu0 0.0
    %4119 = vmatprep.subr.mxu0 0.0
    %4120 = vmatpush1.msra.mxu0 0.0
    %4121 = vmatprep.subr.mxu0 0.0
    %4122 = vmatpush1.msra.mxu0 0.0
    %4123 = vmatprep.subr.mxu0 0.0
    %4124 = vmatpush1.msra.mxu0 0.0
    %4125 = vmatprep.subr.mxu0 0.0
    %4126 = vmatpush1.msra.mxu0 0.0
    %4127 = vmatprep.subr.mxu0 0.0
    %4128 = vmatpush1.msra.mxu0 0.0
    %4129 = vmatprep.subr.mxu0 0.0
    %4130 = vmatpush1.msra.mxu0 0.0
    %4131 = vmatprep.mubr.f32.mxu0 0.0
    %4132 = vmatmul.mubr.f32.gmra.mrb[0].mxu0 %v3987
    %v4133 = vpop.f32.mrb[0].mxu0
    %v4134 = vadd.f32 0.0, %v4133
    %v4135 = vpop.f32.mrb[0].mxu0
    %4136 = vdwg.mxu0
    %v4138 = vrot.slane %v4134, 4
    %4139 = vrot.lane.b32.xlu0 %v4138, 32
    %v4140 = vpop.permute.xlu0 %4139
    %v4142 = vadd.f32 %v220, %v4140
    %v4143 = vmul.f32 %v4142, 0.5
    %v4144 = vtanh.pop %v4143
    %v4145 = vmul.f32 %v4144, 0.5
    %v4146 = vadd.f32 %v4145, 0.5
    %4147 = vmatprep.subr.mxu0 0.0
    %4148 = vmatpush1.msra.mxu0 %v258
    %4149 = vmatprep.subr.mxu0 0.0
    %4150 = vmatpush1.msra.mxu0 %v259
    %4151 = vmatprep.subr.mxu0 0.0
    %4152 = vmatpush1.msra.mxu0 %v260
    %4153 = vmatprep.subr.mxu0 0.0
    %4154 = vmatpush1.msra.mxu0 %v261
    %4155 = vmatprep.subr.mxu0 0.0
    %4156 = vmatpush1.msra.mxu0 0.0
    %4157 = vmatprep.subr.mxu0 0.0
    %4158 = vmatpush1.msra.mxu0 0.0
    %4159 = vmatprep.subr.mxu0 0.0
    %4160 = vmatpush1.msra.mxu0 0.0
    %4161 = vmatprep.subr.mxu0 0.0
    %4162 = vmatpush1.msra.mxu0 0.0
    %4163 = vmatprep.subr.mxu0 0.0
    %4164 = vmatpush1.msra.mxu0 0.0
    %4165 = vmatprep.subr.mxu0 0.0
    %4166 = vmatpush1.msra.mxu0 0.0
    %4167 = vmatprep.subr.mxu0 0.0
    %4168 = vmatpush1.msra.mxu0 0.0
    %4169 = vmatprep.subr.mxu0 0.0
    %4170 = vmatpush1.msra.mxu0 0.0
    %4171 = vmatprep.subr.mxu0 0.0
    %4172 = vmatpush1.msra.mxu0 0.0
    %4173 = vmatprep.subr.mxu0 0.0
    %4174 = vmatpush1.msra.mxu0 0.0
    %4175 = vmatprep.subr.mxu0 0.0
    %4176 = vmatpush1.msra.mxu0 0.0
    %4177 = vmatprep.subr.mxu0 0.0
    %4178 = vmatpush1.msra.mxu0 0.0
    %4179 = vmatprep.subr.mxu0 0.0
    %4180 = vmatpush1.msra.mxu0 0.0
    %4181 = vmatprep.subr.mxu0 0.0
    %4182 = vmatpush1.msra.mxu0 0.0
    %4183 = vmatprep.subr.mxu0 0.0
    %4184 = vmatpush1.msra.mxu0 0.0
    %4185 = vmatprep.subr.mxu0 0.0
    %4186 = vmatpush1.msra.mxu0 0.0
    %4187 = vmatprep.subr.mxu0 0.0
    %4188 = vmatpush1.msra.mxu0 0.0
    %4189 = vmatprep.subr.mxu0 0.0
    %4190 = vmatpush1.msra.mxu0 0.0
    %4191 = vmatprep.subr.mxu0 0.0
    %4192 = vmatpush1.msra.mxu0 0.0
    %4193 = vmatprep.subr.mxu0 0.0
    %4194 = vmatpush1.msra.mxu0 0.0
    %4195 = vmatprep.subr.mxu0 0.0
    %4196 = vmatpush1.msra.mxu0 0.0
    %4197 = vmatprep.subr.mxu0 0.0
    %4198 = vmatpush1.msra.mxu0 0.0
    %4199 = vmatprep.subr.mxu0 0.0
    %4200 = vmatpush1.msra.mxu0 0.0
    %4201 = vmatprep.subr.mxu0 0.0
    %4202 = vmatpush1.msra.mxu0 0.0
    %4203 = vmatprep.subr.mxu0 0.0
    %4204 = vmatpush1.msra.mxu0 0.0
    %4205 = vmatprep.subr.mxu0 0.0
    %4206 = vmatpush1.msra.mxu0 0.0
    %4207 = vmatprep.subr.mxu0 0.0
    %4208 = vmatpush1.msra.mxu0 0.0
    %4209 = vmatprep.subr.mxu0 0.0
    %4210 = vmatpush1.msra.mxu0 0.0
    %4211 = vmatprep.mubr.f32.mxu0 0.0
    %4212 = vmatmul.mubr.f32.gmra.mrb[0].mxu0 %v3987
    %v4213 = vpop.f32.mrb[0].mxu0
    %v4214 = vadd.f32 0.0, %v4213
    %v4215 = vpop.f32.mrb[0].mxu0
    %4216 = vdwg.mxu0
    %v4218 = vrot.slane %v4214, 4
    %4219 = vrot.lane.b32.xlu0 %v4218, 64
    %v4220 = vpop.permute.xlu0 %4219
    %v4222 = vadd.f32 %v220, %v4220
    %v4223 = vtanh.pop %v4222
    %4224 = vmatprep.subr.mxu0 0.0
    %4225 = vmatpush1.msra.mxu0 %v263
    %4226 = vmatprep.subr.mxu0 0.0
    %4227 = vmatpush1.msra.mxu0 %v264
    %4228 = vmatprep.subr.mxu0 0.0
    %4229 = vmatpush1.msra.mxu0 %v265
    %4230 = vmatprep.subr.mxu0 0.0
    %4231 = vmatpush1.msra.mxu0 %v266
    %4232 = vmatprep.subr.mxu0 0.0
    %4233 = vmatpush1.msra.mxu0 0.0
    %4234 = vmatprep.subr.mxu0 0.0
    %4235 = vmatpush1.msra.mxu0 0.0
    %4236 = vmatprep.subr.mxu0 0.0
    %4237 = vmatpush1.msra.mxu0 0.0
    %4238 = vmatprep.subr.mxu0 0.0
    %4239 = vmatpush1.msra.mxu0 0.0
    %4240 = vmatprep.subr.mxu0 0.0
    %4241 = vmatpush1.msra.mxu0 0.0
    %4242 = vmatprep.subr.mxu0 0.0
    %4243 = vmatpush1.msra.mxu0 0.0
    %4244 = vmatprep.subr.mxu0 0.0
    %4245 = vmatpush1.msra.mxu0 0.0
    %4246 = vmatprep.subr.mxu0 0.0
    %4247 = vmatpush1.msra.mxu0 0.0
    %4248 = vmatprep.subr.mxu0 0.0
    %4249 = vmatpush1.msra.mxu0 0.0
    %4250 = vmatprep.subr.mxu0 0.0
    %4251 = vmatpush1.msra.mxu0 0.0
    %4252 = vmatprep.subr.mxu0 0.0
    %4253 = vmatpush1.msra.mxu0 0.0
    %4254 = vmatprep.subr.mxu0 0.0
    %4255 = vmatpush1.msra.mxu0 0.0
    %4256 = vmatprep.subr.mxu0 0.0
    %4257 = vmatpush1.msra.mxu0 0.0
    %4258 = vmatprep.subr.mxu0 0.0
    %4259 = vmatpush1.msra.mxu0 0.0
    %4260 = vmatprep.subr.mxu0 0.0
    %4261 = vmatpush1.msra.mxu0 0.0
    %4262 = vmatprep.subr.mxu0 0.0
    %4263 = vmatpush1.msra.mxu0 0.0
    %4264 = vmatprep.subr.mxu0 0.0
    %4265 = vmatpush1.msra.mxu0 0.0
    %4266 = vmatprep.subr.mxu0 0.0
    %4267 = vmatpush1.msra.mxu0 0.0
    %4268 = vmatprep.subr.mxu0 0.0
    %4269 = vmatpush1.msra.mxu0 0.0
    %4270 = vmatprep.subr.mxu0 0.0
    %4271 = vmatpush1.msra.mxu0 0.0
    %4272 = vmatprep.subr.mxu0 0.0
    %4273 = vmatpush1.msra.mxu0 0.0
    %4274 = vmatprep.subr.mxu0 0.0
    %4275 = vmatpush1.msra.mxu0 0.0
    %4276 = vmatprep.subr.mxu0 0.0
    %4277 = vmatpush1.msra.mxu0 0.0
    %4278 = vmatprep.subr.mxu0 0.0
    %4279 = vmatpush1.msra.mxu0 0.0
    %4280 = vmatprep.subr.mxu0 0.0
    %4281 = vmatpush1.msra.mxu0 0.0
    %4282 = vmatprep.subr.mxu0 0.0
    %4283 = vmatpush1.msra.mxu0 0.0
    %4284 = vmatprep.subr.mxu0 0.0
    %4285 = vmatpush1.msra.mxu0 0.0
    %4286 = vmatprep.subr.mxu0 0.0
    %4287 = vmatpush1.msra.mxu0 0.0
    %4288 = vmatprep.mubr.f32.mxu0 0.0
    %4289 = vmatmul.mubr.f32.gmra.mrb[0].mxu0 %v3987
    %v4290 = vpop.f32.mrb[0].mxu0
    %v4291 = vadd.f32 0.0, %v4290
    %v4292 = vpop.f32.mrb[0].mxu0
    %4293 = vdwg.mxu0
    %v4295 = vrot.slane %v4291, 4
    %4296 = vrot.lane.b32.xlu0 %v4295, 96
    %v4297 = vpop.permute.xlu0 %4296
    %v4299 = vadd.f32 %v220, %v4297
    %v4300 = vmul.f32 %v4299, 0.5
    %v4301 = vtanh.pop %v4300
    %v4302 = vmul.f32 %v4301, 0.5
    %v4303 = vadd.f32 %v4302, 0.5
    %v4305 = vrot.slane %v3636, 2
    %v4307 = vmul.f32 %v4146, %v4305
    %4309 = vrot.lane.b32.xlu0 %v4223, 64
    %v4310 = vpop.permute.xlu0 %4309
    %v4312 = vmul.f32 %v4066, %v4310
    %4314 = vrot.lane.b32.xlu0 %v4312, 32
    %v4315 = vpop.permute.xlu0 %4314
    %v4317 = vadd.f32 %v4307, %v4315
    %v4318 = vtanh.pop %v4317
    %4320 = vrot.lane.b32.xlu0 %v4318, 64
    %v4321 = vpop.permute.xlu0 %4320
    %v4323 = vmul.f32 %v4303, %v4321
    %v4325 = vrot.slane %v3982, 2
    %4326 = vrot.lane.b32.xlu0 %v4325, 32
    %v4327 = vpop.permute.xlu0 %4326
    %v4328 = vsel %vm267, %v4327, 0
    %4330 = vmatprep.subr.mxu0 0.0
    %4331 = vmatpush1.msra.mxu0 %v228
    %4332 = vmatprep.subr.mxu0 0.0
    %4333 = vmatpush1.msra.mxu0 %v229
    %4334 = vmatprep.subr.mxu0 0.0
    %4335 = vmatpush1.msra.mxu0 %v230
    %4336 = vmatprep.subr.mxu0 0.0
    %4337 = vmatpush1.msra.mxu0 %v231
    %4338 = vmatprep.subr.mxu0 0.0
    %4339 = vmatpush1.msra.mxu0 0.0
    %4340 = vmatprep.subr.mxu0 0.0
    %4341 = vmatpush1.msra.mxu0 0.0
    %4342 = vmatprep.subr.mxu0 0.0
    %4343 = vmatpush1.msra.mxu0 0.0
    %4344 = vmatprep.subr.mxu0 0.0
    %4345 = vmatpush1.msra.mxu0 0.0
    %4346 = vmatprep.subr.mxu0 0.0
    %4347 = vmatpush1.msra.mxu0 0.0
    %4348 = vmatprep.subr.mxu0 0.0
    %4349 = vmatpush1.msra.mxu0 0.0
    %4350 = vmatprep.subr.mxu0 0.0
    %4351 = vmatpush1.msra.mxu0 0.0
    %4352 = vmatprep.subr.mxu0 0.0
    %4353 = vmatpush1.msra.mxu0 0.0
    %4354 = vmatprep.subr.mxu0 0.0
    %4355 = vmatpush1.msra.mxu0 0.0
    %4356 = vmatprep.subr.mxu0 0.0
    %4357 = vmatpush1.msra.mxu0 0.0
    %4358 = vmatprep.subr.mxu0 0.0
    %4359 = vmatpush1.msra.mxu0 0.0
    %4360 = vmatprep.subr.mxu0 0.0
    %4361 = vmatpush1.msra.mxu0 0.0
    %4362 = vmatprep.subr.mxu0 0.0
    %4363 = vmatpush1.msra.mxu0 0.0
    %4364 = vmatprep.subr.mxu0 0.0
    %4365 = vmatpush1.msra.mxu0 0.0
    %4366 = vmatprep.subr.mxu0 0.0
    %4367 = vmatpush1.msra.mxu0 0.0
    %4368 = vmatprep.subr.mxu0 0.0
    %4369 = vmatpush1.msra.mxu0 0.0
    %4370 = vmatprep.subr.mxu0 0.0
    %4371 = vmatpush1.msra.mxu0 0.0
    %4372 = vmatprep.subr.mxu0 0.0
    %4373 = vmatpush1.msra.mxu0 0.0
    %4374 = vmatprep.subr.mxu0 0.0
    %4375 = vmatpush1.msra.mxu0 0.0
    %4376 = vmatprep.subr.mxu0 0.0
    %4377 = vmatpush1.msra.mxu0 0.0
    %4378 = vmatprep.subr.mxu0 0.0
    %4379 = vmatpush1.msra.mxu0 0.0
    %4380 = vmatprep.subr.mxu0 0.0
    %4381 = vmatpush1.msra.mxu0 0.0
    %4382 = vmatprep.subr.mxu0 0.0
    %4383 = vmatpush1.msra.mxu0 0.0
    %4384 = vmatprep.subr.mxu0 0.0
    %4385 = vmatpush1.msra.mxu0 0.0
    %4386 = vmatprep.subr.mxu0 0.0
    %4387 = vmatpush1.msra.mxu0 0.0
    %4388 = vmatprep.subr.mxu0 0.0
    %4389 = vmatpush1.msra.mxu0 0.0
    %4390 = vmatprep.subr.mxu0 0.0
    %4391 = vmatpush1.msra.mxu0 0.0
    %4392 = vmatprep.subr.mxu0 0.0
    %4393 = vmatpush1.msra.mxu0 0.0
    %4394 = vmatprep.mubr.f32.mxu0 0.0
    %4395 = vmatmul.mubr.f32.gmra.mrb[0].mxu0 %v4328
    %v4396 = vpop.f32.mrb[0].mxu0
    %v4397 = vadd.f32 0.0, %v4396
    %v4398 = vpop.f32.mrb[0].mxu0
    %4399 = vdwg.mxu0
    %v4401 = vrot.slane %v4397, 4
    %v4403 = vadd.f32 %v224, %v4401
    %v4404 = vmul.f32 %v4403, 0.5
    %v4405 = vtanh.pop %v4404
    %v4406 = vmul.f32 %v4405, 0.5
    %v4407 = vadd.f32 %v4406, 0.5
    %4408 = vmatprep.subr.mxu0 0.0
    %4409 = vmatpush1.msra.mxu0 %v233
    %4410 = vmatprep.subr.mxu0 0.0
    %4411 = vmatpush1.msra.mxu0 %v234
    %4412 = vmatprep.subr.mxu0 0.0
    %4413 = vmatpush1.msra.mxu0 %v235
    %4414 = vmatprep.subr.mxu0 0.0
    %4415 = vmatpush1.msra.mxu0 %v236
    %4416 = vmatprep.subr.mxu0 0.0
    %4417 = vmatpush1.msra.mxu0 0.0
    %4418 = vmatprep.subr.mxu0 0.0
    %4419 = vmatpush1.msra.mxu0 0.0
    %4420 = vmatprep.subr.mxu0 0.0
    %4421 = vmatpush1.msra.mxu0 0.0
    %4422 = vmatprep.subr.mxu0 0.0
    %4423 = vmatpush1.msra.mxu0 0.0
    %4424 = vmatprep.subr.mxu0 0.0
    %4425 = vmatpush1.msra.mxu0 0.0
    %4426 = vmatprep.subr.mxu0 0.0
    %4427 = vmatpush1.msra.mxu0 0.0
    %4428 = vmatprep.subr.mxu0 0.0
    %4429 = vmatpush1.msra.mxu0 0.0
    %4430 = vmatprep.subr.mxu0 0.0
    %4431 = vmatpush1.msra.mxu0 0.0
    %4432 = vmatprep.subr.mxu0 0.0
    %4433 = vmatpush1.msra.mxu0 0.0
    %4434 = vmatprep.subr.mxu0 0.0
    %4435 = vmatpush1.msra.mxu0 0.0
    %4436 = vmatprep.subr.mxu0 0.0
    %4437 = vmatpush1.msra.mxu0 0.0
    %4438 = vmatprep.subr.mxu0 0.0
    %4439 = vmatpush1.msra.mxu0 0.0
    %4440 = vmatprep.subr.mxu0 0.0
    %4441 = vmatpush1.msra.mxu0 0.0
    %4442 = vmatprep.subr.mxu0 0.0
    %4443 = vmatpush1.msra.mxu0 0.0
    %4444 = vmatprep.subr.mxu0 0.0
    %4445 = vmatpush1.msra.mxu0 0.0
    %4446 = vmatprep.subr.mxu0 0.0
    %4447 = vmatpush1.msra.mxu0 0.0
    %4448 = vmatprep.subr.mxu0 0.0
    %4449 = vmatpush1.msra.mxu0 0.0
    %4450 = vmatprep.subr.mxu0 0.0
    %4451 = vmatpush1.msra.mxu0 0.0
    %4452 = vmatprep.subr.mxu0 0.0
    %4453 = vmatpush1.msra.mxu0 0.0
    %4454 = vmatprep.subr.mxu0 0.0
    %4455 = vmatpush1.msra.mxu0 0.0
    %4456 = vmatprep.subr.mxu0 0.0
    %4457 = vmatpush1.msra.mxu0 0.0
    %4458 = vmatprep.subr.mxu0 0.0
    %4459 = vmatpush1.msra.mxu0 0.0
    %4460 = vmatprep.subr.mxu0 0.0
    %4461 = vmatpush1.msra.mxu0 0.0
    %4462 = vmatprep.subr.mxu0 0.0
    %4463 = vmatpush1.msra.mxu0 0.0
    %4464 = vmatprep.subr.mxu0 0.0
    %4465 = vmatpush1.msra.mxu0 0.0
    %4466 = vmatprep.subr.mxu0 0.0
    %4467 = vmatpush1.msra.mxu0 0.0
    %4468 = vmatprep.subr.mxu0 0.0
    %4469 = vmatpush1.msra.mxu0 0.0
    %4470 = vmatprep.subr.mxu0 0.0
    %4471 = vmatpush1.msra.mxu0 0.0
    %4472 = vmatprep.mubr.f32.mxu0 0.0
    %4473 = vmatmul.mubr.f32.gmra.mrb[0].mxu0 %v4328
    %v4474 = vpop.f32.mrb[0].mxu0
    %v4475 = vadd.f32 0.0, %v4474
    %v4476 = vpop.f32.mrb[0].mxu0
    %4477 = vdwg.mxu0
    %v4479 = vrot.slane %v4475, 4
    %4480 = vrot.lane.b32.xlu0 %v4479, 32
    %v4481 = vpop.permute.xlu0 %4480
    %v4483 = vadd.f32 %v224, %v4481
    %v4484 = vmul.f32 %v4483, 0.5
    %v4485 = vtanh.pop %v4484
    %v4486 = vmul.f32 %v4485, 0.5
    %v4487 = vadd.f32 %v4486, 0.5
    %4488 = vmatprep.subr.mxu0 0.0
    %4489 = vmatpush1.msra.mxu0 %v238
    %4490 = vmatprep.subr.mxu0 0.0
    %4491 = vmatpush1.msra.mxu0 %v239
    %4492 = vmatprep.subr.mxu0 0.0
    %4493 = vmatpush1.msra.mxu0 %v240
    %4494 = vmatprep.subr.mxu0 0.0
    %4495 = vmatpush1.msra.mxu0 %v241
    %4496 = vmatprep.subr.mxu0 0.0
    %4497 = vmatpush1.msra.mxu0 0.0
    %4498 = vmatprep.subr.mxu0 0.0
    %4499 = vmatpush1.msra.mxu0 0.0
    %4500 = vmatprep.subr.mxu0 0.0
    %4501 = vmatpush1.msra.mxu0 0.0
    %4502 = vmatprep.subr.mxu0 0.0
    %4503 = vmatpush1.msra.mxu0 0.0
    %4504 = vmatprep.subr.mxu0 0.0
    %4505 = vmatpush1.msra.mxu0 0.0
    %4506 = vmatprep.subr.mxu0 0.0
    %4507 = vmatpush1.msra.mxu0 0.0
    %4508 = vmatprep.subr.mxu0 0.0
    %4509 = vmatpush1.msra.mxu0 0.0
    %4510 = vmatprep.subr.mxu0 0.0
    %4511 = vmatpush1.msra.mxu0 0.0
    %4512 = vmatprep.subr.mxu0 0.0
    %4513 = vmatpush1.msra.mxu0 0.0
    %4514 = vmatprep.subr.mxu0 0.0
    %4515 = vmatpush1.msra.mxu0 0.0
    %4516 = vmatprep.subr.mxu0 0.0
    %4517 = vmatpush1.msra.mxu0 0.0
    %4518 = vmatprep.subr.mxu0 0.0
    %4519 = vmatpush1.msra.mxu0 0.0
    %4520 = vmatprep.subr.mxu0 0.0
    %4521 = vmatpush1.msra.mxu0 0.0
    %4522 = vmatprep.subr.mxu0 0.0
    %4523 = vmatpush1.msra.mxu0 0.0
    %4524 = vmatprep.subr.mxu0 0.0
    %4525 = vmatpush1.msra.mxu0 0.0
    %4526 = vmatprep.subr.mxu0 0.0
    %4527 = vmatpush1.msra.mxu0 0.0
    %4528 = vmatprep.subr.mxu0 0.0
    %4529 = vmatpush1.msra.mxu0 0.0
    %4530 = vmatprep.subr.mxu0 0.0
    %4531 = vmatpush1.msra.mxu0 0.0
    %4532 = vmatprep.subr.mxu0 0.0
    %4533 = vmatpush1.msra.mxu0 0.0
    %4534 = vmatprep.subr.mxu0 0.0
    %4535 = vmatpush1.msra.mxu0 0.0
    %4536 = vmatprep.subr.mxu0 0.0
    %4537 = vmatpush1.msra.mxu0 0.0
    %4538 = vmatprep.subr.mxu0 0.0
    %4539 = vmatpush1.msra.mxu0 0.0
    %4540 = vmatprep.subr.mxu0 0.0
    %4541 = vmatpush1.msra.mxu0 0.0
    %4542 = vmatprep.subr.mxu0 0.0
    %4543 = vmatpush1.msra.mxu0 0.0
    %4544 = vmatprep.subr.mxu0 0.0
    %4545 = vmatpush1.msra.mxu0 0.0
    %4546 = vmatprep.subr.mxu0 0.0
    %4547 = vmatpush1.msra.mxu0 0.0
    %4548 = vmatprep.subr.mxu0 0.0
    %4549 = vmatpush1.msra.mxu0 0.0
    %4550 = vmatprep.subr.mxu0 0.0
    %4551 = vmatpush1.msra.mxu0 0.0
    %4552 = vmatprep.mubr.f32.mxu0 0.0
    %4553 = vmatmul.mubr.f32.gmra.mrb[0].mxu0 %v4328
    %v4554 = vpop.f32.mrb[0].mxu0
    %v4555 = vadd.f32 0.0, %v4554
    %v4556 = vpop.f32.mrb[0].mxu0
    %4557 = vdwg.mxu0
    %v4559 = vrot.slane %v4555, 4
    %4560 = vrot.lane.b32.xlu0 %v4559, 64
    %v4561 = vpop.permute.xlu0 %4560
    %v4563 = vadd.f32 %v224, %v4561
    %v4564 = vtanh.pop %v4563
    %4565 = vmatprep.subr.mxu0 0.0
    %4566 = vmatpush1.msra.mxu0 %v243
    %4567 = vmatprep.subr.mxu0 0.0
    %4568 = vmatpush1.msra.mxu0 %v244
    %4569 = vmatprep.subr.mxu0 0.0
    %4570 = vmatpush1.msra.mxu0 %v245
    %4571 = vmatprep.subr.mxu0 0.0
    %4572 = vmatpush1.msra.mxu0 %v246
    %4573 = vmatprep.subr.mxu0 0.0
    %4574 = vmatpush1.msra.mxu0 0.0
    %4575 = vmatprep.subr.mxu0 0.0
    %4576 = vmatpush1.msra.mxu0 0.0
    %4577 = vmatprep.subr.mxu0 0.0
    %4578 = vmatpush1.msra.mxu0 0.0
    %4579 = vmatprep.subr.mxu0 0.0
    %4580 = vmatpush1.msra.mxu0 0.0
    %4581 = vmatprep.subr.mxu0 0.0
    %4582 = vmatpush1.msra.mxu0 0.0
    %4583 = vmatprep.subr.mxu0 0.0
    %4584 = vmatpush1.msra.mxu0 0.0
    %4585 = vmatprep.subr.mxu0 0.0
    %4586 = vmatpush1.msra.mxu0 0.0
    %4587 = vmatprep.subr.mxu0 0.0
    %4588 = vmatpush1.msra.mxu0 0.0
    %4589 = vmatprep.subr.mxu0 0.0
    %4590 = vmatpush1.msra.mxu0 0.0
    %4591 = vmatprep.subr.mxu0 0.0
    %4592 = vmatpush1.msra.mxu0 0.0
    %4593 = vmatprep.subr.mxu0 0.0
    %4594 = vmatpush1.msra.mxu0 0.0
    %4595 = vmatprep.subr.mxu0 0.0
    %4596 = vmatpush1.msra.mxu0 0.0
    %4597 = vmatprep.subr.mxu0 0.0
    %4598 = vmatpush1.msra.mxu0 0.0
    %4599 = vmatprep.subr.mxu0 0.0
    %4600 = vmatpush1.msra.mxu0 0.0
    %4601 = vmatprep.subr.mxu0 0.0
    %4602 = vmatpush1.msra.mxu0 0.0
    %4603 = vmatprep.subr.mxu0 0.0
    %4604 = vmatpush1.msra.mxu0 0.0
    %4605 = vmatprep.subr.mxu0 0.0
    %4606 = vmatpush1.msra.mxu0 0.0
    %4607 = vmatprep.subr.mxu0 0.0
    %4608 = vmatpush1.msra.mxu0 0.0
    %4609 = vmatprep.subr.mxu0 0.0
    %4610 = vmatpush1.msra.mxu0 0.0
    %4611 = vmatprep.subr.mxu0 0.0
    %4612 = vmatpush1.msra.mxu0 0.0
    %4613 = vmatprep.subr.mxu0 0.0
    %4614 = vmatpush1.msra.mxu0 0.0
    %4615 = vmatprep.subr.mxu0 0.0
    %4616 = vmatpush1.msra.mxu0 0.0
    %4617 = vmatprep.subr.mxu0 0.0
    %4618 = vmatpush1.msra.mxu0 0.0
    %4619 = vmatprep.subr.mxu0 0.0
    %4620 = vmatpush1.msra.mxu0 0.0
    %4621 = vmatprep.subr.mxu0 0.0
    %4622 = vmatpush1.msra.mxu0 0.0
    %4623 = vmatprep.subr.mxu0 0.0
    %4624 = vmatpush1.msra.mxu0 0.0
    %4625 = vmatprep.subr.mxu0 0.0
    %4626 = vmatpush1.msra.mxu0 0.0
    %4627 = vmatprep.subr.mxu0 0.0
    %4628 = vmatpush1.msra.mxu0 0.0
    %4629 = vmatprep.mubr.f32.mxu0 0.0
    %4630 = vmatmul.mubr.f32.gmra.mrb[0].mxu0 %v4328
    %v4631 = vpop.f32.mrb[0].mxu0
    %v4632 = vadd.f32 0.0, %v4631
    %v4633 = vpop.f32.mrb[0].mxu0
    %4634 = vdwg.mxu0
    %v4636 = vrot.slane %v4632, 4
    %4637 = vrot.lane.b32.xlu0 %v4636, 96
    %v4638 = vpop.permute.xlu0 %4637
    %v4640 = vadd.f32 %v224, %v4638
    %v4641 = vmul.f32 %v4640, 0.5
    %v4642 = vtanh.pop %v4641
    %v4643 = vmul.f32 %v4642, 0.5
    %v4644 = vadd.f32 %v4643, 0.5
    %v4646 = vrot.slane %v3976, 6
    %v4648 = vmul.f32 %v4487, %v4646
    %4650 = vrot.lane.b32.xlu0 %v4564, 64
    %v4651 = vpop.permute.xlu0 %4650
    %v4653 = vmul.f32 %v4407, %v4651
    %4655 = vrot.lane.b32.xlu0 %v4653, 32
    %v4656 = vpop.permute.xlu0 %4655
    %v4658 = vadd.f32 %v4648, %v4656
    %v4659 = vtanh.pop %v4658
    %4661 = vrot.lane.b32.xlu0 %v4659, 64
    %v4662 = vpop.permute.xlu0 %4661
    %v4664 = vmul.f32 %v4644, %v4662
    %v4666 = vrot.slane %v4323, 4
    %4667 = vrot.lane.b32.xlu0 %v4666, 32
    %v4668 = vpop.permute.xlu0 %4667
    %v4669 = vsel %vm267, %v4668, 0
    %4671 = vmatprep.subr.mxu0 0.0
    %4672 = vmatpush1.msra.mxu0 %v248
    %4673 = vmatprep.subr.mxu0 0.0
    %4674 = vmatpush1.msra.mxu0 %v249
    %4675 = vmatprep.subr.mxu0 0.0
    %4676 = vmatpush1.msra.mxu0 %v250
    %4677 = vmatprep.subr.mxu0 0.0
    %4678 = vmatpush1.msra.mxu0 %v251
    %4679 = vmatprep.subr.mxu0 0.0
    %4680 = vmatpush1.msra.mxu0 0.0
    %4681 = vmatprep.subr.mxu0 0.0
    %4682 = vmatpush1.msra.mxu0 0.0
    %4683 = vmatprep.subr.mxu0 0.0
    %4684 = vmatpush1.msra.mxu0 0.0
    %4685 = vmatprep.subr.mxu0 0.0
    %4686 = vmatpush1.msra.mxu0 0.0
    %4687 = vmatprep.subr.mxu0 0.0
    %4688 = vmatpush1.msra.mxu0 0.0
    %4689 = vmatprep.subr.mxu0 0.0
    %4690 = vmatpush1.msra.mxu0 0.0
    %4691 = vmatprep.subr.mxu0 0.0
    %4692 = vmatpush1.msra.mxu0 0.0
    %4693 = vmatprep.subr.mxu0 0.0
    %4694 = vmatpush1.msra.mxu0 0.0
    %4695 = vmatprep.subr.mxu0 0.0
    %4696 = vmatpush1.msra.mxu0 0.0
    %4697 = vmatprep.subr.mxu0 0.0
    %4698 = vmatpush1.msra.mxu0 0.0
    %4699 = vmatprep.subr.mxu0 0.0
    %4700 = vmatpush1.msra.mxu0 0.0
    %4701 = vmatprep.subr.mxu0 0.0
    %4702 = vmatpush1.msra.mxu0 0.0
    %4703 = vmatprep.subr.mxu0 0.0
    %4704 = vmatpush1.msra.mxu0 0.0
    %4705 = vmatprep.subr.mxu0 0.0
    %4706 = vmatpush1.msra.mxu0 0.0
    %4707 = vmatprep.subr.mxu0 0.0
    %4708 = vmatpush1.msra.mxu0 0.0
    %4709 = vmatprep.subr.mxu0 0.0
    %4710 = vmatpush1.msra.mxu0 0.0
    %4711 = vmatprep.subr.mxu0 0.0
    %4712 = vmatpush1.msra.mxu0 0.0
    %4713 = vmatprep.subr.mxu0 0.0
    %4714 = vmatpush1.msra.mxu0 0.0
    %4715 = vmatprep.subr.mxu0 0.0
    %4716 = vmatpush1.msra.mxu0 0.0
    %4717 = vmatprep.subr.mxu0 0.0
    %4718 = vmatpush1.msra.mxu0 0.0
    %4719 = vmatprep.subr.mxu0 0.0
    %4720 = vmatpush1.msra.mxu0 0.0
    %4721 = vmatprep.subr.mxu0 0.0
    %4722 = vmatpush1.msra.mxu0 0.0
    %4723 = vmatprep.subr.mxu0 0.0
    %4724 = vmatpush1.msra.mxu0 0.0
    %4725 = vmatprep.subr.mxu0 0.0
    %4726 = vmatpush1.msra.mxu0 0.0
    %4727 = vmatprep.subr.mxu0 0.0
    %4728 = vmatpush1.msra.mxu0 0.0
    %4729 = vmatprep.subr.mxu0 0.0
    %4730 = vmatpush1.msra.mxu0 0.0
    %4731 = vmatprep.subr.mxu0 0.0
    %4732 = vmatpush1.msra.mxu0 0.0
    %4733 = vmatprep.subr.mxu0 0.0
    %4734 = vmatpush1.msra.mxu0 0.0
    %4735 = vmatprep.mubr.f32.mxu0 0.0
    %4736 = vmatmul.mubr.f32.gmra.mrb[0].mxu0 %v4669
    %v4737 = vpop.f32.mrb[0].mxu0
    %v4738 = vadd.f32 0.0, %v4737
    %v4739 = vpop.f32.mrb[0].mxu0
    %4740 = vdwg.mxu0
    %v4742 = vrot.slane %v4738, 6
    %v4744 = vadd.f32 %v220, %v4742
    %v4745 = vmul.f32 %v4744, 0.5
    %v4746 = vtanh.pop %v4745
    %v4747 = vmul.f32 %v4746, 0.5
    %v4748 = vadd.f32 %v4747, 0.5
    %4749 = vmatprep.subr.mxu0 0.0
    %4750 = vmatpush1.msra.mxu0 %v253
    %4751 = vmatprep.subr.mxu0 0.0
    %4752 = vmatpush1.msra.mxu0 %v254
    %4753 = vmatprep.subr.mxu0 0.0
    %4754 = vmatpush1.msra.mxu0 %v255
    %4755 = vmatprep.subr.mxu0 0.0
    %4756 = vmatpush1.msra.mxu0 %v256
    %4757 = vmatprep.subr.mxu0 0.0
    %4758 = vmatpush1.msra.mxu0 0.0
    %4759 = vmatprep.subr.mxu0 0.0
    %4760 = vmatpush1.msra.mxu0 0.0
    %4761 = vmatprep.subr.mxu0 0.0
    %4762 = vmatpush1.msra.mxu0 0.0
    %4763 = vmatprep.subr.mxu0 0.0
    %4764 = vmatpush1.msra.mxu0 0.0
    %4765 = vmatprep.subr.mxu0 0.0
    %4766 = vmatpush1.msra.mxu0 0.0
    %4767 = vmatprep.subr.mxu0 0.0
    %4768 = vmatpush1.msra.mxu0 0.0
    %4769 = vmatprep.subr.mxu0 0.0
    %4770 = vmatpush1.msra.mxu0 0.0
    %4771 = vmatprep.subr.mxu0 0.0
    %4772 = vmatpush1.msra.mxu0 0.0
    %4773 = vmatprep.subr.mxu0 0.0
    %4774 = vmatpush1.msra.mxu0 0.0
    %4775 = vmatprep.subr.mxu0 0.0
    %4776 = vmatpush1.msra.mxu0 0.0
    %4777 = vmatprep.subr.mxu0 0.0
    %4778 = vmatpush1.msra.mxu0 0.0
    %4779 = vmatprep.subr.mxu0 0.0
    %4780 = vmatpush1.msra.mxu0 0.0
    %4781 = vmatprep.subr.mxu0 0.0
    %4782 = vmatpush1.msra.mxu0 0.0
    %4783 = vmatprep.subr.mxu0 0.0
    %4784 = vmatpush1.msra.mxu0 0.0
    %4785 = vmatprep.subr.mxu0 0.0
    %4786 = vmatpush1.msra.mxu0 0.0
    %4787 = vmatprep.subr.mxu0 0.0
    %4788 = vmatpush1.msra.mxu0 0.0
    %4789 = vmatprep.subr.mxu0 0.0
    %4790 = vmatpush1.msra.mxu0 0.0
    %4791 = vmatprep.subr.mxu0 0.0
    %4792 = vmatpush1.msra.mxu0 0.0
    %4793 = vmatprep.subr.mxu0 0.0
    %4794 = vmatpush1.msra.mxu0 0.0
    %4795 = vmatprep.subr.mxu0 0.0
    %4796 = vmatpush1.msra.mxu0 0.0
    %4797 = vmatprep.subr.mxu0 0.0
    %4798 = vmatpush1.msra.mxu0 0.0
    %4799 = vmatprep.subr.mxu0 0.0
    %4800 = vmatpush1.msra.mxu0 0.0
    %4801 = vmatprep.subr.mxu0 0.0
    %4802 = vmatpush1.msra.mxu0 0.0
    %4803 = vmatprep.subr.mxu0 0.0
    %4804 = vmatpush1.msra.mxu0 0.0
    %4805 = vmatprep.subr.mxu0 0.0
    %4806 = vmatpush1.msra.mxu0 0.0
    %4807 = vmatprep.subr.mxu0 0.0
    %4808 = vmatpush1.msra.mxu0 0.0
    %4809 = vmatprep.subr.mxu0 0.0
    %4810 = vmatpush1.msra.mxu0 0.0
    %4811 = vmatprep.subr.mxu0 0.0
    %4812 = vmatpush1.msra.mxu0 0.0
    %4813 = vmatprep.mubr.f32.mxu0 0.0
    %4814 = vmatmul.mubr.f32.gmra.mrb[0].mxu0 %v4669
    %v4815 = vpop.f32.mrb[0].mxu0
    %v4816 = vadd.f32 0.0, %v4815
    %v4817 = vpop.f32.mrb[0].mxu0
    %4818 = vdwg.mxu0
    %v4820 = vrot.slane %v4816, 6
    %4821 = vrot.lane.b32.xlu0 %v4820, 32
    %v4822 = vpop.permute.xlu0 %4821
    %v4824 = vadd.f32 %v220, %v4822
    %v4825 = vmul.f32 %v4824, 0.5
    %v4826 = vtanh.pop %v4825
    %v4827 = vmul.f32 %v4826, 0.5
    %v4828 = vadd.f32 %v4827, 0.5
    %4829 = vmatprep.subr.mxu0 0.0
    %4830 = vmatpush1.msra.mxu0 %v258
    %4831 = vmatprep.subr.mxu0 0.0
    %4832 = vmatpush1.msra.mxu0 %v259
    %4833 = vmatprep.subr.mxu0 0.0
    %4834 = vmatpush1.msra.mxu0 %v260
    %4835 = vmatprep.subr.mxu0 0.0
    %4836 = vmatpush1.msra.mxu0 %v261
    %4837 = vmatprep.subr.mxu0 0.0
    %4838 = vmatpush1.msra.mxu0 0.0
    %4839 = vmatprep.subr.mxu0 0.0
    %4840 = vmatpush1.msra.mxu0 0.0
    %4841 = vmatprep.subr.mxu0 0.0
    %4842 = vmatpush1.msra.mxu0 0.0
    %4843 = vmatprep.subr.mxu0 0.0
    %4844 = vmatpush1.msra.mxu0 0.0
    %4845 = vmatprep.subr.mxu0 0.0
    %4846 = vmatpush1.msra.mxu0 0.0
    %4847 = vmatprep.subr.mxu0 0.0
    %4848 = vmatpush1.msra.mxu0 0.0
    %4849 = vmatprep.subr.mxu0 0.0
    %4850 = vmatpush1.msra.mxu0 0.0
    %4851 = vmatprep.subr.mxu0 0.0
    %4852 = vmatpush1.msra.mxu0 0.0
    %4853 = vmatprep.subr.mxu0 0.0
    %4854 = vmatpush1.msra.mxu0 0.0
    %4855 = vmatprep.subr.mxu0 0.0
    %4856 = vmatpush1.msra.mxu0 0.0
    %4857 = vmatprep.subr.mxu0 0.0
    %4858 = vmatpush1.msra.mxu0 0.0
    %4859 = vmatprep.subr.mxu0 0.0
    %4860 = vmatpush1.msra.mxu0 0.0
    %4861 = vmatprep.subr.mxu0 0.0
    %4862 = vmatpush1.msra.mxu0 0.0
    %4863 = vmatprep.subr.mxu0 0.0
    %4864 = vmatpush1.msra.mxu0 0.0
    %4865 = vmatprep.subr.mxu0 0.0
    %4866 = vmatpush1.msra.mxu0 0.0
    %4867 = vmatprep.subr.mxu0 0.0
    %4868 = vmatpush1.msra.mxu0 0.0
    %4869 = vmatprep.subr.mxu0 0.0
    %4870 = vmatpush1.msra.mxu0 0.0
    %4871 = vmatprep.subr.mxu0 0.0
    %4872 = vmatpush1.msra.mxu0 0.0
    %4873 = vmatprep.subr.mxu0 0.0
    %4874 = vmatpush1.msra.mxu0 0.0
    %4875 = vmatprep.subr.mxu0 0.0
    %4876 = vmatpush1.msra.mxu0 0.0
    %4877 = vmatprep.subr.mxu0 0.0
    %4878 = vmatpush1.msra.mxu0 0.0
    %4879 = vmatprep.subr.mxu0 0.0
    %4880 = vmatpush1.msra.mxu0 0.0
    %4881 = vmatprep.subr.mxu0 0.0
    %4882 = vmatpush1.msra.mxu0 0.0
    %4883 = vmatprep.subr.mxu0 0.0
    %4884 = vmatpush1.msra.mxu0 0.0
    %4885 = vmatprep.subr.mxu0 0.0
    %4886 = vmatpush1.msra.mxu0 0.0
    %4887 = vmatprep.subr.mxu0 0.0
    %4888 = vmatpush1.msra.mxu0 0.0
    %4889 = vmatprep.subr.mxu0 0.0
    %4890 = vmatpush1.msra.mxu0 0.0
    %4891 = vmatprep.subr.mxu0 0.0
    %4892 = vmatpush1.msra.mxu0 0.0
    %4893 = vmatprep.mubr.f32.mxu0 0.0
    %4894 = vmatmul.mubr.f32.gmra.mrb[0].mxu0 %v4669
    %v4895 = vpop.f32.mrb[0].mxu0
    %v4896 = vadd.f32 0.0, %v4895
    %v4897 = vpop.f32.mrb[0].mxu0
    %4898 = vdwg.mxu0
    %v4900 = vrot.slane %v4896, 6
    %4901 = vrot.lane.b32.xlu0 %v4900, 64
    %v4902 = vpop.permute.xlu0 %4901
    %v4904 = vadd.f32 %v220, %v4902
    %v4905 = vtanh.pop %v4904
    %4906 = vmatprep.subr.mxu0 0.0
    %4907 = vmatpush1.msra.mxu0 %v263
    %4908 = vmatprep.subr.mxu0 0.0
    %4909 = vmatpush1.msra.mxu0 %v264
    %4910 = vmatprep.subr.mxu0 0.0
    %4911 = vmatpush1.msra.mxu0 %v265
    %4912 = vmatprep.subr.mxu0 0.0
    %4913 = vmatpush1.msra.mxu0 %v266
    %4914 = vmatprep.subr.mxu0 0.0
    %4915 = vmatpush1.msra.mxu0 0.0
    %4916 = vmatprep.subr.mxu0 0.0
    %4917 = vmatpush1.msra.mxu0 0.0
    %4918 = vmatprep.subr.mxu0 0.0
    %4919 = vmatpush1.msra.mxu0 0.0
    %4920 = vmatprep.subr.mxu0 0.0
    %4921 = vmatpush1.msra.mxu0 0.0
    %4922 = vmatprep.subr.mxu0 0.0
    %4923 = vmatpush1.msra.mxu0 0.0
    %4924 = vmatprep.subr.mxu0 0.0
    %4925 = vmatpush1.msra.mxu0 0.0
    %4926 = vmatprep.subr.mxu0 0.0
    %4927 = vmatpush1.msra.mxu0 0.0
    %4928 = vmatprep.subr.mxu0 0.0
    %4929 = vmatpush1.msra.mxu0 0.0
    %4930 = vmatprep.subr.mxu0 0.0
    %4931 = vmatpush1.msra.mxu0 0.0
    %4932 = vmatprep.subr.mxu0 0.0
    %4933 = vmatpush1.msra.mxu0 0.0
    %4934 = vmatprep.subr.mxu0 0.0
    %4935 = vmatpush1.msra.mxu0 0.0
    %4936 = vmatprep.subr.mxu0 0.0
    %4937 = vmatpush1.msra.mxu0 0.0
    %4938 = vmatprep.subr.mxu0 0.0
    %4939 = vmatpush1.msra.mxu0 0.0
    %4940 = vmatprep.subr.mxu0 0.0
    %4941 = vmatpush1.msra.mxu0 0.0
    %4942 = vmatprep.subr.mxu0 0.0
    %4943 = vmatpush1.msra.mxu0 0.0
    %4944 = vmatprep.subr.mxu0 0.0
    %4945 = vmatpush1.msra.mxu0 0.0
    %4946 = vmatprep.subr.mxu0 0.0
    %4947 = vmatpush1.msra.mxu0 0.0
    %4948 = vmatprep.subr.mxu0 0.0
    %4949 = vmatpush1.msra.mxu0 0.0
    %4950 = vmatprep.subr.mxu0 0.0
    %4951 = vmatpush1.msra.mxu0 0.0
    %4952 = vmatprep.subr.mxu0 0.0
    %4953 = vmatpush1.msra.mxu0 0.0
    %4954 = vmatprep.subr.mxu0 0.0
    %4955 = vmatpush1.msra.mxu0 0.0
    %4956 = vmatprep.subr.mxu0 0.0
    %4957 = vmatpush1.msra.mxu0 0.0
    %4958 = vmatprep.subr.mxu0 0.0
    %4959 = vmatpush1.msra.mxu0 0.0
    %4960 = vmatprep.subr.mxu0 0.0
    %4961 = vmatpush1.msra.mxu0 0.0
    %4962 = vmatprep.subr.mxu0 0.0
    %4963 = vmatpush1.msra.mxu0 0.0
    %4964 = vmatprep.subr.mxu0 0.0
    %4965 = vmatpush1.msra.mxu0 0.0
    %4966 = vmatprep.subr.mxu0 0.0
    %4967 = vmatpush1.msra.mxu0 0.0
    %4968 = vmatprep.subr.mxu0 0.0
    %4969 = vmatpush1.msra.mxu0 0.0
    %4970 = vmatprep.mubr.f32.mxu0 0.0
    %4971 = vmatmul.mubr.f32.gmra.mrb[0].mxu0 %v4669
    %v4972 = vpop.f32.mrb[0].mxu0
    %v4973 = vadd.f32 0.0, %v4972
    %v4974 = vpop.f32.mrb[0].mxu0
    %4975 = vdwg.mxu0
    %v4977 = vrot.slane %v4973, 6
    %4978 = vrot.lane.b32.xlu0 %v4977, 96
    %v4979 = vpop.permute.xlu0 %4978
    %v4981 = vadd.f32 %v220, %v4979
    %v4982 = vmul.f32 %v4981, 0.5
    %v4983 = vtanh.pop %v4982
    %v4984 = vmul.f32 %v4983, 0.5
    %v4985 = vadd.f32 %v4984, 0.5
    %v4987 = vrot.slane %v4317, 2
    %v4989 = vmul.f32 %v4828, %v4987
    %4991 = vrot.lane.b32.xlu0 %v4905, 64
    %v4992 = vpop.permute.xlu0 %4991
    %v4994 = vmul.f32 %v4748, %v4992
    %4996 = vrot.lane.b32.xlu0 %v4994, 32
    %v4997 = vpop.permute.xlu0 %4996
    %v4999 = vadd.f32 %v4989, %v4997
    %v5000 = vtanh.pop %v4999
    %5002 = vrot.lane.b32.xlu0 %v5000, 64
    %v5003 = vpop.permute.xlu0 %5002
    %v5005 = vmul.f32 %v4985, %v5003
    %v5007 = vrot.slane %v4664, 4
    %5008 = vrot.lane.b32.xlu0 %v5007, 32
    %v5009 = vpop.permute.xlu0 %5008
    %v5010 = vsel %vm267, %v5009, 0
    %5012 = vmatprep.subr.mxu0 0.0
    %5013 = vmatpush1.msra.mxu0 %v228
    %5014 = vmatprep.subr.mxu0 0.0
    %5015 = vmatpush1.msra.mxu0 %v229
    %5016 = vmatprep.subr.mxu0 0.0
    %5017 = vmatpush1.msra.mxu0 %v230
    %5018 = vmatprep.subr.mxu0 0.0
    %5019 = vmatpush1.msra.mxu0 %v231
    %5020 = vmatprep.subr.mxu0 0.0
    %5021 = vmatpush1.msra.mxu0 0.0
    %5022 = vmatprep.subr.mxu0 0.0
    %5023 = vmatpush1.msra.mxu0 0.0
    %5024 = vmatprep.subr.mxu0 0.0
    %5025 = vmatpush1.msra.mxu0 0.0
    %5026 = vmatprep.subr.mxu0 0.0
    %5027 = vmatpush1.msra.mxu0 0.0
    %5028 = vmatprep.subr.mxu0 0.0
    %5029 = vmatpush1.msra.mxu0 0.0
    %5030 = vmatprep.subr.mxu0 0.0
    %5031 = vmatpush1.msra.mxu0 0.0
    %5032 = vmatprep.subr.mxu0 0.0
    %5033 = vmatpush1.msra.mxu0 0.0
    %5034 = vmatprep.subr.mxu0 0.0
    %5035 = vmatpush1.msra.mxu0 0.0
    %5036 = vmatprep.subr.mxu0 0.0
    %5037 = vmatpush1.msra.mxu0 0.0
    %5038 = vmatprep.subr.mxu0 0.0
    %5039 = vmatpush1.msra.mxu0 0.0
    %5040 = vmatprep.subr.mxu0 0.0
    %5041 = vmatpush1.msra.mxu0 0.0
    %5042 = vmatprep.subr.mxu0 0.0
    %5043 = vmatpush1.msra.mxu0 0.0
    %5044 = vmatprep.subr.mxu0 0.0
    %5045 = vmatpush1.msra.mxu0 0.0
    %5046 = vmatprep.subr.mxu0 0.0
    %5047 = vmatpush1.msra.mxu0 0.0
    %5048 = vmatprep.subr.mxu0 0.0
    %5049 = vmatpush1.msra.mxu0 0.0
    %5050 = vmatprep.subr.mxu0 0.0
    %5051 = vmatpush1.msra.mxu0 0.0
    %5052 = vmatprep.subr.mxu0 0.0
    %5053 = vmatpush1.msra.mxu0 0.0
    %5054 = vmatprep.subr.mxu0 0.0
    %5055 = vmatpush1.msra.mxu0 0.0
    %5056 = vmatprep.subr.mxu0 0.0
    %5057 = vmatpush1.msra.mxu0 0.0
    %5058 = vmatprep.subr.mxu0 0.0
    %5059 = vmatpush1.msra.mxu0 0.0
    %5060 = vmatprep.subr.mxu0 0.0
    %5061 = vmatpush1.msra.mxu0 0.0
    %5062 = vmatprep.subr.mxu0 0.0
    %5063 = vmatpush1.msra.mxu0 0.0
    %5064 = vmatprep.subr.mxu0 0.0
    %5065 = vmatpush1.msra.mxu0 0.0
    %5066 = vmatprep.subr.mxu0 0.0
    %5067 = vmatpush1.msra.mxu0 0.0
    %5068 = vmatprep.subr.mxu0 0.0
    %5069 = vmatpush1.msra.mxu0 0.0
    %5070 = vmatprep.subr.mxu0 0.0
    %5071 = vmatpush1.msra.mxu0 0.0
    %5072 = vmatprep.subr.mxu0 0.0
    %5073 = vmatpush1.msra.mxu0 0.0
    %5074 = vmatprep.subr.mxu0 0.0
    %5075 = vmatpush1.msra.mxu0 0.0
    %5076 = vmatprep.mubr.f32.mxu0 0.0
    %5077 = vmatmul.mubr.f32.gmra.mrb[0].mxu0 %v5010
    %v5078 = vpop.f32.mrb[0].mxu0
    %v5079 = vadd.f32 0.0, %v5078
    %v5080 = vpop.f32.mrb[0].mxu0
    %5081 = vdwg.mxu0
    %v5083 = vrot.slane %v5079, 2
    %v5085 = vadd.f32 %v224, %v5083
    %v5086 = vmul.f32 %v5085, 0.5
    %v5087 = vtanh.pop %v5086
    %v5088 = vmul.f32 %v5087, 0.5
    %v5089 = vadd.f32 %v5088, 0.5
    %5090 = vmatprep.subr.mxu0 0.0
    %5091 = vmatpush1.msra.mxu0 %v233
    %5092 = vmatprep.subr.mxu0 0.0
    %5093 = vmatpush1.msra.mxu0 %v234
    %5094 = vmatprep.subr.mxu0 0.0
    %5095 = vmatpush1.msra.mxu0 %v235
    %5096 = vmatprep.subr.mxu0 0.0
    %5097 = vmatpush1.msra.mxu0 %v236
    %5098 = vmatprep.subr.mxu0 0.0
    %5099 = vmatpush1.msra.mxu0 0.0
    %5100 = vmatprep.subr.mxu0 0.0
    %5101 = vmatpush1.msra.mxu0 0.0
    %5102 = vmatprep.subr.mxu0 0.0
    %5103 = vmatpush1.msra.mxu0 0.0
    %5104 = vmatprep.subr.mxu0 0.0
    %5105 = vmatpush1.msra.mxu0 0.0
    %5106 = vmatprep.subr.mxu0 0.0
    %5107 = vmatpush1.msra.mxu0 0.0
    %5108 = vmatprep.subr.mxu0 0.0
    %5109 = vmatpush1.msra.mxu0 0.0
    %5110 = vmatprep.subr.mxu0 0.0
    %5111 = vmatpush1.msra.mxu0 0.0
    %5112 = vmatprep.subr.mxu0 0.0
    %5113 = vmatpush1.msra.mxu0 0.0
    %5114 = vmatprep.subr.mxu0 0.0
    %5115 = vmatpush1.msra.mxu0 0.0
    %5116 = vmatprep.subr.mxu0 0.0
    %5117 = vmatpush1.msra.mxu0 0.0
    %5118 = vmatprep.subr.mxu0 0.0
    %5119 = vmatpush1.msra.mxu0 0.0
    %5120 = vmatprep.subr.mxu0 0.0
    %5121 = vmatpush1.msra.mxu0 0.0
    %5122 = vmatprep.subr.mxu0 0.0
    %5123 = vmatpush1.msra.mxu0 0.0
    %5124 = vmatprep.subr.mxu0 0.0
    %5125 = vmatpush1.msra.mxu0 0.0
    %5126 = vmatprep.subr.mxu0 0.0
    %5127 = vmatpush1.msra.mxu0 0.0
    %5128 = vmatprep.subr.mxu0 0.0
    %5129 = vmatpush1.msra.mxu0 0.0
    %5130 = vmatprep.subr.mxu0 0.0
    %5131 = vmatpush1.msra.mxu0 0.0
    %5132 = vmatprep.subr.mxu0 0.0
    %5133 = vmatpush1.msra.mxu0 0.0
    %5134 = vmatprep.subr.mxu0 0.0
    %5135 = vmatpush1.msra.mxu0 0.0
    %5136 = vmatprep.subr.mxu0 0.0
    %5137 = vmatpush1.msra.mxu0 0.0
    %5138 = vmatprep.subr.mxu0 0.0
    %5139 = vmatpush1.msra.mxu0 0.0
    %5140 = vmatprep.subr.mxu0 0.0
    %5141 = vmatpush1.msra.mxu0 0.0
    %5142 = vmatprep.subr.mxu0 0.0
    %5143 = vmatpush1.msra.mxu0 0.0
    %5144 = vmatprep.subr.mxu0 0.0
    %5145 = vmatpush1.msra.mxu0 0.0
    %5146 = vmatprep.subr.mxu0 0.0
    %5147 = vmatpush1.msra.mxu0 0.0
    %5148 = vmatprep.subr.mxu0 0.0
    %5149 = vmatpush1.msra.mxu0 0.0
    %5150 = vmatprep.subr.mxu0 0.0
    %5151 = vmatpush1.msra.mxu0 0.0
    %5152 = vmatprep.subr.mxu0 0.0
    %5153 = vmatpush1.msra.mxu0 0.0
    %5154 = vmatprep.mubr.f32.mxu0 0.0
    %5155 = vmatmul.mubr.f32.gmra.mrb[0].mxu0 %v5010
    %v5156 = vpop.f32.mrb[0].mxu0
    %v5157 = vadd.f32 0.0, %v5156
    %v5158 = vpop.f32.mrb[0].mxu0
    %5159 = vdwg.mxu0
    %v5161 = vrot.slane %v5157, 2
    %5162 = vrot.lane.b32.xlu0 %v5161, 32
    %v5163 = vpop.permute.xlu0 %5162
    %v5165 = vadd.f32 %v224, %v5163
    %v5166 = vmul.f32 %v5165, 0.5
    %v5167 = vtanh.pop %v5166
    %v5168 = vmul.f32 %v5167, 0.5
    %v5169 = vadd.f32 %v5168, 0.5
    %5170 = vmatprep.subr.mxu0 0.0
    %5171 = vmatpush1.msra.mxu0 %v238
    %5172 = vmatprep.subr.mxu0 0.0
    %5173 = vmatpush1.msra.mxu0 %v239
    %5174 = vmatprep.subr.mxu0 0.0
    %5175 = vmatpush1.msra.mxu0 %v240
    %5176 = vmatprep.subr.mxu0 0.0
    %5177 = vmatpush1.msra.mxu0 %v241
    %5178 = vmatprep.subr.mxu0 0.0
    %5179 = vmatpush1.msra.mxu0 0.0
    %5180 = vmatprep.subr.mxu0 0.0
    %5181 = vmatpush1.msra.mxu0 0.0
    %5182 = vmatprep.subr.mxu0 0.0
    %5183 = vmatpush1.msra.mxu0 0.0
    %5184 = vmatprep.subr.mxu0 0.0
    %5185 = vmatpush1.msra.mxu0 0.0
    %5186 = vmatprep.subr.mxu0 0.0
    %5187 = vmatpush1.msra.mxu0 0.0
    %5188 = vmatprep.subr.mxu0 0.0
    %5189 = vmatpush1.msra.mxu0 0.0
    %5190 = vmatprep.subr.mxu0 0.0
    %5191 = vmatpush1.msra.mxu0 0.0
    %5192 = vmatprep.subr.mxu0 0.0
    %5193 = vmatpush1.msra.mxu0 0.0
    %5194 = vmatprep.subr.mxu0 0.0
    %5195 = vmatpush1.msra.mxu0 0.0
    %5196 = vmatprep.subr.mxu0 0.0
    %5197 = vmatpush1.msra.mxu0 0.0
    %5198 = vmatprep.subr.mxu0 0.0
    %5199 = vmatpush1.msra.mxu0 0.0
    %5200 = vmatprep.subr.mxu0 0.0
    %5201 = vmatpush1.msra.mxu0 0.0
    %5202 = vmatprep.subr.mxu0 0.0
    %5203 = vmatpush1.msra.mxu0 0.0
    %5204 = vmatprep.subr.mxu0 0.0
    %5205 = vmatpush1.msra.mxu0 0.0
    %5206 = vmatprep.subr.mxu0 0.0
    %5207 = vmatpush1.msra.mxu0 0.0
    %5208 = vmatprep.subr.mxu0 0.0
    %5209 = vmatpush1.msra.mxu0 0.0
    %5210 = vmatprep.subr.mxu0 0.0
    %5211 = vmatpush1.msra.mxu0 0.0
    %5212 = vmatprep.subr.mxu0 0.0
    %5213 = vmatpush1.msra.mxu0 0.0
    %5214 = vmatprep.subr.mxu0 0.0
    %5215 = vmatpush1.msra.mxu0 0.0
    %5216 = vmatprep.subr.mxu0 0.0
    %5217 = vmatpush1.msra.mxu0 0.0
    %5218 = vmatprep.subr.mxu0 0.0
    %5219 = vmatpush1.msra.mxu0 0.0
    %5220 = vmatprep.subr.mxu0 0.0
    %5221 = vmatpush1.msra.mxu0 0.0
    %5222 = vmatprep.subr.mxu0 0.0
    %5223 = vmatpush1.msra.mxu0 0.0
    %5224 = vmatprep.subr.mxu0 0.0
    %5225 = vmatpush1.msra.mxu0 0.0
    %5226 = vmatprep.subr.mxu0 0.0
    %5227 = vmatpush1.msra.mxu0 0.0
    %5228 = vmatprep.subr.mxu0 0.0
    %5229 = vmatpush1.msra.mxu0 0.0
    %5230 = vmatprep.subr.mxu0 0.0
    %5231 = vmatpush1.msra.mxu0 0.0
    %5232 = vmatprep.subr.mxu0 0.0
    %5233 = vmatpush1.msra.mxu0 0.0
    %5234 = vmatprep.mubr.f32.mxu0 0.0
    %5235 = vmatmul.mubr.f32.gmra.mrb[0].mxu0 %v5010
    %v5236 = vpop.f32.mrb[0].mxu0
    %v5237 = vadd.f32 0.0, %v5236
    %v5238 = vpop.f32.mrb[0].mxu0
    %5239 = vdwg.mxu0
    %v5241 = vrot.slane %v5237, 2
    %5242 = vrot.lane.b32.xlu0 %v5241, 64
    %v5243 = vpop.permute.xlu0 %5242
    %v5245 = vadd.f32 %v224, %v5243
    %v5246 = vtanh.pop %v5245
    %5247 = vmatprep.subr.mxu0 0.0
    %5248 = vmatpush1.msra.mxu0 %v243
    %5249 = vmatprep.subr.mxu0 0.0
    %5250 = vmatpush1.msra.mxu0 %v244
    %5251 = vmatprep.subr.mxu0 0.0
    %5252 = vmatpush1.msra.mxu0 %v245
    %5253 = vmatprep.subr.mxu0 0.0
    %5254 = vmatpush1.msra.mxu0 %v246
    %5255 = vmatprep.subr.mxu0 0.0
    %5256 = vmatpush1.msra.mxu0 0.0
    %5257 = vmatprep.subr.mxu0 0.0
    %5258 = vmatpush1.msra.mxu0 0.0
    %5259 = vmatprep.subr.mxu0 0.0
    %5260 = vmatpush1.msra.mxu0 0.0
    %5261 = vmatprep.subr.mxu0 0.0
    %5262 = vmatpush1.msra.mxu0 0.0
    %5263 = vmatprep.subr.mxu0 0.0
    %5264 = vmatpush1.msra.mxu0 0.0
    %5265 = vmatprep.subr.mxu0 0.0
    %5266 = vmatpush1.msra.mxu0 0.0
    %5267 = vmatprep.subr.mxu0 0.0
    %5268 = vmatpush1.msra.mxu0 0.0
    %5269 = vmatprep.subr.mxu0 0.0
    %5270 = vmatpush1.msra.mxu0 0.0
    %5271 = vmatprep.subr.mxu0 0.0
    %5272 = vmatpush1.msra.mxu0 0.0
    %5273 = vmatprep.subr.mxu0 0.0
    %5274 = vmatpush1.msra.mxu0 0.0
    %5275 = vmatprep.subr.mxu0 0.0
    %5276 = vmatpush1.msra.mxu0 0.0
    %5277 = vmatprep.subr.mxu0 0.0
    %5278 = vmatpush1.msra.mxu0 0.0
    %5279 = vmatprep.subr.mxu0 0.0
    %5280 = vmatpush1.msra.mxu0 0.0
    %5281 = vmatprep.subr.mxu0 0.0
    %5282 = vmatpush1.msra.mxu0 0.0
    %5283 = vmatprep.subr.mxu0 0.0
    %5284 = vmatpush1.msra.mxu0 0.0
    %5285 = vmatprep.subr.mxu0 0.0
    %5286 = vmatpush1.msra.mxu0 0.0
    %5287 = vmatprep.subr.mxu0 0.0
    %5288 = vmatpush1.msra.mxu0 0.0
    %5289 = vmatprep.subr.mxu0 0.0
    %5290 = vmatpush1.msra.mxu0 0.0
    %5291 = vmatprep.subr.mxu0 0.0
    %5292 = vmatpush1.msra.mxu0 0.0
    %5293 = vmatprep.subr.mxu0 0.0
    %5294 = vmatpush1.msra.mxu0 0.0
    %5295 = vmatprep.subr.mxu0 0.0
    %5296 = vmatpush1.msra.mxu0 0.0
    %5297 = vmatprep.subr.mxu0 0.0
    %5298 = vmatpush1.msra.mxu0 0.0
    %5299 = vmatprep.subr.mxu0 0.0
    %5300 = vmatpush1.msra.mxu0 0.0
    %5301 = vmatprep.subr.mxu0 0.0
    %5302 = vmatpush1.msra.mxu0 0.0
    %5303 = vmatprep.subr.mxu0 0.0
    %5304 = vmatpush1.msra.mxu0 0.0
    %5305 = vmatprep.subr.mxu0 0.0
    %5306 = vmatpush1.msra.mxu0 0.0
    %5307 = vmatprep.subr.mxu0 0.0
    %5308 = vmatpush1.msra.mxu0 0.0
    %5309 = vmatprep.subr.mxu0 0.0
    %5310 = vmatpush1.msra.mxu0 0.0
    %5311 = vmatprep.mubr.f32.mxu0 0.0
    %5312 = vmatmul.mubr.f32.gmra.mrb[0].mxu0 %v5010
    %v5313 = vpop.f32.mrb[0].mxu0
    %v5314 = vadd.f32 0.0, %v5313
    %v5315 = vpop.f32.mrb[0].mxu0
    %5316 = vdwg.mxu0
    %v5318 = vrot.slane %v5314, 2
    %5319 = vrot.lane.b32.xlu0 %v5318, 96
    %v5320 = vpop.permute.xlu0 %5319
    %v5322 = vadd.f32 %v224, %v5320
    %v5323 = vmul.f32 %v5322, 0.5
    %v5324 = vtanh.pop %v5323
    %v5325 = vmul.f32 %v5324, 0.5
    %v5326 = vadd.f32 %v5325, 0.5
    %v5328 = vrot.slane %v4658, 6
    %v5330 = vmul.f32 %v5169, %v5328
    %5332 = vrot.lane.b32.xlu0 %v5246, 64
    %v5333 = vpop.permute.xlu0 %5332
    %v5335 = vmul.f32 %v5089, %v5333
    %5337 = vrot.lane.b32.xlu0 %v5335, 32
    %v5338 = vpop.permute.xlu0 %5337
    %v5340 = vadd.f32 %v5330, %v5338
    %v5341 = vtanh.pop %v5340
    %5343 = vrot.lane.b32.xlu0 %v5341, 64
    %v5344 = vpop.permute.xlu0 %5343
    %v5346 = vmul.f32 %v5326, %v5344
    %v5348 = vrot.slane %v5005, 2
    %5349 = vrot.lane.b32.xlu0 %v5348, 32
    %v5350 = vpop.permute.xlu0 %5349
    %v5351 = vsel %vm267, %v5350, 0
    %5353 = vmatprep.subr.mxu0 0.0
    %5354 = vmatpush1.msra.mxu0 %v248
    %5355 = vmatprep.subr.mxu0 0.0
    %5356 = vmatpush1.msra.mxu0 %v249
    %5357 = vmatprep.subr.mxu0 0.0
    %5358 = vmatpush1.msra.mxu0 %v250
    %5359 = vmatprep.subr.mxu0 0.0
    %5360 = vmatpush1.msra.mxu0 %v251
    %5361 = vmatprep.subr.mxu0 0.0
    %5362 = vmatpush1.msra.mxu0 0.0
    %5363 = vmatprep.subr.mxu0 0.0
    %5364 = vmatpush1.msra.mxu0 0.0
    %5365 = vmatprep.subr.mxu0 0.0
    %5366 = vmatpush1.msra.mxu0 0.0
    %5367 = vmatprep.subr.mxu0 0.0
    %5368 = vmatpush1.msra.mxu0 0.0
    %5369 = vmatprep.subr.mxu0 0.0
    %5370 = vmatpush1.msra.mxu0 0.0
    %5371 = vmatprep.subr.mxu0 0.0
    %5372 = vmatpush1.msra.mxu0 0.0
    %5373 = vmatprep.subr.mxu0 0.0
    %5374 = vmatpush1.msra.mxu0 0.0
    %5375 = vmatprep.subr.mxu0 0.0
    %5376 = vmatpush1.msra.mxu0 0.0
    %5377 = vmatprep.subr.mxu0 0.0
    %5378 = vmatpush1.msra.mxu0 0.0
    %5379 = vmatprep.subr.mxu0 0.0
    %5380 = vmatpush1.msra.mxu0 0.0
    %5381 = vmatprep.subr.mxu0 0.0
    %5382 = vmatpush1.msra.mxu0 0.0
    %5383 = vmatprep.subr.mxu0 0.0
    %5384 = vmatpush1.msra.mxu0 0.0
    %5385 = vmatprep.subr.mxu0 0.0
    %5386 = vmatpush1.msra.mxu0 0.0
    %5387 = vmatprep.subr.mxu0 0.0
    %5388 = vmatpush1.msra.mxu0 0.0
    %5389 = vmatprep.subr.mxu0 0.0
    %5390 = vmatpush1.msra.mxu0 0.0
    %5391 = vmatprep.subr.mxu0 0.0
    %5392 = vmatpush1.msra.mxu0 0.0
    %5393 = vmatprep.subr.mxu0 0.0
    %5394 = vmatpush1.msra.mxu0 0.0
    %5395 = vmatprep.subr.mxu0 0.0
    %5396 = vmatpush1.msra.mxu0 0.0
    %5397 = vmatprep.subr.mxu0 0.0
    %5398 = vmatpush1.msra.mxu0 0.0
    %5399 = vmatprep.subr.mxu0 0.0
    %5400 = vmatpush1.msra.mxu0 0.0
    %5401 = vmatprep.subr.mxu0 0.0
    %5402 = vmatpush1.msra.mxu0 0.0
    %5403 = vmatprep.subr.mxu0 0.0
    %5404 = vmatpush1.msra.mxu0 0.0
    %5405 = vmatprep.subr.mxu0 0.0
    %5406 = vmatpush1.msra.mxu0 0.0
    %5407 = vmatprep.subr.mxu0 0.0
    %5408 = vmatpush1.msra.mxu0 0.0
    %5409 = vmatprep.subr.mxu0 0.0
    %5410 = vmatpush1.msra.mxu0 0.0
    %5411 = vmatprep.subr.mxu0 0.0
    %5412 = vmatpush1.msra.mxu0 0.0
    %5413 = vmatprep.subr.mxu0 0.0
    %5414 = vmatpush1.msra.mxu0 0.0
    %5415 = vmatprep.subr.mxu0 0.0
    %5416 = vmatpush1.msra.mxu0 0.0
    %5417 = vmatprep.mubr.f32.mxu0 0.0
    %5418 = vmatmul.mubr.f32.gmra.mrb[0].mxu0 %v5351
    %v5419 = vpop.f32.mrb[0].mxu0
    %v5420 = vadd.f32 0.0, %v5419
    %v5421 = vpop.f32.mrb[0].mxu0
    %5422 = vdwg.mxu0
    %v5423 = vadd.f32 %v220, %v5420
    %v5424 = vmul.f32 %v5423, 0.5
    %v5425 = vtanh.pop %v5424
    %v5426 = vmul.f32 %v5425, 0.5
    %v5427 = vadd.f32 %v5426, 0.5
    %5428 = vmatprep.subr.mxu0 0.0
    %5429 = vmatpush1.msra.mxu0 %v253
    %5430 = vmatprep.subr.mxu0 0.0
    %5431 = vmatpush1.msra.mxu0 %v254
    %5432 = vmatprep.subr.mxu0 0.0
    %5433 = vmatpush1.msra.mxu0 %v255
    %5434 = vmatprep.subr.mxu0 0.0
    %5435 = vmatpush1.msra.mxu0 %v256
    %5436 = vmatprep.subr.mxu0 0.0
    %5437 = vmatpush1.msra.mxu0 0.0
    %5438 = vmatprep.subr.mxu0 0.0
    %5439 = vmatpush1.msra.mxu0 0.0
    %5440 = vmatprep.subr.mxu0 0.0
    %5441 = vmatpush1.msra.mxu0 0.0
    %5442 = vmatprep.subr.mxu0 0.0
    %5443 = vmatpush1.msra.mxu0 0.0
    %5444 = vmatprep.subr.mxu0 0.0
    %5445 = vmatpush1.msra.mxu0 0.0
    %5446 = vmatprep.subr.mxu0 0.0
    %5447 = vmatpush1.msra.mxu0 0.0
    %5448 = vmatprep.subr.mxu0 0.0
    %5449 = vmatpush1.msra.mxu0 0.0
    %5450 = vmatprep.subr.mxu0 0.0
    %5451 = vmatpush1.msra.mxu0 0.0
    %5452 = vmatprep.subr.mxu0 0.0
    %5453 = vmatpush1.msra.mxu0 0.0
    %5454 = vmatprep.subr.mxu0 0.0
    %5455 = vmatpush1.msra.mxu0 0.0
    %5456 = vmatprep.subr.mxu0 0.0
    %5457 = vmatpush1.msra.mxu0 0.0
    %5458 = vmatprep.subr.mxu0 0.0
    %5459 = vmatpush1.msra.mxu0 0.0
    %5460 = vmatprep.subr.mxu0 0.0
    %5461 = vmatpush1.msra.mxu0 0.0
    %5462 = vmatprep.subr.mxu0 0.0
    %5463 = vmatpush1.msra.mxu0 0.0
    %5464 = vmatprep.subr.mxu0 0.0
    %5465 = vmatpush1.msra.mxu0 0.0
    %5466 = vmatprep.subr.mxu0 0.0
    %5467 = vmatpush1.msra.mxu0 0.0
    %5468 = vmatprep.subr.mxu0 0.0
    %5469 = vmatpush1.msra.mxu0 0.0
    %5470 = vmatprep.subr.mxu0 0.0
    %5471 = vmatpush1.msra.mxu0 0.0
    %5472 = vmatprep.subr.mxu0 0.0
    %5473 = vmatpush1.msra.mxu0 0.0
    %5474 = vmatprep.subr.mxu0 0.0
    %5475 = vmatpush1.msra.mxu0 0.0
    %5476 = vmatprep.subr.mxu0 0.0
    %5477 = vmatpush1.msra.mxu0 0.0
    %5478 = vmatprep.subr.mxu0 0.0
    %5479 = vmatpush1.msra.mxu0 0.0
    %5480 = vmatprep.subr.mxu0 0.0
    %5481 = vmatpush1.msra.mxu0 0.0
    %5482 = vmatprep.subr.mxu0 0.0
    %5483 = vmatpush1.msra.mxu0 0.0
    %5484 = vmatprep.subr.mxu0 0.0
    %5485 = vmatpush1.msra.mxu0 0.0
    %5486 = vmatprep.subr.mxu0 0.0
    %5487 = vmatpush1.msra.mxu0 0.0
    %5488 = vmatprep.subr.mxu0 0.0
    %5489 = vmatpush1.msra.mxu0 0.0
    %5490 = vmatprep.subr.mxu0 0.0
    %5491 = vmatpush1.msra.mxu0 0.0
    %5492 = vmatprep.mubr.f32.mxu0 0.0
    %5493 = vmatmul.mubr.f32.gmra.mrb[0].mxu0 %v5351
    %v5494 = vpop.f32.mrb[0].mxu0
    %v5495 = vadd.f32 0.0, %v5494
    %v5496 = vpop.f32.mrb[0].mxu0
    %5497 = vdwg.mxu0
    %5499 = vrot.lane.b32.xlu0 %v5495, 32
    %v5500 = vpop.permute.xlu0 %5499
    %v5502 = vadd.f32 %v220, %v5500
    %v5503 = vmul.f32 %v5502, 0.5
    %v5504 = vtanh.pop %v5503
    %v5505 = vmul.f32 %v5504, 0.5
    %v5506 = vadd.f32 %v5505, 0.5
    %5507 = vmatprep.subr.mxu0 0.0
    %5508 = vmatpush1.msra.mxu0 %v258
    %5509 = vmatprep.subr.mxu0 0.0
    %5510 = vmatpush1.msra.mxu0 %v259
    %5511 = vmatprep.subr.mxu0 0.0
    %5512 = vmatpush1.msra.mxu0 %v260
    %5513 = vmatprep.subr.mxu0 0.0
    %5514 = vmatpush1.msra.mxu0 %v261
    %5515 = vmatprep.subr.mxu0 0.0
    %5516 = vmatpush1.msra.mxu0 0.0
    %5517 = vmatprep.subr.mxu0 0.0
    %5518 = vmatpush1.msra.mxu0 0.0
    %5519 = vmatprep.subr.mxu0 0.0
    %5520 = vmatpush1.msra.mxu0 0.0
    %5521 = vmatprep.subr.mxu0 0.0
    %5522 = vmatpush1.msra.mxu0 0.0
    %5523 = vmatprep.subr.mxu0 0.0
    %5524 = vmatpush1.msra.mxu0 0.0
    %5525 = vmatprep.subr.mxu0 0.0
    %5526 = vmatpush1.msra.mxu0 0.0
    %5527 = vmatprep.subr.mxu0 0.0
    %5528 = vmatpush1.msra.mxu0 0.0
    %5529 = vmatprep.subr.mxu0 0.0
    %5530 = vmatpush1.msra.mxu0 0.0
    %5531 = vmatprep.subr.mxu0 0.0
    %5532 = vmatpush1.msra.mxu0 0.0
    %5533 = vmatprep.subr.mxu0 0.0
    %5534 = vmatpush1.msra.mxu0 0.0
    %5535 = vmatprep.subr.mxu0 0.0
    %5536 = vmatpush1.msra.mxu0 0.0
    %5537 = vmatprep.subr.mxu0 0.0
    %5538 = vmatpush1.msra.mxu0 0.0
    %5539 = vmatprep.subr.mxu0 0.0
    %5540 = vmatpush1.msra.mxu0 0.0
    %5541 = vmatprep.subr.mxu0 0.0
    %5542 = vmatpush1.msra.mxu0 0.0
    %5543 = vmatprep.subr.mxu0 0.0
    %5544 = vmatpush1.msra.mxu0 0.0
    %5545 = vmatprep.subr.mxu0 0.0
    %5546 = vmatpush1.msra.mxu0 0.0
    %5547 = vmatprep.subr.mxu0 0.0
    %5548 = vmatpush1.msra.mxu0 0.0
    %5549 = vmatprep.subr.mxu0 0.0
    %5550 = vmatpush1.msra.mxu0 0.0
    %5551 = vmatprep.subr.mxu0 0.0
    %5552 = vmatpush1.msra.mxu0 0.0
    %5553 = vmatprep.subr.mxu0 0.0
    %5554 = vmatpush1.msra.mxu0 0.0
    %5555 = vmatprep.subr.mxu0 0.0
    %5556 = vmatpush1.msra.mxu0 0.0
    %5557 = vmatprep.subr.mxu0 0.0
    %5558 = vmatpush1.msra.mxu0 0.0
    %5559 = vmatprep.subr.mxu0 0.0
    %5560 = vmatpush1.msra.mxu0 0.0
    %5561 = vmatprep.subr.mxu0 0.0
    %5562 = vmatpush1.msra.mxu0 0.0
    %5563 = vmatprep.subr.mxu0 0.0
    %5564 = vmatpush1.msra.mxu0 0.0
    %5565 = vmatprep.subr.mxu0 0.0
    %5566 = vmatpush1.msra.mxu0 0.0
    %5567 = vmatprep.subr.mxu0 0.0
    %5568 = vmatpush1.msra.mxu0 0.0
    %5569 = vmatprep.subr.mxu0 0.0
    %5570 = vmatpush1.msra.mxu0 0.0
    %5571 = vmatprep.mubr.f32.mxu0 0.0
    %5572 = vmatmul.mubr.f32.gmra.mrb[0].mxu0 %v5351
    %v5573 = vpop.f32.mrb[0].mxu0
    %v5574 = vadd.f32 0.0, %v5573
    %v5575 = vpop.f32.mrb[0].mxu0
    %5576 = vdwg.mxu0
    %5578 = vrot.lane.b32.xlu0 %v5574, 64
    %v5579 = vpop.permute.xlu0 %5578
    %v5581 = vadd.f32 %v220, %v5579
    %v5582 = vtanh.pop %v5581
    %5583 = vmatprep.subr.mxu0 0.0
    %5584 = vmatpush1.msra.mxu0 %v263
    %5585 = vmatprep.subr.mxu0 0.0
    %5586 = vmatpush1.msra.mxu0 %v264
    %5587 = vmatprep.subr.mxu0 0.0
    %5588 = vmatpush1.msra.mxu0 %v265
    %5589 = vmatprep.subr.mxu0 0.0
    %5590 = vmatpush1.msra.mxu0 %v266
    %5591 = vmatprep.subr.mxu0 0.0
    %5592 = vmatpush1.msra.mxu0 0.0
    %5593 = vmatprep.subr.mxu0 0.0
    %5594 = vmatpush1.msra.mxu0 0.0
    %5595 = vmatprep.subr.mxu0 0.0
    %5596 = vmatpush1.msra.mxu0 0.0
    %5597 = vmatprep.subr.mxu0 0.0
    %5598 = vmatpush1.msra.mxu0 0.0
    %5599 = vmatprep.subr.mxu0 0.0
    %5600 = vmatpush1.msra.mxu0 0.0
    %5601 = vmatprep.subr.mxu0 0.0
    %5602 = vmatpush1.msra.mxu0 0.0
    %5603 = vmatprep.subr.mxu0 0.0
    %5604 = vmatpush1.msra.mxu0 0.0
    %5605 = vmatprep.subr.mxu0 0.0
    %5606 = vmatpush1.msra.mxu0 0.0
    %5607 = vmatprep.subr.mxu0 0.0
    %5608 = vmatpush1.msra.mxu0 0.0
    %5609 = vmatprep.subr.mxu0 0.0
    %5610 = vmatpush1.msra.mxu0 0.0
    %5611 = vmatprep.subr.mxu0 0.0
    %5612 = vmatpush1.msra.mxu0 0.0
    %5613 = vmatprep.subr.mxu0 0.0
    %5614 = vmatpush1.msra.mxu0 0.0
    %5615 = vmatprep.subr.mxu0 0.0
    %5616 = vmatpush1.msra.mxu0 0.0
    %5617 = vmatprep.subr.mxu0 0.0
    %5618 = vmatpush1.msra.mxu0 0.0
    %5619 = vmatprep.subr.mxu0 0.0
    %5620 = vmatpush1.msra.mxu0 0.0
    %5621 = vmatprep.subr.mxu0 0.0
    %5622 = vmatpush1.msra.mxu0 0.0
    %5623 = vmatprep.subr.mxu0 0.0
    %5624 = vmatpush1.msra.mxu0 0.0
    %5625 = vmatprep.subr.mxu0 0.0
    %5626 = vmatpush1.msra.mxu0 0.0
    %5627 = vmatprep.subr.mxu0 0.0
    %5628 = vmatpush1.msra.mxu0 0.0
    %5629 = vmatprep.subr.mxu0 0.0
    %5630 = vmatpush1.msra.mxu0 0.0
    %5631 = vmatprep.subr.mxu0 0.0
    %5632 = vmatpush1.msra.mxu0 0.0
    %5633 = vmatprep.subr.mxu0 0.0
    %5634 = vmatpush1.msra.mxu0 0.0
    %5635 = vmatprep.subr.mxu0 0.0
    %5636 = vmatpush1.msra.mxu0 0.0
    %5637 = vmatprep.subr.mxu0 0.0
    %5638 = vmatpush1.msra.mxu0 0.0
    %5639 = vmatprep.subr.mxu0 0.0
    %5640 = vmatpush1.msra.mxu0 0.0
    %5641 = vmatprep.subr.mxu0 0.0
    %5642 = vmatpush1.msra.mxu0 0.0
    %5643 = vmatprep.subr.mxu0 0.0
    %5644 = vmatpush1.msra.mxu0 0.0
    %5645 = vmatprep.subr.mxu0 0.0
    %5646 = vmatpush1.msra.mxu0 0.0
    %5647 = vmatprep.mubr.f32.mxu0 0.0
    %5648 = vmatmul.mubr.f32.gmra.mrb[0].mxu0 %v5351
    %v5649 = vpop.f32.mrb[0].mxu0
    %v5650 = vadd.f32 0.0, %v5649
    %v5651 = vpop.f32.mrb[0].mxu0
    %5652 = vdwg.mxu0
    %5654 = vrot.lane.b32.xlu0 %v5650, 96
    %v5655 = vpop.permute.xlu0 %5654
    %v5657 = vadd.f32 %v220, %v5655
    %v5658 = vmul.f32 %v5657, 0.5
    %v5659 = vtanh.pop %v5658
    %v5660 = vmul.f32 %v5659, 0.5
    %v5661 = vadd.f32 %v5660, 0.5
    %v5663 = vrot.slane %v4999, 2
    %v5665 = vmul.f32 %v5506, %v5663
    %5667 = vrot.lane.b32.xlu0 %v5582, 64
    %v5668 = vpop.permute.xlu0 %5667
    %v5670 = vmul.f32 %v5427, %v5668
    %5672 = vrot.lane.b32.xlu0 %v5670, 32
    %v5673 = vpop.permute.xlu0 %5672
    %v5675 = vadd.f32 %v5665, %v5673
    %v5676 = vtanh.pop %v5675
    %5678 = vrot.lane.b32.xlu0 %v5676, 64
    %v5679 = vpop.permute.xlu0 %5678
    %v5681 = vmul.f32 %v5661, %v5679
    %v5683 = vunpack.c.l.s4 1966171168
    %v5684 = vunpack.c.0.s8 %v5683
    %v5685 = vlaneseq
    %v5686 = vshrl.u32 %v5685, 7
    %v5687 = vsub.s32 %v5684, %v5686
    %v5688 = vrot.slane %v596, %v5687
    %v5689 = vcombine.high %v5688, %v5688
    %v5691 = vunpack.c.l.s4 1966171168
    %v5692 = vunpack.c.0.s8 %v5691
    %v5693 = vlaneseq
    %v5694 = vshrl.u32 %v5693, 7
    %v5695 = vsub.s32 %v5692, %v5694
    %v5696 = vrot.slane %v5688, %v5695
    %v5698 = vunpack.c.l.s4 1966171168
    %v5699 = vunpack.c.0.s8 %v5698
    %v5700 = vlaneseq
    %v5701 = vshrl.u32 %v5700, 7
    %v5702 = vsub.s32 %v5699, %v5701
    %v5703 = vrot.slane %v5689, %v5702
    %v5707 = vunpack.c.l.s4 1966171168
    %v5708 = vunpack.c.0.s8 %v5707
    %v5709 = vlaneseq
    %v5710 = vshrl.u32 %v5709, 7
    %v5711 = vsub.s32 %v5708, %v5710
    %v5712 = vrot.slane %v1268, %v5711
    %v5713 = vcombine.high %v5712, %v5712
    %v5715 = vunpack.c.l.s4 1966171168
    %v5716 = vunpack.c.0.s8 %v5715
    %v5717 = vlaneseq
    %v5718 = vshrl.u32 %v5717, 7
    %v5719 = vsub.s32 %v5716, %v5718
    %v5720 = vrot.slane %v5712, %v5719
    %v5722 = vunpack.c.l.s4 1966171168
    %v5723 = vunpack.c.0.s8 %v5722
    %v5724 = vlaneseq
    %v5725 = vshrl.u32 %v5724, 7
    %v5726 = vsub.s32 %v5723, %v5725
    %v5727 = vrot.slane %v5713, %v5726
    %v5728 = vcombine.high %v5720, %v5720
    %v5729 = vcombine.high %v5727, %v5727
    %v5730 = vcombine.high %v1950, %v1950
    %v5732 = vunpack.c.l.s4 1966171168
    %v5733 = vunpack.c.0.s8 %v5732
    %v5734 = vlaneseq
    %v5735 = vshrl.u32 %v5734, 7
    %v5736 = vsub.s32 %v5733, %v5735
    %v5737 = vrot.slane %v5730, %v5736
    %v5738 = vcombine.high %v5737, %v5737
    %v5740 = vunpack.c.l.s4 1966171168
    %v5741 = vunpack.c.0.s8 %v5740
    %v5742 = vlaneseq
    %v5743 = vshrl.u32 %v5742, 7
    %v5744 = vsub.s32 %v5741, %v5743
    %v5745 = vrot.slane %v5737, %v5744
    %v5747 = vunpack.c.l.s4 1966171168
    %v5748 = vunpack.c.0.s8 %v5747
    %v5749 = vlaneseq
    %v5750 = vshrl.u32 %v5749, 7
    %v5751 = vsub.s32 %v5748, %v5750
    %v5752 = vrot.slane %v5738, %v5751
    %v5753 = vcombine.high %v2632, %v2632
    %v5755 = vunpack.c.l.s4 1966171168
    %v5756 = vunpack.c.0.s8 %v5755
    %v5757 = vlaneseq
    %v5758 = vshrl.u32 %v5757, 7
    %v5759 = vsub.s32 %v5756, %v5758
    %v5760 = vrot.slane %v5753, %v5759
    %v5761 = vcombine.high %v5760, %v5760
    %v5763 = vunpack.c.l.s4 1966171168
    %v5764 = vunpack.c.0.s8 %v5763
    %v5765 = vlaneseq
    %v5766 = vshrl.u32 %v5765, 7
    %v5767 = vsub.s32 %v5764, %v5766
    %v5768 = vrot.slane %v5760, %v5767
    %v5770 = vunpack.c.l.s4 1966171168
    %v5771 = vunpack.c.0.s8 %v5770
    %v5772 = vlaneseq
    %v5773 = vshrl.u32 %v5772, 7
    %v5774 = vsub.s32 %v5771, %v5773
    %v5775 = vrot.slane %v5761, %v5774
    %v5776 = vcombine.high %v5768, %v5768
    %v5777 = vcombine.high %v5775, %v5775
    %v5779 = vunpack.c.l.s4 1966171168
    %v5780 = vunpack.c.0.s8 %v5779
    %v5781 = vlaneseq
    %v5782 = vshrl.u32 %v5781, 7
    %v5783 = vsub.s32 %v5780, %v5782
    %v5784 = vrot.slane %v3302, %v5783
    %v5785 = vcombine.high %v5784, %v5784
    %v5787 = vunpack.c.l.s4 1966171168
    %v5788 = vunpack.c.0.s8 %v5787
    %v5789 = vlaneseq
    %v5790 = vshrl.u32 %v5789, 7
    %v5791 = vsub.s32 %v5788, %v5790
    %v5792 = vrot.slane %v5784, %v5791
    %v5794 = vunpack.c.l.s4 1966171168
    %v5795 = vunpack.c.0.s8 %v5794
    %v5796 = vlaneseq
    %v5797 = vshrl.u32 %v5796, 7
    %v5798 = vsub.s32 %v5795, %v5797
    %v5799 = vrot.slane %v5785, %v5798
    %v5801 = vunpack.c.l.s4 1966171168
    %v5802 = vunpack.c.0.s8 %v5801
    %v5803 = vlaneseq
    %v5804 = vshrl.u32 %v5803, 7
    %v5805 = vsub.s32 %v5802, %v5804
    %v5806 = vrot.slane %v3982, %v5805
    %v5807 = vcombine.high %v5806, %v5806
    %v5809 = vunpack.c.l.s4 1966171168
    %v5810 = vunpack.c.0.s8 %v5809
    %v5811 = vlaneseq
    %v5812 = vshrl.u32 %v5811, 7
    %v5813 = vsub.s32 %v5810, %v5812
    %v5814 = vrot.slane %v5806, %v5813
    %v5816 = vunpack.c.l.s4 1966171168
    %v5817 = vunpack.c.0.s8 %v5816
    %v5818 = vlaneseq
    %v5819 = vshrl.u32 %v5818, 7
    %v5820 = vsub.s32 %v5817, %v5819
    %v5821 = vrot.slane %v5807, %v5820
    %v5822 = vcombine.high %v5814, %v5814
    %v5823 = vcombine.high %v5821, %v5821
    %v5824 = vcombine.high %v4664, %v4664
    %v5826 = vunpack.c.l.s4 1966171168
    %v5827 = vunpack.c.0.s8 %v5826
    %v5828 = vlaneseq
    %v5829 = vshrl.u32 %v5828, 7
    %v5830 = vsub.s32 %v5827, %v5829
    %v5831 = vrot.slane %v5824, %v5830
    %v5832 = vcombine.high %v5831, %v5831
    %v5834 = vunpack.c.l.s4 1966171168
    %v5835 = vunpack.c.0.s8 %v5834
    %v5836 = vlaneseq
    %v5837 = vshrl.u32 %v5836, 7
    %v5838 = vsub.s32 %v5835, %v5837
    %v5839 = vrot.slane %v5831, %v5838
    %v5841 = vunpack.c.l.s4 1966171168
    %v5842 = vunpack.c.0.s8 %v5841
    %v5843 = vlaneseq
    %v5844 = vshrl.u32 %v5843, 7
    %v5845 = vsub.s32 %v5842, %v5844
    %v5846 = vrot.slane %v5832, %v5845
    %v5848 = vcombine.high %v5346, %v5346
    %v5850 = vunpack.c.l.s4 1966171168
    %v5851 = vunpack.c.0.s8 %v5850
    %v5852 = vlaneseq
    %v5853 = vshrl.u32 %v5852, 7
    %v5854 = vsub.s32 %v5851, %v5853
    %v5855 = vrot.slane %v5848, %v5854
    %v5856 = vcombine.high %v5855, %v5855
    %v5858 = vunpack.c.l.s4 1966171168
    %v5859 = vunpack.c.0.s8 %v5858
    %v5860 = vlaneseq
    %v5861 = vshrl.u32 %v5860, 7
    %v5862 = vsub.s32 %v5859, %v5861
    %v5863 = vrot.slane %v5855, %v5862
    %v5865 = vunpack.c.l.s4 1966171168
    %v5866 = vunpack.c.0.s8 %v5865
    %v5867 = vlaneseq
    %v5868 = vshrl.u32 %v5867, 7
    %v5869 = vsub.s32 %v5866, %v5868
    %v5870 = vrot.slane %v5856, %v5869
    %v5871 = vcombine.high %v5863, %v5863
    %v5872 = vcombine.high %v5870, %v5870
    %v5873 = vlaneseq
    %v5874 = vshrl.u32 %v5873, 7
    %v5875 = vsub.s32 0, %v5874
    %v5876 = vrot.slane %v5728, %v5875
    %v5877 = vlaneseq
    %v5878 = vshrl.u32 %v5877, 7
    %v5879 = vsub.s32 0, %v5878
    %v5880 = vrot.slane %v5729, %v5879
    %v5883 = vlaneseq
    %v5884 = vshrl.u32 %v5883, 7
    %v5885 = vsub.s32 0, %v5884
    %v5886 = vrot.slane %v5745, %v5885
    %v5887 = vlaneseq
    %v5888 = vshrl.u32 %v5887, 7
    %v5889 = vsub.s32 0, %v5888
    %v5890 = vrot.slane %v5752, %v5889
    %v5893 = vlaneseq
    %v5894 = vshrl.u32 %v5893, 7
    %v5895 = vsub.s32 0, %v5894
    %v5896 = vrot.slane %v5776, %v5895
    %v5897 = vlaneseq
    %v5898 = vshrl.u32 %v5897, 7
    %v5899 = vsub.s32 0, %v5898
    %v5900 = vrot.slane %v5777, %v5899
    %v5903 = vlaneseq
    %v5904 = vshrl.u32 %v5903, 7
    %v5905 = vsub.s32 0, %v5904
    %v5906 = vrot.slane %v5792, %v5905
    %v5907 = vlaneseq
    %v5908 = vshrl.u32 %v5907, 7
    %v5909 = vsub.s32 0, %v5908
    %v5910 = vrot.slane %v5799, %v5909
    %v5913 = vlaneseq
    %v5914 = vshrl.u32 %v5913, 7
    %v5915 = vsub.s32 0, %v5914
    %v5916 = vrot.slane %v5822, %v5915
    %v5917 = vlaneseq
    %v5918 = vshrl.u32 %v5917, 7
    %v5919 = vsub.s32 0, %v5918
    %v5920 = vrot.slane %v5823, %v5919
    %v5923 = vlaneseq
    %v5924 = vshrl.u32 %v5923, 7
    %v5925 = vsub.s32 0, %v5924
    %v5926 = vrot.slane %v5839, %v5925
    %v5927 = vlaneseq
    %v5928 = vshrl.u32 %v5927, 7
    %v5929 = vsub.s32 0, %v5928
    %v5930 = vrot.slane %v5846, %v5929
    %v5933 = vlaneseq
    %v5934 = vshrl.u32 %v5933, 7
    %v5935 = vsub.s32 0, %v5934
    %v5936 = vrot.slane %v5871, %v5935
    %v5937 = vlaneseq
    %v5938 = vshrl.u32 %v5937, 7
    %v5939 = vsub.s32 0, %v5938
    %v5940 = vrot.slane %v5872, %v5939
    %vm5943 = vcmask 1040384
    %v5944 = vsel %vm5943, %v5696, %v5876
    %v5945 = vsel %vm5943, %v5703, %v5880
    %vm5946 = vcmask 1041408
    %v5947 = vsel %vm5946, %v5944, %v5886
    %v5948 = vsel %vm5946, %v5945, %v5890
    %vm5949 = vcmask 1042432
    %v5950 = vsel %vm5949, %v5947, %v5896
    %v5951 = vsel %vm5949, %v5948, %v5900
    %vm5952 = vcmask 1043456
    %v5953 = vsel %vm5952, %v5950, %v5906
    %v5954 = vsel %vm5952, %v5951, %v5910
    %vm5955 = vcmask 1044480
    %v5956 = vsel %vm5955, %v5953, %v5916
    %v5957 = vsel %vm5955, %v5954, %v5920
    %vm5958 = vcmask 1045504
    %v5959 = vsel %vm5958, %v5956, %v5926
    %v5960 = vsel %vm5958, %v5957, %v5930
    %vm5961 = vcmask 1046528
    %v5962 = vsel %vm5961, %v5959, %v5936
    %v5963 = vsel %vm5961, %v5960, %v5940
    %v5966 = vunpack.c.l.s4 1966171168
    %v5967 = vunpack.c.0.s8 %v5966
    %v5968 = vlaneseq
    %v5969 = vshrl.u32 %v5968, 7
    %v5970 = vsub.s32 %v5967, %v5969
    %v5971 = vrot.slane %v5681, %v5970
    %v5972 = vcombine.high %v5971, %v5971
    %v5974 = vunpack.c.l.s4 1966171168
    %v5975 = vunpack.c.0.s8 %v5974
    %v5976 = vlaneseq
    %v5977 = vshrl.u32 %v5976, 7
    %v5978 = vsub.s32 %v5975, %v5977
    %v5979 = vrot.slane %v5971, %v5978
    %v5981 = vunpack.c.l.s4 1966171168
    %v5982 = vunpack.c.0.s8 %v5981
    %v5983 = vlaneseq
    %v5984 = vshrl.u32 %v5983, 7
    %v5985 = vsub.s32 %v5982, %v5984
    %v5986 = vrot.slane %v5972, %v5985
    %v5990 = vunpack.c.l.s4 1966171168
    %v5991 = vunpack.c.0.s8 %v5990
    %v5992 = vlaneseq
    %v5993 = vshrl.u32 %v5992, 7
    %v5994 = vsub.s32 %v5991, %v5993
    %v5995 = vrot.slane %v5005, %v5994
    %v5996 = vcombine.high %v5995, %v5995
    %v5998 = vunpack.c.l.s4 1966171168
    %v5999 = vunpack.c.0.s8 %v5998
    %v6000 = vlaneseq
    %v6001 = vshrl.u32 %v6000, 7
    %v6002 = vsub.s32 %v5999, %v6001
    %v6003 = vrot.slane %v5995, %v6002
    %v6005 = vunpack.c.l.s4 1966171168
    %v6006 = vunpack.c.0.s8 %v6005
    %v6007 = vlaneseq
    %v6008 = vshrl.u32 %v6007, 7
    %v6009 = vsub.s32 %v6006, %v6008
    %v6010 = vrot.slane %v5996, %v6009
    %v6011 = vcombine.high %v6003, %v6003
    %v6012 = vcombine.high %v6010, %v6010
    %v6013 = vcombine.high %v4323, %v4323
    %v6015 = vunpack.c.l.s4 1966171168
    %v6016 = vunpack.c.0.s8 %v6015
    %v6017 = vlaneseq
    %v6018 = vshrl.u32 %v6017, 7
    %v6019 = vsub.s32 %v6016, %v6018
    %v6020 = vrot.slane %v6013, %v6019
    %v6021 = vcombine.high %v6020, %v6020
    %v6023 = vunpack.c.l.s4 1966171168
    %v6024 = vunpack.c.0.s8 %v6023
    %v6025 = vlaneseq
    %v6026 = vshrl.u32 %v6025, 7
    %v6027 = vsub.s32 %v6024, %v6026
    %v6028 = vrot.slane %v6020, %v6027
    %v6030 = vunpack.c.l.s4 1966171168
    %v6031 = vunpack.c.0.s8 %v6030
    %v6032 = vlaneseq
    %v6033 = vshrl.u32 %v6032, 7
    %v6034 = vsub.s32 %v6031, %v6033
    %v6035 = vrot.slane %v6021, %v6034
    %v6036 = vcombine.high %v3642, %v3642
    %v6038 = vunpack.c.l.s4 1966171168
    %v6039 = vunpack.c.0.s8 %v6038
    %v6040 = vlaneseq
    %v6041 = vshrl.u32 %v6040, 7
    %v6042 = vsub.s32 %v6039, %v6041
    %v6043 = vrot.slane %v6036, %v6042
    %v6044 = vcombine.high %v6043, %v6043
    %v6046 = vunpack.c.l.s4 1966171168
    %v6047 = vunpack.c.0.s8 %v6046
    %v6048 = vlaneseq
    %v6049 = vshrl.u32 %v6048, 7
    %v6050 = vsub.s32 %v6047, %v6049
    %v6051 = vrot.slane %v6043, %v6050
    %v6053 = vunpack.c.l.s4 1966171168
    %v6054 = vunpack.c.0.s8 %v6053
    %v6055 = vlaneseq
    %v6056 = vshrl.u32 %v6055, 7
    %v6057 = vsub.s32 %v6054, %v6056
    %v6058 = vrot.slane %v6044, %v6057
    %v6059 = vcombine.high %v6051, %v6051
    %v6060 = vcombine.high %v6058, %v6058
    %v6062 = vunpack.c.l.s4 1966171168
    %v6063 = vunpack.c.0.s8 %v6062
    %v6064 = vlaneseq
    %v6065 = vshrl.u32 %v6064, 7
    %v6066 = vsub.s32 %v6063, %v6065
    %v6067 = vrot.slane %v2967, %v6066
    %v6068 = vcombine.high %v6067, %v6067
    %v6070 = vunpack.c.l.s4 1966171168
    %v6071 = vunpack.c.0.s8 %v6070
    %v6072 = vlaneseq
    %v6073 = vshrl.u32 %v6072, 7
    %v6074 = vsub.s32 %v6071, %v6073
    %v6075 = vrot.slane %v6067, %v6074
    %v6077 = vunpack.c.l.s4 1966171168
    %v6078 = vunpack.c.0.s8 %v6077
    %v6079 = vlaneseq
    %v6080 = vshrl.u32 %v6079, 7
    %v6081 = vsub.s32 %v6078, %v6080
    %v6082 = vrot.slane %v6068, %v6081
    %v6084 = vunpack.c.l.s4 1966171168
    %v6085 = vunpack.c.0.s8 %v6084
    %v6086 = vlaneseq
    %v6087 = vshrl.u32 %v6086, 7
    %v6088 = vsub.s32 %v6085, %v6087
    %v6089 = vrot.slane %v2291, %v6088
    %v6090 = vcombine.high %v6089, %v6089
    %v6092 = vunpack.c.l.s4 1966171168
    %v6093 = vunpack.c.0.s8 %v6092
    %v6094 = vlaneseq
    %v6095 = vshrl.u32 %v6094, 7
    %v6096 = vsub.s32 %v6093, %v6095
    %v6097 = vrot.slane %v6089, %v6096
    %v6099 = vunpack.c.l.s4 1966171168
    %v6100 = vunpack.c.0.s8 %v6099
    %v6101 = vlaneseq
    %v6102 = vshrl.u32 %v6101, 7
    %v6103 = vsub.s32 %v6100, %v6102
    %v6104 = vrot.slane %v6090, %v6103
    %v6105 = vcombine.high %v6097, %v6097
    %v6106 = vcombine.high %v6104, %v6104
    %v6107 = vcombine.high %v1609, %v1609
    %v6109 = vunpack.c.l.s4 1966171168
    %v6110 = vunpack.c.0.s8 %v6109
    %v6111 = vlaneseq
    %v6112 = vshrl.u32 %v6111, 7
    %v6113 = vsub.s32 %v6110, %v6112
    %v6114 = vrot.slane %v6107, %v6113
    %v6115 = vcombine.high %v6114, %v6114
    %v6117 = vunpack.c.l.s4 1966171168
    %v6118 = vunpack.c.0.s8 %v6117
    %v6119 = vlaneseq
    %v6120 = vshrl.u32 %v6119, 7
    %v6121 = vsub.s32 %v6118, %v6120
    %v6122 = vrot.slane %v6114, %v6121
    %v6124 = vunpack.c.l.s4 1966171168
    %v6125 = vunpack.c.0.s8 %v6124
    %v6126 = vlaneseq
    %v6127 = vshrl.u32 %v6126, 7
    %v6128 = vsub.s32 %v6125, %v6127
    %v6129 = vrot.slane %v6115, %v6128
    %v6130 = vcombine.high %v928, %v928
    %v6132 = vunpack.c.l.s4 1966171168
    %v6133 = vunpack.c.0.s8 %v6132
    %v6134 = vlaneseq
    %v6135 = vshrl.u32 %v6134, 7
    %v6136 = vsub.s32 %v6133, %v6135
    %v6137 = vrot.slane %v6130, %v6136
    %v6138 = vcombine.high %v6137, %v6137
    %v6140 = vunpack.c.l.s4 1966171168
    %v6141 = vunpack.c.0.s8 %v6140
    %v6142 = vlaneseq
    %v6143 = vshrl.u32 %v6142, 7
    %v6144 = vsub.s32 %v6141, %v6143
    %v6145 = vrot.slane %v6137, %v6144
    %v6147 = vunpack.c.l.s4 1966171168
    %v6148 = vunpack.c.0.s8 %v6147
    %v6149 = vlaneseq
    %v6150 = vshrl.u32 %v6149, 7
    %v6151 = vsub.s32 %v6148, %v6150
    %v6152 = vrot.slane %v6138, %v6151
    %v6153 = vcombine.high %v6145, %v6145
    %v6154 = vcombine.high %v6152, %v6152
    %v6155 = vlaneseq
    %v6156 = vshrl.u32 %v6155, 7
    %v6157 = vsub.s32 0, %v6156
    %v6158 = vrot.slane %v6011, %v6157
    %v6159 = vlaneseq
    %v6160 = vshrl.u32 %v6159, 7
    %v6161 = vsub.s32 0, %v6160
    %v6162 = vrot.slane %v6012, %v6161
    %v6165 = vlaneseq
    %v6166 = vshrl.u32 %v6165, 7
    %v6167 = vsub.s32 0, %v6166
    %v6168 = vrot.slane %v6028, %v6167
    %v6169 = vlaneseq
    %v6170 = vshrl.u32 %v6169, 7
    %v6171 = vsub.s32 0, %v6170
    %v6172 = vrot.slane %v6035, %v6171
    %v6175 = vlaneseq
    %v6176 = vshrl.u32 %v6175, 7
    %v6177 = vsub.s32 0, %v6176
    %v6178 = vrot.slane %v6059, %v6177
    %v6179 = vlaneseq
    %v6180 = vshrl.u32 %v6179, 7
    %v6181 = vsub.s32 0, %v6180
    %v6182 = vrot.slane %v6060, %v6181
    %v6185 = vlaneseq
    %v6186 = vshrl.u32 %v6185, 7
    %v6187 = vsub.s32 0, %v6186
    %v6188 = vrot.slane %v6075, %v6187
    %v6189 = vlaneseq
    %v6190 = vshrl.u32 %v6189, 7
    %v6191 = vsub.s32 0, %v6190
    %v6192 = vrot.slane %v6082, %v6191
    %v6195 = vlaneseq
    %v6196 = vshrl.u32 %v6195, 7
    %v6197 = vsub.s32 0, %v6196
    %v6198 = vrot.slane %v6105, %v6197
    %v6199 = vlaneseq
    %v6200 = vshrl.u32 %v6199, 7
    %v6201 = vsub.s32 0, %v6200
    %v6202 = vrot.slane %v6106, %v6201
    %v6205 = vlaneseq
    %v6206 = vshrl.u32 %v6205, 7
    %v6207 = vsub.s32 0, %v6206
    %v6208 = vrot.slane %v6122, %v6207
    %v6209 = vlaneseq
    %v6210 = vshrl.u32 %v6209, 7
    %v6211 = vsub.s32 0, %v6210
    %v6212 = vrot.slane %v6129, %v6211
    %v6215 = vlaneseq
    %v6216 = vshrl.u32 %v6215, 7
    %v6217 = vsub.s32 0, %v6216
    %v6218 = vrot.slane %v6153, %v6217
    %v6219 = vlaneseq
    %v6220 = vshrl.u32 %v6219, 7
    %v6221 = vsub.s32 0, %v6220
    %v6222 = vrot.slane %v6154, %v6221
    %v6225 = vsel %vm5943, %v5979, %v6158
    %v6226 = vsel %vm5943, %v5986, %v6162
    %v6227 = vsel %vm5946, %v6225, %v6168
    %v6228 = vsel %vm5946, %v6226, %v6172
    %v6229 = vsel %vm5949, %v6227, %v6178
    %v6230 = vsel %vm5949, %v6228, %v6182
    %v6231 = vsel %vm5952, %v6229, %v6188
    %v6232 = vsel %vm5952, %v6230, %v6192
    %v6233 = vsel %vm5955, %v6231, %v6198
    %v6234 = vsel %vm5955, %v6232, %v6202
    %v6235 = vsel %vm5958, %v6233, %v6208
    %v6236 = vsel %vm5958, %v6234, %v6212
    %v6237 = vsel %vm5961, %v6235, %v6218
    %v6238 = vsel %vm5961, %v6236, %v6222
    %6241 = vrot.lane.b32.xlu0 %v5962, 32
    %v6242 = vpop.permute.xlu0 %6241
    %6243 = vrot.lane.b32.xlu0 %v5963, 32
    %v6244 = vpop.permute.xlu0 %6243
    %6249 = vrot.lane.b32.xlu0 %v6237, 64
    %v6250 = vpop.permute.xlu0 %6249
    %6251 = vrot.lane.b32.xlu0 %v6238, 64
    %v6252 = vpop.permute.xlu0 %6251
    %v6255 = vsel %vm267, %v6242, %v6250
    %v6256 = vsel %vm267, %v6244, %v6252
    %v6257 = vld [vmem:[%s5] sm:$0xff]
    %v6258 = vld [vmem:[%s5 + $0x8] sm:$0xff]
    %v6259 = vld [vmem:[%s5 + $0x10] sm:$0xff]
    %v6260 = vld [vmem:[%s5 + $0x18] sm:$0xff]
    %v6261 = vld [vmem:[%s5 + $0x20] sm:$0xff]
    %v6262 = vld [vmem:[%s5 + $0x28] sm:$0xff]
    %v6263 = vld [vmem:[%s5 + $0x30] sm:$0xff]
    %v6264 = vld [vmem:[%s5 + $0x38] sm:$0xff]
    %v6265 = vld [vmem:[%s6] sm:$0x1]
    %v6266 = vld [vmem:[%s7] sm:$0xff]
    %v6267 = vld [vmem:[%s7 + $0x8] sm:$0xff]
    %v6268 = vld [vmem:[%s8] sm:$0x1]
    %v6270 = vlaneseq
    %v6271 = vshrl.u32 %v6270, 7
    %v6272 = vsub.s32 0, %v6271
    %v6273 = vrot.slane %v6265, %v6272
    %vm6275 = vcmask 523264
    %v6277 = vsel %vm6275, %v6255, 0
    %v6280 = vsel %vm6275, %v6256, 0
    %6282 = vmatprep.subr.mxu0 0.0
    %6283 = vmatpush1.msra.mxu0 %v6257
    %6284 = vmatprep.subr.mxu0 0.0
    %6285 = vmatpush1.msra.mxu0 %v6258
    %6286 = vmatprep.subr.mxu0 0.0
    %6287 = vmatpush1.msra.mxu0 %v6259
    %6288 = vmatprep.subr.mxu0 0.0
    %6289 = vmatpush1.msra.mxu0 %v6260
    %6290 = vmatprep.subr.mxu0 0.0
    %6291 = vmatpush1.msra.mxu0 %v6261
    %6292 = vmatprep.subr.mxu0 0.0
    %6293 = vmatpush1.msra.mxu0 %v6262
    %6294 = vmatprep.subr.mxu0 0.0
    %6295 = vmatpush1.msra.mxu0 %v6263
    %6296 = vmatprep.subr.mxu0 0.0
    %6297 = vmatpush1.msra.mxu0 %v6264
    %6298 = vmatprep.subr.mxu0 0.0
    %6299 = vmatpush1.msra.mxu0 0.0
    %6300 = vmatprep.subr.mxu0 0.0
    %6301 = vmatpush1.msra.mxu0 0.0
    %6302 = vmatprep.subr.mxu0 0.0
    %6303 = vmatpush1.msra.mxu0 0.0
    %6304 = vmatprep.subr.mxu0 0.0
    %6305 = vmatpush1.msra.mxu0 0.0
    %6306 = vmatprep.subr.mxu0 0.0
    %6307 = vmatpush1.msra.mxu0 0.0
    %6308 = vmatprep.subr.mxu0 0.0
    %6309 = vmatpush1.msra.mxu0 0.0
    %6310 = vmatprep.subr.mxu0 0.0
    %6311 = vmatpush1.msra.mxu0 0.0
    %6312 = vmatprep.subr.mxu0 0.0
    %6313 = vmatpush1.msra.mxu0 0.0
    %6314 = vmatprep.subr.mxu0 0.0
    %6315 = vmatpush1.msra.mxu0 0.0
    %6316 = vmatprep.subr.mxu0 0.0
    %6317 = vmatpush1.msra.mxu0 0.0
    %6318 = vmatprep.subr.mxu0 0.0
    %6319 = vmatpush1.msra.mxu0 0.0
    %6320 = vmatprep.subr.mxu0 0.0
    %6321 = vmatpush1.msra.mxu0 0.0
    %6322 = vmatprep.subr.mxu0 0.0
    %6323 = vmatpush1.msra.mxu0 0.0
    %6324 = vmatprep.subr.mxu0 0.0
    %6325 = vmatpush1.msra.mxu0 0.0
    %6326 = vmatprep.subr.mxu0 0.0
    %6327 = vmatpush1.msra.mxu0 0.0
    %6328 = vmatprep.subr.mxu0 0.0
    %6329 = vmatpush1.msra.mxu0 0.0
    %6330 = vmatprep.subr.mxu0 0.0
    %6331 = vmatpush1.msra.mxu0 0.0
    %6332 = vmatprep.subr.mxu0 0.0
    %6333 = vmatpush1.msra.mxu0 0.0
    %6334 = vmatprep.subr.mxu0 0.0
    %6335 = vmatpush1.msra.mxu0 0.0
    %6336 = vmatprep.subr.mxu0 0.0
    %6337 = vmatpush1.msra.mxu0 0.0
    %6338 = vmatprep.subr.mxu0 0.0
    %6339 = vmatpush1.msra.mxu0 0.0
    %6340 = vmatprep.subr.mxu0 0.0
    %6341 = vmatpush1.msra.mxu0 0.0
    %6342 = vmatprep.subr.mxu0 0.0
    %6343 = vmatpush1.msra.mxu0 0.0
    %6344 = vmatprep.subr.mxu0 0.0
    %6345 = vmatpush1.msra.mxu0 0.0
    %6346 = vmatprep.mubr.f32.mxu0 0.0
    %6347 = vmatmul.mubr.f32.gmra.mrb[0].mxu0 %v6277
    %v6348 = vpop.f32.mrb[0].mxu0
    %v6349 = vadd.f32 %v6273, %v6348
    %v6350 = vpop.f32.mrb[0].mxu0
    %6351 = vmatprep.mubr.f32.mxu0 0.0
    %6352 = vmatmul.mubr.f32.gmra.mrb[0].mxu0 %v6280
    %v6353 = vpop.f32.mrb[0].mxu0
    %v6354 = vadd.f32 %v6273, %v6353
    %v6355 = vpop.f32.mrb[0].mxu0
    %6356 = vdwg.mxu0
    %v6357 = vtanh.pop %v6349
    %v6358 = vtanh.pop %v6354
    %v6360 = vlaneseq
    %v6361 = vshrl.u32 %v6360, 7
    %v6362 = vsub.s32 0, %v6361
    %v6363 = vrot.slane %v6268, %v6362
    %v6366 = vsel %vm146, %v6357, 0
    %v6369 = vsel %vm146, %v6358, 0
    %6371 = vmatprep.subr.mxu0 0.0
    %6372 = vmatpush1.msra.mxu0 %v6266
    %6373 = vmatprep.subr.mxu0 0.0
    %6374 = vmatpush1.msra.mxu0 %v6267
    %6375 = vmatprep.subr.mxu0 0.0
    %6376 = vmatpush1.msra.mxu0 0.0
    %6377 = vmatprep.subr.mxu0 0.0
    %6378 = vmatpush1.msra.mxu0 0.0
    %6379 = vmatprep.subr.mxu0 0.0
    %6380 = vmatpush1.msra.mxu0 0.0
    %6381 = vmatprep.subr.mxu0 0.0
    %6382 = vmatpush1.msra.mxu0 0.0
    %6383 = vmatprep.subr.mxu0 0.0
    %6384 = vmatpush1.msra.mxu0 0.0
    %6385 = vmatprep.subr.mxu0 0.0
    %6386 = vmatpush1.msra.mxu0 0.0
    %6387 = vmatprep.subr.mxu0 0.0
    %6388 = vmatpush1.msra.mxu0 0.0
    %6389 = vmatprep.subr.mxu0 0.0
    %6390 = vmatpush1.msra.mxu0 0.0
    %6391 = vmatprep.subr.mxu0 0.0
    %6392 = vmatpush1.msra.mxu0 0.0
    %6393 = vmatprep.subr.mxu0 0.0
    %6394 = vmatpush1.msra.mxu0 0.0
    %6395 = vmatprep.subr.mxu0 0.0
    %6396 = vmatpush1.msra.mxu0 0.0
    %6397 = vmatprep.subr.mxu0 0.0
    %6398 = vmatpush1.msra.mxu0 0.0
    %6399 = vmatprep.subr.mxu0 0.0
    %6400 = vmatpush1.msra.mxu0 0.0
    %6401 = vmatprep.subr.mxu0 0.0
    %6402 = vmatpush1.msra.mxu0 0.0
    %6403 = vmatprep.subr.mxu0 0.0
    %6404 = vmatpush1.msra.mxu0 0.0
    %6405 = vmatprep.subr.mxu0 0.0
    %6406 = vmatpush1.msra.mxu0 0.0
    %6407 = vmatprep.subr.mxu0 0.0
    %6408 = vmatpush1.msra.mxu0 0.0
    %6409 = vmatprep.subr.mxu0 0.0
    %6410 = vmatpush1.msra.mxu0 0.0
    %6411 = vmatprep.subr.mxu0 0.0
    %6412 = vmatpush1.msra.mxu0 0.0
    %6413 = vmatprep.subr.mxu0 0.0
    %6414 = vmatpush1.msra.mxu0 0.0
    %6415 = vmatprep.subr.mxu0 0.0
    %6416 = vmatpush1.msra.mxu0 0.0
    %6417 = vmatprep.subr.mxu0 0.0
    %6418 = vmatpush1.msra.mxu0 0.0
    %6419 = vmatprep.subr.mxu0 0.0
    %6420 = vmatpush1.msra.mxu0 0.0
    %6421 = vmatprep.subr.mxu0 0.0
    %6422 = vmatpush1.msra.mxu0 0.0
    %6423 = vmatprep.subr.mxu0 0.0
    %6424 = vmatpush1.msra.mxu0 0.0
    %6425 = vmatprep.subr.mxu0 0.0
    %6426 = vmatpush1.msra.mxu0 0.0
    %6427 = vmatprep.subr.mxu0 0.0
    %6428 = vmatpush1.msra.mxu0 0.0
    %6429 = vmatprep.subr.mxu0 0.0
    %6430 = vmatpush1.msra.mxu0 0.0
    %6431 = vmatprep.subr.mxu0 0.0
    %6432 = vmatpush1.msra.mxu0 0.0
    %6433 = vmatprep.subr.mxu0 0.0
    %6434 = vmatpush1.msra.mxu0 0.0
    %6435 = vmatprep.mubr.f32.mxu0 0.0
    %6436 = vmatmul.mubr.f32.gmra.mrb[0].mxu0 %v6366
    %v6437 = vpop.f32.mrb[0].mxu0
    %v6438 = vadd.f32 %v6363, %v6437
    %v6439 = vpop.f32.mrb[0].mxu0
    %6440 = vmatprep.mubr.f32.mxu0 0.0
    %6441 = vmatmul.mubr.f32.gmra.mrb[0].mxu0 %v6369
    %v6442 = vpop.f32.mrb[0].mxu0
    %v6443 = vadd.f32 %v6363, %v6442
    %v6444 = vpop.f32.mrb[0].mxu0
    %6445 = vdwg.mxu0
    %vm6446 = vcmask 31744
    %v6447 = vsel %vm6446, %v6438, -inf
    %v6448 = vrot.slane %v6447, 4
    %v6449 = vmax.f32 %v6447, %v6448
    %v6450 = vrot.slane %v6449, 2
    %v6451 = vmax.f32 %v6449, %v6450
    %v6452 = vrot.slane %v6451, 1
    %v6453 = vmax.f32 %v6451, %v6452
    %v6454 = vsel %vm6446, %v6443, -inf
    %v6455 = vrot.slane %v6454, 4
    %v6456 = vmax.f32 %v6454, %v6455
    %v6457 = vrot.slane %v6456, 2
    %v6458 = vmax.f32 %v6456, %v6457
    %v6459 = vrot.slane %v6458, 1
    %v6460 = vmax.f32 %v6458, %v6459
    %v6461 = vsub.f32 %v6438, %v6453
    %v6462 = vsub.f32 %v6443, %v6460
    %v6463 = vmul.f32 %v6461, 1.442695
    %v6464 = vpow.pop %v6463
    %v6465 = vmul.f32 %v6462, 1.442695
    %v6466 = vpow.pop %v6465
    %v6467 = vsel %vm6446, %v6464, 0.0
    %v6468 = vrot.slane %v6467, 4
    %v6469 = vadd.f32 %v6467, %v6468
    %v6470 = vrot.slane %v6469, 2
    %v6471 = vadd.f32 %v6469, %v6470
    %v6472 = vrot.slane %v6471, 1
    %v6473 = vadd.f32 %v6471, %v6472
    %v6474 = vsel %vm6446, %v6466, 0.0
    %v6475 = vrot.slane %v6474, 4
    %v6476 = vadd.f32 %v6474, %v6475
    %v6477 = vrot.slane %v6476, 2
    %v6478 = vadd.f32 %v6476, %v6477
    %v6479 = vrot.slane %v6478, 1
    %v6480 = vadd.f32 %v6478, %v6479
    %v6481 = vrcp.pop %v6473
    %v6482 = vrcp.pop %v6480
    %v6483 = vmul.f32 %v6464, %v6481
    %v6484 = vmul.f32 %v6466, %v6482
    %6485 = vxpose.xlu0.b32.start [1/16] %v6483, 128
    %6486 = vxpose.xlu0.b32.cont [2/16] 0.0, 128
    %6487 = vxpose.xlu0.b32.cont [3/16] 0.0, 128
    %6488 = vxpose.xlu0.b32.cont [4/16] 0.0, 128
    %6489 = vxpose.xlu0.b32.cont [5/16] 0.0, 128
    %6490 = vxpose.xlu0.b32.cont [6/16] 0.0, 128
    %6491 = vxpose.xlu0.b32.cont [7/16] 0.0, 128
    %6492 = vxpose.xlu0.b32.cont [8/16] 0.0, 128
    %6493 = vxpose.xlu0.b32.cont [9/16] 0.0, 128
    %6494 = vxpose.xlu0.b32.cont [10/16] 0.0, 128
    %6495 = vxpose.xlu0.b32.cont [11/16] 0.0, 128
    %6496 = vxpose.xlu0.b32.cont [12/16] 0.0, 128
    %6497 = vxpose.xlu0.b32.cont [13/16] 0.0, 128
    %6498 = vxpose.xlu0.b32.cont [14/16] 0.0, 128
    %6499 = vxpose.xlu0.b32.cont [15/16] 0.0, 128
    %6500 = vxpose.xlu0.b32.end [16/16] 0.0, 128
    %v6501 = vpop.trf.xlu0
    %v6502 = vpop.trf.xlu0
    %v6503 = vpop.trf.xlu0
    %v6504 = vpop.trf.xlu0
    %v6505 = vpop.trf.xlu0
    %v6506 = vpop.trf.xlu0
    %v6507 = vpop.trf.xlu0
    %v6508 = vpop.trf.xlu0
    %v6509 = vpop.trf.xlu0
    %v6510 = vpop.trf.xlu0
    %v6511 = vpop.trf.xlu0
    %v6512 = vpop.trf.xlu0
    %v6513 = vpop.trf.xlu0
    %v6514 = vpop.trf.xlu0
    %v6515 = vpop.trf.xlu0
    %v6516 = vpop.trf.xlu0
    %vm6517 = vcmask 64512
    %v6519 = vsel %vm6517, %v6501, 0
    %6521 = vmatprep.subr.mxu0 0.0
    %6522 = vmatpush1.msra.mxu0 %v6255
    %6523 = vmatprep.subr.mxu0 0.0
    %6524 = vmatpush1.msra.mxu0 0.0
    %6525 = vmatprep.subr.mxu0 0.0
    %6526 = vmatpush1.msra.mxu0 0.0
    %6527 = vmatprep.subr.mxu0 0.0
    %6528 = vmatpush1.msra.mxu0 0.0
    %6529 = vmatprep.subr.mxu0 0.0
    %6530 = vmatpush1.msra.mxu0 0.0
    %6531 = vmatprep.subr.mxu0 0.0
    %6532 = vmatpush1.msra.mxu0 0.0
    %6533 = vmatprep.subr.mxu0 0.0
    %6534 = vmatpush1.msra.mxu0 0.0
    %6535 = vmatprep.subr.mxu0 0.0
    %6536 = vmatpush1.msra.mxu0 0.0
    %6537 = vmatprep.subr.mxu0 0.0
    %6538 = vmatpush1.msra.mxu0 0.0
    %6539 = vmatprep.subr.mxu0 0.0
    %6540 = vmatpush1.msra.mxu0 0.0
    %6541 = vmatprep.subr.mxu0 0.0
    %6542 = vmatpush1.msra.mxu0 0.0
    %6543 = vmatprep.subr.mxu0 0.0
    %6544 = vmatpush1.msra.mxu0 0.0
    %6545 = vmatprep.subr.mxu0 0.0
    %6546 = vmatpush1.msra.mxu0 0.0
    %6547 = vmatprep.subr.mxu0 0.0
    %6548 = vmatpush1.msra.mxu0 0.0
    %6549 = vmatprep.subr.mxu0 0.0
    %6550 = vmatpush1.msra.mxu0 0.0
    %6551 = vmatprep.subr.mxu0 0.0
    %6552 = vmatpush1.msra.mxu0 0.0
    %6553 = vmatprep.subr.mxu0 0.0
    %6554 = vmatpush1.msra.mxu0 0.0
    %6555 = vmatprep.subr.mxu0 0.0
    %6556 = vmatpush1.msra.mxu0 0.0
    %6557 = vmatprep.subr.mxu0 0.0
    %6558 = vmatpush1.msra.mxu0 0.0
    %6559 = vmatprep.subr.mxu0 0.0
    %6560 = vmatpush1.msra.mxu0 0.0
    %6561 = vmatprep.subr.mxu0 0.0
    %6562 = vmatpush1.msra.mxu0 0.0
    %6563 = vmatprep.subr.mxu0 0.0
    %6564 = vmatpush1.msra.mxu0 0.0
    %6565 = vmatprep.subr.mxu0 0.0
    %6566 = vmatpush1.msra.mxu0 0.0
    %6567 = vmatprep.subr.mxu0 0.0
    %6568 = vmatpush1.msra.mxu0 0.0
    %6569 = vmatprep.subr.mxu0 0.0
    %6570 = vmatpush1.msra.mxu0 0.0
    %6571 = vmatprep.subr.mxu0 0.0
    %6572 = vmatpush1.msra.mxu0 0.0
    %6573 = vmatprep.subr.mxu0 0.0
    %6574 = vmatpush1.msra.mxu0 0.0
    %6575 = vmatprep.subr.mxu0 0.0
    %6576 = vmatpush1.msra.mxu0 0.0
    %6577 = vmatprep.subr.mxu0 0.0
    %6578 = vmatpush1.msra.mxu0 0.0
    %6579 = vmatprep.subr.mxu0 0.0
    %6580 = vmatpush1.msra.mxu0 0.0
    %6581 = vmatprep.subr.mxu0 0.0
    %6582 = vmatpush1.msra.mxu0 0.0
    %6583 = vmatprep.subr.mxu0 0.0
    %6584 = vmatpush1.msra.mxu0 0.0
    %6585 = vmatprep.mubr.f32.mxu0 0.0
    %6586 = vmatmul.mubr.f32.gmra.mrb[0].mxu0 %v6519
    %v6587 = vpop.f32.mrb[0].mxu0
    %v6588 = vadd.f32 0.0, %v6587
    %v6589 = vpop.f32.mrb[0].mxu0
    %6590 = vdwg.mxu0
    %6591 = vxpose.xlu0.b32.start [1/16] %v6484, 128
    %6592 = vxpose.xlu0.b32.cont [2/16] 0.0, 128
    %6593 = vxpose.xlu0.b32.cont [3/16] 0.0, 128
    %6594 = vxpose.xlu0.b32.cont [4/16] 0.0, 128
    %6595 = vxpose.xlu0.b32.cont [5/16] 0.0, 128
    %6596 = vxpose.xlu0.b32.cont [6/16] 0.0, 128
    %6597 = vxpose.xlu0.b32.cont [7/16] 0.0, 128
    %6598 = vxpose.xlu0.b32.cont [8/16] 0.0, 128
    %6599 = vxpose.xlu0.b32.cont [9/16] 0.0, 128
    %6600 = vxpose.xlu0.b32.cont [10/16] 0.0, 128
    %6601 = vxpose.xlu0.b32.cont [11/16] 0.0, 128
    %6602 = vxpose.xlu0.b32.cont [12/16] 0.0, 128
    %6603 = vxpose.xlu0.b32.cont [13/16] 0.0, 128
    %6604 = vxpose.xlu0.b32.cont [14/16] 0.0, 128
    %6605 = vxpose.xlu0.b32.cont [15/16] 0.0, 128
    %6606 = vxpose.xlu0.b32.end [16/16] 0.0, 128
    %v6607 = vpop.trf.xlu0
    %v6608 = vpop.trf.xlu0
    %v6609 = vpop.trf.xlu0
    %v6610 = vpop.trf.xlu0
    %v6611 = vpop.trf.xlu0
    %v6612 = vpop.trf.xlu0
    %v6613 = vpop.trf.xlu0
    %v6614 = vpop.trf.xlu0
    %v6615 = vpop.trf.xlu0
    %v6616 = vpop.trf.xlu0
    %v6617 = vpop.trf.xlu0
    %v6618 = vpop.trf.xlu0
    %v6619 = vpop.trf.xlu0
    %v6620 = vpop.trf.xlu0
    %v6621 = vpop.trf.xlu0
    %v6622 = vpop.trf.xlu0
    %v6624 = vsel %vm6517, %v6607, 0
    %6626 = vmatprep.subr.mxu0 0.0
    %6627 = vmatpush1.msra.mxu0 %v6256
    %6628 = vmatprep.subr.mxu0 0.0
    %6629 = vmatpush1.msra.mxu0 0.0
    %6630 = vmatprep.subr.mxu0 0.0
    %6631 = vmatpush1.msra.mxu0 0.0
    %6632 = vmatprep.subr.mxu0 0.0
    %6633 = vmatpush1.msra.mxu0 0.0
    %6634 = vmatprep.subr.mxu0 0.0
    %6635 = vmatpush1.msra.mxu0 0.0
    %6636 = vmatprep.subr.mxu0 0.0
    %6637 = vmatpush1.msra.mxu0 0.0
    %6638 = vmatprep.subr.mxu0 0.0
    %6639 = vmatpush1.msra.mxu0 0.0
    %6640 = vmatprep.subr.mxu0 0.0
    %6641 = vmatpush1.msra.mxu0 0.0
    %6642 = vmatprep.subr.mxu0 0.0
    %6643 = vmatpush1.msra.mxu0 0.0
    %6644 = vmatprep.subr.mxu0 0.0
    %6645 = vmatpush1.msra.mxu0 0.0
    %6646 = vmatprep.subr.mxu0 0.0
    %6647 = vmatpush1.msra.mxu0 0.0
    %6648 = vmatprep.subr.mxu0 0.0
    %6649 = vmatpush1.msra.mxu0 0.0
    %6650 = vmatprep.subr.mxu0 0.0
    %6651 = vmatpush1.msra.mxu0 0.0
    %6652 = vmatprep.subr.mxu0 0.0
    %6653 = vmatpush1.msra.mxu0 0.0
    %6654 = vmatprep.subr.mxu0 0.0
    %6655 = vmatpush1.msra.mxu0 0.0
    %6656 = vmatprep.subr.mxu0 0.0
    %6657 = vmatpush1.msra.mxu0 0.0
    %6658 = vmatprep.subr.mxu0 0.0
    %6659 = vmatpush1.msra.mxu0 0.0
    %6660 = vmatprep.subr.mxu0 0.0
    %6661 = vmatpush1.msra.mxu0 0.0
    %6662 = vmatprep.subr.mxu0 0.0
    %6663 = vmatpush1.msra.mxu0 0.0
    %6664 = vmatprep.subr.mxu0 0.0
    %6665 = vmatpush1.msra.mxu0 0.0
    %6666 = vmatprep.subr.mxu0 0.0
    %6667 = vmatpush1.msra.mxu0 0.0
    %6668 = vmatprep.subr.mxu0 0.0
    %6669 = vmatpush1.msra.mxu0 0.0
    %6670 = vmatprep.subr.mxu0 0.0
    %6671 = vmatpush1.msra.mxu0 0.0
    %6672 = vmatprep.subr.mxu0 0.0
    %6673 = vmatpush1.msra.mxu0 0.0
    %6674 = vmatprep.subr.mxu0 0.0
    %6675 = vmatpush1.msra.mxu0 0.0
    %6676 = vmatprep.subr.mxu0 0.0
    %6677 = vmatpush1.msra.mxu0 0.0
    %6678 = vmatprep.subr.mxu0 0.0
    %6679 = vmatpush1.msra.mxu0 0.0
    %6680 = vmatprep.subr.mxu0 0.0
    %6681 = vmatpush1.msra.mxu0 0.0
    %6682 = vmatprep.subr.mxu0 0.0
    %6683 = vmatpush1.msra.mxu0 0.0
    %6684 = vmatprep.subr.mxu0 0.0
    %6685 = vmatpush1.msra.mxu0 0.0
    %6686 = vmatprep.subr.mxu0 0.0
    %6687 = vmatpush1.msra.mxu0 0.0
    %6688 = vmatprep.subr.mxu0 0.0
    %6689 = vmatpush1.msra.mxu0 0.0
    %6690 = vmatprep.mubr.f32.mxu0 0.0
    %6691 = vmatmul.mubr.f32.gmra.mrb[0].mxu0 %v6624
    %v6692 = vpop.f32.mrb[0].mxu0
    %v6693 = vadd.f32 0.0, %v6692
    %v6694 = vpop.f32.mrb[0].mxu0
    %6695 = vdwg.mxu0
    %v6697 = vunpack.c.l.s4 1983009808
    %v6698 = vunpack.c.0.s8 %v6697
    %v6699 = vlaneseq
    %v6700 = vshrl.u32 %v6699, 7
    %v6701 = vsub.s32 %v6698, %v6700
    %v6702 = vrot.slane %v6588, %v6701
    %v6704 = vunpack.c.l.s4 1983009808
    %v6705 = vunpack.c.0.s8 %v6704
    %v6706 = vlaneseq
    %v6707 = vshrl.u32 %v6706, 7
    %v6708 = vsub.s32 %v6705, %v6707
    %v6709 = vrot.slane %v6693, %v6708
    %v6710 = vcombine.low %v6702, %v6709
    %v6711 = vcombine.high %v6702, %v6709
    %v6713 = vunpack.c.l.s4 1934713408
    %v6714 = vunpack.c.0.s8 %v6713
    %v6715 = vlaneseq
    %v6716 = vshrl.u32 %v6715, 7
    %v6717 = vsub.s32 %v6714, %v6716
    %v6718 = vrot.slane %v6710, %v6717
    %v6720 = vunpack.c.l.s4 1934713408
    %v6721 = vunpack.c.0.s8 %v6720
    %v6722 = vlaneseq
    %v6723 = vshrl.u32 %v6722, 7
    %v6724 = vsub.s32 %v6721, %v6723
    %v6725 = vrot.slane %v6711, %v6724
    %v6726 = vcombine.high %v6718, 0.0
    %v6727 = vcombine.high %v6725, 0.0
    %6729 = vrot.lane.b32.xlu0 %v6726, 64
    %v6730 = vpop.permute.xlu0 %6729
    %6733 = vrot.lane.b32.xlu0 %v6727, 64
    %v6734 = vpop.permute.xlu0 %6733
    %v6736 = vsel %vm6275, %v6718, %v6730
    %v6737 = vsel %vm6275, %v6725, %v6734
    %v6738 = vld [vmem:[%s1] sm:$0xff]
    %v6739 = vld [vmem:[%s1 + $0x8] sm:$0xff]
    %v6740 = vld [vmem:[%s1 + $0x10] sm:$0xff]
    %v6741 = vld [vmem:[%s1 + $0x18] sm:$0xff]
    %v6742 = vld [vmem:[%s9] sm:$0xff]
    %v6743 = vld [vmem:[%s9 + $0x8] sm:$0xff]
    %v6744 = vld [vmem:[%s9 + $0x10] sm:$0xff]
    %v6745 = vld [vmem:[%s9 + $0x18] sm:$0xff]
    %v6746 = vld [vmem:[%s9 + $0x20] sm:$0xff]
    %v6747 = vld [vmem:[%s9 + $0x28] sm:$0xff]
    %v6748 = vld [vmem:[%s9 + $0x30] sm:$0xff]
    %v6749 = vld [vmem:[%s9 + $0x38] sm:$0xff]
    %v6750 = vld [vmem:[%s10] sm:$0x1]
    %v6752 = vlaneseq
    %v6753 = vshrl.u32 %v6752, 7
    %v6754 = vsub.s32 0, %v6753
    %v6755 = vrot.slane %v6750, %v6754
    %v6758 = vsel %vm6275, %v6738, 0
    %v6761 = vsel %vm6275, %v6739, 0
    %v6764 = vsel %vm6275, %v6740, 0
    %v6767 = vsel %vm6275, %v6741, 0
    %6769 = vmatprep.subr.mxu0 0.0
    %6770 = vmatpush1.msra.mxu0 %v6742
    %6771 = vmatprep.subr.mxu0 0.0
    %6772 = vmatpush1.msra.mxu0 %v6743
    %6773 = vmatprep.subr.mxu0 0.0
    %6774 = vmatpush1.msra.mxu0 %v6744
    %6775 = vmatprep.subr.mxu0 0.0
    %6776 = vmatpush1.msra.mxu0 %v6745
    %6777 = vmatprep.subr.mxu0 0.0
    %6778 = vmatpush1.msra.mxu0 %v6746
    %6779 = vmatprep.subr.mxu0 0.0
    %6780 = vmatpush1.msra.mxu0 %v6747
    %6781 = vmatprep.subr.mxu0 0.0
    %6782 = vmatpush1.msra.mxu0 %v6748
    %6783 = vmatprep.subr.mxu0 0.0
    %6784 = vmatpush1.msra.mxu0 %v6749
    %6785 = vmatprep.subr.mxu0 0.0
    %6786 = vmatpush1.msra.mxu0 0.0
    %6787 = vmatprep.subr.mxu0 0.0
    %6788 = vmatpush1.msra.mxu0 0.0
    %6789 = vmatprep.subr.mxu0 0.0
    %6790 = vmatpush1.msra.mxu0 0.0
    %6791 = vmatprep.subr.mxu0 0.0
    %6792 = vmatpush1.msra.mxu0 0.0
    %6793 = vmatprep.subr.mxu0 0.0
    %6794 = vmatpush1.msra.mxu0 0.0
    %6795 = vmatprep.subr.mxu0 0.0
    %6796 = vmatpush1.msra.mxu0 0.0
    %6797 = vmatprep.subr.mxu0 0.0
    %6798 = vmatpush1.msra.mxu0 0.0
    %6799 = vmatprep.subr.mxu0 0.0
    %6800 = vmatpush1.msra.mxu0 0.0
    %6801 = vmatprep.subr.mxu0 0.0
    %6802 = vmatpush1.msra.mxu0 0.0
    %6803 = vmatprep.subr.mxu0 0.0
    %6804 = vmatpush1.msra.mxu0 0.0
    %6805 = vmatprep.subr.mxu0 0.0
    %6806 = vmatpush1.msra.mxu0 0.0
    %6807 = vmatprep.subr.mxu0 0.0
    %6808 = vmatpush1.msra.mxu0 0.0
    %6809 = vmatprep.subr.mxu0 0.0
    %6810 = vmatpush1.msra.mxu0 0.0
    %6811 = vmatprep.subr.mxu0 0.0
    %6812 = vmatpush1.msra.mxu0 0.0
    %6813 = vmatprep.subr.mxu0 0.0
    %6814 = vmatpush1.msra.mxu0 0.0
    %6815 = vmatprep.subr.mxu0 0.0
    %6816 = vmatpush1.msra.mxu0 0.0
    %6817 = vmatprep.subr.mxu0 0.0
    %6818 = vmatpush1.msra.mxu0 0.0
    %6819 = vmatprep.subr.mxu0 0.0
    %6820 = vmatpush1.msra.mxu0 0.0
    %6821 = vmatprep.subr.mxu0 0.0
    %6822 = vmatpush1.msra.mxu0 0.0
    %6823 = vmatprep.subr.mxu0 0.0
    %6824 = vmatpush1.msra.mxu0 0.0
    %6825 = vmatprep.subr.mxu0 0.0
    %6826 = vmatpush1.msra.mxu0 0.0
    %6827 = vmatprep.subr.mxu0 0.0
    %6828 = vmatpush1.msra.mxu0 0.0
    %6829 = vmatprep.subr.mxu0 0.0
    %6830 = vmatpush1.msra.mxu0 0.0
    %6831 = vmatprep.subr.mxu0 0.0
    %6832 = vmatpush1.msra.mxu0 0.0
    %6833 = vmatprep.mubr.f32.mxu0 0.0
    %6834 = vmatmul.mubr.f32.gmra.mrb[0].mxu0 %v6758
    %v6835 = vpop.f32.mrb[0].mxu0
    %v6836 = vadd.f32 %v6755, %v6835
    %v6837 = vpop.f32.mrb[0].mxu0
    %6838 = vmatprep.mubr.f32.mxu0 0.0
    %6839 = vmatmul.mubr.f32.gmra.mrb[0].mxu0 %v6761
    %v6840 = vpop.f32.mrb[0].mxu0
    %v6841 = vadd.f32 %v6755, %v6840
    %v6842 = vpop.f32.mrb[0].mxu0
    %6843 = vmatprep.mubr.f32.mxu0 0.0
    %6844 = vmatmul.mubr.f32.gmra.mrb[0].mxu0 %v6764
    %v6845 = vpop.f32.mrb[0].mxu0
    %v6846 = vadd.f32 %v6755, %v6845
    %v6847 = vpop.f32.mrb[0].mxu0
    %6848 = vmatprep.mubr.f32.mxu0 0.0
    %6849 = vmatmul.mubr.f32.gmra.mrb[0].mxu0 %v6767
    %v6850 = vpop.f32.mrb[0].mxu0
    %v6851 = vadd.f32 %v6755, %v6850
    %v6852 = vpop.f32.mrb[0].mxu0
    %6853 = vdwg.mxu0
    %v6854 = vmax.f32 %v6836, 0.0
    %v6855 = vmax.f32 %v6841, 0.0
    %v6856 = vmax.f32 %v6846, 0.0
    %v6857 = vmax.f32 %v6851, 0.0
    %v6858 = vld [vmem:[%s11] sm:$0xff]
    %v6859 = vld [vmem:[%s11 + $0x8] sm:$0xff]
    %v6860 = vld [vmem:[%s11 + $0x10] sm:$0xff]
    %v6861 = vld [vmem:[%s11 + $0x18] sm:$0xff]
    %v6862 = vld [vmem:[%s11 + $0x20] sm:$0xff]
    %v6863 = vld [vmem:[%s11 + $0x28] sm:$0xff]
    %v6864 = vld [vmem:[%s11 + $0x30] sm:$0xff]
    %v6865 = vld [vmem:[%s11 + $0x38] sm:$0xff]
    %v6866 = vld [vmem:[%s11 + $0x40] sm:$0xff]
    %v6867 = vld [vmem:[%s11 + $0x48] sm:$0xff]
    %v6868 = vld [vmem:[%s11 + $0x50] sm:$0xff]
    %v6869 = vld [vmem:[%s11 + $0x58] sm:$0xff]
    %v6870 = vld [vmem:[%s11 + $0x60] sm:$0xff]
    %v6871 = vld [vmem:[%s11 + $0x68] sm:$0xff]
    %v6872 = vld [vmem:[%s11 + $0x70] sm:$0xff]
    %v6873 = vld [vmem:[%s11 + $0x78] sm:$0xff]
    %6874 = vmatprep.subr.mxu0 0.0
    %6875 = vmatpush1.msra.mxu0 %v6858
    %6876 = vmatprep.subr.mxu0 0.0
    %6877 = vmatpush1.msra.mxu0 %v6859
    %6878 = vmatprep.subr.mxu0 0.0
    %6879 = vmatpush1.msra.mxu0 %v6860
    %6880 = vmatprep.subr.mxu0 0.0
    %6881 = vmatpush1.msra.mxu0 %v6861
    %6882 = vmatprep.subr.mxu0 0.0
    %6883 = vmatpush1.msra.mxu0 %v6862
    %6884 = vmatprep.subr.mxu0 0.0
    %6885 = vmatpush1.msra.mxu0 %v6863
    %6886 = vmatprep.subr.mxu0 0.0
    %6887 = vmatpush1.msra.mxu0 %v6864
    %6888 = vmatprep.subr.mxu0 0.0
    %6889 = vmatpush1.msra.mxu0 %v6865
    %6890 = vmatprep.subr.mxu0 0.0
    %6891 = vmatpush1.msra.mxu0 0.0
    %6892 = vmatprep.subr.mxu0 0.0
    %6893 = vmatpush1.msra.mxu0 0.0
    %6894 = vmatprep.subr.mxu0 0.0
    %6895 = vmatpush1.msra.mxu0 0.0
    %6896 = vmatprep.subr.mxu0 0.0
    %6897 = vmatpush1.msra.mxu0 0.0
    %6898 = vmatprep.subr.mxu0 0.0
    %6899 = vmatpush1.msra.mxu0 0.0
    %6900 = vmatprep.subr.mxu0 0.0
    %6901 = vmatpush1.msra.mxu0 0.0
    %6902 = vmatprep.subr.mxu0 0.0
    %6903 = vmatpush1.msra.mxu0 0.0
    %6904 = vmatprep.subr.mxu0 0.0
    %6905 = vmatpush1.msra.mxu0 0.0
    %6906 = vmatprep.subr.mxu0 0.0
    %6907 = vmatpush1.msra.mxu0 0.0
    %6908 = vmatprep.subr.mxu0 0.0
    %6909 = vmatpush1.msra.mxu0 0.0
    %6910 = vmatprep.subr.mxu0 0.0
    %6911 = vmatpush1.msra.mxu0 0.0
    %6912 = vmatprep.subr.mxu0 0.0
    %6913 = vmatpush1.msra.mxu0 0.0
    %6914 = vmatprep.subr.mxu0 0.0
    %6915 = vmatpush1.msra.mxu0 0.0
    %6916 = vmatprep.subr.mxu0 0.0
    %6917 = vmatpush1.msra.mxu0 0.0
    %6918 = vmatprep.subr.mxu0 0.0
    %6919 = vmatpush1.msra.mxu0 0.0
    %6920 = vmatprep.subr.mxu0 0.0
    %6921 = vmatpush1.msra.mxu0 0.0
    %6922 = vmatprep.subr.mxu0 0.0
    %6923 = vmatpush1.msra.mxu0 0.0
    %6924 = vmatprep.subr.mxu0 0.0
    %6925 = vmatpush1.msra.mxu0 0.0
    %6926 = vmatprep.subr.mxu0 0.0
    %6927 = vmatpush1.msra.mxu0 0.0
    %6928 = vmatprep.subr.mxu0 0.0
    %6929 = vmatpush1.msra.mxu0 0.0
    %6930 = vmatprep.subr.mxu0 0.0
    %6931 = vmatpush1.msra.mxu0 0.0
    %6932 = vmatprep.subr.mxu0 0.0
    %6933 = vmatpush1.msra.mxu0 0.0
    %6934 = vmatprep.subr.mxu0 0.0
    %6935 = vmatpush1.msra.mxu0 0.0
    %6936 = vmatprep.subr.mxu0 0.0
    %6937 = vmatpush1.msra.mxu0 0.0
    %6938 = vmatprep.mubr.f32.mxu0 0.0
    %6939 = vmatmul.mubr.f32.gmra.mrb[0].mxu0 %v6277
    %v6940 = vpop.f32.mrb[0].mxu0
    %v6941 = vadd.f32 0.0, %v6940
    %v6942 = vpop.f32.mrb[0].mxu0
    %6943 = vdwg.mxu0
    %6944 = vmatprep.subr.mxu0 0.0
    %6945 = vmatpush1.msra.mxu0 %v6866
    %6946 = vmatprep.subr.mxu0 0.0
    %6947 = vmatpush1.msra.mxu0 %v6867
    %6948 = vmatprep.subr.mxu0 0.0
    %6949 = vmatpush1.msra.mxu0 %v6868
    %6950 = vmatprep.subr.mxu0 0.0
    %6951 = vmatpush1.msra.mxu0 %v6869
    %6952 = vmatprep.subr.mxu0 0.0
    %6953 = vmatpush1.msra.mxu0 %v6870
    %6954 = vmatprep.subr.mxu0 0.0
    %6955 = vmatpush1.msra.mxu0 %v6871
    %6956 = vmatprep.subr.mxu0 0.0
    %6957 = vmatpush1.msra.mxu0 %v6872
    %6958 = vmatprep.subr.mxu0 0.0
    %6959 = vmatpush1.msra.mxu0 %v6873
    %6960 = vmatprep.subr.mxu0 0.0
    %6961 = vmatpush1.msra.mxu0 0.0
    %6962 = vmatprep.subr.mxu0 0.0
    %6963 = vmatpush1.msra.mxu0 0.0
    %6964 = vmatprep.subr.mxu0 0.0
    %6965 = vmatpush1.msra.mxu0 0.0
    %6966 = vmatprep.subr.mxu0 0.0
    %6967 = vmatpush1.msra.mxu0 0.0
    %6968 = vmatprep.subr.mxu0 0.0
    %6969 = vmatpush1.msra.mxu0 0.0
    %6970 = vmatprep.subr.mxu0 0.0
    %6971 = vmatpush1.msra.mxu0 0.0
    %6972 = vmatprep.subr.mxu0 0.0
    %6973 = vmatpush1.msra.mxu0 0.0
    %6974 = vmatprep.subr.mxu0 0.0
    %6975 = vmatpush1.msra.mxu0 0.0
    %6976 = vmatprep.subr.mxu0 0.0
    %6977 = vmatpush1.msra.mxu0 0.0
    %6978 = vmatprep.subr.mxu0 0.0
    %6979 = vmatpush1.msra.mxu0 0.0
    %6980 = vmatprep.subr.mxu0 0.0
    %6981 = vmatpush1.msra.mxu0 0.0
    %6982 = vmatprep.subr.mxu0 0.0
    %6983 = vmatpush1.msra.mxu0 0.0
    %6984 = vmatprep.subr.mxu0 0.0
    %6985 = vmatpush1.msra.mxu0 0.0
    %6986 = vmatprep.subr.mxu0 0.0
    %6987 = vmatpush1.msra.mxu0 0.0
    %6988 = vmatprep.subr.mxu0 0.0
    %6989 = vmatpush1.msra.mxu0 0.0
    %6990 = vmatprep.subr.mxu0 0.0
    %6991 = vmatpush1.msra.mxu0 0.0
    %6992 = vmatprep.subr.mxu0 0.0
    %6993 = vmatpush1.msra.mxu0 0.0
    %6994 = vmatprep.subr.mxu0 0.0
    %6995 = vmatpush1.msra.mxu0 0.0
    %6996 = vmatprep.subr.mxu0 0.0
    %6997 = vmatpush1.msra.mxu0 0.0
    %6998 = vmatprep.subr.mxu0 0.0
    %6999 = vmatpush1.msra.mxu0 0.0
    %7000 = vmatprep.subr.mxu0 0.0
    %7001 = vmatpush1.msra.mxu0 0.0
    %7002 = vmatprep.subr.mxu0 0.0
    %7003 = vmatpush1.msra.mxu0 0.0
    %7004 = vmatprep.subr.mxu0 0.0
    %7005 = vmatpush1.msra.mxu0 0.0
    %7006 = vmatprep.subr.mxu0 0.0
    %7007 = vmatpush1.msra.mxu0 0.0
    %7008 = vmatprep.mubr.f32.mxu0 0.0
    %7009 = vmatmul.mubr.f32.gmra.mrb[0].mxu0 %v6280
    %v7010 = vpop.f32.mrb[0].mxu0
    %v7011 = vadd.f32 0.0, %v7010
    %v7012 = vpop.f32.mrb[0].mxu0
    %7013 = vdwg.mxu0
    %v7015 = vsel %vm6275, %v6941, 0
    %v7018 = vsel %vm6275, %v6854, 0
    %v7021 = vsel %vm6275, %v6855, 0
    %7023 = vmatprep.subr.mxu0 0.0
    %7024 = vmatpush1.xpose.msra.mxu0 %v7018
    %7025 = vmatprep.subr.mxu0 0.0
    %7026 = vmatpush1.xpose.msra.mxu0 %v7021
    %7027 = vmatprep.subr.mxu0 0.0
    %7028 = vmatpush1.xpose.msra.mxu0 0.0
    %7029 = vmatprep.subr.mxu0 0.0
    %7030 = vmatpush1.xpose.msra.mxu0 0.0
    %7031 = vmatprep.subr.mxu0 0.0
    %7032 = vmatpush1.xpose.msra.mxu0 0.0
    %7033 = vmatprep.subr.mxu0 0.0
    %7034 = vmatpush1.xpose.msra.mxu0 0.0
    %7035 = vmatprep.subr.mxu0 0.0
    %7036 = vmatpush1.xpose.msra.mxu0 0.0
    %7037 = vmatprep.subr.mxu0 0.0
    %7038 = vmatpush1.xpose.msra.mxu0 0.0
    %7039 = vmatprep.subr.mxu0 0.0
    %7040 = vmatpush1.xpose.msra.mxu0 0.0
    %7041 = vmatprep.subr.mxu0 0.0
    %7042 = vmatpush1.xpose.msra.mxu0 0.0
    %7043 = vmatprep.subr.mxu0 0.0
    %7044 = vmatpush1.xpose.msra.mxu0 0.0
    %7045 = vmatprep.subr.mxu0 0.0
    %7046 = vmatpush1.xpose.msra.mxu0 0.0
    %7047 = vmatprep.subr.mxu0 0.0
    %7048 = vmatpush1.xpose.msra.mxu0 0.0
    %7049 = vmatprep.subr.mxu0 0.0
    %7050 = vmatpush1.xpose.msra.mxu0 0.0
    %7051 = vmatprep.subr.mxu0 0.0
    %7052 = vmatpush1.xpose.msra.mxu0 0.0
    %7053 = vmatprep.subr.mxu0 0.0
    %7054 = vmatpush1.xpose.msra.mxu0 0.0
    %7055 = vmatprep.subr.mxu0 0.0
    %7056 = vmatpush1.xpose.msra.mxu0 0.0
    %7057 = vmatprep.subr.mxu0 0.0
    %7058 = vmatpush1.xpose.msra.mxu0 0.0
    %7059 = vmatprep.subr.mxu0 0.0
    %7060 = vmatpush1.xpose.msra.mxu0 0.0
    %7061 = vmatprep.subr.mxu0 0.0
    %7062 = vmatpush1.xpose.msra.mxu0 0.0
    %7063 = vmatprep.subr.mxu0 0.0
    %7064 = vmatpush1.xpose.msra.mxu0 0.0
    %7065 = vmatprep.subr.mxu0 0.0
    %7066 = vmatpush1.xpose.msra.mxu0 0.0
    %7067 = vmatprep.subr.mxu0 0.0
    %7068 = vmatpush1.xpose.msra.mxu0 0.0
    %7069 = vmatprep.subr.mxu0 0.0
    %7070 = vmatpush1.xpose.msra.mxu0 0.0
    %7071 = vmatprep.subr.mxu0 0.0
    %7072 = vmatpush1.xpose.msra.mxu0 0.0
    %7073 = vmatprep.subr.mxu0 0.0
    %7074 = vmatpush1.xpose.msra.mxu0 0.0
    %7075 = vmatprep.subr.mxu0 0.0
    %7076 = vmatpush1.xpose.msra.mxu0 0.0
    %7077 = vmatprep.subr.mxu0 0.0
    %7078 = vmatpush1.xpose.msra.mxu0 0.0
    %7079 = vmatprep.subr.mxu0 0.0
    %7080 = vmatpush1.xpose.msra.mxu0 0.0
    %7081 = vmatprep.subr.mxu0 0.0
    %7082 = vmatpush1.xpose.msra.mxu0 0.0
    %7083 = vmatprep.subr.mxu0 0.0
    %7084 = vmatpush1.xpose.msra.mxu0 0.0
    %7085 = vmatprep.subr.mxu0 0.0
    %7086 = vmatpush1.xpose.msra.mxu0 0.0
    %7087 = vmatprep.mubr.f32.mxu0 0.0
    %7088 = vmatmul.mubr.f32.gmra.mrb[0].mxu0 %v7015
    %v7089 = vpop.f32.mrb[0].mxu0
    %v7090 = vadd.f32 0.0, %v7089
    %v7091 = vpop.f32.mrb[0].mxu0
    %7092 = vdwg.mxu0
    %v7094 = vsel %vm6275, %v7011, 0
    %v7097 = vsel %vm6275, %v6856, 0
    %v7100 = vsel %vm6275, %v6857, 0
    %7102 = vmatprep.subr.mxu0 0.0
    %7103 = vmatpush1.xpose.msra.mxu0 %v7097
    %7104 = vmatprep.subr.mxu0 0.0
    %7105 = vmatpush1.xpose.msra.mxu0 %v7100
    %7106 = vmatprep.subr.mxu0 0.0
    %7107 = vmatpush1.xpose.msra.mxu0 0.0
    %7108 = vmatprep.subr.mxu0 0.0
    %7109 = vmatpush1.xpose.msra.mxu0 0.0
    %7110 = vmatprep.subr.mxu0 0.0
    %7111 = vmatpush1.xpose.msra.mxu0 0.0
    %7112 = vmatprep.subr.mxu0 0.0
    %7113 = vmatpush1.xpose.msra.mxu0 0.0
    %7114 = vmatprep.subr.mxu0 0.0
    %7115 = vmatpush1.xpose.msra.mxu0 0.0
    %7116 = vmatprep.subr.mxu0 0.0
    %7117 = vmatpush1.xpose.msra.mxu0 0.0
    %7118 = vmatprep.subr.mxu0 0.0
    %7119 = vmatpush1.xpose.msra.mxu0 0.0
    %7120 = vmatprep.subr.mxu0 0.0
    %7121 = vmatpush1.xpose.msra.mxu0 0.0
    %7122 = vmatprep.subr.mxu0 0.0
    %7123 = vmatpush1.xpose.msra.mxu0 0.0
    %7124 = vmatprep.subr.mxu0 0.0
    %7125 = vmatpush1.xpose.msra.mxu0 0.0
    %7126 = vmatprep.subr.mxu0 0.0
    %7127 = vmatpush1.xpose.msra.mxu0 0.0
    %7128 = vmatprep.subr.mxu0 0.0
    %7129 = vmatpush1.xpose.msra.mxu0 0.0
    %7130 = vmatprep.subr.mxu0 0.0
    %7131 = vmatpush1.xpose.msra.mxu0 0.0
    %7132 = vmatprep.subr.mxu0 0.0
    %7133 = vmatpush1.xpose.msra.mxu0 0.0
    %7134 = vmatprep.subr.mxu0 0.0
    %7135 = vmatpush1.xpose.msra.mxu0 0.0
    %7136 = vmatprep.subr.mxu0 0.0
    %7137 = vmatpush1.xpose.msra.mxu0 0.0
    %7138 = vmatprep.subr.mxu0 0.0
    %7139 = vmatpush1.xpose.msra.mxu0 0.0
    %7140 = vmatprep.subr.mxu0 0.0
    %7141 = vmatpush1.xpose.msra.mxu0 0.0
    %7142 = vmatprep.subr.mxu0 0.0
    %7143 = vmatpush1.xpose.msra.mxu0 0.0
    %7144 = vmatprep.subr.mxu0 0.0
    %7145 = vmatpush1.xpose.msra.mxu0 0.0
    %7146 = vmatprep.subr.mxu0 0.0
    %7147 = vmatpush1.xpose.msra.mxu0 0.0
    %7148 = vmatprep.subr.mxu0 0.0
    %7149 = vmatpush1.xpose.msra.mxu0 0.0
    %7150 = vmatprep.subr.mxu0 0.0
    %7151 = vmatpush1.xpose.msra.mxu0 0.0
    %7152 = vmatprep.subr.mxu0 0.0
    %7153 = vmatpush1.xpose.msra.mxu0 0.0
    %7154 = vmatprep.subr.mxu0 0.0
    %7155 = vmatpush1.xpose.msra.mxu0 0.0
    %7156 = vmatprep.subr.mxu0 0.0
    %7157 = vmatpush1.xpose.msra.mxu0 0.0
    %7158 = vmatprep.subr.mxu0 0.0
    %7159 = vmatpush1.xpose.msra.mxu0 0.0
    %7160 = vmatprep.subr.mxu0 0.0
    %7161 = vmatpush1.xpose.msra.mxu0 0.0
    %7162 = vmatprep.subr.mxu0 0.0
    %7163 = vmatpush1.xpose.msra.mxu0 0.0
    %7164 = vmatprep.subr.mxu0 0.0
    %7165 = vmatpush1.xpose.msra.mxu0 0.0
    %7166 = vmatprep.mubr.f32.mxu0 0.0
    %7167 = vmatmul.mubr.f32.gmra.mrb[0].mxu0 %v7094
    %v7168 = vpop.f32.mrb[0].mxu0
    %v7169 = vadd.f32 0.0, %v7168
    %v7170 = vpop.f32.mrb[0].mxu0
    %7171 = vdwg.mxu0
    %v7172 = vsel %vm146, %v7090, 0.0
    %v7173 = vrot.slane %v7172, 4
    %v7174 = vadd.f32 %v7172, %v7173
    %v7175 = vrot.slane %v7174, 2
    %v7176 = vadd.f32 %v7174, %v7175
    %v7177 = vrot.slane %v7176, 1
    %v7178 = vadd.f32 %v7176, %v7177
    %v7179 = vsel %vm146, %v7169, 0.0
    %v7180 = vrot.slane %v7179, 4
    %v7181 = vadd.f32 %v7179, %v7180
    %v7182 = vrot.slane %v7181, 2
    %v7183 = vadd.f32 %v7181, %v7182
    %v7184 = vrot.slane %v7183, 1
    %v7185 = vadd.f32 %v7183, %v7184
    %v7186 = vrcp.pop %v7178
    %v7187 = vmul.f32 %v7090, %v7186
    %v7188 = vrcp.pop %v7185
    %v7189 = vmul.f32 %v7169, %v7188
    %7190 = vxpose.xlu0.b32.start [1/16] %v7187, 128
    %7191 = vxpose.xlu0.b32.cont [2/16] 0.0, 128
    %7192 = vxpose.xlu0.b32.cont [3/16] 0.0, 128
    %7193 = vxpose.xlu0.b32.cont [4/16] 0.0, 128
    %7194 = vxpose.xlu0.b32.cont [5/16] 0.0, 128
    %7195 = vxpose.xlu0.b32.cont [6/16] 0.0, 128
    %7196 = vxpose.xlu0.b32.cont [7/16] 0.0, 128
    %7197 = vxpose.xlu0.b32.cont [8/16] 0.0, 128
    %7198 = vxpose.xlu0.b32.cont [9/16] 0.0, 128
    %7199 = vxpose.xlu0.b32.cont [10/16] 0.0, 128
    %7200 = vxpose.xlu0.b32.cont [11/16] 0.0, 128
    %7201 = vxpose.xlu0.b32.cont [12/16] 0.0, 128
    %7202 = vxpose.xlu0.b32.cont [13/16] 0.0, 128
    %7203 = vxpose.xlu0.b32.cont [14/16] 0.0, 128
    %7204 = vxpose.xlu0.b32.cont [15/16] 0.0, 128
    %7205 = vxpose.xlu0.b32.end [16/16] 0.0, 128
    %v7206 = vpop.trf.xlu0
    %v7207 = vpop.trf.xlu0
    %v7208 = vpop.trf.xlu0
    %v7209 = vpop.trf.xlu0
    %v7210 = vpop.trf.xlu0
    %v7211 = vpop.trf.xlu0
    %v7212 = vpop.trf.xlu0
    %v7213 = vpop.trf.xlu0
    %v7214 = vpop.trf.xlu0
    %v7215 = vpop.trf.xlu0
    %v7216 = vpop.trf.xlu0
    %v7217 = vpop.trf.xlu0
    %v7218 = vpop.trf.xlu0
    %v7219 = vpop.trf.xlu0
    %v7220 = vpop.trf.xlu0
    %v7221 = vpop.trf.xlu0
    %v7223 = vsel %vm6517, %v7206, 0
    %v7226 = vsel %vm6517, %v7207, 0
    %7228 = vmatprep.subr.mxu0 0.0
    %7229 = vmatpush1.msra.mxu0 %v6255
    %7230 = vmatprep.subr.mxu0 0.0
    %7231 = vmatpush1.msra.mxu0 0.0
    %7232 = vmatprep.subr.mxu0 0.0
    %7233 = vmatpush1.msra.mxu0 0.0
    %7234 = vmatprep.subr.mxu0 0.0
    %7235 = vmatpush1.msra.mxu0 0.0
    %7236 = vmatprep.subr.mxu0 0.0
    %7237 = vmatpush1.msra.mxu0 0.0
    %7238 = vmatprep.subr.mxu0 0.0
    %7239 = vmatpush1.msra.mxu0 0.0
    %7240 = vmatprep.subr.mxu0 0.0
    %7241 = vmatpush1.msra.mxu0 0.0
    %7242 = vmatprep.subr.mxu0 0.0
    %7243 = vmatpush1.msra.mxu0 0.0
    %7244 = vmatprep.subr.mxu0 0.0
    %7245 = vmatpush1.msra.mxu0 0.0
    %7246 = vmatprep.subr.mxu0 0.0
    %7247 = vmatpush1.msra.mxu0 0.0
    %7248 = vmatprep.subr.mxu0 0.0
    %7249 = vmatpush1.msra.mxu0 0.0
    %7250 = vmatprep.subr.mxu0 0.0
    %7251 = vmatpush1.msra.mxu0 0.0
    %7252 = vmatprep.subr.mxu0 0.0
    %7253 = vmatpush1.msra.mxu0 0.0
    %7254 = vmatprep.subr.mxu0 0.0
    %7255 = vmatpush1.msra.mxu0 0.0
    %7256 = vmatprep.subr.mxu0 0.0
    %7257 = vmatpush1.msra.mxu0 0.0
    %7258 = vmatprep.subr.mxu0 0.0
    %7259 = vmatpush1.msra.mxu0 0.0
    %7260 = vmatprep.subr.mxu0 0.0
    %7261 = vmatpush1.msra.mxu0 0.0
    %7262 = vmatprep.subr.mxu0 0.0
    %7263 = vmatpush1.msra.mxu0 0.0
    %7264 = vmatprep.subr.mxu0 0.0
    %7265 = vmatpush1.msra.mxu0 0.0
    %7266 = vmatprep.subr.mxu0 0.0
    %7267 = vmatpush1.msra.mxu0 0.0
    %7268 = vmatprep.subr.mxu0 0.0
    %7269 = vmatpush1.msra.mxu0 0.0
    %7270 = vmatprep.subr.mxu0 0.0
    %7271 = vmatpush1.msra.mxu0 0.0
    %7272 = vmatprep.subr.mxu0 0.0
    %7273 = vmatpush1.msra.mxu0 0.0
    %7274 = vmatprep.subr.mxu0 0.0
    %7275 = vmatpush1.msra.mxu0 0.0
    %7276 = vmatprep.subr.mxu0 0.0
    %7277 = vmatpush1.msra.mxu0 0.0
    %7278 = vmatprep.subr.mxu0 0.0
    %7279 = vmatpush1.msra.mxu0 0.0
    %7280 = vmatprep.subr.mxu0 0.0
    %7281 = vmatpush1.msra.mxu0 0.0
    %7282 = vmatprep.subr.mxu0 0.0
    %7283 = vmatpush1.msra.mxu0 0.0
    %7284 = vmatprep.subr.mxu0 0.0
    %7285 = vmatpush1.msra.mxu0 0.0
    %7286 = vmatprep.subr.mxu0 0.0
    %7287 = vmatpush1.msra.mxu0 0.0
    %7288 = vmatprep.subr.mxu0 0.0
    %7289 = vmatpush1.msra.mxu0 0.0
    %7290 = vmatprep.subr.mxu0 0.0
    %7291 = vmatpush1.msra.mxu0 0.0
    %7292 = vmatprep.mubr.f32.mxu0 0.0
    %7293 = vmatmul.mubr.f32.gmra.mrb[0].mxu0 %v7223
    %v7294 = vpop.f32.mrb[0].mxu0
    %v7295 = vadd.f32 0.0, %v7294
    %v7296 = vpop.f32.mrb[0].mxu0
    %7297 = vmatprep.mubr.f32.mxu0 0.0
    %7298 = vmatmul.mubr.f32.gmra.mrb[0].mxu0 %v7226
    %v7299 = vpop.f32.mrb[0].mxu0
    %v7300 = vadd.f32 0.0, %v7299
    %v7301 = vpop.f32.mrb[0].mxu0
    %7302 = vdwg.mxu0
    %7303 = vxpose.xlu0.b32.start [1/16] %v7189, 128
    %7304 = vxpose.xlu0.b32.cont [2/16] 0.0, 128
    %7305 = vxpose.xlu0.b32.cont [3/16] 0.0, 128
    %7306 = vxpose.xlu0.b32.cont [4/16] 0.0, 128
    %7307 = vxpose.xlu0.b32.cont [5/16] 0.0, 128
    %7308 = vxpose.xlu0.b32.cont [6/16] 0.0, 128
    %7309 = vxpose.xlu0.b32.cont [7/16] 0.0, 128
    %7310 = vxpose.xlu0.b32.cont [8/16] 0.0, 128
    %7311 = vxpose.xlu0.b32.cont [9/16] 0.0, 128
    %7312 = vxpose.xlu0.b32.cont [10/16] 0.0, 128
    %7313 = vxpose.xlu0.b32.cont [11/16] 0.0, 128
    %7314 = vxpose.xlu0.b32.cont [12/16] 0.0, 128
    %7315 = vxpose.xlu0.b32.cont [13/16] 0.0, 128
    %7316 = vxpose.xlu0.b32.cont [14/16] 0.0, 128
    %7317 = vxpose.xlu0.b32.cont [15/16] 0.0, 128
    %7318 = vxpose.xlu0.b32.end [16/16] 0.0, 128
    %v7319 = vpop.trf.xlu0
    %v7320 = vpop.trf.xlu0
    %v7321 = vpop.trf.xlu0
    %v7322 = vpop.trf.xlu0
    %v7323 = vpop.trf.xlu0
    %v7324 = vpop.trf.xlu0
    %v7325 = vpop.trf.xlu0
    %v7326 = vpop.trf.xlu0
    %v7327 = vpop.trf.xlu0
    %v7328 = vpop.trf.xlu0
    %v7329 = vpop.trf.xlu0
    %v7330 = vpop.trf.xlu0
    %v7331 = vpop.trf.xlu0
    %v7332 = vpop.trf.xlu0
    %v7333 = vpop.trf.xlu0
    %v7334 = vpop.trf.xlu0
    %v7336 = vsel %vm6517, %v7319, 0
    %v7339 = vsel %vm6517, %v7320, 0
    %7341 = vmatprep.subr.mxu0 0.0
    %7342 = vmatpush1.msra.mxu0 %v6256
    %7343 = vmatprep.subr.mxu0 0.0
    %7344 = vmatpush1.msra.mxu0 0.0
    %7345 = vmatprep.subr.mxu0 0.0
    %7346 = vmatpush1.msra.mxu0 0.0
    %7347 = vmatprep.subr.mxu0 0.0
    %7348 = vmatpush1.msra.mxu0 0.0
    %7349 = vmatprep.subr.mxu0 0.0
    %7350 = vmatpush1.msra.mxu0 0.0
    %7351 = vmatprep.subr.mxu0 0.0
    %7352 = vmatpush1.msra.mxu0 0.0
    %7353 = vmatprep.subr.mxu0 0.0
    %7354 = vmatpush1.msra.mxu0 0.0
    %7355 = vmatprep.subr.mxu0 0.0
    %7356 = vmatpush1.msra.mxu0 0.0
    %7357 = vmatprep.subr.mxu0 0.0
    %7358 = vmatpush1.msra.mxu0 0.0
    %7359 = vmatprep.subr.mxu0 0.0
    %7360 = vmatpush1.msra.mxu0 0.0
    %7361 = vmatprep.subr.mxu0 0.0
    %7362 = vmatpush1.msra.mxu0 0.0
    %7363 = vmatprep.subr.mxu0 0.0
    %7364 = vmatpush1.msra.mxu0 0.0
    %7365 = vmatprep.subr.mxu0 0.0
    %7366 = vmatpush1.msra.mxu0 0.0
    %7367 = vmatprep.subr.mxu0 0.0
    %7368 = vmatpush1.msra.mxu0 0.0
    %7369 = vmatprep.subr.mxu0 0.0
    %7370 = vmatpush1.msra.mxu0 0.0
    %7371 = vmatprep.subr.mxu0 0.0
    %7372 = vmatpush1.msra.mxu0 0.0
    %7373 = vmatprep.subr.mxu0 0.0
    %7374 = vmatpush1.msra.mxu0 0.0
    %7375 = vmatprep.subr.mxu0 0.0
    %7376 = vmatpush1.msra.mxu0 0.0
    %7377 = vmatprep.subr.mxu0 0.0
    %7378 = vmatpush1.msra.mxu0 0.0
    %7379 = vmatprep.subr.mxu0 0.0
    %7380 = vmatpush1.msra.mxu0 0.0
    %7381 = vmatprep.subr.mxu0 0.0
    %7382 = vmatpush1.msra.mxu0 0.0
    %7383 = vmatprep.subr.mxu0 0.0
    %7384 = vmatpush1.msra.mxu0 0.0
    %7385 = vmatprep.subr.mxu0 0.0
    %7386 = vmatpush1.msra.mxu0 0.0
    %7387 = vmatprep.subr.mxu0 0.0
    %7388 = vmatpush1.msra.mxu0 0.0
    %7389 = vmatprep.subr.mxu0 0.0
    %7390 = vmatpush1.msra.mxu0 0.0
    %7391 = vmatprep.subr.mxu0 0.0
    %7392 = vmatpush1.msra.mxu0 0.0
    %7393 = vmatprep.subr.mxu0 0.0
    %7394 = vmatpush1.msra.mxu0 0.0
    %7395 = vmatprep.subr.mxu0 0.0
    %7396 = vmatpush1.msra.mxu0 0.0
    %7397 = vmatprep.subr.mxu0 0.0
    %7398 = vmatpush1.msra.mxu0 0.0
    %7399 = vmatprep.subr.mxu0 0.0
    %7400 = vmatpush1.msra.mxu0 0.0
    %7401 = vmatprep.subr.mxu0 0.0
    %7402 = vmatpush1.msra.mxu0 0.0
    %7403 = vmatprep.subr.mxu0 0.0
    %7404 = vmatpush1.msra.mxu0 0.0
    %7405 = vmatprep.mubr.f32.mxu0 0.0
    %7406 = vmatmul.mubr.f32.gmra.mrb[0].mxu0 %v7336
    %v7407 = vpop.f32.mrb[0].mxu0
    %v7408 = vadd.f32 0.0, %v7407
    %v7409 = vpop.f32.mrb[0].mxu0
    %7410 = vmatprep.mubr.f32.mxu0 0.0
    %7411 = vmatmul.mubr.f32.gmra.mrb[0].mxu0 %v7339
    %v7412 = vpop.f32.mrb[0].mxu0
    %v7413 = vadd.f32 0.0, %v7412
    %v7414 = vpop.f32.mrb[0].mxu0
    %7415 = vdwg.mxu0
    %v7416 = vmul.f32 %v6854, %v7295
    %v7417 = vmul.f32 %v6855, %v7300
    %v7418 = vmul.f32 %v6856, %v7408
    %v7419 = vmul.f32 %v6857, %v7413
    %v7420 = vsel %vm6275, %v7416, 0.0
    %7421 = vadd.xlane.f32.xlu0 %v7420
    %v7422 = vpop.xlane.xlu0 %7421
    %v7423 = vsel %vm6275, %v7417, 0.0
    %7424 = vadd.xlane.f32.xlu0 %v7423
    %v7425 = vpop.xlane.xlu0 %7424
    %v7426 = vsel %vm6275, %v7418, 0.0
    %7427 = vadd.xlane.f32.xlu0 %v7426
    %v7428 = vpop.xlane.xlu0 %7427
    %v7429 = vsel %vm6275, %v7419, 0.0
    %7430 = vadd.xlane.f32.xlu0 %v7429
    %v7431 = vpop.xlane.xlu0 %7430
    %v7432 = vmul.f32 %v6854, %v6854
    %v7433 = vmul.f32 %v6855, %v6855
    %v7434 = vmul.f32 %v6856, %v6856
    %v7435 = vmul.f32 %v6857, %v6857
    %v7436 = vsel %vm6275, %v7432, 0.0
    %7437 = vadd.xlane.f32.xlu0 %v7436
    %v7438 = vpop.xlane.xlu0 %7437
    %v7439 = vsel %vm6275, %v7433, 0.0
    %7440 = vadd.xlane.f32.xlu0 %v7439
    %v7441 = vpop.xlane.xlu0 %7440
    %v7442 = vsel %vm6275, %v7434, 0.0
    %7443 = vadd.xlane.f32.xlu0 %v7442
    %v7444 = vpop.xlane.xlu0 %7443
    %v7445 = vsel %vm6275, %v7435, 0.0
    %7446 = vadd.xlane.f32.xlu0 %v7445
    %v7447 = vpop.xlane.xlu0 %7446
    %v7448 = vmul.f32 %v7295, %v7295
    %v7449 = vmul.f32 %v7300, %v7300
    %v7450 = vmul.f32 %v7408, %v7408
    %v7451 = vmul.f32 %v7413, %v7413
    %v7452 = vsel %vm6275, %v7448, 0.0
    %7453 = vadd.xlane.f32.xlu0 %v7452
    %v7454 = vpop.xlane.xlu0 %7453
    %v7455 = vsel %vm6275, %v7449, 0.0
    %7456 = vadd.xlane.f32.xlu0 %v7455
    %v7457 = vpop.xlane.xlu0 %7456
    %v7458 = vsel %vm6275, %v7450, 0.0
    %7459 = vadd.xlane.f32.xlu0 %v7458
    %v7460 = vpop.xlane.xlu0 %7459
    %v7461 = vsel %vm6275, %v7451, 0.0
    %7462 = vadd.xlane.f32.xlu0 %v7461
    %v7463 = vpop.xlane.xlu0 %7462
    %v7464 = vmax.f32 %v7438, 1e-12
    %v7465 = vmax.f32 %v7441, 1e-12
    %v7466 = vmax.f32 %v7444, 1e-12
    %v7467 = vmax.f32 %v7447, 1e-12
    %v7468 = vrsqrt.pop %v7464
    %v7469 = vrsqrt.pop %v7465
    %v7470 = vrsqrt.pop %v7466
    %v7471 = vrsqrt.pop %v7467
    %v7472 = vmul.f32 %v7422, %v7468
    %v7473 = vmul.f32 %v7425, %v7469
    %v7474 = vmul.f32 %v7428, %v7470
    %v7475 = vmul.f32 %v7431, %v7471
    %v7476 = vmax.f32 %v7454, 1e-12
    %v7477 = vmax.f32 %v7457, 1e-12
    %v7478 = vmax.f32 %v7460, 1e-12
    %v7479 = vmax.f32 %v7463, 1e-12
    %v7480 = vrsqrt.pop %v7476
    %v7481 = vrsqrt.pop %v7477
    %v7482 = vrsqrt.pop %v7478
    %v7483 = vrsqrt.pop %v7479
    %v7484 = vmul.f32 %v7472, %v7480
    %v7485 = vmul.f32 %v7473, %v7481
    %v7486 = vmul.f32 %v7474, %v7482
    %v7487 = vmul.f32 %v7475, %v7483
    %v7488 = vsub.f32 1.0, %v7484
    %v7489 = vsub.f32 1.0, %v7485
    %v7490 = vsub.f32 1.0, %v7486
    %v7491 = vsub.f32 1.0, %v7487
    %v7492 = vmul.f32 %v7295, %v7488
    %v7493 = vmul.f32 %v7300, %v7489
    %v7494 = vmul.f32 %v7408, %v7490
    %v7495 = vmul.f32 %v7413, %v7491
    %v7497 = vsel %vm6275, %v7492, 0
    %v7500 = vsel %vm6275, %v7493, 0
    %v7503 = vsel %vm6275, %v7494, 0
    %v7506 = vsel %vm6275, %v7495, 0
    %7508 = vmatprep.subr.mxu0 0.0
    %7509 = vmatpush1.msra.mxu0 %v6257
    %7510 = vmatprep.subr.mxu0 0.0
    %7511 = vmatpush1.msra.mxu0 %v6258
    %7512 = vmatprep.subr.mxu0 0.0
    %7513 = vmatpush1.msra.mxu0 %v6259
    %7514 = vmatprep.subr.mxu0 0.0
    %7515 = vmatpush1.msra.mxu0 %v6260
    %7516 = vmatprep.subr.mxu0 0.0
    %7517 = vmatpush1.msra.mxu0 %v6261
    %7518 = vmatprep.subr.mxu0 0.0
    %7519 = vmatpush1.msra.mxu0 %v6262
    %7520 = vmatprep.subr.mxu0 0.0
    %7521 = vmatpush1.msra.mxu0 %v6263
    %7522 = vmatprep.subr.mxu0 0.0
    %7523 = vmatpush1.msra.mxu0 %v6264
    %7524 = vmatprep.subr.mxu0 0.0
    %7525 = vmatpush1.msra.mxu0 0.0
    %7526 = vmatprep.subr.mxu0 0.0
    %7527 = vmatpush1.msra.mxu0 0.0
    %7528 = vmatprep.subr.mxu0 0.0
    %7529 = vmatpush1.msra.mxu0 0.0
    %7530 = vmatprep.subr.mxu0 0.0
    %7531 = vmatpush1.msra.mxu0 0.0
    %7532 = vmatprep.subr.mxu0 0.0
    %7533 = vmatpush1.msra.mxu0 0.0
    %7534 = vmatprep.subr.mxu0 0.0
    %7535 = vmatpush1.msra.mxu0 0.0
    %7536 = vmatprep.subr.mxu0 0.0
    %7537 = vmatpush1.msra.mxu0 0.0
    %7538 = vmatprep.subr.mxu0 0.0
    %7539 = vmatpush1.msra.mxu0 0.0
    %7540 = vmatprep.subr.mxu0 0.0
    %7541 = vmatpush1.msra.mxu0 0.0
    %7542 = vmatprep.subr.mxu0 0.0
    %7543 = vmatpush1.msra.mxu0 0.0
    %7544 = vmatprep.subr.mxu0 0.0
    %7545 = vmatpush1.msra.mxu0 0.0
    %7546 = vmatprep.subr.mxu0 0.0
    %7547 = vmatpush1.msra.mxu0 0.0
    %7548 = vmatprep.subr.mxu0 0.0
    %7549 = vmatpush1.msra.mxu0 0.0
    %7550 = vmatprep.subr.mxu0 0.0
    %7551 = vmatpush1.msra.mxu0 0.0
    %7552 = vmatprep.subr.mxu0 0.0
    %7553 = vmatpush1.msra.mxu0 0.0
    %7554 = vmatprep.subr.mxu0 0.0
    %7555 = vmatpush1.msra.mxu0 0.0
    %7556 = vmatprep.subr.mxu0 0.0
    %7557 = vmatpush1.msra.mxu0 0.0
    %7558 = vmatprep.subr.mxu0 0.0
    %7559 = vmatpush1.msra.mxu0 0.0
    %7560 = vmatprep.subr.mxu0 0.0
    %7561 = vmatpush1.msra.mxu0 0.0
    %7562 = vmatprep.subr.mxu0 0.0
    %7563 = vmatpush1.msra.mxu0 0.0
    %7564 = vmatprep.subr.mxu0 0.0
    %7565 = vmatpush1.msra.mxu0 0.0
    %7566 = vmatprep.subr.mxu0 0.0
    %7567 = vmatpush1.msra.mxu0 0.0
    %7568 = vmatprep.subr.mxu0 0.0
    %7569 = vmatpush1.msra.mxu0 0.0
    %7570 = vmatprep.subr.mxu0 0.0
    %7571 = vmatpush1.msra.mxu0 0.0
    %7572 = vmatprep.mubr.f32.mxu0 0.0
    %7573 = vmatmul.mubr.f32.gmra.mrb[0].mxu0 %v7497
    %v7574 = vpop.f32.mrb[0].mxu0
    %v7575 = vadd.f32 %v6273, %v7574
    %v7576 = vpop.f32.mrb[0].mxu0
    %7577 = vmatprep.mubr.f32.mxu0 0.0
    %7578 = vmatmul.mubr.f32.gmra.mrb[0].mxu0 %v7500
    %v7579 = vpop.f32.mrb[0].mxu0
    %v7580 = vadd.f32 %v6273, %v7579
    %v7581 = vpop.f32.mrb[0].mxu0
    %7582 = vmatprep.mubr.f32.mxu0 0.0
    %7583 = vmatmul.mubr.f32.gmra.mrb[0].mxu0 %v7503
    %v7584 = vpop.f32.mrb[0].mxu0
    %v7585 = vadd.f32 %v6273, %v7584
    %v7586 = vpop.f32.mrb[0].mxu0
    %7587 = vmatprep.mubr.f32.mxu0 0.0
    %7588 = vmatmul.mubr.f32.gmra.mrb[0].mxu0 %v7506
    %v7589 = vpop.f32.mrb[0].mxu0
    %v7590 = vadd.f32 %v6273, %v7589
    %v7591 = vpop.f32.mrb[0].mxu0
    %7592 = vdwg.mxu0
    %v7593 = vtanh.pop %v7575
    %v7594 = vtanh.pop %v7580
    %v7595 = vtanh.pop %v7585
    %v7596 = vtanh.pop %v7590
    %v7598 = vsel %vm146, %v7593, 0
    %v7601 = vsel %vm146, %v7594, 0
    %v7604 = vsel %vm146, %v7595, 0
    %v7607 = vsel %vm146, %v7596, 0
    %7609 = vmatprep.subr.mxu0 0.0
    %7610 = vmatpush1.msra.mxu0 %v6266
    %7611 = vmatprep.subr.mxu0 0.0
    %7612 = vmatpush1.msra.mxu0 %v6267
    %7613 = vmatprep.subr.mxu0 0.0
    %7614 = vmatpush1.msra.mxu0 0.0
    %7615 = vmatprep.subr.mxu0 0.0
    %7616 = vmatpush1.msra.mxu0 0.0
    %7617 = vmatprep.subr.mxu0 0.0
    %7618 = vmatpush1.msra.mxu0 0.0
    %7619 = vmatprep.subr.mxu0 0.0
    %7620 = vmatpush1.msra.mxu0 0.0
    %7621 = vmatprep.subr.mxu0 0.0
    %7622 = vmatpush1.msra.mxu0 0.0
    %7623 = vmatprep.subr.mxu0 0.0
    %7624 = vmatpush1.msra.mxu0 0.0
    %7625 = vmatprep.subr.mxu0 0.0
    %7626 = vmatpush1.msra.mxu0 0.0
    %7627 = vmatprep.subr.mxu0 0.0
    %7628 = vmatpush1.msra.mxu0 0.0
    %7629 = vmatprep.subr.mxu0 0.0
    %7630 = vmatpush1.msra.mxu0 0.0
    %7631 = vmatprep.subr.mxu0 0.0
    %7632 = vmatpush1.msra.mxu0 0.0
    %7633 = vmatprep.subr.mxu0 0.0
    %7634 = vmatpush1.msra.mxu0 0.0
    %7635 = vmatprep.subr.mxu0 0.0
    %7636 = vmatpush1.msra.mxu0 0.0
    %7637 = vmatprep.subr.mxu0 0.0
    %7638 = vmatpush1.msra.mxu0 0.0
    %7639 = vmatprep.subr.mxu0 0.0
    %7640 = vmatpush1.msra.mxu0 0.0
    %7641 = vmatprep.subr.mxu0 0.0
    %7642 = vmatpush1.msra.mxu0 0.0
    %7643 = vmatprep.subr.mxu0 0.0
    %7644 = vmatpush1.msra.mxu0 0.0
    %7645 = vmatprep.subr.mxu0 0.0
    %7646 = vmatpush1.msra.mxu0 0.0
    %7647 = vmatprep.subr.mxu0 0.0
    %7648 = vmatpush1.msra.mxu0 0.0
    %7649 = vmatprep.subr.mxu0 0.0
    %7650 = vmatpush1.msra.mxu0 0.0
    %7651 = vmatprep.subr.mxu0 0.0
    %7652 = vmatpush1.msra.mxu0 0.0
    %7653 = vmatprep.subr.mxu0 0.0
    %7654 = vmatpush1.msra.mxu0 0.0
    %7655 = vmatprep.subr.mxu0 0.0
    %7656 = vmatpush1.msra.mxu0 0.0
    %7657 = vmatprep.subr.mxu0 0.0
    %7658 = vmatpush1.msra.mxu0 0.0
    %7659 = vmatprep.subr.mxu0 0.0
    %7660 = vmatpush1.msra.mxu0 0.0
    %7661 = vmatprep.subr.mxu0 0.0
    %7662 = vmatpush1.msra.mxu0 0.0
    %7663 = vmatprep.subr.mxu0 0.0
    %7664 = vmatpush1.msra.mxu0 0.0
    %7665 = vmatprep.subr.mxu0 0.0
    %7666 = vmatpush1.msra.mxu0 0.0
    %7667 = vmatprep.subr.mxu0 0.0
    %7668 = vmatpush1.msra.mxu0 0.0
    %7669 = vmatprep.subr.mxu0 0.0
    %7670 = vmatpush1.msra.mxu0 0.0
    %7671 = vmatprep.subr.mxu0 0.0
    %7672 = vmatpush1.msra.mxu0 0.0
    %7673 = vmatprep.mubr.f32.mxu0 0.0
    %7674 = vmatmul.mubr.f32.gmra.mrb[0].mxu0 %v7598
    %v7675 = vpop.f32.mrb[0].mxu0
    %v7676 = vadd.f32 %v6363, %v7675
    %v7677 = vpop.f32.mrb[0].mxu0
    %7678 = vmatprep.mubr.f32.mxu0 0.0
    %7679 = vmatmul.mubr.f32.gmra.mrb[0].mxu0 %v7601
    %v7680 = vpop.f32.mrb[0].mxu0
    %v7681 = vadd.f32 %v6363, %v7680
    %v7682 = vpop.f32.mrb[0].mxu0
    %7683 = vmatprep.mubr.f32.mxu0 0.0
    %7684 = vmatmul.mubr.f32.gmra.mrb[0].mxu0 %v7604
    %v7685 = vpop.f32.mrb[0].mxu0
    %v7686 = vadd.f32 %v6363, %v7685
    %v7687 = vpop.f32.mrb[0].mxu0
    %7688 = vmatprep.mubr.f32.mxu0 0.0
    %7689 = vmatmul.mubr.f32.gmra.mrb[0].mxu0 %v7607
    %v7690 = vpop.f32.mrb[0].mxu0
    %v7691 = vadd.f32 %v6363, %v7690
    %v7692 = vpop.f32.mrb[0].mxu0
    %7693 = vdwg.mxu0
    %v7694 = vsel %vm6446, %v7676, -inf
    %v7695 = vsel %vm6446, %v7681, -inf
    %v7696 = vmax.f32 %v7694, %v7695
    %v7697 = vrot.slane %v7696, 4
    %v7698 = vmax.f32 %v7696, %v7697
    %v7699 = vrot.slane %v7698, 2
    %v7700 = vmax.f32 %v7698, %v7699
    %v7701 = vrot.slane %v7700, 1
    %v7702 = vmax.f32 %v7700, %v7701
    %v7703 = vsel %vm6446, %v7686, -inf
    %v7704 = vsel %vm6446, %v7691, -inf
    %v7705 = vmax.f32 %v7703, %v7704
    %v7706 = vrot.slane %v7705, 4
    %v7707 = vmax.f32 %v7705, %v7706
    %v7708 = vrot.slane %v7707, 2
    %v7709 = vmax.f32 %v7707, %v7708
    %v7710 = vrot.slane %v7709, 1
    %v7711 = vmax.f32 %v7709, %v7710
    %v7712 = vsub.f32 %v7676, %v7702
    %v7713 = vsub.f32 %v7681, %v7702
    %v7714 = vsub.f32 %v7686, %v7711
    %v7715 = vsub.f32 %v7691, %v7711
    %v7716 = vmul.f32 %v7712, 1.442695
    %v7717 = vpow.pop %v7716
    %v7718 = vmul.f32 %v7713, 1.442695
    %v7719 = vpow.pop %v7718
    %v7720 = vmul.f32 %v7714, 1.442695
    %v7721 = vpow.pop %v7720
    %v7722 = vmul.f32 %v7715, 1.442695
    %v7723 = vpow.pop %v7722
    %v7724 = vsel %vm6446, %v7717, 0.0
    %v7725 = vsel %vm6446, %v7719, 0.0
    %v7726 = vadd.f32 %v7724, %v7725
    %v7727 = vrot.slane %v7726, 4
    %v7728 = vadd.f32 %v7726, %v7727
    %v7729 = vrot.slane %v7728, 2
    %v7730 = vadd.f32 %v7728, %v7729
    %v7731 = vrot.slane %v7730, 1
    %v7732 = vadd.f32 %v7730, %v7731
    %v7733 = vsel %vm6446, %v7721, 0.0
    %v7734 = vsel %vm6446, %v7723, 0.0
    %v7735 = vadd.f32 %v7733, %v7734
    %v7736 = vrot.slane %v7735, 4
    %v7737 = vadd.f32 %v7735, %v7736
    %v7738 = vrot.slane %v7737, 2
    %v7739 = vadd.f32 %v7737, %v7738
    %v7740 = vrot.slane %v7739, 1
    %v7741 = vadd.f32 %v7739, %v7740
    %v7742 = vrcp.pop %v7732
    %v7743 = vrcp.pop %v7741
    %v7744 = vmul.f32 %v7717, %v7742
    %v7745 = vmul.f32 %v7719, %v7742
    %v7746 = vmul.f32 %v7721, %v7743
    %v7747 = vmul.f32 %v7723, %v7743
    %7748 = vxpose.xlu0.b32.start [1/16] %v7744, 128
    %7749 = vxpose.xlu0.b32.cont [2/16] %v7745, 128
    %7750 = vxpose.xlu0.b32.cont [3/16] 0.0, 128
    %7751 = vxpose.xlu0.b32.cont [4/16] 0.0, 128
    %7752 = vxpose.xlu0.b32.cont [5/16] 0.0, 128
    %7753 = vxpose.xlu0.b32.cont [6/16] 0.0, 128
    %7754 = vxpose.xlu0.b32.cont [7/16] 0.0, 128
    %7755 = vxpose.xlu0.b32.cont [8/16] 0.0, 128
    %7756 = vxpose.xlu0.b32.cont [9/16] 0.0, 128
    %7757 = vxpose.xlu0.b32.cont [10/16] 0.0, 128
    %7758 = vxpose.xlu0.b32.cont [11/16] 0.0, 128
    %7759 = vxpose.xlu0.b32.cont [12/16] 0.0, 128
    %7760 = vxpose.xlu0.b32.cont [13/16] 0.0, 128
    %7761 = vxpose.xlu0.b32.cont [14/16] 0.0, 128
    %7762 = vxpose.xlu0.b32.cont [15/16] 0.0, 128
    %7763 = vxpose.xlu0.b32.end [16/16] 0.0, 128
    %v7764 = vpop.trf.xlu0
    %v7765 = vpop.trf.xlu0
    %v7766 = vpop.trf.xlu0
    %v7767 = vpop.trf.xlu0
    %v7768 = vpop.trf.xlu0
    %v7769 = vpop.trf.xlu0
    %v7770 = vpop.trf.xlu0
    %v7771 = vpop.trf.xlu0
    %v7772 = vpop.trf.xlu0
    %v7773 = vpop.trf.xlu0
    %v7774 = vpop.trf.xlu0
    %v7775 = vpop.trf.xlu0
    %v7776 = vpop.trf.xlu0
    %v7777 = vpop.trf.xlu0
    %v7778 = vpop.trf.xlu0
    %v7779 = vpop.trf.xlu0
    %v7781 = vsel %vm146, %v7764, 0
    %7783 = vmatprep.subr.mxu0 0.0
    %7784 = vmatpush1.msra.mxu0 %v7492
    %7785 = vmatprep.subr.mxu0 0.0
    %7786 = vmatpush1.msra.mxu0 %v7493
    %7787 = vmatprep.subr.mxu0 0.0
    %7788 = vmatpush1.msra.mxu0 0.0
    %7789 = vmatprep.subr.mxu0 0.0
    %7790 = vmatpush1.msra.mxu0 0.0
    %7791 = vmatprep.subr.mxu0 0.0
    %7792 = vmatpush1.msra.mxu0 0.0
    %7793 = vmatprep.subr.mxu0 0.0
    %7794 = vmatpush1.msra.mxu0 0.0
    %7795 = vmatprep.subr.mxu0 0.0
    %7796 = vmatpush1.msra.mxu0 0.0
    %7797 = vmatprep.subr.mxu0 0.0
    %7798 = vmatpush1.msra.mxu0 0.0
    %7799 = vmatprep.subr.mxu0 0.0
    %7800 = vmatpush1.msra.mxu0 0.0
    %7801 = vmatprep.subr.mxu0 0.0
    %7802 = vmatpush1.msra.mxu0 0.0
    %7803 = vmatprep.subr.mxu0 0.0
    %7804 = vmatpush1.msra.mxu0 0.0
    %7805 = vmatprep.subr.mxu0 0.0
    %7806 = vmatpush1.msra.mxu0 0.0
    %7807 = vmatprep.subr.mxu0 0.0
    %7808 = vmatpush1.msra.mxu0 0.0
    %7809 = vmatprep.subr.mxu0 0.0
    %7810 = vmatpush1.msra.mxu0 0.0
    %7811 = vmatprep.subr.mxu0 0.0
    %7812 = vmatpush1.msra.mxu0 0.0
    %7813 = vmatprep.subr.mxu0 0.0
    %7814 = vmatpush1.msra.mxu0 0.0
    %7815 = vmatprep.subr.mxu0 0.0
    %7816 = vmatpush1.msra.mxu0 0.0
    %7817 = vmatprep.subr.mxu0 0.0
    %7818 = vmatpush1.msra.mxu0 0.0
    %7819 = vmatprep.subr.mxu0 0.0
    %7820 = vmatpush1.msra.mxu0 0.0
    %7821 = vmatprep.subr.mxu0 0.0
    %7822 = vmatpush1.msra.mxu0 0.0
    %7823 = vmatprep.subr.mxu0 0.0
    %7824 = vmatpush1.msra.mxu0 0.0
    %7825 = vmatprep.subr.mxu0 0.0
    %7826 = vmatpush1.msra.mxu0 0.0
    %7827 = vmatprep.subr.mxu0 0.0
    %7828 = vmatpush1.msra.mxu0 0.0
    %7829 = vmatprep.subr.mxu0 0.0
    %7830 = vmatpush1.msra.mxu0 0.0
    %7831 = vmatprep.subr.mxu0 0.0
    %7832 = vmatpush1.msra.mxu0 0.0
    %7833 = vmatprep.subr.mxu0 0.0
    %7834 = vmatpush1.msra.mxu0 0.0
    %7835 = vmatprep.subr.mxu0 0.0
    %7836 = vmatpush1.msra.mxu0 0.0
    %7837 = vmatprep.subr.mxu0 0.0
    %7838 = vmatpush1.msra.mxu0 0.0
    %7839 = vmatprep.subr.mxu0 0.0
    %7840 = vmatpush1.msra.mxu0 0.0
    %7841 = vmatprep.subr.mxu0 0.0
    %7842 = vmatpush1.msra.mxu0 0.0
    %7843 = vmatprep.subr.mxu0 0.0
    %7844 = vmatpush1.msra.mxu0 0.0
    %7845 = vmatprep.subr.mxu0 0.0
    %7846 = vmatpush1.msra.mxu0 0.0
    %7847 = vmatprep.mubr.f32.mxu0 0.0
    %7848 = vmatmul.mubr.f32.gmra.mrb[0].mxu0 %v7781
    %v7849 = vpop.f32.mrb[0].mxu0
    %v7850 = vadd.f32 0.0, %v7849
    %v7851 = vpop.f32.mrb[0].mxu0
    %7852 = vdwg.mxu0
    %7853 = vxpose.xlu0.b32.start [1/16] %v7746, 128
    %7854 = vxpose.xlu0.b32.cont [2/16] %v7747, 128
    %7855 = vxpose.xlu0.b32.cont [3/16] 0.0, 128
    %7856 = vxpose.xlu0.b32.cont [4/16] 0.0, 128
    %7857 = vxpose.xlu0.b32.cont [5/16] 0.0, 128
    %7858 = vxpose.xlu0.b32.cont [6/16] 0.0, 128
    %7859 = vxpose.xlu0.b32.cont [7/16] 0.0, 128
    %7860 = vxpose.xlu0.b32.cont [8/16] 0.0, 128
    %7861 = vxpose.xlu0.b32.cont [9/16] 0.0, 128
    %7862 = vxpose.xlu0.b32.cont [10/16] 0.0, 128
    %7863 = vxpose.xlu0.b32.cont [11/16] 0.0, 128
    %7864 = vxpose.xlu0.b32.cont [12/16] 0.0, 128
    %7865 = vxpose.xlu0.b32.cont [13/16] 0.0, 128
    %7866 = vxpose.xlu0.b32.cont [14/16] 0.0, 128
    %7867 = vxpose.xlu0.b32.cont [15/16] 0.0, 128
    %7868 = vxpose.xlu0.b32.end [16/16] 0.0, 128
    %v7869 = vpop.trf.xlu0
    %v7870 = vpop.trf.xlu0
    %v7871 = vpop.trf.xlu0
    %v7872 = vpop.trf.xlu0
    %v7873 = vpop.trf.xlu0
    %v7874 = vpop.trf.xlu0
    %v7875 = vpop.trf.xlu0
    %v7876 = vpop.trf.xlu0
    %v7877 = vpop.trf.xlu0
    %v7878 = vpop.trf.xlu0
    %v7879 = vpop.trf.xlu0
    %v7880 = vpop.trf.xlu0
    %v7881 = vpop.trf.xlu0
    %v7882 = vpop.trf.xlu0
    %v7883 = vpop.trf.xlu0
    %v7884 = vpop.trf.xlu0
    %v7886 = vsel %vm146, %v7869, 0
    %7888 = vmatprep.subr.mxu0 0.0
    %7889 = vmatpush1.msra.mxu0 %v7494
    %7890 = vmatprep.subr.mxu0 0.0
    %7891 = vmatpush1.msra.mxu0 %v7495
    %7892 = vmatprep.subr.mxu0 0.0
    %7893 = vmatpush1.msra.mxu0 0.0
    %7894 = vmatprep.subr.mxu0 0.0
    %7895 = vmatpush1.msra.mxu0 0.0
    %7896 = vmatprep.subr.mxu0 0.0
    %7897 = vmatpush1.msra.mxu0 0.0
    %7898 = vmatprep.subr.mxu0 0.0
    %7899 = vmatpush1.msra.mxu0 0.0
    %7900 = vmatprep.subr.mxu0 0.0
    %7901 = vmatpush1.msra.mxu0 0.0
    %7902 = vmatprep.subr.mxu0 0.0
    %7903 = vmatpush1.msra.mxu0 0.0
    %7904 = vmatprep.subr.mxu0 0.0
    %7905 = vmatpush1.msra.mxu0 0.0
    %7906 = vmatprep.subr.mxu0 0.0
    %7907 = vmatpush1.msra.mxu0 0.0
    %7908 = vmatprep.subr.mxu0 0.0
    %7909 = vmatpush1.msra.mxu0 0.0
    %7910 = vmatprep.subr.mxu0 0.0
    %7911 = vmatpush1.msra.mxu0 0.0
    %7912 = vmatprep.subr.mxu0 0.0
    %7913 = vmatpush1.msra.mxu0 0.0
    %7914 = vmatprep.subr.mxu0 0.0
    %7915 = vmatpush1.msra.mxu0 0.0
    %7916 = vmatprep.subr.mxu0 0.0
    %7917 = vmatpush1.msra.mxu0 0.0
    %7918 = vmatprep.subr.mxu0 0.0
    %7919 = vmatpush1.msra.mxu0 0.0
    %7920 = vmatprep.subr.mxu0 0.0
    %7921 = vmatpush1.msra.mxu0 0.0
    %7922 = vmatprep.subr.mxu0 0.0
    %7923 = vmatpush1.msra.mxu0 0.0
    %7924 = vmatprep.subr.mxu0 0.0
    %7925 = vmatpush1.msra.mxu0 0.0
    %7926 = vmatprep.subr.mxu0 0.0
    %7927 = vmatpush1.msra.mxu0 0.0
    %7928 = vmatprep.subr.mxu0 0.0
    %7929 = vmatpush1.msra.mxu0 0.0
    %7930 = vmatprep.subr.mxu0 0.0
    %7931 = vmatpush1.msra.mxu0 0.0
    %7932 = vmatprep.subr.mxu0 0.0
    %7933 = vmatpush1.msra.mxu0 0.0
    %7934 = vmatprep.subr.mxu0 0.0
    %7935 = vmatpush1.msra.mxu0 0.0
    %7936 = vmatprep.subr.mxu0 0.0
    %7937 = vmatpush1.msra.mxu0 0.0
    %7938 = vmatprep.subr.mxu0 0.0
    %7939 = vmatpush1.msra.mxu0 0.0
    %7940 = vmatprep.subr.mxu0 0.0
    %7941 = vmatpush1.msra.mxu0 0.0
    %7942 = vmatprep.subr.mxu0 0.0
    %7943 = vmatpush1.msra.mxu0 0.0
    %7944 = vmatprep.subr.mxu0 0.0
    %7945 = vmatpush1.msra.mxu0 0.0
    %7946 = vmatprep.subr.mxu0 0.0
    %7947 = vmatpush1.msra.mxu0 0.0
    %7948 = vmatprep.subr.mxu0 0.0
    %7949 = vmatpush1.msra.mxu0 0.0
    %7950 = vmatprep.subr.mxu0 0.0
    %7951 = vmatpush1.msra.mxu0 0.0
    %7952 = vmatprep.mubr.f32.mxu0 0.0
    %7953 = vmatmul.mubr.f32.gmra.mrb[0].mxu0 %v7886
    %v7954 = vpop.f32.mrb[0].mxu0
    %v7955 = vadd.f32 0.0, %v7954
    %v7956 = vpop.f32.mrb[0].mxu0
    %7957 = vdwg.mxu0
    %v7959 = vunpack.c.l.s4 1983009808
    %v7960 = vunpack.c.0.s8 %v7959
    %v7961 = vlaneseq
    %v7962 = vshrl.u32 %v7961, 7
    %v7963 = vsub.s32 %v7960, %v7962
    %v7964 = vrot.slane %v7850, %v7963
    %v7966 = vunpack.c.l.s4 1983009808
    %v7967 = vunpack.c.0.s8 %v7966
    %v7968 = vlaneseq
    %v7969 = vshrl.u32 %v7968, 7
    %v7970 = vsub.s32 %v7967, %v7969
    %v7971 = vrot.slane %v7955, %v7970
    %v7972 = vcombine.low %v7964, %v7971
    %v7973 = vcombine.high %v7964, %v7971
    %v7975 = vunpack.c.l.s4 1934713408
    %v7976 = vunpack.c.0.s8 %v7975
    %v7977 = vlaneseq
    %v7978 = vshrl.u32 %v7977, 7
    %v7979 = vsub.s32 %v7976, %v7978
    %v7980 = vrot.slane %v7972, %v7979
    %v7982 = vunpack.c.l.s4 1934713408
    %v7983 = vunpack.c.0.s8 %v7982
    %v7984 = vlaneseq
    %v7985 = vshrl.u32 %v7984, 7
    %v7986 = vsub.s32 %v7983, %v7985
    %v7987 = vrot.slane %v7973, %v7986
    %v7988 = vcombine.high %v7980, 0.0
    %v7989 = vcombine.high %v7987, 0.0
    %7991 = vrot.lane.b32.xlu0 %v7988, 64
    %v7992 = vpop.permute.xlu0 %7991
    %7995 = vrot.lane.b32.xlu0 %v7989, 64
    %v7996 = vpop.permute.xlu0 %7995
    %v7998 = vsel %vm6275, %v7980, %v7992
    %v7999 = vsel %vm6275, %v7987, %v7996
    %v8002 = vrot.slane %v7998, 6
    %v8003 = vrot.slane %v7999, 6
    %v8006 = vsel %vm5946, %v6736, %v8002
    %v8007 = vsel %vm5946, %v6737, %v8003
    %v8008 = vld [vmem:[%s12] sm:$0xff]
    %v8009 = vld [vmem:[%s12 + $0x8] sm:$0xff]
    %v8010 = vld [vmem:[%s12 + $0x10] sm:$0xff]
    %v8011 = vld [vmem:[%s12 + $0x18] sm:$0xff]
    %v8012 = vld [vmem:[%s12 + $0x20] sm:$0xff]
    %v8013 = vld [vmem:[%s12 + $0x28] sm:$0xff]
    %v8014 = vld [vmem:[%s12 + $0x30] sm:$0xff]
    %v8015 = vld [vmem:[%s12 + $0x38] sm:$0xff]
    %v8016 = vld [vmem:[%s12 + $0x40] sm:$0xff]
    %v8017 = vld [vmem:[%s12 + $0x48] sm:$0xff]
    %v8018 = vld [vmem:[%s12 + $0x50] sm:$0xff]
    %v8019 = vld [vmem:[%s12 + $0x58] sm:$0xff]
    %v8020 = vld [vmem:[%s12 + $0x60] sm:$0xff]
    %v8021 = vld [vmem:[%s12 + $0x68] sm:$0xff]
    %v8022 = vld [vmem:[%s12 + $0x70] sm:$0xff]
    %v8023 = vld [vmem:[%s12 + $0x78] sm:$0xff]
    %v8024 = vld [vmem:[%s12 + $0x80] sm:$0xff]
    %v8025 = vld [vmem:[%s12 + $0x88] sm:$0xff]
    %v8026 = vld [vmem:[%s12 + $0x90] sm:$0xff]
    %v8027 = vld [vmem:[%s12 + $0x98] sm:$0xff]
    %v8028 = vld [vmem:[%s12 + $0xa0] sm:$0xff]
    %v8029 = vld [vmem:[%s12 + $0xa8] sm:$0xff]
    %v8030 = vld [vmem:[%s12 + $0xb0] sm:$0xff]
    %v8031 = vld [vmem:[%s12 + $0xb8] sm:$0xff]
    %v8032 = vld [vmem:[%s12 + $0xc0] sm:$0xff]
    %v8033 = vld [vmem:[%s12 + $0xc8] sm:$0xff]
    %v8034 = vld [vmem:[%s12 + $0xd0] sm:$0xff]
    %v8035 = vld [vmem:[%s12 + $0xd8] sm:$0xff]
    %v8036 = vld [vmem:[%s12 + $0xe0] sm:$0xff]
    %v8037 = vld [vmem:[%s12 + $0xe8] sm:$0xff]
    %v8038 = vld [vmem:[%s12 + $0xf0] sm:$0xff]
    %v8039 = vld [vmem:[%s12 + $0xf8] sm:$0xff]
    %v8040 = vld [vmem:[%s13] sm:$0x1]
    %v8042 = vlaneseq
    %v8043 = vshrl.u32 %v8042, 7
    %v8044 = vsub.s32 0, %v8043
    %v8045 = vrot.slane %v8040, %v8044
    %8047 = vmatprep.subr.mxu0 0.0
    %8048 = vmatpush1.msra.mxu0 %v8008
    %8049 = vmatprep.subr.mxu0 0.0
    %8050 = vmatpush1.msra.mxu0 %v8009
    %8051 = vmatprep.subr.mxu0 0.0
    %8052 = vmatpush1.msra.mxu0 %v8010
    %8053 = vmatprep.subr.mxu0 0.0
    %8054 = vmatpush1.msra.mxu0 %v8011
    %8055 = vmatprep.subr.mxu0 0.0
    %8056 = vmatpush1.msra.mxu0 %v8012
    %8057 = vmatprep.subr.mxu0 0.0
    %8058 = vmatpush1.msra.mxu0 %v8013
    %8059 = vmatprep.subr.mxu0 0.0
    %8060 = vmatpush1.msra.mxu0 %v8014
    %8061 = vmatprep.subr.mxu0 0.0
    %8062 = vmatpush1.msra.mxu0 %v8015
    %8063 = vmatprep.subr.mxu0 0.0
    %8064 = vmatpush1.msra.mxu0 %v8016
    %8065 = vmatprep.subr.mxu0 0.0
    %8066 = vmatpush1.msra.mxu0 %v8017
    %8067 = vmatprep.subr.mxu0 0.0
    %8068 = vmatpush1.msra.mxu0 %v8018
    %8069 = vmatprep.subr.mxu0 0.0
    %8070 = vmatpush1.msra.mxu0 %v8019
    %8071 = vmatprep.subr.mxu0 0.0
    %8072 = vmatpush1.msra.mxu0 %v8020
    %8073 = vmatprep.subr.mxu0 0.0
    %8074 = vmatpush1.msra.mxu0 %v8021
    %8075 = vmatprep.subr.mxu0 0.0
    %8076 = vmatpush1.msra.mxu0 %v8022
    %8077 = vmatprep.subr.mxu0 0.0
    %8078 = vmatpush1.msra.mxu0 %v8023
    %8079 = vmatprep.subr.mxu0 0.0
    %8080 = vmatpush1.msra.mxu0 %v8024
    %8081 = vmatprep.subr.mxu0 0.0
    %8082 = vmatpush1.msra.mxu0 %v8025
    %8083 = vmatprep.subr.mxu0 0.0
    %8084 = vmatpush1.msra.mxu0 %v8026
    %8085 = vmatprep.subr.mxu0 0.0
    %8086 = vmatpush1.msra.mxu0 %v8027
    %8087 = vmatprep.subr.mxu0 0.0
    %8088 = vmatpush1.msra.mxu0 %v8028
    %8089 = vmatprep.subr.mxu0 0.0
    %8090 = vmatpush1.msra.mxu0 %v8029
    %8091 = vmatprep.subr.mxu0 0.0
    %8092 = vmatpush1.msra.mxu0 %v8030
    %8093 = vmatprep.subr.mxu0 0.0
    %8094 = vmatpush1.msra.mxu0 %v8031
    %8095 = vmatprep.subr.mxu0 0.0
    %8096 = vmatpush1.msra.mxu0 %v8032
    %8097 = vmatprep.subr.mxu0 0.0
    %8098 = vmatpush1.msra.mxu0 %v8033
    %8099 = vmatprep.subr.mxu0 0.0
    %8100 = vmatpush1.msra.mxu0 %v8034
    %8101 = vmatprep.subr.mxu0 0.0
    %8102 = vmatpush1.msra.mxu0 %v8035
    %8103 = vmatprep.subr.mxu0 0.0
    %8104 = vmatpush1.msra.mxu0 %v8036
    %8105 = vmatprep.subr.mxu0 0.0
    %8106 = vmatpush1.msra.mxu0 %v8037
    %8107 = vmatprep.subr.mxu0 0.0
    %8108 = vmatpush1.msra.mxu0 %v8038
    %8109 = vmatprep.subr.mxu0 0.0
    %8110 = vmatpush1.msra.mxu0 %v8039
    %8111 = vmatprep.mubr.f32.mxu0 %v8007
    %8112 = vmatmul.mubr.f32.gmra.mrb[0].mxu0 %v8006
    %v8113 = vpop.f32.mrb[0].mxu0
    %v8114 = vadd.f32 %v8045, %v8113
    %v8115 = vpop.f32.mrb[0].mxu0
    %8116 = vdwg.mxu0
    %v8117 = vld [vmem:[%s16] sm:$0xff]
    %v8118 = vld [vmem:[%s16 + $0x8] sm:$0xff]
    %v8119 = vld [vmem:[%s16 + $0x10] sm:$0xff]
    %v8120 = vld [vmem:[%s16 + $0x18] sm:$0xff]
    %v8121 = vld [vmem:[%s16 + $0x20] sm:$0xff]
    %v8122 = vld [vmem:[%s16 + $0x28] sm:$0xff]
    %v8123 = vld [vmem:[%s16 + $0x30] sm:$0xff]
    %v8124 = vld [vmem:[%s16 + $0x38] sm:$0xff]
    %v8125 = vld [vmem:[%s17] sm:$0x1]
    %v8127 = vlaneseq
    %v8128 = vshrl.u32 %v8127, 7
    %v8129 = vsub.s32 0, %v8128
    %v8130 = vrot.slane %v8125, %v8129
    %v8133 = vsel %vm6275, %v8114, 0
    %8135 = vmatprep.subr.mxu0 0.0
    %8136 = vmatpush1.msra.mxu0 %v8117
    %8137 = vmatprep.subr.mxu0 0.0
    %8138 = vmatpush1.msra.mxu0 %v8118
    %8139 = vmatprep.subr.mxu0 0.0
    %8140 = vmatpush1.msra.mxu0 %v8119
    %8141 = vmatprep.subr.mxu0 0.0
    %8142 = vmatpush1.msra.mxu0 %v8120
    %8143 = vmatprep.subr.mxu0 0.0
    %8144 = vmatpush1.msra.mxu0 %v8121
    %8145 = vmatprep.subr.mxu0 0.0
    %8146 = vmatpush1.msra.mxu0 %v8122
    %8147 = vmatprep.subr.mxu0 0.0
    %8148 = vmatpush1.msra.mxu0 %v8123
    %8149 = vmatprep.subr.mxu0 0.0
    %8150 = vmatpush1.msra.mxu0 %v8124
    %8151 = vmatprep.subr.mxu0 0.0
    %8152 = vmatpush1.msra.mxu0 0.0
    %8153 = vmatprep.subr.mxu0 0.0
    %8154 = vmatpush1.msra.mxu0 0.0
    %8155 = vmatprep.subr.mxu0 0.0
    %8156 = vmatpush1.msra.mxu0 0.0
    %8157 = vmatprep.subr.mxu0 0.0
    %8158 = vmatpush1.msra.mxu0 0.0
    %8159 = vmatprep.subr.mxu0 0.0
    %8160 = vmatpush1.msra.mxu0 0.0
    %8161 = vmatprep.subr.mxu0 0.0
    %8162 = vmatpush1.msra.mxu0 0.0
    %8163 = vmatprep.subr.mxu0 0.0
    %8164 = vmatpush1.msra.mxu0 0.0
    %8165 = vmatprep.subr.mxu0 0.0
    %8166 = vmatpush1.msra.mxu0 0.0
    %8167 = vmatprep.subr.mxu0 0.0
    %8168 = vmatpush1.msra.mxu0 0.0
    %8169 = vmatprep.subr.mxu0 0.0
    %8170 = vmatpush1.msra.mxu0 0.0
    %8171 = vmatprep.subr.mxu0 0.0
    %8172 = vmatpush1.msra.mxu0 0.0
    %8173 = vmatprep.subr.mxu0 0.0
    %8174 = vmatpush1.msra.mxu0 0.0
    %8175 = vmatprep.subr.mxu0 0.0
    %8176 = vmatpush1.msra.mxu0 0.0
    %8177 = vmatprep.subr.mxu0 0.0
    %8178 = vmatpush1.msra.mxu0 0.0
    %8179 = vmatprep.subr.mxu0 0.0
    %8180 = vmatpush1.msra.mxu0 0.0
    %8181 = vmatprep.subr.mxu0 0.0
    %8182 = vmatpush1.msra.mxu0 0.0
    %8183 = vmatprep.subr.mxu0 0.0
    %8184 = vmatpush1.msra.mxu0 0.0
    %8185 = vmatprep.subr.mxu0 0.0
    %8186 = vmatpush1.msra.mxu0 0.0
    %8187 = vmatprep.subr.mxu0 0.0
    %8188 = vmatpush1.msra.mxu0 0.0
    %8189 = vmatprep.subr.mxu0 0.0
    %8190 = vmatpush1.msra.mxu0 0.0
    %8191 = vmatprep.subr.mxu0 0.0
    %8192 = vmatpush1.msra.mxu0 0.0
    %8193 = vmatprep.subr.mxu0 0.0
    %8194 = vmatpush1.msra.mxu0 0.0
    %8195 = vmatprep.subr.mxu0 0.0
    %8196 = vmatpush1.msra.mxu0 0.0
    %8197 = vmatprep.subr.mxu0 0.0
    %8198 = vmatpush1.msra.mxu0 0.0
    %8199 = vmatprep.mubr.f32.mxu0 0.0
    %8200 = vmatmul.mubr.f32.gmra.mrb[0].mxu0 %v8133
    %v8201 = vpop.f32.mrb[0].mxu0
    %v8202 = vadd.f32 %v8130, %v8201
    %v8203 = vpop.f32.mrb[0].mxu0
    %8204 = vdwg.mxu0
    %v8205 = vld [vmem:[%s18] sm:$0xff]
    %v8206 = vld [vmem:[%s18 + $0x8] sm:$0xff]
    %v8207 = vld [vmem:[%s18 + $0x10] sm:$0xff]
    %v8208 = vld [vmem:[%s18 + $0x18] sm:$0xff]
    %v8209 = vld [vmem:[%s19] sm:$0x1]
    %v8211 = vlaneseq
    %v8212 = vshrl.u32 %v8211, 7
    %v8213 = vsub.s32 0, %v8212
    %v8214 = vrot.slane %v8209, %v8213
    %v8217 = vsel %vm267, %v8202, 0
    %8219 = vmatprep.subr.mxu0 0.0
    %8220 = vmatpush1.msra.mxu0 %v8205
    %8221 = vmatprep.subr.mxu0 0.0
    %8222 = vmatpush1.msra.mxu0 %v8206
    %8223 = vmatprep.subr.mxu0 0.0
    %8224 = vmatpush1.msra.mxu0 %v8207
    %8225 = vmatprep.subr.mxu0 0.0
    %8226 = vmatpush1.msra.mxu0 %v8208
    %8227 = vmatprep.subr.mxu0 0.0
    %8228 = vmatpush1.msra.mxu0 0.0
    %8229 = vmatprep.subr.mxu0 0.0
    %8230 = vmatpush1.msra.mxu0 0.0
    %8231 = vmatprep.subr.mxu0 0.0
    %8232 = vmatpush1.msra.mxu0 0.0
    %8233 = vmatprep.subr.mxu0 0.0
    %8234 = vmatpush1.msra.mxu0 0.0
    %8235 = vmatprep.subr.mxu0 0.0
    %8236 = vmatpush1.msra.mxu0 0.0
    %8237 = vmatprep.subr.mxu0 0.0
    %8238 = vmatpush1.msra.mxu0 0.0
    %8239 = vmatprep.subr.mxu0 0.0
    %8240 = vmatpush1.msra.mxu0 0.0
    %8241 = vmatprep.subr.mxu0 0.0
    %8242 = vmatpush1.msra.mxu0 0.0
    %8243 = vmatprep.subr.mxu0 0.0
    %8244 = vmatpush1.msra.mxu0 0.0
    %8245 = vmatprep.subr.mxu0 0.0
    %8246 = vmatpush1.msra.mxu0 0.0
    %8247 = vmatprep.subr.mxu0 0.0
    %8248 = vmatpush1.msra.mxu0 0.0
    %8249 = vmatprep.subr.mxu0 0.0
    %8250 = vmatpush1.msra.mxu0 0.0
    %8251 = vmatprep.subr.mxu0 0.0
    %8252 = vmatpush1.msra.mxu0 0.0
    %8253 = vmatprep.subr.mxu0 0.0
    %8254 = vmatpush1.msra.mxu0 0.0
    %8255 = vmatprep.subr.mxu0 0.0
    %8256 = vmatpush1.msra.mxu0 0.0
    %8257 = vmatprep.subr.mxu0 0.0
    %8258 = vmatpush1.msra.mxu0 0.0
    %8259 = vmatprep.subr.mxu0 0.0
    %8260 = vmatpush1.msra.mxu0 0.0
    %8261 = vmatprep.subr.mxu0 0.0
    %8262 = vmatpush1.msra.mxu0 0.0
    %8263 = vmatprep.subr.mxu0 0.0
    %8264 = vmatpush1.msra.mxu0 0.0
    %8265 = vmatprep.subr.mxu0 0.0
    %8266 = vmatpush1.msra.mxu0 0.0
    %8267 = vmatprep.subr.mxu0 0.0
    %8268 = vmatpush1.msra.mxu0 0.0
    %8269 = vmatprep.subr.mxu0 0.0
    %8270 = vmatpush1.msra.mxu0 0.0
    %8271 = vmatprep.subr.mxu0 0.0
    %8272 = vmatpush1.msra.mxu0 0.0
    %8273 = vmatprep.subr.mxu0 0.0
    %8274 = vmatpush1.msra.mxu0 0.0
    %8275 = vmatprep.subr.mxu0 0.0
    %8276 = vmatpush1.msra.mxu0 0.0
    %8277 = vmatprep.subr.mxu0 0.0
    %8278 = vmatpush1.msra.mxu0 0.0
    %8279 = vmatprep.subr.mxu0 0.0
    %8280 = vmatpush1.msra.mxu0 0.0
    %8281 = vmatprep.subr.mxu0 0.0
    %8282 = vmatpush1.msra.mxu0 0.0
    %8283 = vmatprep.mubr.f32.mxu0 0.0
    %8284 = vmatmul.mubr.f32.gmra.mrb[0].mxu0 %v8217
    %v8285 = vpop.f32.mrb[0].mxu0
    %v8286 = vadd.f32 %v8214, %v8285
    %v8287 = vpop.f32.mrb[0].mxu0
    %8288 = vdwg.mxu0
    %v8289 = vld [vmem:[%s20] sm:$0xff]
    %v8290 = vld [vmem:[%s20 + $0x8] sm:$0xff]
    %v8291 = vld [vmem:[%s21] sm:$0x1]
    %v8293 = vlaneseq
    %v8294 = vshrl.u32 %v8293, 7
    %v8295 = vsub.s32 0, %v8294
    %v8296 = vrot.slane %v8291, %v8295
    %v8299 = vsel %vm146, %v8286, 0
    %8301 = vmatprep.subr.mxu0 0.0
    %8302 = vmatpush1.msra.mxu0 %v8289
    %8303 = vmatprep.subr.mxu0 0.0
    %8304 = vmatpush1.msra.mxu0 %v8290
    %8305 = vmatprep.subr.mxu0 0.0
    %8306 = vmatpush1.msra.mxu0 0.0
    %8307 = vmatprep.subr.mxu0 0.0
    %8308 = vmatpush1.msra.mxu0 0.0
    %8309 = vmatprep.subr.mxu0 0.0
    %8310 = vmatpush1.msra.mxu0 0.0
    %8311 = vmatprep.subr.mxu0 0.0
    %8312 = vmatpush1.msra.mxu0 0.0
    %8313 = vmatprep.subr.mxu0 0.0
    %8314 = vmatpush1.msra.mxu0 0.0
    %8315 = vmatprep.subr.mxu0 0.0
    %8316 = vmatpush1.msra.mxu0 0.0
    %8317 = vmatprep.subr.mxu0 0.0
    %8318 = vmatpush1.msra.mxu0 0.0
    %8319 = vmatprep.subr.mxu0 0.0
    %8320 = vmatpush1.msra.mxu0 0.0
    %8321 = vmatprep.subr.mxu0 0.0
    %8322 = vmatpush1.msra.mxu0 0.0
    %8323 = vmatprep.subr.mxu0 0.0
    %8324 = vmatpush1.msra.mxu0 0.0
    %8325 = vmatprep.subr.mxu0 0.0
    %8326 = vmatpush1.msra.mxu0 0.0
    %8327 = vmatprep.subr.mxu0 0.0
    %8328 = vmatpush1.msra.mxu0 0.0
    %8329 = vmatprep.subr.mxu0 0.0
    %8330 = vmatpush1.msra.mxu0 0.0
    %8331 = vmatprep.subr.mxu0 0.0
    %8332 = vmatpush1.msra.mxu0 0.0
    %8333 = vmatprep.subr.mxu0 0.0
    %8334 = vmatpush1.msra.mxu0 0.0
    %8335 = vmatprep.subr.mxu0 0.0
    %8336 = vmatpush1.msra.mxu0 0.0
    %8337 = vmatprep.subr.mxu0 0.0
    %8338 = vmatpush1.msra.mxu0 0.0
    %8339 = vmatprep.subr.mxu0 0.0
    %8340 = vmatpush1.msra.mxu0 0.0
    %8341 = vmatprep.subr.mxu0 0.0
    %8342 = vmatpush1.msra.mxu0 0.0
    %8343 = vmatprep.subr.mxu0 0.0
    %8344 = vmatpush1.msra.mxu0 0.0
    %8345 = vmatprep.subr.mxu0 0.0
    %8346 = vmatpush1.msra.mxu0 0.0
    %8347 = vmatprep.subr.mxu0 0.0
    %8348 = vmatpush1.msra.mxu0 0.0
    %8349 = vmatprep.subr.mxu0 0.0
    %8350 = vmatpush1.msra.mxu0 0.0
    %8351 = vmatprep.subr.mxu0 0.0
    %8352 = vmatpush1.msra.mxu0 0.0
    %8353 = vmatprep.subr.mxu0 0.0
    %8354 = vmatpush1.msra.mxu0 0.0
    %8355 = vmatprep.subr.mxu0 0.0
    %8356 = vmatpush1.msra.mxu0 0.0
    %8357 = vmatprep.subr.mxu0 0.0
    %8358 = vmatpush1.msra.mxu0 0.0
    %8359 = vmatprep.subr.mxu0 0.0
    %8360 = vmatpush1.msra.mxu0 0.0
    %8361 = vmatprep.subr.mxu0 0.0
    %8362 = vmatpush1.msra.mxu0 0.0
    %8363 = vmatprep.subr.mxu0 0.0
    %8364 = vmatpush1.msra.mxu0 0.0
    %8365 = vmatprep.mubr.f32.mxu0 0.0
    %8366 = vmatmul.mubr.f32.gmra.mrb[0].mxu0 %v8299
    %v8367 = vpop.f32.mrb[0].mxu0
    %v8368 = vadd.f32 %v8296, %v8367
    %v8369 = vpop.f32.mrb[0].mxu0
    %8370 = vdwg.mxu0
    %v8371 = vld [vmem:[%s22] sm:$0xff]
    %v8372 = vld [vmem:[#allocation2] sm:$0x1]
    %v8374 = vlaneseq
    %v8375 = vshrl.u32 %v8374, 7
    %v8376 = vsub.s32 0, %v8375
    %v8377 = vrot.slane %v8372, %v8376
    %v8380 = vsel %vm6517, %v8368, 0
    %8382 = vmatprep.subr.mxu0 0.0
    %8383 = vmatpush1.msra.mxu0 %v8371
    %8384 = vmatprep.subr.mxu0 0.0
    %8385 = vmatpush1.msra.mxu0 0.0
    %8386 = vmatprep.subr.mxu0 0.0
    %8387 = vmatpush1.msra.mxu0 0.0
    %8388 = vmatprep.subr.mxu0 0.0
    %8389 = vmatpush1.msra.mxu0 0.0
    %8390 = vmatprep.subr.mxu0 0.0
    %8391 = vmatpush1.msra.mxu0 0.0
    %8392 = vmatprep.subr.mxu0 0.0
    %8393 = vmatpush1.msra.mxu0 0.0
    %8394 = vmatprep.subr.mxu0 0.0
    %8395 = vmatpush1.msra.mxu0 0.0
    %8396 = vmatprep.subr.mxu0 0.0
    %8397 = vmatpush1.msra.mxu0 0.0
    %8398 = vmatprep.subr.mxu0 0.0
    %8399 = vmatpush1.msra.mxu0 0.0
    %8400 = vmatprep.subr.mxu0 0.0
    %8401 = vmatpush1.msra.mxu0 0.0
    %8402 = vmatprep.subr.mxu0 0.0
    %8403 = vmatpush1.msra.mxu0 0.0
    %8404 = vmatprep.subr.mxu0 0.0
    %8405 = vmatpush1.msra.mxu0 0.0
    %8406 = vmatprep.subr.mxu0 0.0
    %8407 = vmatpush1.msra.mxu0 0.0
    %8408 = vmatprep.subr.mxu0 0.0
    %8409 = vmatpush1.msra.mxu0 0.0
    %8410 = vmatprep.subr.mxu0 0.0
    %8411 = vmatpush1.msra.mxu0 0.0
    %8412 = vmatprep.subr.mxu0 0.0
    %8413 = vmatpush1.msra.mxu0 0.0
    %8414 = vmatprep.subr.mxu0 0.0
    %8415 = vmatpush1.msra.mxu0 0.0
    %8416 = vmatprep.subr.mxu0 0.0
    %8417 = vmatpush1.msra.mxu0 0.0
    %8418 = vmatprep.subr.mxu0 0.0
    %8419 = vmatpush1.msra.mxu0 0.0
    %8420 = vmatprep.subr.mxu0 0.0
    %8421 = vmatpush1.msra.mxu0 0.0
    %8422 = vmatprep.subr.mxu0 0.0
    %8423 = vmatpush1.msra.mxu0 0.0
    %8424 = vmatprep.subr.mxu0 0.0
    %8425 = vmatpush1.msra.mxu0 0.0
    %8426 = vmatprep.subr.mxu0 0.0
    %8427 = vmatpush1.msra.mxu0 0.0
    %8428 = vmatprep.subr.mxu0 0.0
    %8429 = vmatpush1.msra.mxu0 0.0
    %8430 = vmatprep.subr.mxu0 0.0
    %8431 = vmatpush1.msra.mxu0 0.0
    %8432 = vmatprep.subr.mxu0 0.0
    %8433 = vmatpush1.msra.mxu0 0.0
    %8434 = vmatprep.subr.mxu0 0.0
    %8435 = vmatpush1.msra.mxu0 0.0
    %8436 = vmatprep.subr.mxu0 0.0
    %8437 = vmatpush1.msra.mxu0 0.0
    %8438 = vmatprep.subr.mxu0 0.0
    %8439 = vmatpush1.msra.mxu0 0.0
    %8440 = vmatprep.subr.mxu0 0.0
    %8441 = vmatpush1.msra.mxu0 0.0
    %8442 = vmatprep.subr.mxu0 0.0
    %8443 = vmatpush1.msra.mxu0 0.0
    %8444 = vmatprep.subr.mxu0 0.0
    %8445 = vmatpush1.msra.mxu0 0.0
    %8446 = vmatprep.mubr.f32.mxu0 0.0
    %8447 = vmatmul.mubr.f32.gmra.mrb[0].mxu0 %v8380
    %v8448 = vpop.f32.mrb[0].mxu0
    %v8449 = vadd.f32 %v8377, %v8448
    %v8450 = vpop.f32.mrb[0].mxu0
    %8451 = vdwg.mxu0
    %v8453 = vrot.slane %v8449, 2
    %8454 = vrot.lane.b32.xlu0 %v8453, 1
    %v8455 = vpop.permute.xlu0 %8454
    %vm8457 = vcmask 7168
    %v8458 = vsel %vm8457, %v8449, %v8455
    %vm8459 = vcmask 9216
    %v8460 = vsel %vm8459, %v8458, -inf
    %8461 = vmax.xlane.f32.xlu0 %v8460
    %v8462 = vpop.xlane.xlu0 %8461
    %v8463 = vsub.f32 %v8458, %v8462
    %v8464 = vmul.f32 %v8463, 1.442695
    %v8465 = vpow.pop %v8464
    %v8466 = vsel %vm8459, %v8465, 0.0
    %8467 = vadd.xlane.f32.xlu0 %v8466
    %v8468 = vpop.xlane.xlu0 %8467
    %v8469 = vrcp.pop %v8468
    %v8470 = vmul.f32 %v8465, %v8469
    %v8471 = vadd.f32 %v8470, 1.0
    %v8472 = vlaneseq
    %v8473 = vshrl.u32 %v8472, 7
    %v8474 = vsub.s32 0, %v8473
    %v8475 = vrot.slane %v8114, %v8474
    %8477 = vbcast.lane.b32.xlu0 %v8475, 256
    %v8478 = vpop.permute.xlu0 %8477
    %s8480 = sor.u32 256, 8
    %8481 = vbcast.lane.b32.xlu0 %v8475, %s8480
    %v8482 = vpop.permute.xlu0 %8481
    %s8484 = sor.u32 256, 16
    %8485 = vbcast.lane.b32.xlu0 %v8475, %s8484
    %v8486 = vpop.permute.xlu0 %8485
    %s8488 = sor.u32 256, 24
    %8489 = vbcast.lane.b32.xlu0 %v8475, %s8488
    %v8490 = vpop.permute.xlu0 %8489
    %s8492 = sor.u32 256, 32
    %8493 = vbcast.lane.b32.xlu0 %v8475, %s8492
    %v8494 = vpop.permute.xlu0 %8493
    %s8496 = sor.u32 256, 40
    %8497 = vbcast.lane.b32.xlu0 %v8475, %s8496
    %v8498 = vpop.permute.xlu0 %8497
    %s8500 = sor.u32 256, 48
    %8501 = vbcast.lane.b32.xlu0 %v8475, %s8500
    %v8502 = vpop.permute.xlu0 %8501
    %s8504 = sor.u32 256, 56
    %8505 = vbcast.lane.b32.xlu0 %v8475, %s8504
    %v8506 = vpop.permute.xlu0 %8505
    %v8507 = vlaneseq
    %v8508 = vshrl.u32 %v8507, 7
    %v8509 = vsub.s32 1, %v8508
    %v8510 = vrot.slane %v8114, %v8509
    %8512 = vbcast.lane.b32.xlu0 %v8510, 256
    %v8513 = vpop.permute.xlu0 %8512
    %s8515 = sor.u32 256, 8
    %8516 = vbcast.lane.b32.xlu0 %v8510, %s8515
    %v8517 = vpop.permute.xlu0 %8516
    %s8519 = sor.u32 256, 16
    %8520 = vbcast.lane.b32.xlu0 %v8510, %s8519
    %v8521 = vpop.permute.xlu0 %8520
    %s8523 = sor.u32 256, 24
    %8524 = vbcast.lane.b32.xlu0 %v8510, %s8523
    %v8525 = vpop.permute.xlu0 %8524
    %s8527 = sor.u32 256, 32
    %8528 = vbcast.lane.b32.xlu0 %v8510, %s8527
    %v8529 = vpop.permute.xlu0 %8528
    %s8531 = sor.u32 256, 40
    %8532 = vbcast.lane.b32.xlu0 %v8510, %s8531
    %v8533 = vpop.permute.xlu0 %8532
    %s8535 = sor.u32 256, 48
    %8536 = vbcast.lane.b32.xlu0 %v8510, %s8535
    %v8537 = vpop.permute.xlu0 %8536
    %s8539 = sor.u32 256, 56
    %8540 = vbcast.lane.b32.xlu0 %v8510, %s8539
    %v8541 = vpop.permute.xlu0 %8540
    %v8542 = vlaneseq
    %v8543 = vshrl.u32 %v8542, 7
    %v8544 = vsub.s32 2, %v8543
    %v8545 = vrot.slane %v8114, %v8544
    %8547 = vbcast.lane.b32.xlu0 %v8545, 256
    %v8548 = vpop.permute.xlu0 %8547
    %s8550 = sor.u32 256, 8
    %8551 = vbcast.lane.b32.xlu0 %v8545, %s8550
    %v8552 = vpop.permute.xlu0 %8551
    %s8554 = sor.u32 256, 16
    %8555 = vbcast.lane.b32.xlu0 %v8545, %s8554
    %v8556 = vpop.permute.xlu0 %8555
    %s8558 = sor.u32 256, 24
    %8559 = vbcast.lane.b32.xlu0 %v8545, %s8558
    %v8560 = vpop.permute.xlu0 %8559
    %s8562 = sor.u32 256, 32
    %8563 = vbcast.lane.b32.xlu0 %v8545, %s8562
    %v8564 = vpop.permute.xlu0 %8563
    %s8566 = sor.u32 256, 40
    %8567 = vbcast.lane.b32.xlu0 %v8545, %s8566
    %v8568 = vpop.permute.xlu0 %8567
    %s8570 = sor.u32 256, 48
    %8571 = vbcast.lane.b32.xlu0 %v8545, %s8570
    %v8572 = vpop.permute.xlu0 %8571
    %s8574 = sor.u32 256, 56
    %8575 = vbcast.lane.b32.xlu0 %v8545, %s8574
    %v8576 = vpop.permute.xlu0 %8575
    %v8577 = vlaneseq
    %v8578 = vshrl.u32 %v8577, 7
    %v8579 = vsub.s32 3, %v8578
    %v8580 = vrot.slane %v8114, %v8579
    %8582 = vbcast.lane.b32.xlu0 %v8580, 256
    %v8583 = vpop.permute.xlu0 %8582
    %s8585 = sor.u32 256, 8
    %8586 = vbcast.lane.b32.xlu0 %v8580, %s8585
    %v8587 = vpop.permute.xlu0 %8586
    %s8589 = sor.u32 256, 16
    %8590 = vbcast.lane.b32.xlu0 %v8580, %s8589
    %v8591 = vpop.permute.xlu0 %8590
    %s8593 = sor.u32 256, 24
    %8594 = vbcast.lane.b32.xlu0 %v8580, %s8593
    %v8595 = vpop.permute.xlu0 %8594
    %s8597 = sor.u32 256, 32
    %8598 = vbcast.lane.b32.xlu0 %v8580, %s8597
    %v8599 = vpop.permute.xlu0 %8598
    %s8601 = sor.u32 256, 40
    %8602 = vbcast.lane.b32.xlu0 %v8580, %s8601
    %v8603 = vpop.permute.xlu0 %8602
    %s8605 = sor.u32 256, 48
    %8606 = vbcast.lane.b32.xlu0 %v8580, %s8605
    %v8607 = vpop.permute.xlu0 %8606
    %s8609 = sor.u32 256, 56
    %8610 = vbcast.lane.b32.xlu0 %v8580, %s8609
    %v8611 = vpop.permute.xlu0 %8610
    %v8612 = vsel %vm8457, %v8478, %v8548
    %v8613 = vsel %vm8457, %v8482, %v8552
    %v8614 = vsel %vm8457, %v8486, %v8556
    %v8615 = vsel %vm8457, %v8490, %v8560
    %v8616 = vsel %vm8457, %v8494, %v8564
    %v8617 = vsel %vm8457, %v8498, %v8568
    %v8618 = vsel %vm8457, %v8502, %v8572
    %v8619 = vsel %vm8457, %v8506, %v8576
    %v8620 = vsel %vm8457, %v8513, %v8583
    %v8621 = vsel %vm8457, %v8517, %v8587
    %v8622 = vsel %vm8457, %v8521, %v8591
    %v8623 = vsel %vm8457, %v8525, %v8595
    %v8624 = vsel %vm8457, %v8529, %v8599
    %v8625 = vsel %vm8457, %v8533, %v8603
    %v8626 = vsel %vm8457, %v8537, %v8607
    %v8627 = vsel %vm8457, %v8541, %v8611
    %v8630 = vunpack.c.l.s4 1966171168
    %v8631 = vunpack.c.0.s8 %v8630
    %v8632 = vlaneseq
    %v8633 = vshrl.u32 %v8632, 7
    %v8634 = vsub.s32 %v8631, %v8633
    %v8635 = vrot.slane %v8471, %v8634
    %v8636 = vcombine.high %v8635, %v8635
    %v8638 = vunpack.c.l.s4 1966171168
    %v8639 = vunpack.c.0.s8 %v8638
    %v8640 = vlaneseq
    %v8641 = vshrl.u32 %v8640, 7
    %v8642 = vsub.s32 %v8639, %v8641
    %v8643 = vrot.slane %v8635, %v8642
    %v8645 = vunpack.c.l.s4 1966171168
    %v8646 = vunpack.c.0.s8 %v8645
    %v8647 = vlaneseq
    %v8648 = vshrl.u32 %v8647, 7
    %v8649 = vsub.s32 %v8646, %v8648
    %v8650 = vrot.slane %v8636, %v8649
    %v8651 = vlaneseq
    %v8652 = vshrl.u32 %v8651, 7
    %v8653 = vsub.s32 0, %v8652
    %v8654 = vrot.slane %v8643, %v8653
    %v8655 = vlaneseq
    %v8656 = vshrl.u32 %v8655, 7
    %v8657 = vsub.s32 0, %v8656
    %v8658 = vrot.slane %v8650, %v8657
    %v8661 = vmul.f32 %v8612, %v8654
    %v8662 = vmul.f32 %v8613, %v8654
    %v8663 = vmul.f32 %v8614, %v8654
    %v8664 = vmul.f32 %v8615, %v8654
    %v8665 = vmul.f32 %v8616, %v8654
    %v8666 = vmul.f32 %v8617, %v8654
    %v8667 = vmul.f32 %v8618, %v8654
    %v8668 = vmul.f32 %v8619, %v8654
    %v8669 = vmul.f32 %v8620, %v8658
    %v8670 = vmul.f32 %v8621, %v8658
    %v8671 = vmul.f32 %v8622, %v8658
    %v8672 = vmul.f32 %v8623, %v8658
    %v8673 = vmul.f32 %v8624, %v8658
    %v8674 = vmul.f32 %v8625, %v8658
    %v8675 = vmul.f32 %v8626, %v8658
    %v8676 = vmul.f32 %v8627, %v8658
    %v8677 = vld [vmem:[%s14] sm:$0xff]
    %v8678 = vld [vmem:[%s14 + $0x8] sm:$0xff]
    %v8679 = vld [vmem:[%s14 + $0x10] sm:$0xff]
    %v8680 = vld [vmem:[%s14 + $0x18] sm:$0xff]
    %v8681 = vld [vmem:[%s14 + $0x20] sm:$0xff]
    %v8682 = vld [vmem:[%s14 + $0x28] sm:$0xff]
    %v8683 = vld [vmem:[%s14 + $0x30] sm:$0xff]
    %v8684 = vld [vmem:[%s14 + $0x38] sm:$0xff]
    %v8685 = vld [vmem:[%s14 + $0x40] sm:$0xff]
    %v8686 = vld [vmem:[%s14 + $0x48] sm:$0xff]
    %v8687 = vld [vmem:[%s14 + $0x50] sm:$0xff]
    %v8688 = vld [vmem:[%s14 + $0x58] sm:$0xff]
    %v8689 = vld [vmem:[%s14 + $0x60] sm:$0xff]
    %v8690 = vld [vmem:[%s14 + $0x68] sm:$0xff]
    %v8691 = vld [vmem:[%s14 + $0x70] sm:$0xff]
    %v8692 = vld [vmem:[%s14 + $0x78] sm:$0xff]
    %v8694 = vsel %vm6275, %v8677, 0
    %v8697 = vsel %vm6275, %v8678, 0
    %v8700 = vsel %vm6275, %v8679, 0
    %v8703 = vsel %vm6275, %v8680, 0
    %v8706 = vsel %vm6275, %v8681, 0
    %v8709 = vsel %vm6275, %v8682, 0
    %v8712 = vsel %vm6275, %v8683, 0
    %v8715 = vsel %vm6275, %v8684, 0
    %8717 = vmatprep.subr.mxu0 0.0
    %8718 = vmatpush1.msra.mxu0 %v8661
    %8719 = vmatprep.subr.mxu0 0.0
    %8720 = vmatpush1.msra.mxu0 %v8662
    %8721 = vmatprep.subr.mxu0 0.0
    %8722 = vmatpush1.msra.mxu0 %v8663
    %8723 = vmatprep.subr.mxu0 0.0
    %8724 = vmatpush1.msra.mxu0 %v8664
    %8725 = vmatprep.subr.mxu0 0.0
    %8726 = vmatpush1.msra.mxu0 %v8665
    %8727 = vmatprep.subr.mxu0 0.0
    %8728 = vmatpush1.msra.mxu0 %v8666
    %8729 = vmatprep.subr.mxu0 0.0
    %8730 = vmatpush1.msra.mxu0 %v8667
    %8731 = vmatprep.subr.mxu0 0.0
    %8732 = vmatpush1.msra.mxu0 %v8668
    %8733 = vmatprep.subr.mxu0 0.0
    %8734 = vmatpush1.msra.mxu0 0.0
    %8735 = vmatprep.subr.mxu0 0.0
    %8736 = vmatpush1.msra.mxu0 0.0
    %8737 = vmatprep.subr.mxu0 0.0
    %8738 = vmatpush1.msra.mxu0 0.0
    %8739 = vmatprep.subr.mxu0 0.0
    %8740 = vmatpush1.msra.mxu0 0.0
    %8741 = vmatprep.subr.mxu0 0.0
    %8742 = vmatpush1.msra.mxu0 0.0
    %8743 = vmatprep.subr.mxu0 0.0
    %8744 = vmatpush1.msra.mxu0 0.0
    %8745 = vmatprep.subr.mxu0 0.0
    %8746 = vmatpush1.msra.mxu0 0.0
    %8747 = vmatprep.subr.mxu0 0.0
    %8748 = vmatpush1.msra.mxu0 0.0
    %8749 = vmatprep.subr.mxu0 0.0
    %8750 = vmatpush1.msra.mxu0 0.0
    %8751 = vmatprep.subr.mxu0 0.0
    %8752 = vmatpush1.msra.mxu0 0.0
    %8753 = vmatprep.subr.mxu0 0.0
    %8754 = vmatpush1.msra.mxu0 0.0
    %8755 = vmatprep.subr.mxu0 0.0
    %8756 = vmatpush1.msra.mxu0 0.0
    %8757 = vmatprep.subr.mxu0 0.0
    %8758 = vmatpush1.msra.mxu0 0.0
    %8759 = vmatprep.subr.mxu0 0.0
    %8760 = vmatpush1.msra.mxu0 0.0
    %8761 = vmatprep.subr.mxu0 0.0
    %8762 = vmatpush1.msra.mxu0 0.0
    %8763 = vmatprep.subr.mxu0 0.0
    %8764 = vmatpush1.msra.mxu0 0.0
    %8765 = vmatprep.subr.mxu0 0.0
    %8766 = vmatpush1.msra.mxu0 0.0
    %8767 = vmatprep.subr.mxu0 0.0
    %8768 = vmatpush1.msra.mxu0 0.0
    %8769 = vmatprep.subr.mxu0 0.0
    %8770 = vmatpush1.msra.mxu0 0.0
    %8771 = vmatprep.subr.mxu0 0.0
    %8772 = vmatpush1.msra.mxu0 0.0
    %8773 = vmatprep.subr.mxu0 0.0
    %8774 = vmatpush1.msra.mxu0 0.0
    %8775 = vmatprep.subr.mxu0 0.0
    %8776 = vmatpush1.msra.mxu0 0.0
    %8777 = vmatprep.subr.mxu0 0.0
    %8778 = vmatpush1.msra.mxu0 0.0
    %8779 = vmatprep.subr.mxu0 0.0
    %8780 = vmatpush1.msra.mxu0 0.0
    %8781 = vmatprep.mubr.f32.mxu0 0.0
    %8782 = vmatmul.mubr.f32.gmra.mrb[0].mxu0 %v8694
    %v8783 = vpop.f32.mrb[0].mxu0
    %v8784 = vadd.f32 0.0, %v8783
    %v8785 = vpop.f32.mrb[0].mxu0
    %8786 = vmatprep.mubr.f32.mxu0 0.0
    %8787 = vmatmul.mubr.f32.gmra.mrb[0].mxu0 %v8697
    %v8788 = vpop.f32.mrb[0].mxu0
    %v8789 = vadd.f32 0.0, %v8788
    %v8790 = vpop.f32.mrb[0].mxu0
    %8791 = vmatprep.mubr.f32.mxu0 0.0
    %8792 = vmatmul.mubr.f32.gmra.mrb[0].mxu0 %v8700
    %v8793 = vpop.f32.mrb[0].mxu0
    %v8794 = vadd.f32 0.0, %v8793
    %v8795 = vpop.f32.mrb[0].mxu0
    %8796 = vmatprep.mubr.f32.mxu0 0.0
    %8797 = vmatmul.mubr.f32.gmra.mrb[0].mxu0 %v8703
    %v8798 = vpop.f32.mrb[0].mxu0
    %v8799 = vadd.f32 0.0, %v8798
    %v8800 = vpop.f32.mrb[0].mxu0
    %8801 = vmatprep.mubr.f32.mxu0 0.0
    %8802 = vmatmul.mubr.f32.gmra.mrb[0].mxu0 %v8706
    %v8803 = vpop.f32.mrb[0].mxu0
    %v8804 = vadd.f32 0.0, %v8803
    %v8805 = vpop.f32.mrb[0].mxu0
    %8806 = vmatprep.mubr.f32.mxu0 0.0
    %8807 = vmatmul.mubr.f32.gmra.mrb[0].mxu0 %v8709
    %v8808 = vpop.f32.mrb[0].mxu0
    %v8809 = vadd.f32 0.0, %v8808
    %v8810 = vpop.f32.mrb[0].mxu0
    %8811 = vmatprep.mubr.f32.mxu0 0.0
    %8812 = vmatmul.mubr.f32.gmra.mrb[0].mxu0 %v8712
    %v8813 = vpop.f32.mrb[0].mxu0
    %v8814 = vadd.f32 0.0, %v8813
    %v8815 = vpop.f32.mrb[0].mxu0
    %8816 = vmatprep.mubr.f32.mxu0 0.0
    %8817 = vmatmul.mubr.f32.gmra.mrb[0].mxu0 %v8715
    %v8818 = vpop.f32.mrb[0].mxu0
    %v8819 = vadd.f32 0.0, %v8818
    %v8820 = vpop.f32.mrb[0].mxu0
    %8821 = vdwg.mxu0
    %v8823 = vsel %vm6275, %v8685, 0
    %v8826 = vsel %vm6275, %v8686, 0
    %v8829 = vsel %vm6275, %v8687, 0
    %v8832 = vsel %vm6275, %v8688, 0
    %v8835 = vsel %vm6275, %v8689, 0
    %v8838 = vsel %vm6275, %v8690, 0
    %v8841 = vsel %vm6275, %v8691, 0
    %v8844 = vsel %vm6275, %v8692, 0
    %8846 = vmatprep.subr.mxu0 0.0
    %8847 = vmatpush1.msra.mxu0 %v8669
    %8848 = vmatprep.subr.mxu0 0.0
    %8849 = vmatpush1.msra.mxu0 %v8670
    %8850 = vmatprep.subr.mxu0 0.0
    %8851 = vmatpush1.msra.mxu0 %v8671
    %8852 = vmatprep.subr.mxu0 0.0
    %8853 = vmatpush1.msra.mxu0 %v8672
    %8854 = vmatprep.subr.mxu0 0.0
    %8855 = vmatpush1.msra.mxu0 %v8673
    %8856 = vmatprep.subr.mxu0 0.0
    %8857 = vmatpush1.msra.mxu0 %v8674
    %8858 = vmatprep.subr.mxu0 0.0
    %8859 = vmatpush1.msra.mxu0 %v8675
    %8860 = vmatprep.subr.mxu0 0.0
    %8861 = vmatpush1.msra.mxu0 %v8676
    %8862 = vmatprep.subr.mxu0 0.0
    %8863 = vmatpush1.msra.mxu0 0.0
    %8864 = vmatprep.subr.mxu0 0.0
    %8865 = vmatpush1.msra.mxu0 0.0
    %8866 = vmatprep.subr.mxu0 0.0
    %8867 = vmatpush1.msra.mxu0 0.0
    %8868 = vmatprep.subr.mxu0 0.0
    %8869 = vmatpush1.msra.mxu0 0.0
    %8870 = vmatprep.subr.mxu0 0.0
    %8871 = vmatpush1.msra.mxu0 0.0
    %8872 = vmatprep.subr.mxu0 0.0
    %8873 = vmatpush1.msra.mxu0 0.0
    %8874 = vmatprep.subr.mxu0 0.0
    %8875 = vmatpush1.msra.mxu0 0.0
    %8876 = vmatprep.subr.mxu0 0.0
    %8877 = vmatpush1.msra.mxu0 0.0
    %8878 = vmatprep.subr.mxu0 0.0
    %8879 = vmatpush1.msra.mxu0 0.0
    %8880 = vmatprep.subr.mxu0 0.0
    %8881 = vmatpush1.msra.mxu0 0.0
    %8882 = vmatprep.subr.mxu0 0.0
    %8883 = vmatpush1.msra.mxu0 0.0
    %8884 = vmatprep.subr.mxu0 0.0
    %8885 = vmatpush1.msra.mxu0 0.0
    %8886 = vmatprep.subr.mxu0 0.0
    %8887 = vmatpush1.msra.mxu0 0.0
    %8888 = vmatprep.subr.mxu0 0.0
    %8889 = vmatpush1.msra.mxu0 0.0
    %8890 = vmatprep.subr.mxu0 0.0
    %8891 = vmatpush1.msra.mxu0 0.0
    %8892 = vmatprep.subr.mxu0 0.0
    %8893 = vmatpush1.msra.mxu0 0.0
    %8894 = vmatprep.subr.mxu0 0.0
    %8895 = vmatpush1.msra.mxu0 0.0
    %8896 = vmatprep.subr.mxu0 0.0
    %8897 = vmatpush1.msra.mxu0 0.0
    %8898 = vmatprep.subr.mxu0 0.0
    %8899 = vmatpush1.msra.mxu0 0.0
    %8900 = vmatprep.subr.mxu0 0.0
    %8901 = vmatpush1.msra.mxu0 0.0
    %8902 = vmatprep.subr.mxu0 0.0
    %8903 = vmatpush1.msra.mxu0 0.0
    %8904 = vmatprep.subr.mxu0 0.0
    %8905 = vmatpush1.msra.mxu0 0.0
    %8906 = vmatprep.subr.mxu0 0.0
    %8907 = vmatpush1.msra.mxu0 0.0
    %8908 = vmatprep.subr.mxu0 0.0
    %8909 = vmatpush1.msra.mxu0 0.0
    %8910 = vmatprep.mubr.f32.mxu0 0.0
    %8911 = vmatmul.mubr.f32.gmra.mrb[0].mxu0 %v8823
    %v8912 = vpop.f32.mrb[0].mxu0
    %v8913 = vadd.f32 0.0, %v8912
    %v8914 = vpop.f32.mrb[0].mxu0
    %8915 = vmatprep.mubr.f32.mxu0 0.0
    %8916 = vmatmul.mubr.f32.gmra.mrb[0].mxu0 %v8826
    %v8917 = vpop.f32.mrb[0].mxu0
    %v8918 = vadd.f32 0.0, %v8917
    %v8919 = vpop.f32.mrb[0].mxu0
    %8920 = vmatprep.mubr.f32.mxu0 0.0
    %8921 = vmatmul.mubr.f32.gmra.mrb[0].mxu0 %v8829
    %v8922 = vpop.f32.mrb[0].mxu0
    %v8923 = vadd.f32 0.0, %v8922
    %v8924 = vpop.f32.mrb[0].mxu0
    %8925 = vmatprep.mubr.f32.mxu0 0.0
    %8926 = vmatmul.mubr.f32.gmra.mrb[0].mxu0 %v8832
    %v8927 = vpop.f32.mrb[0].mxu0
    %v8928 = vadd.f32 0.0, %v8927
    %v8929 = vpop.f32.mrb[0].mxu0
    %8930 = vmatprep.mubr.f32.mxu0 0.0
    %8931 = vmatmul.mubr.f32.gmra.mrb[0].mxu0 %v8835
    %v8932 = vpop.f32.mrb[0].mxu0
    %v8933 = vadd.f32 0.0, %v8932
    %v8934 = vpop.f32.mrb[0].mxu0
    %8935 = vmatprep.mubr.f32.mxu0 0.0
    %8936 = vmatmul.mubr.f32.gmra.mrb[0].mxu0 %v8838
    %v8937 = vpop.f32.mrb[0].mxu0
    %v8938 = vadd.f32 0.0, %v8937
    %v8939 = vpop.f32.mrb[0].mxu0
    %8940 = vmatprep.mubr.f32.mxu0 0.0
    %8941 = vmatmul.mubr.f32.gmra.mrb[0].mxu0 %v8841
    %v8942 = vpop.f32.mrb[0].mxu0
    %v8943 = vadd.f32 0.0, %v8942
    %v8944 = vpop.f32.mrb[0].mxu0
    %8945 = vmatprep.mubr.f32.mxu0 0.0
    %8946 = vmatmul.mubr.f32.gmra.mrb[0].mxu0 %v8844
    %v8947 = vpop.f32.mrb[0].mxu0
    %v8948 = vadd.f32 0.0, %v8947
    %v8949 = vpop.f32.mrb[0].mxu0
    %8950 = vdwg.mxu0
    %v8951 = vtanh.pop %v8784
    %v8952 = vtanh.pop %v8789
    %v8953 = vtanh.pop %v8794
    %v8954 = vtanh.pop %v8799
    %v8955 = vtanh.pop %v8804
    %v8956 = vtanh.pop %v8809
    %v8957 = vtanh.pop %v8814
    %v8958 = vtanh.pop %v8819
    %v8959 = vtanh.pop %v8913
    %v8960 = vtanh.pop %v8918
    %v8961 = vtanh.pop %v8923
    %v8962 = vtanh.pop %v8928
    %v8963 = vtanh.pop %v8933
    %v8964 = vtanh.pop %v8938
    %v8965 = vtanh.pop %v8943
    %v8966 = vtanh.pop %v8948
    %vm8967 = vcmask 15360
    %v8968 = vsel %vm8967, %v8951, -inf
    %8969 = vmax.xlane.f32.xlu0 %v8968
    %v8970 = vpop.xlane.xlu0 %8969
    %v8971 = vsel %vm8967, %v8952, -inf
    %8972 = vmax.xlane.f32.xlu0 %v8971
    %v8973 = vpop.xlane.xlu0 %8972
    %v8974 = vsel %vm8967, %v8953, -inf
    %8975 = vmax.xlane.f32.xlu0 %v8974
    %v8976 = vpop.xlane.xlu0 %8975
    %v8977 = vsel %vm8967, %v8954, -inf
    %8978 = vmax.xlane.f32.xlu0 %v8977
    %v8979 = vpop.xlane.xlu0 %8978
    %v8980 = vsel %vm8967, %v8955, -inf
    %8981 = vmax.xlane.f32.xlu0 %v8980
    %v8982 = vpop.xlane.xlu0 %8981
    %v8983 = vsel %vm8967, %v8956, -inf
    %8984 = vmax.xlane.f32.xlu0 %v8983
    %v8985 = vpop.xlane.xlu0 %8984
    %v8986 = vsel %vm8967, %v8957, -inf
    %8987 = vmax.xlane.f32.xlu0 %v8986
    %v8988 = vpop.xlane.xlu0 %8987
    %v8989 = vsel %vm8967, %v8958, -inf
    %8990 = vmax.xlane.f32.xlu0 %v8989
    %v8991 = vpop.xlane.xlu0 %8990
    %v8992 = vsel %vm8967, %v8959, -inf
    %8993 = vmax.xlane.f32.xlu0 %v8992
    %v8994 = vpop.xlane.xlu0 %8993
    %v8995 = vsel %vm8967, %v8960, -inf
    %8996 = vmax.xlane.f32.xlu0 %v8995
    %v8997 = vpop.xlane.xlu0 %8996
    %v8998 = vsel %vm8967, %v8961, -inf
    %8999 = vmax.xlane.f32.xlu0 %v8998
    %v9000 = vpop.xlane.xlu0 %8999
    %v9001 = vsel %vm8967, %v8962, -inf
    %9002 = vmax.xlane.f32.xlu0 %v9001
    %v9003 = vpop.xlane.xlu0 %9002
    %v9004 = vsel %vm8967, %v8963, -inf
    %9005 = vmax.xlane.f32.xlu0 %v9004
    %v9006 = vpop.xlane.xlu0 %9005
    %v9007 = vsel %vm8967, %v8964, -inf
    %9008 = vmax.xlane.f32.xlu0 %v9007
    %v9009 = vpop.xlane.xlu0 %9008
    %v9010 = vsel %vm8967, %v8965, -inf
    %9011 = vmax.xlane.f32.xlu0 %v9010
    %v9012 = vpop.xlane.xlu0 %9011
    %v9013 = vsel %vm8967, %v8966, -inf
    %9014 = vmax.xlane.f32.xlu0 %v9013
    %v9015 = vpop.xlane.xlu0 %9014
    %v9016 = vsub.f32 %v8951, %v8970
    %v9017 = vsub.f32 %v8952, %v8973
    %v9018 = vsub.f32 %v8953, %v8976
    %v9019 = vsub.f32 %v8954, %v8979
    %v9020 = vsub.f32 %v8955, %v8982
    %v9021 = vsub.f32 %v8956, %v8985
    %v9022 = vsub.f32 %v8957, %v8988
    %v9023 = vsub.f32 %v8958, %v8991
    %v9024 = vsub.f32 %v8959, %v8994
    %v9025 = vsub.f32 %v8960, %v8997
    %v9026 = vsub.f32 %v8961, %v9000
    %v9027 = vsub.f32 %v8962, %v9003
    %v9028 = vsub.f32 %v8963, %v9006
    %v9029 = vsub.f32 %v8964, %v9009
    %v9030 = vsub.f32 %v8965, %v9012
    %v9031 = vsub.f32 %v8966, %v9015
    %v9032 = vmul.f32 %v9016, 1.442695
    %v9033 = vpow.pop %v9032
    %v9034 = vmul.f32 %v9017, 1.442695
    %v9035 = vpow.pop %v9034
    %v9036 = vmul.f32 %v9018, 1.442695
    %v9037 = vpow.pop %v9036
    %v9038 = vmul.f32 %v9019, 1.442695
    %v9039 = vpow.pop %v9038
    %v9040 = vmul.f32 %v9020, 1.442695
    %v9041 = vpow.pop %v9040
    %v9042 = vmul.f32 %v9021, 1.442695
    %v9043 = vpow.pop %v9042
    %v9044 = vmul.f32 %v9022, 1.442695
    %v9045 = vpow.pop %v9044
    %v9046 = vmul.f32 %v9023, 1.442695
    %v9047 = vpow.pop %v9046
    %v9048 = vmul.f32 %v9024, 1.442695
    %v9049 = vpow.pop %v9048
    %v9050 = vmul.f32 %v9025, 1.442695
    %v9051 = vpow.pop %v9050
    %v9052 = vmul.f32 %v9026, 1.442695
    %v9053 = vpow.pop %v9052
    %v9054 = vmul.f32 %v9027, 1.442695
    %v9055 = vpow.pop %v9054
    %v9056 = vmul.f32 %v9028, 1.442695
    %v9057 = vpow.pop %v9056
    %v9058 = vmul.f32 %v9029, 1.442695
    %v9059 = vpow.pop %v9058
    %v9060 = vmul.f32 %v9030, 1.442695
    %v9061 = vpow.pop %v9060
    %v9062 = vmul.f32 %v9031, 1.442695
    %v9063 = vpow.pop %v9062
    %v9064 = vsel %vm8967, %v9033, 0.0
    %9065 = vadd.xlane.f32.xlu0 %v9064
    %v9066 = vpop.xlane.xlu0 %9065
    %v9067 = vsel %vm8967, %v9035, 0.0
    %9068 = vadd.xlane.f32.xlu0 %v9067
    %v9069 = vpop.xlane.xlu0 %9068
    %v9070 = vsel %vm8967, %v9037, 0.0
    %9071 = vadd.xlane.f32.xlu0 %v9070
    %v9072 = vpop.xlane.xlu0 %9071
    %v9073 = vsel %vm8967, %v9039, 0.0
    %9074 = vadd.xlane.f32.xlu0 %v9073
    %v9075 = vpop.xlane.xlu0 %9074
    %v9076 = vsel %vm8967, %v9041, 0.0
    %9077 = vadd.xlane.f32.xlu0 %v9076
    %v9078 = vpop.xlane.xlu0 %9077
    %v9079 = vsel %vm8967, %v9043, 0.0
    %9080 = vadd.xlane.f32.xlu0 %v9079
    %v9081 = vpop.xlane.xlu0 %9080
    %v9082 = vsel %vm8967, %v9045, 0.0
    %9083 = vadd.xlane.f32.xlu0 %v9082
    %v9084 = vpop.xlane.xlu0 %9083
    %v9085 = vsel %vm8967, %v9047, 0.0
    %9086 = vadd.xlane.f32.xlu0 %v9085
    %v9087 = vpop.xlane.xlu0 %9086
    %v9088 = vsel %vm8967, %v9049, 0.0
    %9089 = vadd.xlane.f32.xlu0 %v9088
    %v9090 = vpop.xlane.xlu0 %9089
    %v9091 = vsel %vm8967, %v9051, 0.0
    %9092 = vadd.xlane.f32.xlu0 %v9091
    %v9093 = vpop.xlane.xlu0 %9092
    %v9094 = vsel %vm8967, %v9053, 0.0
    %9095 = vadd.xlane.f32.xlu0 %v9094
    %v9096 = vpop.xlane.xlu0 %9095
    %v9097 = vsel %vm8967, %v9055, 0.0
    %9098 = vadd.xlane.f32.xlu0 %v9097
    %v9099 = vpop.xlane.xlu0 %9098
    %v9100 = vsel %vm8967, %v9057, 0.0
    %9101 = vadd.xlane.f32.xlu0 %v9100
    %v9102 = vpop.xlane.xlu0 %9101
    %v9103 = vsel %vm8967, %v9059, 0.0
    %9104 = vadd.xlane.f32.xlu0 %v9103
    %v9105 = vpop.xlane.xlu0 %9104
    %v9106 = vsel %vm8967, %v9061, 0.0
    %9107 = vadd.xlane.f32.xlu0 %v9106
    %v9108 = vpop.xlane.xlu0 %9107
    %v9109 = vsel %vm8967, %v9063, 0.0
    %9110 = vadd.xlane.f32.xlu0 %v9109
    %v9111 = vpop.xlane.xlu0 %9110
    %v9112 = vrcp.pop %v9066
    %v9113 = vrcp.pop %v9069
    %v9114 = vrcp.pop %v9072
    %v9115 = vrcp.pop %v9075
    %v9116 = vrcp.pop %v9078
    %v9117 = vrcp.pop %v9081
    %v9118 = vrcp.pop %v9084
    %v9119 = vrcp.pop %v9087
    %v9120 = vrcp.pop %v9090
    %v9121 = vrcp.pop %v9093
    %v9122 = vrcp.pop %v9096
    %v9123 = vrcp.pop %v9099
    %v9124 = vrcp.pop %v9102
    %v9125 = vrcp.pop %v9105
    %v9126 = vrcp.pop %v9108
    %v9127 = vrcp.pop %v9111
    %v9128 = vmul.f32 %v9033, %v9112
    %v9129 = vmul.f32 %v9035, %v9113
    %v9130 = vmul.f32 %v9037, %v9114
    %v9131 = vmul.f32 %v9039, %v9115
    %v9132 = vmul.f32 %v9041, %v9116
    %v9133 = vmul.f32 %v9043, %v9117
    %v9134 = vmul.f32 %v9045, %v9118
    %v9135 = vmul.f32 %v9047, %v9119
    %v9136 = vmul.f32 %v9049, %v9120
    %v9137 = vmul.f32 %v9051, %v9121
    %v9138 = vmul.f32 %v9053, %v9122
    %v9139 = vmul.f32 %v9055, %v9123
    %v9140 = vmul.f32 %v9057, %v9124
    %v9141 = vmul.f32 %v9059, %v9125
    %v9142 = vmul.f32 %v9061, %v9126
    %v9143 = vmul.f32 %v9063, %v9127
    %v9144 = vld [vmem:[%s15] sm:$0x3]
    %v9145 = vlaneseq
    %v9146 = vshrl.u32 %v9145, 7
    %v9147 = vsub.s32 0, %v9146
    %v9148 = vrot.slane %v9144, %v9147
    %9150 = vbcast.lane.b32.xlu0 %v9148, 256
    %v9151 = vpop.permute.xlu0 %9150
    %s9153 = sor.u32 256, 8
    %9154 = vbcast.lane.b32.xlu0 %v9148, %s9153
    %v9155 = vpop.permute.xlu0 %9154
    %s9157 = sor.u32 256, 16
    %9158 = vbcast.lane.b32.xlu0 %v9148, %s9157
    %v9159 = vpop.permute.xlu0 %9158
    %s9161 = sor.u32 256, 24
    %9162 = vbcast.lane.b32.xlu0 %v9148, %s9161
    %v9163 = vpop.permute.xlu0 %9162
    %s9165 = sor.u32 256, 32
    %9166 = vbcast.lane.b32.xlu0 %v9148, %s9165
    %v9167 = vpop.permute.xlu0 %9166
    %s9169 = sor.u32 256, 40
    %9170 = vbcast.lane.b32.xlu0 %v9148, %s9169
    %v9171 = vpop.permute.xlu0 %9170
    %s9173 = sor.u32 256, 48
    %9174 = vbcast.lane.b32.xlu0 %v9148, %s9173
    %v9175 = vpop.permute.xlu0 %9174
    %s9177 = sor.u32 256, 56
    %9178 = vbcast.lane.b32.xlu0 %v9148, %s9177
    %v9179 = vpop.permute.xlu0 %9178
    %v9180 = vlaneseq
    %v9181 = vshrl.u32 %v9180, 7
    %v9182 = vsub.s32 1, %v9181
    %v9183 = vrot.slane %v9144, %v9182
    %9185 = vbcast.lane.b32.xlu0 %v9183, 256
    %v9186 = vpop.permute.xlu0 %9185
    %s9188 = sor.u32 256, 8
    %9189 = vbcast.lane.b32.xlu0 %v9183, %s9188
    %v9190 = vpop.permute.xlu0 %9189
    %s9192 = sor.u32 256, 16
    %9193 = vbcast.lane.b32.xlu0 %v9183, %s9192
    %v9194 = vpop.permute.xlu0 %9193
    %s9196 = sor.u32 256, 24
    %9197 = vbcast.lane.b32.xlu0 %v9183, %s9196
    %v9198 = vpop.permute.xlu0 %9197
    %s9200 = sor.u32 256, 32
    %9201 = vbcast.lane.b32.xlu0 %v9183, %s9200
    %v9202 = vpop.permute.xlu0 %9201
    %s9204 = sor.u32 256, 40
    %9205 = vbcast.lane.b32.xlu0 %v9183, %s9204
    %v9206 = vpop.permute.xlu0 %9205
    %s9208 = sor.u32 256, 48
    %9209 = vbcast.lane.b32.xlu0 %v9183, %s9208
    %v9210 = vpop.permute.xlu0 %9209
    %s9212 = sor.u32 256, 56
    %9213 = vbcast.lane.b32.xlu0 %v9183, %s9212
    %v9214 = vpop.permute.xlu0 %9213
    %v9215 = vmul.f32 %v9151, %v9128
    %v9216 = vmul.f32 %v9155, %v9129
    %v9217 = vmul.f32 %v9159, %v9130
    %v9218 = vmul.f32 %v9163, %v9131
    %v9219 = vmul.f32 %v9167, %v9132
    %v9220 = vmul.f32 %v9171, %v9133
    %v9221 = vmul.f32 %v9175, %v9134
    %v9222 = vmul.f32 %v9179, %v9135
    %v9223 = vmul.f32 %v9186, %v9136
    %v9224 = vmul.f32 %v9190, %v9137
    %v9225 = vmul.f32 %v9194, %v9138
    %v9226 = vmul.f32 %v9198, %v9139
    %v9227 = vmul.f32 %v9202, %v9140
    %v9228 = vmul.f32 %v9206, %v9141
    %v9229 = vmul.f32 %v9210, %v9142
    %v9230 = vmul.f32 %v9214, %v9143
    %v9231 = vsel %vm8967, %v9215, 0.0
    %v9232 = vsel %vm8967, %v9216, 0.0
    %v9233 = vadd.f32 %v9231, %v9232
    %v9234 = vsel %vm8967, %v9217, 0.0
    %v9235 = vadd.f32 %v9233, %v9234
    %v9236 = vsel %vm8967, %v9218, 0.0
    %v9237 = vadd.f32 %v9235, %v9236
    %v9238 = vsel %vm8967, %v9219, 0.0
    %v9239 = vadd.f32 %v9237, %v9238
    %v9240 = vsel %vm8967, %v9220, 0.0
    %v9241 = vadd.f32 %v9239, %v9240
    %v9242 = vsel %vm8967, %v9221, 0.0
    %v9243 = vadd.f32 %v9241, %v9242
    %v9244 = vsel %vm8967, %v9222, 0.0
    %v9245 = vadd.f32 %v9243, %v9244
    %v9246 = vrot.slane %v9245, 4
    %v9247 = vadd.f32 %v9245, %v9246
    %v9248 = vrot.slane %v9247, 2
    %v9249 = vadd.f32 %v9247, %v9248
    %v9250 = vrot.slane %v9249, 1
    %v9251 = vadd.f32 %v9249, %v9250
    %v9252 = vsel %vm8967, %v9223, 0.0
    %v9253 = vsel %vm8967, %v9224, 0.0
    %v9254 = vadd.f32 %v9252, %v9253
    %v9255 = vsel %vm8967, %v9225, 0.0
    %v9256 = vadd.f32 %v9254, %v9255
    %v9257 = vsel %vm8967, %v9226, 0.0
    %v9258 = vadd.f32 %v9256, %v9257
    %v9259 = vsel %vm8967, %v9227, 0.0
    %v9260 = vadd.f32 %v9258, %v9259
    %v9261 = vsel %vm8967, %v9228, 0.0
    %v9262 = vadd.f32 %v9260, %v9261
    %v9263 = vsel %vm8967, %v9229, 0.0
    %v9264 = vadd.f32 %v9262, %v9263
    %v9265 = vsel %vm8967, %v9230, 0.0
    %v9266 = vadd.f32 %v9264, %v9265
    %v9267 = vrot.slane %v9266, 4
    %v9268 = vadd.f32 %v9266, %v9267
    %v9269 = vrot.slane %v9268, 2
    %v9270 = vadd.f32 %v9268, %v9269
    %v9271 = vrot.slane %v9270, 1
    %v9272 = vadd.f32 %v9270, %v9271
    %v9273 = vmul.f32 %v8661, %v9251
    %v9274 = vmul.f32 %v8662, %v9251
    %v9275 = vmul.f32 %v8663, %v9251
    %v9276 = vmul.f32 %v8664, %v9251
    %v9277 = vmul.f32 %v8665, %v9251
    %v9278 = vmul.f32 %v8666, %v9251
    %v9279 = vmul.f32 %v8667, %v9251
    %v9280 = vmul.f32 %v8668, %v9251
    %v9281 = vmul.f32 %v8669, %v9272
    %v9282 = vmul.f32 %v8670, %v9272
    %v9283 = vmul.f32 %v8671, %v9272
    %v9284 = vmul.f32 %v8672, %v9272
    %v9285 = vmul.f32 %v8673, %v9272
    %v9286 = vmul.f32 %v8674, %v9272
    %v9287 = vmul.f32 %v8675, %v9272
    %v9288 = vmul.f32 %v8676, %v9272
    %v9289 = vsel %vm8967, %v9273, 0.0
    %9290 = vadd.xlane.f32.xlu0 %v9289
    %v9291 = vpop.xlane.xlu0 %9290
    %v9292 = vsel %vm8967, %v9274, 0.0
    %9293 = vadd.xlane.f32.xlu0 %v9292
    %v9294 = vpop.xlane.xlu0 %9293
    %v9295 = vsel %vm8967, %v9275, 0.0
    %9296 = vadd.xlane.f32.xlu0 %v9295
    %v9297 = vpop.xlane.xlu0 %9296
    %v9298 = vsel %vm8967, %v9276, 0.0
    %9299 = vadd.xlane.f32.xlu0 %v9298
    %v9300 = vpop.xlane.xlu0 %9299
    %v9301 = vsel %vm8967, %v9277, 0.0
    %9302 = vadd.xlane.f32.xlu0 %v9301
    %v9303 = vpop.xlane.xlu0 %9302
    %v9304 = vsel %vm8967, %v9278, 0.0
    %9305 = vadd.xlane.f32.xlu0 %v9304
    %v9306 = vpop.xlane.xlu0 %9305
    %v9307 = vsel %vm8967, %v9279, 0.0
    %9308 = vadd.xlane.f32.xlu0 %v9307
    %v9309 = vpop.xlane.xlu0 %9308
    %v9310 = vsel %vm8967, %v9280, 0.0
    %9311 = vadd.xlane.f32.xlu0 %v9310
    %v9312 = vpop.xlane.xlu0 %9311
    %v9313 = vsel %vm8967, %v9281, 0.0
    %9314 = vadd.xlane.f32.xlu0 %v9313
    %v9315 = vpop.xlane.xlu0 %9314
    %v9316 = vsel %vm8967, %v9282, 0.0
    %9317 = vadd.xlane.f32.xlu0 %v9316
    %v9318 = vpop.xlane.xlu0 %9317
    %v9319 = vsel %vm8967, %v9283, 0.0
    %9320 = vadd.xlane.f32.xlu0 %v9319
    %v9321 = vpop.xlane.xlu0 %9320
    %v9322 = vsel %vm8967, %v9284, 0.0
    %9323 = vadd.xlane.f32.xlu0 %v9322
    %v9324 = vpop.xlane.xlu0 %9323
    %v9325 = vsel %vm8967, %v9285, 0.0
    %9326 = vadd.xlane.f32.xlu0 %v9325
    %v9327 = vpop.xlane.xlu0 %9326
    %v9328 = vsel %vm8967, %v9286, 0.0
    %9329 = vadd.xlane.f32.xlu0 %v9328
    %v9330 = vpop.xlane.xlu0 %9329
    %v9331 = vsel %vm8967, %v9287, 0.0
    %9332 = vadd.xlane.f32.xlu0 %v9331
    %v9333 = vpop.xlane.xlu0 %9332
    %v9334 = vsel %vm8967, %v9288, 0.0
    %9335 = vadd.xlane.f32.xlu0 %v9334
    %v9336 = vpop.xlane.xlu0 %9335
    %v9353 = vlaneseq
    %v9354 = vand.u32 %v9353, 127
    %v9355 = vlaneseq
    %v9356 = vshrl.u32 %v9355, 7
    %v9357 = vsub.s32 %v9354, %v9356
    %v9358 = vrot.slane %v9291, %v9357
    %v9359 = vadd.s32 %v9354, 4294967288
    %v9360 = vlaneseq
    %v9361 = vshrl.u32 %v9360, 7
    %v9362 = vsub.s32 %v9359, %v9361
    %v9363 = vrot.slane %v9294, %v9362
    %vm9364 = vcmask 130112
    %v9365 = vsel %vm9364, %v9363, %v9358
    %v9366 = vadd.s32 %v9354, 4294967280
    %v9367 = vlaneseq
    %v9368 = vshrl.u32 %v9367, 7
    %v9369 = vsub.s32 %v9366, %v9368
    %v9370 = vrot.slane %v9297, %v9369
    %vm9371 = vcmask 195712
    %v9372 = vsel %vm9371, %v9370, %v9365
    %v9373 = vadd.s32 %v9354, 4294967272
    %v9374 = vlaneseq
    %v9375 = vshrl.u32 %v9374, 7
    %v9376 = vsub.s32 %v9373, %v9375
    %v9377 = vrot.slane %v9300, %v9376
    %vm9378 = vcmask 261312
    %v9379 = vsel %vm9378, %v9377, %v9372
    %v9380 = vadd.s32 %v9354, 4294967264
    %v9381 = vlaneseq
    %v9382 = vshrl.u32 %v9381, 7
    %v9383 = vsub.s32 %v9380, %v9382
    %v9384 = vrot.slane %v9303, %v9383
    %vm9385 = vcmask 326912
    %v9386 = vsel %vm9385, %v9384, %v9379
    %v9387 = vadd.s32 %v9354, 4294967256
    %v9388 = vlaneseq
    %v9389 = vshrl.u32 %v9388, 7
    %v9390 = vsub.s32 %v9387, %v9389
    %v9391 = vrot.slane %v9306, %v9390
    %vm9392 = vcmask 392512
    %v9393 = vsel %vm9392, %v9391, %v9386
    %v9394 = vadd.s32 %v9354, 4294967248
    %v9395 = vlaneseq
    %v9396 = vshrl.u32 %v9395, 7
    %v9397 = vsub.s32 %v9394, %v9396
    %v9398 = vrot.slane %v9309, %v9397
    %vm9399 = vcmask 458112
    %v9400 = vsel %vm9399, %v9398, %v9393
    %v9401 = vadd.s32 %v9354, 4294967240
    %v9402 = vlaneseq
    %v9403 = vshrl.u32 %v9402, 7
    %v9404 = vsub.s32 %v9401, %v9403
    %v9405 = vrot.slane %v9312, %v9404
    %vm9406 = vcmask 523712
    %v9407 = vsel %vm9406, %v9405, %v9400
    %v9408 = vlaneseq
    %v9409 = vshrl.u32 %v9408, 7
    %v9410 = vsub.s32 %v9354, %v9409
    %v9411 = vrot.slane %v9315, %v9410
    %v9412 = vlaneseq
    %v9413 = vshrl.u32 %v9412, 7
    %v9414 = vsub.s32 %v9359, %v9413
    %v9415 = vrot.slane %v9318, %v9414
    %v9416 = vsel %vm9364, %v9415, %v9411
    %v9417 = vlaneseq
    %v9418 = vshrl.u32 %v9417, 7
    %v9419 = vsub.s32 %v9366, %v9418
    %v9420 = vrot.slane %v9321, %v9419
    %v9421 = vsel %vm9371, %v9420, %v9416
    %v9422 = vlaneseq
    %v9423 = vshrl.u32 %v9422, 7
    %v9424 = vsub.s32 %v9373, %v9423
    %v9425 = vrot.slane %v9324, %v9424
    %v9426 = vsel %vm9378, %v9425, %v9421
    %v9427 = vlaneseq
    %v9428 = vshrl.u32 %v9427, 7
    %v9429 = vsub.s32 %v9380, %v9428
    %v9430 = vrot.slane %v9327, %v9429
    %v9431 = vsel %vm9385, %v9430, %v9426
    %v9432 = vlaneseq
    %v9433 = vshrl.u32 %v9432, 7
    %v9434 = vsub.s32 %v9387, %v9433
    %v9435 = vrot.slane %v9330, %v9434
    %v9436 = vsel %vm9392, %v9435, %v9431
    %v9437 = vlaneseq
    %v9438 = vshrl.u32 %v9437, 7
    %v9439 = vsub.s32 %v9394, %v9438
    %v9440 = vrot.slane %v9333, %v9439
    %v9441 = vsel %vm9399, %v9440, %v9436
    %v9442 = vlaneseq
    %v9443 = vshrl.u32 %v9442, 7
    %v9444 = vsub.s32 %v9401, %v9443
    %v9445 = vrot.slane %v9336, %v9444
    %v9446 = vsel %vm9406, %v9445, %v9441
    %vm9447 = vcmask 1041409
    %v9448 = vsel %vm9447, %v9446, %v9407
    %vm9450 = vcmask 517120
    %9451 = vst.msk [vmem:[#allocation3] sm:$0x3] %vm9450, %v9448
    // Predicated region
    $region98: #{memo_lstm_forward.1} parent=1 // pred_check
      _
    $region99: #{memo_lstm_forward.1} parent=1 // pred_check_branch
      %9453 = sbr.rel (0) target = $region101
    $region100: #{memo_lstm_forward.1} parent=1 // pred_region
      %s9455 = ssub.s32 32, 32
      %9456 = vsyncadd [#allocation4], %s9455
      %s9458 = sshll.u32 [#allocation3], 4
      %s9459 = int_to_ptr.vmem [resolvable:$true] %s9458
      %9461 = dma.vmem_to_hbm [thread:$0]  %s9459, 32, %s24, [#allocation4]
    $region101: #{memo_lstm_forward.1} parent=1 // pred_fallthru
      _
    // Predicated region
    $region102: #{memo_lstm_forward.1} parent=1 // pred_check
      _
    $region103: #{memo_lstm_forward.1} parent=1 // pred_check_branch
      %9463 = sbr.rel (0) target = $region105
    $region104: #{memo_lstm_forward.1} parent=1 // pred_region
      %9464 = dma.done [#allocation4], 32
    $region105: #{memo_lstm_forward.1} parent=1 // pred_fallthru
      _
    %9465 = vsyncpa [#allocation4], 1

</llo_original>
